<compile_context>
chip_gen: v6e
topology: v6e:2x2x1
jax: 0.10.0
libtpu: 0.0.40
codegen_flags: <defaults>
</compile_context>

<pallas_src>
import jax
import jax.numpy as jnp
from jax import lax
from jax.experimental import pallas as pl
from jax.experimental.pallas import tpu as pltpu  # noqa: F401  (not required once grid is collapsed)


# ----------------------------------------------------------------------------
# Model hyper-parameters (small, consistent with the module's forward).
# ----------------------------------------------------------------------------
B = 2            # batch_size
T = 4            # sequence length
H = W = 8        # spatial dims of each x_t  -> controller input dim = 64
DIN = H * W
N_MEM = 16       # memory_dims[0]
M_MEM = 32       # memory_dims[1]
HID = 32         # controller.num_hidden
NUM_OUTPUTS = 16
OUT_HALF = NUM_OUTPUTS // 2
KO = 2 * M_MEM + OUT_HALF + 2    # fused [kw | kr | out | beta_w | beta_r] = 74

BN_EPS = 1e-5
COS_EPS = 1e-8


def _dg(a, b, contract):
    """dot_general with no batch dims, f32 accumulate."""
    return lax.dot_general(
        a, b, dimension_numbers=(contract, ((), ())),
        preferred_element_type=jnp.float32)


def _mm(a, b):
    return jnp.dot(a, b, preferred_element_type=jnp.float32)


def _ntm_kernel(x_ref, mem0_ref, h0_ref,
                wc_ref, bc_ref, wea_ref, bea_ref, wko_ref, bko_ref,
                out_ref):
    """Single-invocation kernel: whole bidirectional recurrence, unrolled."""

    # Initial addressing weights: wr = ww = eye(B, N)  (reset in forward()).
    rows = lax.broadcasted_iota(jnp.int32, (B, N_MEM), 0)
    cols = lax.broadcasted_iota(jnp.int32, (B, N_MEM), 1)
    eye = (rows == cols).astype(jnp.float32)

    memory = mem0_ref[...]        # (N, M)
    ww = eye                      # (B, N)
    wr = eye                      # (B, N)
    h_fwd = h0_ref[0]             # (B, HID)
    h_bwd = h0_ref[1]             # (B, HID) -- never updated (PyTorch quirk)

    def step(h_prev, ww, wr, memory, x2d):
        # ---- write head (get_weights=False): fused erase/add matmul --------
        ea = _mm(h_prev, wea_ref[...]) + bea_ref[...]          # (B, 2M)
        e = jax.nn.sigmoid(ea[:, :M_MEM])                      # (B, M)
        a = jnp.tanh(ea[:, M_MEM:])                            # (B, M)
        erase_term = _dg(ww, e, ((0,), (0,)))                  # (N, M)
        add_term = _dg(ww, a, ((0,), (0,)))                    # (N, M)
        m_t = memory * (1.0 - erase_term) + add_term           # (N, M)

        # ---- read head (get_weights=False): weighted read -------------------
        r_t = _mm(wr, m_t)                                     # (B, M)

        # ---- controller (packed weight, two dots on 8-aligned row slices) ---
        wc = wc_ref[...]                                       # (DIN+M, HID)
        h_t = jax.nn.relu(_mm(x2d, wc[:DIN, :])
                          + _mm(r_t, wc[DIN:, :])
                          + bc_ref[...])                       # (B, HID)

        # ---- fused addressing keys / betas / output head ---------------------
        z = _mm(h_t, wko_ref[...]) + bko_ref[...]              # (B, KO)
        kw = jnp.tanh(z[:, :M_MEM])                            # (B, M)
        kr = jnp.tanh(z[:, M_MEM:2 * M_MEM])                   # (B, M)
        out = jax.nn.sigmoid(z[:, 2 * M_MEM:2 * M_MEM + OUT_HALF])   # (B, OH)
        beta_w = jax.nn.softplus(
            z[:, 2 * M_MEM + OUT_HALF:2 * M_MEM + OUT_HALF + 1])     # (B, 1)
        beta_r = jax.nn.softplus(
            z[:, 2 * M_MEM + OUT_HALF + 1:2 * M_MEM + OUT_HALF + 2]) # (B, 1)

        # ---- content-based addressing; memory row norm shared by both heads -
        msum = jnp.sum(m_t * m_t, axis=1, keepdims=True)       # (N, 1)

        def address(k, beta):
            num = _dg(k, m_t, ((1,), (1,)))                    # (B, N)
            ksum = jnp.sum(k * k, axis=1, keepdims=True)       # (B, 1)
            denom = jnp.sqrt(_dg(ksum, msum, ((1,), (1,))))    # (B, N)
            sim = num * pl.reciprocal(denom + COS_EPS, approx=True)
            zl = beta * sim
            zl = zl - jnp.max(zl, axis=1, keepdims=True)
            p = jnp.exp(zl)
            return p * pl.reciprocal(jnp.sum(p, axis=1, keepdims=True),
                                     approx=True)              # (B, N)

        ww_t = address(kw, beta_w)
        wr_t = address(kr, beta_r)

        # ---- memory BatchNorm1d (training-mode batch stats, gamma=1, beta=0)
        mu = jnp.mean(m_t, axis=0, keepdims=True)              # (1, M)
        var = jnp.mean((m_t - mu) ** 2, axis=0, keepdims=True) # (1, M)
        mem_new = (m_t - mu) * lax.rsqrt(var + BN_EPS)         # (N, M)

        return h_t, ww_t, wr_t, mem_new, out

    # ---- forward half (fully unrolled, static indices) ----------------------
    for t in range(T):
        h_fwd, ww, wr, memory, out = step(h_fwd, ww, wr, memory, x_ref[t])
        out_ref[t] = out

    # ---- backward half (reversed time; reads the never-updated h0_bwd) ------
    for j in range(T):
        _, ww, wr, memory, out = step(h_bwd, ww, wr, memory, x_ref[T - 1 - j])
        out_ref[T + j] = out


def _fuse_params(p):
    """Host-side packing of the 21 raw parameters into 9 packed arrays."""
    return dict(
        mem0=p["mem0"],
        h0=jnp.stack([p["h0_fwd"], p["h0_bwd"]], axis=0),                   # (2, B, HID)
        wc=jnp.concatenate([p["wcx"], p["wcr"]], axis=0),                   # (DIN+M, HID)
        bc=p["bc"],                                                         # (1, HID)
        wea=jnp.concatenate([p["we"], p["wa"]], axis=1),                    # (HID, 2M)
        bea=jnp.concatenate([p["be"], p["ba"]], axis=1),                    # (1, 2M)
        wko=jnp.concatenate([p["wkw"], p["wkr"], p["wout"],
                             p["wbw"], p["wbr"]], axis=1),                  # (HID, 74)
        bko=jnp.concatenate([p["bkw"], p["bkr"], p["bout"],
                             p["bbw"], p["bbr"]], axis=1),                  # (1, 74)
    )


@jax.jit
def bidirectional_ntm_forward(x, params):
    """x: (B, T, H, W) float32. Returns (2, T, B, 1, OUT_HALF)."""
    b, t, h, w = x.shape
    assert (b, t, h, w) == (B, T, H, W)
    # x.permute(1, 0, 2, 3) then flatten spatial dims -> (T, B, DIN)
    x_flat = jnp.transpose(x, (1, 0, 2, 3)).reshape(T, B, DIN).astype(jnp.float32)
    fp = _fuse_params(params)

    # Single invocation: no grid, every input is one whole-array VMEM block
    # (one prologue DMA each), output written back to HBM in one DMA.
    outs = pl.pallas_call(
        _ntm_kernel,
        out_shape=jax.ShapeDtypeStruct((2 * T, B, OUT_HALF), jnp.float32),
    )(
        x_flat, fp["mem0"], fp["h0"],
        fp["wc"], fp["bc"], fp["wea"], fp["bea"], fp["wko"], fp["bko"],
    )

    outs = outs.reshape(2, T, B, OUT_HALF)     # (fwd, bwd-in-reversed-order)
    return outs[:, :, :, None, :]              # (2, T, B, 1, OUT_HALF)


def init_params(key):
    def uni(key, shape, fan_in):
        bound = 1.0 / jnp.sqrt(float(fan_in))
        return jax.random.uniform(key, shape, jnp.float32, -bound, bound)

    ks = jax.random.split(key, 20)
    p = {
        # persistent initial state from __init__
        "mem0": jnp.full((N_MEM, M_MEM), 5e-06, jnp.float32),
        "h0_fwd": jax.random.normal(ks[0], (B, HID), jnp.float32) / HID,
        "h0_bwd": jax.random.normal(ks[1], (B, HID), jnp.float32) / HID,
        # controller
        "wcx": uni(ks[2], (DIN, HID), DIN),
        "wcr": uni(ks[3], (M_MEM, HID), M_MEM),
        "bc": uni(ks[4], (1, HID), DIN),
        # write head erase / add
        "we": uni(ks[5], (HID, M_MEM), HID), "be": uni(ks[6], (1, M_MEM), HID),
        "wa": uni(ks[7], (HID, M_MEM), HID), "ba": uni(ks[8], (1, M_MEM), HID),
        # write head addressing
        "wkw": uni(ks[9], (HID, M_MEM), HID), "bkw": uni(ks[10], (1, M_MEM), HID),
        "wbw": uni(ks[11], (HID, 1), HID), "bbw": uni(ks[12], (1, 1), HID),
        # read head addressing
        "wkr": uni(ks[13], (HID, M_MEM), HID), "bkr": uni(ks[14], (1, M_MEM), HID),
        "wbr": uni(ks[15], (HID, 1), HID), "bbr": uni(ks[16], (1, 1), HID),
        # hid_to_out
        "wout": uni(ks[17], (HID, OUT_HALF), HID),
        "bout": uni(ks[18], (1, OUT_HALF), HID),
    }
    return p


if __name__ == "__main__":
    key = jax.random.PRNGKey(0)
    k_x, k_p = jax.random.split(key)
    x = jax.random.uniform(k_x, (B, T, H, W), jnp.float32)   # (batch, seq, H, W)
    params = init_params(k_p)

    out = bidirectional_ntm_forward(x, params)
    out = jax.block_until_ready(out)

    assert out.shape == (2, T, B, 1, OUT_HALF), out.shape
    assert bool(jnp.all(jnp.isfinite(out)))
    print("KERNEL_OK")
</pallas_src>

<mosaic_0001>
module attributes {stable_mosaic.version = 11 : i64} {
  func.func @_ntm_kernel(%arg0: memref<4x2x64xf32, #tpu.memory_space<vmem>>, %arg1: memref<16x32xf32, #tpu.memory_space<vmem>>, %arg2: memref<2x2x32xf32, #tpu.memory_space<vmem>>, %arg3: memref<96x32xf32, #tpu.memory_space<vmem>>, %arg4: memref<1x32xf32, #tpu.memory_space<vmem>>, %arg5: memref<32x64xf32, #tpu.memory_space<vmem>>, %arg6: memref<1x64xf32, #tpu.memory_space<vmem>>, %arg7: memref<32x74xf32, #tpu.memory_space<vmem>>, %arg8: memref<1x74xf32, #tpu.memory_space<vmem>>, %arg9: memref<8x2x8xf32, #tpu.memory_space<vmem>>) attributes {dimension_semantics = [], scalar_prefetch = 0 : i64, scratch_operands = 0 : i64, tpu.core_type = #tpu.core_type<tc>} {
    %0 = tpu.iota {dimensions = array<i32: 0>} : vector<2x16xi32>
    %1 = tpu.iota {dimensions = array<i32: 1>} : vector<2x16xi32>
    %2 = arith.cmpi eq, %0, %1 : vector<2x16xi32>
    %3 = arith.extui %2 : vector<2x16xi1> to vector<2x16xi32>
    %4 = arith.sitofp %3 : vector<2x16xi32> to vector<2x16xf32>
    %c0 = arith.constant 0 : index
    %c0_0 = arith.constant 0 : index
    %5 = vector.load %arg1[%c0, %c0_0] : memref<16x32xf32, #tpu.memory_space<vmem>>, vector<16x32xf32>
    %c0_1 = arith.constant 0 : index
    %c0_2 = arith.constant 0 : index
    %c0_3 = arith.constant 0 : index
    %6 = vector.load %arg2[%c0_1, %c0_2, %c0_3] : memref<2x2x32xf32, #tpu.memory_space<vmem>>, vector<1x2x32xf32>
    %7 = vector.shape_cast %6 : vector<1x2x32xf32> to vector<2x32xf32>
    %c1 = arith.constant 1 : index
    %c0_4 = arith.constant 0 : index
    %c0_5 = arith.constant 0 : index
    %8 = vector.load %arg2[%c1, %c0_4, %c0_5] : memref<2x2x32xf32, #tpu.memory_space<vmem>>, vector<1x2x32xf32>
    %9 = vector.shape_cast %8 : vector<1x2x32xf32> to vector<2x32xf32>
    %c0_6 = arith.constant 0 : index
    %c0_7 = arith.constant 0 : index
    %c0_8 = arith.constant 0 : index
    %10 = vector.load %arg0[%c0_6, %c0_7, %c0_8] : memref<4x2x64xf32, #tpu.memory_space<vmem>>, vector<1x2x64xf32>
    %11 = vector.shape_cast %10 : vector<1x2x64xf32> to vector<2x64xf32>
    %c0_9 = arith.constant 0 : index
    %c0_10 = arith.constant 0 : index
    %12 = vector.load %arg5[%c0_9, %c0_10] : memref<32x64xf32, #tpu.memory_space<vmem>>, vector<32x64xf32>
    %cst = arith.constant dense<0.000000e+00> : vector<2x64xf32>
    %13 = tpu.matmul %7, %12, %cst {dimension_numbers = #tpu.dot_dimension_numbers<[1], [0], [0], [1], [0, 0, 1, 1], [], []>} : vector<2x32xf32>, vector<32x64xf32>, vector<2x64xf32> -> vector<2x64xf32>
    %c0_11 = arith.constant 0 : index
    %c0_12 = arith.constant 0 : index
    %14 = vector.load %arg6[%c0_11, %c0_12] : memref<1x64xf32, #tpu.memory_space<vmem>>, vector<1x64xf32>
    %15 = vector.broadcast %14 : vector<1x64xf32> to vector<2x64xf32>
    %16 = arith.addf %13, %15 : vector<2x64xf32>
    %17 = vector.extract_strided_slice %16 {offsets = [0, 0], sizes = [2, 32], strides = [1, 1]} : vector<2x64xf32> to vector<2x32xf32>
    %18 = arith.negf %17 : vector<2x32xf32>
    %19 = math.exp %18 : vector<2x32xf32>
    %cst_13 = arith.constant 1.000000e+00 : f32
    %20 = vector.broadcast %cst_13 : f32 to vector<2x32xf32>
    %21 = arith.addf %20, %19 : vector<2x32xf32>
    %22 = arith.divf %20, %21 : vector<2x32xf32>
    %23 = vector.extract_strided_slice %16 {offsets = [0, 32], sizes = [2, 32], strides = [1, 1]} : vector<2x64xf32> to vector<2x32xf32>
    %24 = math.tanh %23 : vector<2x32xf32>
    %cst_14 = arith.constant dense<0.000000e+00> : vector<16x32xf32>
    %25 = tpu.matmul %4, %22, %cst_14 {dimension_numbers = #tpu.dot_dimension_numbers<[0], [0], [1], [1], [0, 1, 1, 1], [], []>} : vector<2x16xf32>, vector<2x32xf32>, vector<16x32xf32> -> vector<16x32xf32>
    %cst_15 = arith.constant dense<0.000000e+00> : vector<16x32xf32>
    %26 = tpu.matmul %4, %24, %cst_15 {dimension_numbers = #tpu.dot_dimension_numbers<[0], [0], [1], [1], [0, 1, 1, 1], [], []>} : vector<2x16xf32>, vector<2x32xf32>, vector<16x32xf32> -> vector<16x32xf32>
    %cst_16 = arith.constant 1.000000e+00 : f32
    %27 = vector.broadcast %cst_16 : f32 to vector<16x32xf32>
    %28 = arith.subf %27, %25 : vector<16x32xf32>
    %29 = arith.mulf %5, %28 : vector<16x32xf32>
    %30 = arith.addf %29, %26 : vector<16x32xf32>
    %cst_17 = arith.constant dense<0.000000e+00> : vector<2x32xf32>
    %31 = tpu.matmul %4, %30, %cst_17 {dimension_numbers = #tpu.dot_dimension_numbers<[1], [0], [0], [1], [0, 0, 1, 1], [], []>} : vector<2x16xf32>, vector<16x32xf32>, vector<2x32xf32> -> vector<2x32xf32>
    %c0_18 = arith.constant 0 : index
    %c0_19 = arith.constant 0 : index
    %32 = vector.load %arg3[%c0_18, %c0_19] : memref<96x32xf32, #tpu.memory_space<vmem>>, vector<96x32xf32>
    %33 = vector.extract_strided_slice %32 {offsets = [0, 0], sizes = [64, 32], strides = [1, 1]} : vector<96x32xf32> to vector<64x32xf32>
    %cst_20 = arith.constant dense<0.000000e+00> : vector<2x32xf32>
    %34 = tpu.matmul %11, %33, %cst_20 {dimension_numbers = #tpu.dot_dimension_numbers<[1], [0], [0], [1], [0, 0, 1, 1], [], []>} : vector<2x64xf32>, vector<64x32xf32>, vector<2x32xf32> -> vector<2x32xf32>
    %35 = vector.extract_strided_slice %32 {offsets = [64, 0], sizes = [32, 32], strides = [1, 1]} : vector<96x32xf32> to vector<32x32xf32>
    %cst_21 = arith.constant dense<0.000000e+00> : vector<2x32xf32>
    %36 = tpu.matmul %31, %35, %cst_21 {dimension_numbers = #tpu.dot_dimension_numbers<[1], [0], [0], [1], [0, 0, 1, 1], [], []>} : vector<2x32xf32>, vector<32x32xf32>, vector<2x32xf32> -> vector<2x32xf32>
    %37 = arith.addf %34, %36 : vector<2x32xf32>
    %c0_22 = arith.constant 0 : index
    %c0_23 = arith.constant 0 : index
    %38 = vector.load %arg4[%c0_22, %c0_23] : memref<1x32xf32, #tpu.memory_space<vmem>>, vector<1x32xf32>
    %39 = vector.broadcast %38 : vector<1x32xf32> to vector<2x32xf32>
    %40 = arith.addf %37, %39 : vector<2x32xf32>
    %cst_24 = arith.constant 0.000000e+00 : f32
    %41 = vector.broadcast %cst_24 : f32 to vector<2x32xf32>
    %42 = arith.maximumf %40, %41 : vector<2x32xf32>
    %c0_25 = arith.constant 0 : index
    %c0_26 = arith.constant 0 : index
    %43 = vector.load %arg7[%c0_25, %c0_26] : memref<32x74xf32, #tpu.memory_space<vmem>>, vector<32x74xf32>
    %cst_27 = arith.constant dense<0.000000e+00> : vector<2x74xf32>
    %44 = tpu.matmul %42, %43, %cst_27 {dimension_numbers = #tpu.dot_dimension_numbers<[1], [0], [0], [1], [0, 0, 1, 1], [], []>} : vector<2x32xf32>, vector<32x74xf32>, vector<2x74xf32> -> vector<2x74xf32>
    %c0_28 = arith.constant 0 : index
    %c0_29 = arith.constant 0 : index
    %45 = vector.load %arg8[%c0_28, %c0_29] : memref<1x74xf32, #tpu.memory_space<vmem>>, vector<1x74xf32>
    %46 = vector.broadcast %45 : vector<1x74xf32> to vector<2x74xf32>
    %47 = arith.addf %44, %46 : vector<2x74xf32>
    %48 = vector.extract_strided_slice %47 {offsets = [0, 0], sizes = [2, 32], strides = [1, 1]} : vector<2x74xf32> to vector<2x32xf32>
    %49 = math.tanh %48 : vector<2x32xf32>
    %50 = vector.extract_strided_slice %47 {offsets = [0, 32], sizes = [2, 32], strides = [1, 1]} : vector<2x74xf32> to vector<2x32xf32>
    %51 = math.tanh %50 : vector<2x32xf32>
    %52 = vector.extract_strided_slice %47 {offsets = [0, 64], sizes = [2, 8], strides = [1, 1]} : vector<2x74xf32> to vector<2x8xf32>
    %53 = arith.negf %52 : vector<2x8xf32>
    %54 = math.exp %53 : vector<2x8xf32>
    %cst_30 = arith.constant 1.000000e+00 : f32
    %55 = vector.broadcast %cst_30 : f32 to vector<2x8xf32>
    %56 = arith.addf %55, %54 : vector<2x8xf32>
    %57 = arith.divf %55, %56 : vector<2x8xf32>
    %58 = vector.extract_strided_slice %47 {offsets = [0, 72], sizes = [2, 1], strides = [1, 1]} : vector<2x74xf32> to vector<2x1xf32>
    %cst_31 = arith.constant 0.000000e+00 : f32
    %59 = vector.broadcast %cst_31 : f32 to vector<2x1xf32>
    %60 = arith.maximumf %58, %59 : vector<2x1xf32>
    %61 = vector.broadcast %cst_31 : f32 to vector<2x1xf32>
    %62 = arith.subf %58, %61 : vector<2x1xf32>
    %63 = arith.cmpf one, %62, %62 : vector<2x1xf32>
    %64 = vector.broadcast %cst_31 : f32 to vector<2x1xf32>
    %65 = arith.addf %58, %64 : vector<2x1xf32>
    %66 = math.absf %62 : vector<2x1xf32>
    %cst_32 = arith.constant 0.000000e+00 : f32
    %67 = vector.broadcast %cst_32 : f32 to vector<2x1xf32>
    %68 = arith.subf %67, %66 : vector<2x1xf32>
    %69 = math.exp %68 : vector<2x1xf32>
    %70 = math.log1p %69 : vector<2x1xf32>
    %71 = arith.addf %60, %70 : vector<2x1xf32>
    %72 = arith.select %63, %65, %71 : vector<2x1xi1>, vector<2x1xf32>
    %73 = vector.extract_strided_slice %47 {offsets = [0, 73], sizes = [2, 1], strides = [1, 1]} : vector<2x74xf32> to vector<2x1xf32>
    %cst_33 = arith.constant 0.000000e+00 : f32
    %74 = vector.broadcast %cst_33 : f32 to vector<2x1xf32>
    %75 = arith.maximumf %73, %74 : vector<2x1xf32>
    %76 = vector.broadcast %cst_33 : f32 to vector<2x1xf32>
    %77 = arith.subf %73, %76 : vector<2x1xf32>
    %78 = arith.cmpf one, %77, %77 : vector<2x1xf32>
    %79 = vector.broadcast %cst_33 : f32 to vector<2x1xf32>
    %80 = arith.addf %73, %79 : vector<2x1xf32>
    %81 = math.absf %77 : vector<2x1xf32>
    %cst_34 = arith.constant 0.000000e+00 : f32
    %82 = vector.broadcast %cst_34 : f32 to vector<2x1xf32>
    %83 = arith.subf %82, %81 : vector<2x1xf32>
    %84 = math.exp %83 : vector<2x1xf32>
    %85 = math.log1p %84 : vector<2x1xf32>
    %86 = arith.addf %75, %85 : vector<2x1xf32>
    %87 = arith.select %78, %80, %86 : vector<2x1xi1>, vector<2x1xf32>
    %88 = arith.mulf %30, %30 : vector<16x32xf32>
    %cst_35 = arith.constant dense<0.000000e+00> : vector<16xf32>
    %89 = vector.multi_reduction <add>, %88, %cst_35 [1] : vector<16x32xf32> to vector<16xf32>
    %90 = vector.shape_cast %89 : vector<16xf32> to vector<16x1xf32>
    %cst_36 = arith.constant dense<0.000000e+00> : vector<2x16xf32>
    %91 = tpu.matmul %49, %30, %cst_36 {dimension_numbers = #tpu.dot_dimension_numbers<[1], [1], [0], [0], [0, 0, 1, 0], [], []>} : vector<2x32xf32>, vector<16x32xf32>, vector<2x16xf32> -> vector<2x16xf32>
    %92 = arith.mulf %49, %49 : vector<2x32xf32>
    %cst_37 = arith.constant dense<0.000000e+00> : vector<2xf32>
    %93 = vector.multi_reduction <add>, %92, %cst_37 [1] : vector<2x32xf32> to vector<2xf32>
    %94 = vector.shape_cast %93 : vector<2xf32> to vector<2x1xf32>
    %cst_38 = arith.constant dense<0.000000e+00> : vector<2x16xf32>
    %95 = tpu.matmul %94, %90, %cst_38 {dimension_numbers = #tpu.dot_dimension_numbers<[1], [1], [0], [0], [0, 0, 1, 0], [], []>} : vector<2x1xf32>, vector<16x1xf32>, vector<2x16xf32> -> vector<2x16xf32>
    %96 = math.sqrt %95 : vector<2x16xf32>
    %cst_39 = arith.constant 9.99999993E-9 : f32
    %97 = vector.broadcast %cst_39 : f32 to vector<2x16xf32>
    %98 = arith.addf %96, %97 : vector<2x16xf32>
    %99 = tpu.reciprocal %98 {approx = true} : vector<2x16xf32> -> vector<2x16xf32>
    %100 = arith.mulf %91, %99 : vector<2x16xf32>
    %101 = vector.broadcast %72 : vector<2x1xf32> to vector<2x16xf32>
    %102 = arith.mulf %101, %100 : vector<2x16xf32>
    %cst_40 = arith.constant dense<0xFF800000> : vector<2xf32>
    %103 = vector.multi_reduction <maximumf>, %102, %cst_40 [1] : vector<2x16xf32> to vector<2xf32>
    %104 = vector.shape_cast %103 : vector<2xf32> to vector<2x1xf32>
    %105 = vector.broadcast %104 : vector<2x1xf32> to vector<2x16xf32>
    %106 = arith.subf %102, %105 : vector<2x16xf32>
    %107 = math.exp %106 : vector<2x16xf32>
    %cst_41 = arith.constant dense<0.000000e+00> : vector<2xf32>
    %108 = vector.multi_reduction <add>, %107, %cst_41 [1] : vector<2x16xf32> to vector<2xf32>
    %109 = vector.shape_cast %108 : vector<2xf32> to vector<2x1xf32>
    %110 = tpu.reciprocal %109 {approx = true} : vector<2x1xf32> -> vector<2x1xf32>
    %111 = vector.broadcast %110 : vector<2x1xf32> to vector<2x16xf32>
    %112 = arith.mulf %107, %111 : vector<2x16xf32>
    %cst_42 = arith.constant dense<0.000000e+00> : vector<2x16xf32>
    %113 = tpu.matmul %51, %30, %cst_42 {dimension_numbers = #tpu.dot_dimension_numbers<[1], [1], [0], [0], [0, 0, 1, 0], [], []>} : vector<2x32xf32>, vector<16x32xf32>, vector<2x16xf32> -> vector<2x16xf32>
    %114 = arith.mulf %51, %51 : vector<2x32xf32>
    %cst_43 = arith.constant dense<0.000000e+00> : vector<2xf32>
    %115 = vector.multi_reduction <add>, %114, %cst_43 [1] : vector<2x32xf32> to vector<2xf32>
    %116 = vector.shape_cast %115 : vector<2xf32> to vector<2x1xf32>
    %cst_44 = arith.constant dense<0.000000e+00> : vector<2x16xf32>
    %117 = tpu.matmul %116, %90, %cst_44 {dimension_numbers = #tpu.dot_dimension_numbers<[1], [1], [0], [0], [0, 0, 1, 0], [], []>} : vector<2x1xf32>, vector<16x1xf32>, vector<2x16xf32> -> vector<2x16xf32>
    %118 = math.sqrt %117 : vector<2x16xf32>
    %cst_45 = arith.constant 9.99999993E-9 : f32
    %119 = vector.broadcast %cst_45 : f32 to vector<2x16xf32>
    %120 = arith.addf %118, %119 : vector<2x16xf32>
    %121 = tpu.reciprocal %120 {approx = true} : vector<2x16xf32> -> vector<2x16xf32>
    %122 = arith.mulf %113, %121 : vector<2x16xf32>
    %123 = vector.broadcast %87 : vector<2x1xf32> to vector<2x16xf32>
    %124 = arith.mulf %123, %122 : vector<2x16xf32>
    %cst_46 = arith.constant dense<0xFF800000> : vector<2xf32>
    %125 = vector.multi_reduction <maximumf>, %124, %cst_46 [1] : vector<2x16xf32> to vector<2xf32>
    %126 = vector.shape_cast %125 : vector<2xf32> to vector<2x1xf32>
    %127 = vector.broadcast %126 : vector<2x1xf32> to vector<2x16xf32>
    %128 = arith.subf %124, %127 : vector<2x16xf32>
    %129 = math.exp %128 : vector<2x16xf32>
    %cst_47 = arith.constant dense<0.000000e+00> : vector<2xf32>
    %130 = vector.multi_reduction <add>, %129, %cst_47 [1] : vector<2x16xf32> to vector<2xf32>
    %131 = vector.shape_cast %130 : vector<2xf32> to vector<2x1xf32>
    %132 = tpu.reciprocal %131 {approx = true} : vector<2x1xf32> -> vector<2x1xf32>
    %133 = vector.broadcast %132 : vector<2x1xf32> to vector<2x16xf32>
    %134 = arith.mulf %129, %133 : vector<2x16xf32>
    %cst_48 = arith.constant dense<0.000000e+00> : vector<32xf32>
    %135 = vector.multi_reduction <add>, %30, %cst_48 [0] : vector<16x32xf32> to vector<32xf32>
    %136 = vector.shape_cast %135 : vector<32xf32> to vector<1x32xf32>
    %cst_49 = arith.constant 1.600000e+01 : f32
    %137 = vector.broadcast %cst_49 : f32 to vector<1x32xf32>
    %138 = arith.divf %136, %137 : vector<1x32xf32>
    %139 = vector.broadcast %138 : vector<1x32xf32> to vector<16x32xf32>
    %140 = arith.subf %30, %139 : vector<16x32xf32>
    %141 = arith.mulf %140, %140 : vector<16x32xf32>
    %cst_50 = arith.constant dense<0.000000e+00> : vector<32xf32>
    %142 = vector.multi_reduction <add>, %141, %cst_50 [0] : vector<16x32xf32> to vector<32xf32>
    %143 = vector.shape_cast %142 : vector<32xf32> to vector<1x32xf32>
    %cst_51 = arith.constant 1.600000e+01 : f32
    %144 = vector.broadcast %cst_51 : f32 to vector<1x32xf32>
    %145 = arith.divf %143, %144 : vector<1x32xf32>
    %146 = vector.broadcast %138 : vector<1x32xf32> to vector<16x32xf32>
    %147 = arith.subf %30, %146 : vector<16x32xf32>
    %cst_52 = arith.constant 9.99999974E-6 : f32
    %148 = vector.broadcast %cst_52 : f32 to vector<1x32xf32>
    %149 = arith.addf %145, %148 : vector<1x32xf32>
    %150 = math.rsqrt %149 : vector<1x32xf32>
    %151 = vector.broadcast %150 : vector<1x32xf32> to vector<16x32xf32>
    %152 = arith.mulf %147, %151 : vector<16x32xf32>
    %c0_53 = arith.constant 0 : index
    %c0_54 = arith.constant 0 : index
    %c0_55 = arith.constant 0 : index
    %153 = vector.load %arg9[%c0_53, %c0_54, %c0_55] : memref<8x2x8xf32, #tpu.memory_space<vmem>>, vector<1x2x8xf32>
    %154 = vector.shape_cast %153 : vector<1x2x8xf32> to vector<2x8xf32>
    %155 = vector.shape_cast %57 : vector<2x8xf32> to vector<1x2x8xf32>
    tpu.vector_store %arg9[%c0_53, %c0_54, %c0_55], %155 {strides = array<i32>} : memref<8x2x8xf32, #tpu.memory_space<vmem>>, vector<1x2x8xf32>,
    %c1_56 = arith.constant 1 : index
    %c0_57 = arith.constant 0 : index
    %c0_58 = arith.constant 0 : index
    %156 = vector.load %arg0[%c1_56, %c0_57, %c0_58] : memref<4x2x64xf32, #tpu.memory_space<vmem>>, vector<1x2x64xf32>
    %157 = vector.shape_cast %156 : vector<1x2x64xf32> to vector<2x64xf32>
    %c0_59 = arith.constant 0 : index
    %c0_60 = arith.constant 0 : index
    %158 = vector.load %arg5[%c0_59, %c0_60] : memref<32x64xf32, #tpu.memory_space<vmem>>, vector<32x64xf32>
    %cst_61 = arith.constant dense<0.000000e+00> : vector<2x64xf32>
    %159 = tpu.matmul %42, %158, %cst_61 {dimension_numbers = #tpu.dot_dimension_numbers<[1], [0], [0], [1], [0, 0, 1, 1], [], []>} : vector<2x32xf32>, vector<32x64xf32>, vector<2x64xf32> -> vector<2x64xf32>
    %c0_62 = arith.constant 0 : index
    %c0_63 = arith.constant 0 : index
    %160 = vector.load %arg6[%c0_62, %c0_63] : memref<1x64xf32, #tpu.memory_space<vmem>>, vector<1x64xf32>
    %161 = vector.broadcast %160 : vector<1x64xf32> to vector<2x64xf32>
    %162 = arith.addf %159, %161 : vector<2x64xf32>
    %163 = vector.extract_strided_slice %162 {offsets = [0, 0], sizes = [2, 32], strides = [1, 1]} : vector<2x64xf32> to vector<2x32xf32>
    %164 = arith.negf %163 : vector<2x32xf32>
    %165 = math.exp %164 : vector<2x32xf32>
    %cst_64 = arith.constant 1.000000e+00 : f32
    %166 = vector.broadcast %cst_64 : f32 to vector<2x32xf32>
    %167 = arith.addf %166, %165 : vector<2x32xf32>
    %168 = arith.divf %166, %167 : vector<2x32xf32>
    %169 = vector.extract_strided_slice %162 {offsets = [0, 32], sizes = [2, 32], strides = [1, 1]} : vector<2x64xf32> to vector<2x32xf32>
    %170 = math.tanh %169 : vector<2x32xf32>
    %cst_65 = arith.constant dense<0.000000e+00> : vector<16x32xf32>
    %171 = tpu.matmul %112, %168, %cst_65 {dimension_numbers = #tpu.dot_dimension_numbers<[0], [0], [1], [1], [0, 1, 1, 1], [], []>} : vector<2x16xf32>, vector<2x32xf32>, vector<16x32xf32> -> vector<16x32xf32>
    %cst_66 = arith.constant dense<0.000000e+00> : vector<16x32xf32>
    %172 = tpu.matmul %112, %170, %cst_66 {dimension_numbers = #tpu.dot_dimension_numbers<[0], [0], [1], [1], [0, 1, 1, 1], [], []>} : vector<2x16xf32>, vector<2x32xf32>, vector<16x32xf32> -> vector<16x32xf32>
    %cst_67 = arith.constant 1.000000e+00 : f32
    %173 = vector.broadcast %cst_67 : f32 to vector<16x32xf32>
    %174 = arith.subf %173, %171 : vector<16x32xf32>
    %175 = arith.mulf %152, %174 : vector<16x32xf32>
    %176 = arith.addf %175, %172 : vector<16x32xf32>
    %cst_68 = arith.constant dense<0.000000e+00> : vector<2x32xf32>
    %177 = tpu.matmul %134, %176, %cst_68 {dimension_numbers = #tpu.dot_dimension_numbers<[1], [0], [0], [1], [0, 0, 1, 1], [], []>} : vector<2x16xf32>, vector<16x32xf32>, vector<2x32xf32> -> vector<2x32xf32>
    %c0_69 = arith.constant 0 : index
    %c0_70 = arith.constant 0 : index
    %178 = vector.load %arg3[%c0_69, %c0_70] : memref<96x32xf32, #tpu.memory_space<vmem>>, vector<96x32xf32>
    %179 = vector.extract_strided_slice %178 {offsets = [0, 0], sizes = [64, 32], strides = [1, 1]} : vector<96x32xf32> to vector<64x32xf32>
    %cst_71 = arith.constant dense<0.000000e+00> : vector<2x32xf32>
    %180 = tpu.matmul %157, %179, %cst_71 {dimension_numbers = #tpu.dot_dimension_numbers<[1], [0], [0], [1], [0, 0, 1, 1], [], []>} : vector<2x64xf32>, vector<64x32xf32>, vector<2x32xf32> -> vector<2x32xf32>
    %181 = vector.extract_strided_slice %178 {offsets = [64, 0], sizes = [32, 32], strides = [1, 1]} : vector<96x32xf32> to vector<32x32xf32>
    %cst_72 = arith.constant dense<0.000000e+00> : vector<2x32xf32>
    %182 = tpu.matmul %177, %181, %cst_72 {dimension_numbers = #tpu.dot_dimension_numbers<[1], [0], [0], [1], [0, 0, 1, 1], [], []>} : vector<2x32xf32>, vector<32x32xf32>, vector<2x32xf32> -> vector<2x32xf32>
    %183 = arith.addf %180, %182 : vector<2x32xf32>
    %c0_73 = arith.constant 0 : index
    %c0_74 = arith.constant 0 : index
    %184 = vector.load %arg4[%c0_73, %c0_74] : memref<1x32xf32, #tpu.memory_space<vmem>>, vector<1x32xf32>
    %185 = vector.broadcast %184 : vector<1x32xf32> to vector<2x32xf32>
    %186 = arith.addf %183, %185 : vector<2x32xf32>
    %cst_75 = arith.constant 0.000000e+00 : f32
    %187 = vector.broadcast %cst_75 : f32 to vector<2x32xf32>
    %188 = arith.maximumf %186, %187 : vector<2x32xf32>
    %c0_76 = arith.constant 0 : index
    %c0_77 = arith.constant 0 : index
    %189 = vector.load %arg7[%c0_76, %c0_77] : memref<32x74xf32, #tpu.memory_space<vmem>>, vector<32x74xf32>
    %cst_78 = arith.constant dense<0.000000e+00> : vector<2x74xf32>
    %190 = tpu.matmul %188, %189, %cst_78 {dimension_numbers = #tpu.dot_dimension_numbers<[1], [0], [0], [1], [0, 0, 1, 1], [], []>} : vector<2x32xf32>, vector<32x74xf32>, vector<2x74xf32> -> vector<2x74xf32>
    %c0_79 = arith.constant 0 : index
    %c0_80 = arith.constant 0 : index
    %191 = vector.load %arg8[%c0_79, %c0_80] : memref<1x74xf32, #tpu.memory_space<vmem>>, vector<1x74xf32>
    %192 = vector.broadcast %191 : vector<1x74xf32> to vector<2x74xf32>
    %193 = arith.addf %190, %192 : vector<2x74xf32>
    %194 = vector.extract_strided_slice %193 {offsets = [0, 0], sizes = [2, 32], strides = [1, 1]} : vector<2x74xf32> to vector<2x32xf32>
    %195 = math.tanh %194 : vector<2x32xf32>
    %196 = vector.extract_strided_slice %193 {offsets = [0, 32], sizes = [2, 32], strides = [1, 1]} : vector<2x74xf32> to vector<2x32xf32>
    %197 = math.tanh %196 : vector<2x32xf32>
    %198 = vector.extract_strided_slice %193 {offsets = [0, 64], sizes = [2, 8], strides = [1, 1]} : vector<2x74xf32> to vector<2x8xf32>
    %199 = arith.negf %198 : vector<2x8xf32>
    %200 = math.exp %199 : vector<2x8xf32>
    %cst_81 = arith.constant 1.000000e+00 : f32
    %201 = vector.broadcast %cst_81 : f32 to vector<2x8xf32>
    %202 = arith.addf %201, %200 : vector<2x8xf32>
    %203 = arith.divf %201, %202 : vector<2x8xf32>
    %204 = vector.extract_strided_slice %193 {offsets = [0, 72], sizes = [2, 1], strides = [1, 1]} : vector<2x74xf32> to vector<2x1xf32>
    %cst_82 = arith.constant 0.000000e+00 : f32
    %205 = vector.broadcast %cst_82 : f32 to vector<2x1xf32>
    %206 = arith.maximumf %204, %205 : vector<2x1xf32>
    %207 = vector.broadcast %cst_82 : f32 to vector<2x1xf32>
    %208 = arith.subf %204, %207 : vector<2x1xf32>
    %209 = arith.cmpf one, %208, %208 : vector<2x1xf32>
    %210 = vector.broadcast %cst_82 : f32 to vector<2x1xf32>
    %211 = arith.addf %204, %210 : vector<2x1xf32>
    %212 = math.absf %208 : vector<2x1xf32>
    %cst_83 = arith.constant 0.000000e+00 : f32
    %213 = vector.broadcast %cst_83 : f32 to vector<2x1xf32>
    %214 = arith.subf %213, %212 : vector<2x1xf32>
    %215 = math.exp %214 : vector<2x1xf32>
    %216 = math.log1p %215 : vector<2x1xf32>
    %217 = arith.addf %206, %216 : vector<2x1xf32>
    %218 = arith.select %209, %211, %217 : vector<2x1xi1>, vector<2x1xf32>
    %219 = vector.extract_strided_slice %193 {offsets = [0, 73], sizes = [2, 1], strides = [1, 1]} : vector<2x74xf32> to vector<2x1xf32>
    %cst_84 = arith.constant 0.000000e+00 : f32
    %220 = vector.broadcast %cst_84 : f32 to vector<2x1xf32>
    %221 = arith.maximumf %219, %220 : vector<2x1xf32>
    %222 = vector.broadcast %cst_84 : f32 to vector<2x1xf32>
    %223 = arith.subf %219, %222 : vector<2x1xf32>
    %224 = arith.cmpf one, %223, %223 : vector<2x1xf32>
    %225 = vector.broadcast %cst_84 : f32 to vector<2x1xf32>
    %226 = arith.addf %219, %225 : vector<2x1xf32>
    %227 = math.absf %223 : vector<2x1xf32>
    %cst_85 = arith.constant 0.000000e+00 : f32
    %228 = vector.broadcast %cst_85 : f32 to vector<2x1xf32>
    %229 = arith.subf %228, %227 : vector<2x1xf32>
    %230 = math.exp %229 : vector<2x1xf32>
    %231 = math.log1p %230 : vector<2x1xf32>
    %232 = arith.addf %221, %231 : vector<2x1xf32>
    %233 = arith.select %224, %226, %232 : vector<2x1xi1>, vector<2x1xf32>
    %234 = arith.mulf %176, %176 : vector<16x32xf32>
    %cst_86 = arith.constant dense<0.000000e+00> : vector<16xf32>
    %235 = vector.multi_reduction <add>, %234, %cst_86 [1] : vector<16x32xf32> to vector<16xf32>
    %236 = vector.shape_cast %235 : vector<16xf32> to vector<16x1xf32>
    %cst_87 = arith.constant dense<0.000000e+00> : vector<2x16xf32>
    %237 = tpu.matmul %195, %176, %cst_87 {dimension_numbers = #tpu.dot_dimension_numbers<[1], [1], [0], [0], [0, 0, 1, 0], [], []>} : vector<2x32xf32>, vector<16x32xf32>, vector<2x16xf32> -> vector<2x16xf32>
    %238 = arith.mulf %195, %195 : vector<2x32xf32>
    %cst_88 = arith.constant dense<0.000000e+00> : vector<2xf32>
    %239 = vector.multi_reduction <add>, %238, %cst_88 [1] : vector<2x32xf32> to vector<2xf32>
    %240 = vector.shape_cast %239 : vector<2xf32> to vector<2x1xf32>
    %cst_89 = arith.constant dense<0.000000e+00> : vector<2x16xf32>
    %241 = tpu.matmul %240, %236, %cst_89 {dimension_numbers = #tpu.dot_dimension_numbers<[1], [1], [0], [0], [0, 0, 1, 0], [], []>} : vector<2x1xf32>, vector<16x1xf32>, vector<2x16xf32> -> vector<2x16xf32>
    %242 = math.sqrt %241 : vector<2x16xf32>
    %cst_90 = arith.constant 9.99999993E-9 : f32
    %243 = vector.broadcast %cst_90 : f32 to vector<2x16xf32>
    %244 = arith.addf %242, %243 : vector<2x16xf32>
    %245 = tpu.reciprocal %244 {approx = true} : vector<2x16xf32> -> vector<2x16xf32>
    %246 = arith.mulf %237, %245 : vector<2x16xf32>
    %247 = vector.broadcast %218 : vector<2x1xf32> to vector<2x16xf32>
    %248 = arith.mulf %247, %246 : vector<2x16xf32>
    %cst_91 = arith.constant dense<0xFF800000> : vector<2xf32>
    %249 = vector.multi_reduction <maximumf>, %248, %cst_91 [1] : vector<2x16xf32> to vector<2xf32>
    %250 = vector.shape_cast %249 : vector<2xf32> to vector<2x1xf32>
    %251 = vector.broadcast %250 : vector<2x1xf32> to vector<2x16xf32>
    %252 = arith.subf %248, %251 : vector<2x16xf32>
    %253 = math.exp %252 : vector<2x16xf32>
    %cst_92 = arith.constant dense<0.000000e+00> : vector<2xf32>
    %254 = vector.multi_reduction <add>, %253, %cst_92 [1] : vector<2x16xf32> to vector<2xf32>
    %255 = vector.shape_cast %254 : vector<2xf32> to vector<2x1xf32>
    %256 = tpu.reciprocal %255 {approx = true} : vector<2x1xf32> -> vector<2x1xf32>
    %257 = vector.broadcast %256 : vector<2x1xf32> to vector<2x16xf32>
    %258 = arith.mulf %253, %257 : vector<2x16xf32>
    %cst_93 = arith.constant dense<0.000000e+00> : vector<2x16xf32>
    %259 = tpu.matmul %197, %176, %cst_93 {dimension_numbers = #tpu.dot_dimension_numbers<[1], [1], [0], [0], [0, 0, 1, 0], [], []>} : vector<2x32xf32>, vector<16x32xf32>, vector<2x16xf32> -> vector<2x16xf32>
    %260 = arith.mulf %197, %197 : vector<2x32xf32>
    %cst_94 = arith.constant dense<0.000000e+00> : vector<2xf32>
    %261 = vector.multi_reduction <add>, %260, %cst_94 [1] : vector<2x32xf32> to vector<2xf32>
    %262 = vector.shape_cast %261 : vector<2xf32> to vector<2x1xf32>
    %cst_95 = arith.constant dense<0.000000e+00> : vector<2x16xf32>
    %263 = tpu.matmul %262, %236, %cst_95 {dimension_numbers = #tpu.dot_dimension_numbers<[1], [1], [0], [0], [0, 0, 1, 0], [], []>} : vector<2x1xf32>, vector<16x1xf32>, vector<2x16xf32> -> vector<2x16xf32>
    %264 = math.sqrt %263 : vector<2x16xf32>
    %cst_96 = arith.constant 9.99999993E-9 : f32
    %265 = vector.broadcast %cst_96 : f32 to vector<2x16xf32>
    %266 = arith.addf %264, %265 : vector<2x16xf32>
    %267 = tpu.reciprocal %266 {approx = true} : vector<2x16xf32> -> vector<2x16xf32>
    %268 = arith.mulf %259, %267 : vector<2x16xf32>
    %269 = vector.broadcast %233 : vector<2x1xf32> to vector<2x16xf32>
    %270 = arith.mulf %269, %268 : vector<2x16xf32>
    %cst_97 = arith.constant dense<0xFF800000> : vector<2xf32>
    %271 = vector.multi_reduction <maximumf>, %270, %cst_97 [1] : vector<2x16xf32> to vector<2xf32>
    %272 = vector.shape_cast %271 : vector<2xf32> to vector<2x1xf32>
    %273 = vector.broadcast %272 : vector<2x1xf32> to vector<2x16xf32>
    %274 = arith.subf %270, %273 : vector<2x16xf32>
    %275 = math.exp %274 : vector<2x16xf32>
    %cst_98 = arith.constant dense<0.000000e+00> : vector<2xf32>
    %276 = vector.multi_reduction <add>, %275, %cst_98 [1] : vector<2x16xf32> to vector<2xf32>
    %277 = vector.shape_cast %276 : vector<2xf32> to vector<2x1xf32>
    %278 = tpu.reciprocal %277 {approx = true} : vector<2x1xf32> -> vector<2x1xf32>
    %279 = vector.broadcast %278 : vector<2x1xf32> to vector<2x16xf32>
    %280 = arith.mulf %275, %279 : vector<2x16xf32>
    %cst_99 = arith.constant dense<0.000000e+00> : vector<32xf32>
    %281 = vector.multi_reduction <add>, %176, %cst_99 [0] : vector<16x32xf32> to vector<32xf32>
    %282 = vector.shape_cast %281 : vector<32xf32> to vector<1x32xf32>
    %cst_100 = arith.constant 1.600000e+01 : f32
    %283 = vector.broadcast %cst_100 : f32 to vector<1x32xf32>
    %284 = arith.divf %282, %283 : vector<1x32xf32>
    %285 = vector.broadcast %284 : vector<1x32xf32> to vector<16x32xf32>
    %286 = arith.subf %176, %285 : vector<16x32xf32>
    %287 = arith.mulf %286, %286 : vector<16x32xf32>
    %cst_101 = arith.constant dense<0.000000e+00> : vector<32xf32>
    %288 = vector.multi_reduction <add>, %287, %cst_101 [0] : vector<16x32xf32> to vector<32xf32>
    %289 = vector.shape_cast %288 : vector<32xf32> to vector<1x32xf32>
    %cst_102 = arith.constant 1.600000e+01 : f32
    %290 = vector.broadcast %cst_102 : f32 to vector<1x32xf32>
    %291 = arith.divf %289, %290 : vector<1x32xf32>
    %292 = vector.broadcast %284 : vector<1x32xf32> to vector<16x32xf32>
    %293 = arith.subf %176, %292 : vector<16x32xf32>
    %cst_103 = arith.constant 9.99999974E-6 : f32
    %294 = vector.broadcast %cst_103 : f32 to vector<1x32xf32>
    %295 = arith.addf %291, %294 : vector<1x32xf32>
    %296 = math.rsqrt %295 : vector<1x32xf32>
    %297 = vector.broadcast %296 : vector<1x32xf32> to vector<16x32xf32>
    %298 = arith.mulf %293, %297 : vector<16x32xf32>
    %c1_104 = arith.constant 1 : index
    %c0_105 = arith.constant 0 : index
    %c0_106 = arith.constant 0 : index
    %299 = vector.load %arg9[%c1_104, %c0_105, %c0_106] : memref<8x2x8xf32, #tpu.memory_space<vmem>>, vector<1x2x8xf32>
    %300 = vector.shape_cast %299 : vector<1x2x8xf32> to vector<2x8xf32>
    %301 = vector.shape_cast %203 : vector<2x8xf32> to vector<1x2x8xf32>
    tpu.vector_store %arg9[%c1_104, %c0_105, %c0_106], %301 {strides = array<i32>} : memref<8x2x8xf32, #tpu.memory_space<vmem>>, vector<1x2x8xf32>,
    %c2 = arith.constant 2 : index
    %c0_107 = arith.constant 0 : index
    %c0_108 = arith.constant 0 : index
    %302 = vector.load %arg0[%c2, %c0_107, %c0_108] : memref<4x2x64xf32, #tpu.memory_space<vmem>>, vector<1x2x64xf32>
    %303 = vector.shape_cast %302 : vector<1x2x64xf32> to vector<2x64xf32>
    %c0_109 = arith.constant 0 : index
    %c0_110 = arith.constant 0 : index
    %304 = vector.load %arg5[%c0_109, %c0_110] : memref<32x64xf32, #tpu.memory_space<vmem>>, vector<32x64xf32>
    %cst_111 = arith.constant dense<0.000000e+00> : vector<2x64xf32>
    %305 = tpu.matmul %188, %304, %cst_111 {dimension_numbers = #tpu.dot_dimension_numbers<[1], [0], [0], [1], [0, 0, 1, 1], [], []>} : vector<2x32xf32>, vector<32x64xf32>, vector<2x64xf32> -> vector<2x64xf32>
    %c0_112 = arith.constant 0 : index
    %c0_113 = arith.constant 0 : index
    %306 = vector.load %arg6[%c0_112, %c0_113] : memref<1x64xf32, #tpu.memory_space<vmem>>, vector<1x64xf32>
    %307 = vector.broadcast %306 : vector<1x64xf32> to vector<2x64xf32>
    %308 = arith.addf %305, %307 : vector<2x64xf32>
    %309 = vector.extract_strided_slice %308 {offsets = [0, 0], sizes = [2, 32], strides = [1, 1]} : vector<2x64xf32> to vector<2x32xf32>
    %310 = arith.negf %309 : vector<2x32xf32>
    %311 = math.exp %310 : vector<2x32xf32>
    %cst_114 = arith.constant 1.000000e+00 : f32
    %312 = vector.broadcast %cst_114 : f32 to vector<2x32xf32>
    %313 = arith.addf %312, %311 : vector<2x32xf32>
    %314 = arith.divf %312, %313 : vector<2x32xf32>
    %315 = vector.extract_strided_slice %308 {offsets = [0, 32], sizes = [2, 32], strides = [1, 1]} : vector<2x64xf32> to vector<2x32xf32>
    %316 = math.tanh %315 : vector<2x32xf32>
    %cst_115 = arith.constant dense<0.000000e+00> : vector<16x32xf32>
    %317 = tpu.matmul %258, %314, %cst_115 {dimension_numbers = #tpu.dot_dimension_numbers<[0], [0], [1], [1], [0, 1, 1, 1], [], []>} : vector<2x16xf32>, vector<2x32xf32>, vector<16x32xf32> -> vector<16x32xf32>
    %cst_116 = arith.constant dense<0.000000e+00> : vector<16x32xf32>
    %318 = tpu.matmul %258, %316, %cst_116 {dimension_numbers = #tpu.dot_dimension_numbers<[0], [0], [1], [1], [0, 1, 1, 1], [], []>} : vector<2x16xf32>, vector<2x32xf32>, vector<16x32xf32> -> vector<16x32xf32>
    %cst_117 = arith.constant 1.000000e+00 : f32
    %319 = vector.broadcast %cst_117 : f32 to vector<16x32xf32>
    %320 = arith.subf %319, %317 : vector<16x32xf32>
    %321 = arith.mulf %298, %320 : vector<16x32xf32>
    %322 = arith.addf %321, %318 : vector<16x32xf32>
    %cst_118 = arith.constant dense<0.000000e+00> : vector<2x32xf32>
    %323 = tpu.matmul %280, %322, %cst_118 {dimension_numbers = #tpu.dot_dimension_numbers<[1], [0], [0], [1], [0, 0, 1, 1], [], []>} : vector<2x16xf32>, vector<16x32xf32>, vector<2x32xf32> -> vector<2x32xf32>
    %c0_119 = arith.constant 0 : index
    %c0_120 = arith.constant 0 : index
    %324 = vector.load %arg3[%c0_119, %c0_120] : memref<96x32xf32, #tpu.memory_space<vmem>>, vector<96x32xf32>
    %325 = vector.extract_strided_slice %324 {offsets = [0, 0], sizes = [64, 32], strides = [1, 1]} : vector<96x32xf32> to vector<64x32xf32>
    %cst_121 = arith.constant dense<0.000000e+00> : vector<2x32xf32>
    %326 = tpu.matmul %303, %325, %cst_121 {dimension_numbers = #tpu.dot_dimension_numbers<[1], [0], [0], [1], [0, 0, 1, 1], [], []>} : vector<2x64xf32>, vector<64x32xf32>, vector<2x32xf32> -> vector<2x32xf32>
    %327 = vector.extract_strided_slice %324 {offsets = [64, 0], sizes = [32, 32], strides = [1, 1]} : vector<96x32xf32> to vector<32x32xf32>
    %cst_122 = arith.constant dense<0.000000e+00> : vector<2x32xf32>
    %328 = tpu.matmul %323, %327, %cst_122 {dimension_numbers = #tpu.dot_dimension_numbers<[1], [0], [0], [1], [0, 0, 1, 1], [], []>} : vector<2x32xf32>, vector<32x32xf32>, vector<2x32xf32> -> vector<2x32xf32>
    %329 = arith.addf %326, %328 : vector<2x32xf32>
    %c0_123 = arith.constant 0 : index
    %c0_124 = arith.constant 0 : index
    %330 = vector.load %arg4[%c0_123, %c0_124] : memref<1x32xf32, #tpu.memory_space<vmem>>, vector<1x32xf32>
    %331 = vector.broadcast %330 : vector<1x32xf32> to vector<2x32xf32>
    %332 = arith.addf %329, %331 : vector<2x32xf32>
    %cst_125 = arith.constant 0.000000e+00 : f32
    %333 = vector.broadcast %cst_125 : f32 to vector<2x32xf32>
    %334 = arith.maximumf %332, %333 : vector<2x32xf32>
    %c0_126 = arith.constant 0 : index
    %c0_127 = arith.constant 0 : index
    %335 = vector.load %arg7[%c0_126, %c0_127] : memref<32x74xf32, #tpu.memory_space<vmem>>, vector<32x74xf32>
    %cst_128 = arith.constant dense<0.000000e+00> : vector<2x74xf32>
    %336 = tpu.matmul %334, %335, %cst_128 {dimension_numbers = #tpu.dot_dimension_numbers<[1], [0], [0], [1], [0, 0, 1, 1], [], []>} : vector<2x32xf32>, vector<32x74xf32>, vector<2x74xf32> -> vector<2x74xf32>
    %c0_129 = arith.constant 0 : index
    %c0_130 = arith.constant 0 : index
    %337 = vector.load %arg8[%c0_129, %c0_130] : memref<1x74xf32, #tpu.memory_space<vmem>>, vector<1x74xf32>
    %338 = vector.broadcast %337 : vector<1x74xf32> to vector<2x74xf32>
    %339 = arith.addf %336, %338 : vector<2x74xf32>
    %340 = vector.extract_strided_slice %339 {offsets = [0, 0], sizes = [2, 32], strides = [1, 1]} : vector<2x74xf32> to vector<2x32xf32>
    %341 = math.tanh %340 : vector<2x32xf32>
    %342 = vector.extract_strided_slice %339 {offsets = [0, 32], sizes = [2, 32], strides = [1, 1]} : vector<2x74xf32> to vector<2x32xf32>
    %343 = math.tanh %342 : vector<2x32xf32>
    %344 = vector.extract_strided_slice %339 {offsets = [0, 64], sizes = [2, 8], strides = [1, 1]} : vector<2x74xf32> to vector<2x8xf32>
    %345 = arith.negf %344 : vector<2x8xf32>
    %346 = math.exp %345 : vector<2x8xf32>
    %cst_131 = arith.constant 1.000000e+00 : f32
    %347 = vector.broadcast %cst_131 : f32 to vector<2x8xf32>
    %348 = arith.addf %347, %346 : vector<2x8xf32>
    %349 = arith.divf %347, %348 : vector<2x8xf32>
    %350 = vector.extract_strided_slice %339 {offsets = [0, 72], sizes = [2, 1], strides = [1, 1]} : vector<2x74xf32> to vector<2x1xf32>
    %cst_132 = arith.constant 0.000000e+00 : f32
    %351 = vector.broadcast %cst_132 : f32 to vector<2x1xf32>
    %352 = arith.maximumf %350, %351 : vector<2x1xf32>
    %353 = vector.broadcast %cst_132 : f32 to vector<2x1xf32>
    %354 = arith.subf %350, %353 : vector<2x1xf32>
    %355 = arith.cmpf one, %354, %354 : vector<2x1xf32>
    %356 = vector.broadcast %cst_132 : f32 to vector<2x1xf32>
    %357 = arith.addf %350, %356 : vector<2x1xf32>
    %358 = math.absf %354 : vector<2x1xf32>
    %cst_133 = arith.constant 0.000000e+00 : f32
    %359 = vector.broadcast %cst_133 : f32 to vector<2x1xf32>
    %360 = arith.subf %359, %358 : vector<2x1xf32>
    %361 = math.exp %360 : vector<2x1xf32>
    %362 = math.log1p %361 : vector<2x1xf32>
    %363 = arith.addf %352, %362 : vector<2x1xf32>
    %364 = arith.select %355, %357, %363 : vector<2x1xi1>, vector<2x1xf32>
    %365 = vector.extract_strided_slice %339 {offsets = [0, 73], sizes = [2, 1], strides = [1, 1]} : vector<2x74xf32> to vector<2x1xf32>
    %cst_134 = arith.constant 0.000000e+00 : f32
    %366 = vector.broadcast %cst_134 : f32 to vector<2x1xf32>
    %367 = arith.maximumf %365, %366 : vector<2x1xf32>
    %368 = vector.broadcast %cst_134 : f32 to vector<2x1xf32>
    %369 = arith.subf %365, %368 : vector<2x1xf32>
    %370 = arith.cmpf one, %369, %369 : vector<2x1xf32>
    %371 = vector.broadcast %cst_134 : f32 to vector<2x1xf32>
    %372 = arith.addf %365, %371 : vector<2x1xf32>
    %373 = math.absf %369 : vector<2x1xf32>
    %cst_135 = arith.constant 0.000000e+00 : f32
    %374 = vector.broadcast %cst_135 : f32 to vector<2x1xf32>
    %375 = arith.subf %374, %373 : vector<2x1xf32>
    %376 = math.exp %375 : vector<2x1xf32>
    %377 = math.log1p %376 : vector<2x1xf32>
    %378 = arith.addf %367, %377 : vector<2x1xf32>
    %379 = arith.select %370, %372, %378 : vector<2x1xi1>, vector<2x1xf32>
    %380 = arith.mulf %322, %322 : vector<16x32xf32>
    %cst_136 = arith.constant dense<0.000000e+00> : vector<16xf32>
    %381 = vector.multi_reduction <add>, %380, %cst_136 [1] : vector<16x32xf32> to vector<16xf32>
    %382 = vector.shape_cast %381 : vector<16xf32> to vector<16x1xf32>
    %cst_137 = arith.constant dense<0.000000e+00> : vector<2x16xf32>
    %383 = tpu.matmul %341, %322, %cst_137 {dimension_numbers = #tpu.dot_dimension_numbers<[1], [1], [0], [0], [0, 0, 1, 0], [], []>} : vector<2x32xf32>, vector<16x32xf32>, vector<2x16xf32> -> vector<2x16xf32>
    %384 = arith.mulf %341, %341 : vector<2x32xf32>
    %cst_138 = arith.constant dense<0.000000e+00> : vector<2xf32>
    %385 = vector.multi_reduction <add>, %384, %cst_138 [1] : vector<2x32xf32> to vector<2xf32>
    %386 = vector.shape_cast %385 : vector<2xf32> to vector<2x1xf32>
    %cst_139 = arith.constant dense<0.000000e+00> : vector<2x16xf32>
    %387 = tpu.matmul %386, %382, %cst_139 {dimension_numbers = #tpu.dot_dimension_numbers<[1], [1], [0], [0], [0, 0, 1, 0], [], []>} : vector<2x1xf32>, vector<16x1xf32>, vector<2x16xf32> -> vector<2x16xf32>
    %388 = math.sqrt %387 : vector<2x16xf32>
    %cst_140 = arith.constant 9.99999993E-9 : f32
    %389 = vector.broadcast %cst_140 : f32 to vector<2x16xf32>
    %390 = arith.addf %388, %389 : vector<2x16xf32>
    %391 = tpu.reciprocal %390 {approx = true} : vector<2x16xf32> -> vector<2x16xf32>
    %392 = arith.mulf %383, %391 : vector<2x16xf32>
    %393 = vector.broadcast %364 : vector<2x1xf32> to vector<2x16xf32>
    %394 = arith.mulf %393, %392 : vector<2x16xf32>
    %cst_141 = arith.constant dense<0xFF800000> : vector<2xf32>
    %395 = vector.multi_reduction <maximumf>, %394, %cst_141 [1] : vector<2x16xf32> to vector<2xf32>
    %396 = vector.shape_cast %395 : vector<2xf32> to vector<2x1xf32>
    %397 = vector.broadcast %396 : vector<2x1xf32> to vector<2x16xf32>
    %398 = arith.subf %394, %397 : vector<2x16xf32>
    %399 = math.exp %398 : vector<2x16xf32>
    %cst_142 = arith.constant dense<0.000000e+00> : vector<2xf32>
    %400 = vector.multi_reduction <add>, %399, %cst_142 [1] : vector<2x16xf32> to vector<2xf32>
    %401 = vector.shape_cast %400 : vector<2xf32> to vector<2x1xf32>
    %402 = tpu.reciprocal %401 {approx = true} : vector<2x1xf32> -> vector<2x1xf32>
    %403 = vector.broadcast %402 : vector<2x1xf32> to vector<2x16xf32>
    %404 = arith.mulf %399, %403 : vector<2x16xf32>
    %cst_143 = arith.constant dense<0.000000e+00> : vector<2x16xf32>
    %405 = tpu.matmul %343, %322, %cst_143 {dimension_numbers = #tpu.dot_dimension_numbers<[1], [1], [0], [0], [0, 0, 1, 0], [], []>} : vector<2x32xf32>, vector<16x32xf32>, vector<2x16xf32> -> vector<2x16xf32>
    %406 = arith.mulf %343, %343 : vector<2x32xf32>
    %cst_144 = arith.constant dense<0.000000e+00> : vector<2xf32>
    %407 = vector.multi_reduction <add>, %406, %cst_144 [1] : vector<2x32xf32> to vector<2xf32>
    %408 = vector.shape_cast %407 : vector<2xf32> to vector<2x1xf32>
    %cst_145 = arith.constant dense<0.000000e+00> : vector<2x16xf32>
    %409 = tpu.matmul %408, %382, %cst_145 {dimension_numbers = #tpu.dot_dimension_numbers<[1], [1], [0], [0], [0, 0, 1, 0], [], []>} : vector<2x1xf32>, vector<16x1xf32>, vector<2x16xf32> -> vector<2x16xf32>
    %410 = math.sqrt %409 : vector<2x16xf32>
    %cst_146 = arith.constant 9.99999993E-9 : f32
    %411 = vector.broadcast %cst_146 : f32 to vector<2x16xf32>
    %412 = arith.addf %410, %411 : vector<2x16xf32>
    %413 = tpu.reciprocal %412 {approx = true} : vector<2x16xf32> -> vector<2x16xf32>
    %414 = arith.mulf %405, %413 : vector<2x16xf32>
    %415 = vector.broadcast %379 : vector<2x1xf32> to vector<2x16xf32>
    %416 = arith.mulf %415, %414 : vector<2x16xf32>
    %cst_147 = arith.constant dense<0xFF800000> : vector<2xf32>
    %417 = vector.multi_reduction <maximumf>, %416, %cst_147 [1] : vector<2x16xf32> to vector<2xf32>
    %418 = vector.shape_cast %417 : vector<2xf32> to vector<2x1xf32>
    %419 = vector.broadcast %418 : vector<2x1xf32> to vector<2x16xf32>
    %420 = arith.subf %416, %419 : vector<2x16xf32>
    %421 = math.exp %420 : vector<2x16xf32>
    %cst_148 = arith.constant dense<0.000000e+00> : vector<2xf32>
    %422 = vector.multi_reduction <add>, %421, %cst_148 [1] : vector<2x16xf32> to vector<2xf32>
    %423 = vector.shape_cast %422 : vector<2xf32> to vector<2x1xf32>
    %424 = tpu.reciprocal %423 {approx = true} : vector<2x1xf32> -> vector<2x1xf32>
    %425 = vector.broadcast %424 : vector<2x1xf32> to vector<2x16xf32>
    %426 = arith.mulf %421, %425 : vector<2x16xf32>
    %cst_149 = arith.constant dense<0.000000e+00> : vector<32xf32>
    %427 = vector.multi_reduction <add>, %322, %cst_149 [0] : vector<16x32xf32> to vector<32xf32>
    %428 = vector.shape_cast %427 : vector<32xf32> to vector<1x32xf32>
    %cst_150 = arith.constant 1.600000e+01 : f32
    %429 = vector.broadcast %cst_150 : f32 to vector<1x32xf32>
    %430 = arith.divf %428, %429 : vector<1x32xf32>
    %431 = vector.broadcast %430 : vector<1x32xf32> to vector<16x32xf32>
    %432 = arith.subf %322, %431 : vector<16x32xf32>
    %433 = arith.mulf %432, %432 : vector<16x32xf32>
    %cst_151 = arith.constant dense<0.000000e+00> : vector<32xf32>
    %434 = vector.multi_reduction <add>, %433, %cst_151 [0] : vector<16x32xf32> to vector<32xf32>
    %435 = vector.shape_cast %434 : vector<32xf32> to vector<1x32xf32>
    %cst_152 = arith.constant 1.600000e+01 : f32
    %436 = vector.broadcast %cst_152 : f32 to vector<1x32xf32>
    %437 = arith.divf %435, %436 : vector<1x32xf32>
    %438 = vector.broadcast %430 : vector<1x32xf32> to vector<16x32xf32>
    %439 = arith.subf %322, %438 : vector<16x32xf32>
    %cst_153 = arith.constant 9.99999974E-6 : f32
    %440 = vector.broadcast %cst_153 : f32 to vector<1x32xf32>
    %441 = arith.addf %437, %440 : vector<1x32xf32>
    %442 = math.rsqrt %441 : vector<1x32xf32>
    %443 = vector.broadcast %442 : vector<1x32xf32> to vector<16x32xf32>
    %444 = arith.mulf %439, %443 : vector<16x32xf32>
    %c2_154 = arith.constant 2 : index
    %c0_155 = arith.constant 0 : index
    %c0_156 = arith.constant 0 : index
    %445 = vector.load %arg9[%c2_154, %c0_155, %c0_156] : memref<8x2x8xf32, #tpu.memory_space<vmem>>, vector<1x2x8xf32>
    %446 = vector.shape_cast %445 : vector<1x2x8xf32> to vector<2x8xf32>
    %447 = vector.shape_cast %349 : vector<2x8xf32> to vector<1x2x8xf32>
    tpu.vector_store %arg9[%c2_154, %c0_155, %c0_156], %447 {strides = array<i32>} : memref<8x2x8xf32, #tpu.memory_space<vmem>>, vector<1x2x8xf32>,
    %c3 = arith.constant 3 : index
    %c0_157 = arith.constant 0 : index
    %c0_158 = arith.constant 0 : index
    %448 = vector.load %arg0[%c3, %c0_157, %c0_158] : memref<4x2x64xf32, #tpu.memory_space<vmem>>, vector<1x2x64xf32>
    %449 = vector.shape_cast %448 : vector<1x2x64xf32> to vector<2x64xf32>
    %c0_159 = arith.constant 0 : index
    %c0_160 = arith.constant 0 : index
    %450 = vector.load %arg5[%c0_159, %c0_160] : memref<32x64xf32, #tpu.memory_space<vmem>>, vector<32x64xf32>
    %cst_161 = arith.constant dense<0.000000e+00> : vector<2x64xf32>
    %451 = tpu.matmul %334, %450, %cst_161 {dimension_numbers = #tpu.dot_dimension_numbers<[1], [0], [0], [1], [0, 0, 1, 1], [], []>} : vector<2x32xf32>, vector<32x64xf32>, vector<2x64xf32> -> vector<2x64xf32>
    %c0_162 = arith.constant 0 : index
    %c0_163 = arith.constant 0 : index
    %452 = vector.load %arg6[%c0_162, %c0_163] : memref<1x64xf32, #tpu.memory_space<vmem>>, vector<1x64xf32>
    %453 = vector.broadcast %452 : vector<1x64xf32> to vector<2x64xf32>
    %454 = arith.addf %451, %453 : vector<2x64xf32>
    %455 = vector.extract_strided_slice %454 {offsets = [0, 0], sizes = [2, 32], strides = [1, 1]} : vector<2x64xf32> to vector<2x32xf32>
    %456 = arith.negf %455 : vector<2x32xf32>
    %457 = math.exp %456 : vector<2x32xf32>
    %cst_164 = arith.constant 1.000000e+00 : f32
    %458 = vector.broadcast %cst_164 : f32 to vector<2x32xf32>
    %459 = arith.addf %458, %457 : vector<2x32xf32>
    %460 = arith.divf %458, %459 : vector<2x32xf32>
    %461 = vector.extract_strided_slice %454 {offsets = [0, 32], sizes = [2, 32], strides = [1, 1]} : vector<2x64xf32> to vector<2x32xf32>
    %462 = math.tanh %461 : vector<2x32xf32>
    %cst_165 = arith.constant dense<0.000000e+00> : vector<16x32xf32>
    %463 = tpu.matmul %404, %460, %cst_165 {dimension_numbers = #tpu.dot_dimension_numbers<[0], [0], [1], [1], [0, 1, 1, 1], [], []>} : vector<2x16xf32>, vector<2x32xf32>, vector<16x32xf32> -> vector<16x32xf32>
    %cst_166 = arith.constant dense<0.000000e+00> : vector<16x32xf32>
    %464 = tpu.matmul %404, %462, %cst_166 {dimension_numbers = #tpu.dot_dimension_numbers<[0], [0], [1], [1], [0, 1, 1, 1], [], []>} : vector<2x16xf32>, vector<2x32xf32>, vector<16x32xf32> -> vector<16x32xf32>
    %cst_167 = arith.constant 1.000000e+00 : f32
    %465 = vector.broadcast %cst_167 : f32 to vector<16x32xf32>
    %466 = arith.subf %465, %463 : vector<16x32xf32>
    %467 = arith.mulf %444, %466 : vector<16x32xf32>
    %468 = arith.addf %467, %464 : vector<16x32xf32>
    %cst_168 = arith.constant dense<0.000000e+00> : vector<2x32xf32>
    %469 = tpu.matmul %426, %468, %cst_168 {dimension_numbers = #tpu.dot_dimension_numbers<[1], [0], [0], [1], [0, 0, 1, 1], [], []>} : vector<2x16xf32>, vector<16x32xf32>, vector<2x32xf32> -> vector<2x32xf32>
    %c0_169 = arith.constant 0 : index
    %c0_170 = arith.constant 0 : index
    %470 = vector.load %arg3[%c0_169, %c0_170] : memref<96x32xf32, #tpu.memory_space<vmem>>, vector<96x32xf32>
    %471 = vector.extract_strided_slice %470 {offsets = [0, 0], sizes = [64, 32], strides = [1, 1]} : vector<96x32xf32> to vector<64x32xf32>
    %cst_171 = arith.constant dense<0.000000e+00> : vector<2x32xf32>
    %472 = tpu.matmul %449, %471, %cst_171 {dimension_numbers = #tpu.dot_dimension_numbers<[1], [0], [0], [1], [0, 0, 1, 1], [], []>} : vector<2x64xf32>, vector<64x32xf32>, vector<2x32xf32> -> vector<2x32xf32>
    %473 = vector.extract_strided_slice %470 {offsets = [64, 0], sizes = [32, 32], strides = [1, 1]} : vector<96x32xf32> to vector<32x32xf32>
    %cst_172 = arith.constant dense<0.000000e+00> : vector<2x32xf32>
    %474 = tpu.matmul %469, %473, %cst_172 {dimension_numbers = #tpu.dot_dimension_numbers<[1], [0], [0], [1], [0, 0, 1, 1], [], []>} : vector<2x32xf32>, vector<32x32xf32>, vector<2x32xf32> -> vector<2x32xf32>
    %475 = arith.addf %472, %474 : vector<2x32xf32>
    %c0_173 = arith.constant 0 : index
    %c0_174 = arith.constant 0 : index
    %476 = vector.load %arg4[%c0_173, %c0_174] : memref<1x32xf32, #tpu.memory_space<vmem>>, vector<1x32xf32>
    %477 = vector.broadcast %476 : vector<1x32xf32> to vector<2x32xf32>
    %478 = arith.addf %475, %477 : vector<2x32xf32>
    %cst_175 = arith.constant 0.000000e+00 : f32
    %479 = vector.broadcast %cst_175 : f32 to vector<2x32xf32>
    %480 = arith.maximumf %478, %479 : vector<2x32xf32>
    %c0_176 = arith.constant 0 : index
    %c0_177 = arith.constant 0 : index
    %481 = vector.load %arg7[%c0_176, %c0_177] : memref<32x74xf32, #tpu.memory_space<vmem>>, vector<32x74xf32>
    %cst_178 = arith.constant dense<0.000000e+00> : vector<2x74xf32>
    %482 = tpu.matmul %480, %481, %cst_178 {dimension_numbers = #tpu.dot_dimension_numbers<[1], [0], [0], [1], [0, 0, 1, 1], [], []>} : vector<2x32xf32>, vector<32x74xf32>, vector<2x74xf32> -> vector<2x74xf32>
    %c0_179 = arith.constant 0 : index
    %c0_180 = arith.constant 0 : index
    %483 = vector.load %arg8[%c0_179, %c0_180] : memref<1x74xf32, #tpu.memory_space<vmem>>, vector<1x74xf32>
    %484 = vector.broadcast %483 : vector<1x74xf32> to vector<2x74xf32>
    %485 = arith.addf %482, %484 : vector<2x74xf32>
    %486 = vector.extract_strided_slice %485 {offsets = [0, 0], sizes = [2, 32], strides = [1, 1]} : vector<2x74xf32> to vector<2x32xf32>
    %487 = math.tanh %486 : vector<2x32xf32>
    %488 = vector.extract_strided_slice %485 {offsets = [0, 32], sizes = [2, 32], strides = [1, 1]} : vector<2x74xf32> to vector<2x32xf32>
    %489 = math.tanh %488 : vector<2x32xf32>
    %490 = vector.extract_strided_slice %485 {offsets = [0, 64], sizes = [2, 8], strides = [1, 1]} : vector<2x74xf32> to vector<2x8xf32>
    %491 = arith.negf %490 : vector<2x8xf32>
    %492 = math.exp %491 : vector<2x8xf32>
    %cst_181 = arith.constant 1.000000e+00 : f32
    %493 = vector.broadcast %cst_181 : f32 to vector<2x8xf32>
    %494 = arith.addf %493, %492 : vector<2x8xf32>
    %495 = arith.divf %493, %494 : vector<2x8xf32>
    %496 = vector.extract_strided_slice %485 {offsets = [0, 72], sizes = [2, 1], strides = [1, 1]} : vector<2x74xf32> to vector<2x1xf32>
    %cst_182 = arith.constant 0.000000e+00 : f32
    %497 = vector.broadcast %cst_182 : f32 to vector<2x1xf32>
    %498 = arith.maximumf %496, %497 : vector<2x1xf32>
    %499 = vector.broadcast %cst_182 : f32 to vector<2x1xf32>
    %500 = arith.subf %496, %499 : vector<2x1xf32>
    %501 = arith.cmpf one, %500, %500 : vector<2x1xf32>
    %502 = vector.broadcast %cst_182 : f32 to vector<2x1xf32>
    %503 = arith.addf %496, %502 : vector<2x1xf32>
    %504 = math.absf %500 : vector<2x1xf32>
    %cst_183 = arith.constant 0.000000e+00 : f32
    %505 = vector.broadcast %cst_183 : f32 to vector<2x1xf32>
    %506 = arith.subf %505, %504 : vector<2x1xf32>
    %507 = math.exp %506 : vector<2x1xf32>
    %508 = math.log1p %507 : vector<2x1xf32>
    %509 = arith.addf %498, %508 : vector<2x1xf32>
    %510 = arith.select %501, %503, %509 : vector<2x1xi1>, vector<2x1xf32>
    %511 = vector.extract_strided_slice %485 {offsets = [0, 73], sizes = [2, 1], strides = [1, 1]} : vector<2x74xf32> to vector<2x1xf32>
    %cst_184 = arith.constant 0.000000e+00 : f32
    %512 = vector.broadcast %cst_184 : f32 to vector<2x1xf32>
    %513 = arith.maximumf %511, %512 : vector<2x1xf32>
    %514 = vector.broadcast %cst_184 : f32 to vector<2x1xf32>
    %515 = arith.subf %511, %514 : vector<2x1xf32>
    %516 = arith.cmpf one, %515, %515 : vector<2x1xf32>
    %517 = vector.broadcast %cst_184 : f32 to vector<2x1xf32>
    %518 = arith.addf %511, %517 : vector<2x1xf32>
    %519 = math.absf %515 : vector<2x1xf32>
    %cst_185 = arith.constant 0.000000e+00 : f32
    %520 = vector.broadcast %cst_185 : f32 to vector<2x1xf32>
    %521 = arith.subf %520, %519 : vector<2x1xf32>
    %522 = math.exp %521 : vector<2x1xf32>
    %523 = math.log1p %522 : vector<2x1xf32>
    %524 = arith.addf %513, %523 : vector<2x1xf32>
    %525 = arith.select %516, %518, %524 : vector<2x1xi1>, vector<2x1xf32>
    %526 = arith.mulf %468, %468 : vector<16x32xf32>
    %cst_186 = arith.constant dense<0.000000e+00> : vector<16xf32>
    %527 = vector.multi_reduction <add>, %526, %cst_186 [1] : vector<16x32xf32> to vector<16xf32>
    %528 = vector.shape_cast %527 : vector<16xf32> to vector<16x1xf32>
    %cst_187 = arith.constant dense<0.000000e+00> : vector<2x16xf32>
    %529 = tpu.matmul %487, %468, %cst_187 {dimension_numbers = #tpu.dot_dimension_numbers<[1], [1], [0], [0], [0, 0, 1, 0], [], []>} : vector<2x32xf32>, vector<16x32xf32>, vector<2x16xf32> -> vector<2x16xf32>
    %530 = arith.mulf %487, %487 : vector<2x32xf32>
    %cst_188 = arith.constant dense<0.000000e+00> : vector<2xf32>
    %531 = vector.multi_reduction <add>, %530, %cst_188 [1] : vector<2x32xf32> to vector<2xf32>
    %532 = vector.shape_cast %531 : vector<2xf32> to vector<2x1xf32>
    %cst_189 = arith.constant dense<0.000000e+00> : vector<2x16xf32>
    %533 = tpu.matmul %532, %528, %cst_189 {dimension_numbers = #tpu.dot_dimension_numbers<[1], [1], [0], [0], [0, 0, 1, 0], [], []>} : vector<2x1xf32>, vector<16x1xf32>, vector<2x16xf32> -> vector<2x16xf32>
    %534 = math.sqrt %533 : vector<2x16xf32>
    %cst_190 = arith.constant 9.99999993E-9 : f32
    %535 = vector.broadcast %cst_190 : f32 to vector<2x16xf32>
    %536 = arith.addf %534, %535 : vector<2x16xf32>
    %537 = tpu.reciprocal %536 {approx = true} : vector<2x16xf32> -> vector<2x16xf32>
    %538 = arith.mulf %529, %537 : vector<2x16xf32>
    %539 = vector.broadcast %510 : vector<2x1xf32> to vector<2x16xf32>
    %540 = arith.mulf %539, %538 : vector<2x16xf32>
    %cst_191 = arith.constant dense<0xFF800000> : vector<2xf32>
    %541 = vector.multi_reduction <maximumf>, %540, %cst_191 [1] : vector<2x16xf32> to vector<2xf32>
    %542 = vector.shape_cast %541 : vector<2xf32> to vector<2x1xf32>
    %543 = vector.broadcast %542 : vector<2x1xf32> to vector<2x16xf32>
    %544 = arith.subf %540, %543 : vector<2x16xf32>
    %545 = math.exp %544 : vector<2x16xf32>
    %cst_192 = arith.constant dense<0.000000e+00> : vector<2xf32>
    %546 = vector.multi_reduction <add>, %545, %cst_192 [1] : vector<2x16xf32> to vector<2xf32>
    %547 = vector.shape_cast %546 : vector<2xf32> to vector<2x1xf32>
    %548 = tpu.reciprocal %547 {approx = true} : vector<2x1xf32> -> vector<2x1xf32>
    %549 = vector.broadcast %548 : vector<2x1xf32> to vector<2x16xf32>
    %550 = arith.mulf %545, %549 : vector<2x16xf32>
    %cst_193 = arith.constant dense<0.000000e+00> : vector<2x16xf32>
    %551 = tpu.matmul %489, %468, %cst_193 {dimension_numbers = #tpu.dot_dimension_numbers<[1], [1], [0], [0], [0, 0, 1, 0], [], []>} : vector<2x32xf32>, vector<16x32xf32>, vector<2x16xf32> -> vector<2x16xf32>
    %552 = arith.mulf %489, %489 : vector<2x32xf32>
    %cst_194 = arith.constant dense<0.000000e+00> : vector<2xf32>
    %553 = vector.multi_reduction <add>, %552, %cst_194 [1] : vector<2x32xf32> to vector<2xf32>
    %554 = vector.shape_cast %553 : vector<2xf32> to vector<2x1xf32>
    %cst_195 = arith.constant dense<0.000000e+00> : vector<2x16xf32>
    %555 = tpu.matmul %554, %528, %cst_195 {dimension_numbers = #tpu.dot_dimension_numbers<[1], [1], [0], [0], [0, 0, 1, 0], [], []>} : vector<2x1xf32>, vector<16x1xf32>, vector<2x16xf32> -> vector<2x16xf32>
    %556 = math.sqrt %555 : vector<2x16xf32>
    %cst_196 = arith.constant 9.99999993E-9 : f32
    %557 = vector.broadcast %cst_196 : f32 to vector<2x16xf32>
    %558 = arith.addf %556, %557 : vector<2x16xf32>
    %559 = tpu.reciprocal %558 {approx = true} : vector<2x16xf32> -> vector<2x16xf32>
    %560 = arith.mulf %551, %559 : vector<2x16xf32>
    %561 = vector.broadcast %525 : vector<2x1xf32> to vector<2x16xf32>
    %562 = arith.mulf %561, %560 : vector<2x16xf32>
    %cst_197 = arith.constant dense<0xFF800000> : vector<2xf32>
    %563 = vector.multi_reduction <maximumf>, %562, %cst_197 [1] : vector<2x16xf32> to vector<2xf32>
    %564 = vector.shape_cast %563 : vector<2xf32> to vector<2x1xf32>
    %565 = vector.broadcast %564 : vector<2x1xf32> to vector<2x16xf32>
    %566 = arith.subf %562, %565 : vector<2x16xf32>
    %567 = math.exp %566 : vector<2x16xf32>
    %cst_198 = arith.constant dense<0.000000e+00> : vector<2xf32>
    %568 = vector.multi_reduction <add>, %567, %cst_198 [1] : vector<2x16xf32> to vector<2xf32>
    %569 = vector.shape_cast %568 : vector<2xf32> to vector<2x1xf32>
    %570 = tpu.reciprocal %569 {approx = true} : vector<2x1xf32> -> vector<2x1xf32>
    %571 = vector.broadcast %570 : vector<2x1xf32> to vector<2x16xf32>
    %572 = arith.mulf %567, %571 : vector<2x16xf32>
    %cst_199 = arith.constant dense<0.000000e+00> : vector<32xf32>
    %573 = vector.multi_reduction <add>, %468, %cst_199 [0] : vector<16x32xf32> to vector<32xf32>
    %574 = vector.shape_cast %573 : vector<32xf32> to vector<1x32xf32>
    %cst_200 = arith.constant 1.600000e+01 : f32
    %575 = vector.broadcast %cst_200 : f32 to vector<1x32xf32>
    %576 = arith.divf %574, %575 : vector<1x32xf32>
    %577 = vector.broadcast %576 : vector<1x32xf32> to vector<16x32xf32>
    %578 = arith.subf %468, %577 : vector<16x32xf32>
    %579 = arith.mulf %578, %578 : vector<16x32xf32>
    %cst_201 = arith.constant dense<0.000000e+00> : vector<32xf32>
    %580 = vector.multi_reduction <add>, %579, %cst_201 [0] : vector<16x32xf32> to vector<32xf32>
    %581 = vector.shape_cast %580 : vector<32xf32> to vector<1x32xf32>
    %cst_202 = arith.constant 1.600000e+01 : f32
    %582 = vector.broadcast %cst_202 : f32 to vector<1x32xf32>
    %583 = arith.divf %581, %582 : vector<1x32xf32>
    %584 = vector.broadcast %576 : vector<1x32xf32> to vector<16x32xf32>
    %585 = arith.subf %468, %584 : vector<16x32xf32>
    %cst_203 = arith.constant 9.99999974E-6 : f32
    %586 = vector.broadcast %cst_203 : f32 to vector<1x32xf32>
    %587 = arith.addf %583, %586 : vector<1x32xf32>
    %588 = math.rsqrt %587 : vector<1x32xf32>
    %589 = vector.broadcast %588 : vector<1x32xf32> to vector<16x32xf32>
    %590 = arith.mulf %585, %589 : vector<16x32xf32>
    %c3_204 = arith.constant 3 : index
    %c0_205 = arith.constant 0 : index
    %c0_206 = arith.constant 0 : index
    %591 = vector.load %arg9[%c3_204, %c0_205, %c0_206] : memref<8x2x8xf32, #tpu.memory_space<vmem>>, vector<1x2x8xf32>
    %592 = vector.shape_cast %591 : vector<1x2x8xf32> to vector<2x8xf32>
    %593 = vector.shape_cast %495 : vector<2x8xf32> to vector<1x2x8xf32>
    tpu.vector_store %arg9[%c3_204, %c0_205, %c0_206], %593 {strides = array<i32>} : memref<8x2x8xf32, #tpu.memory_space<vmem>>, vector<1x2x8xf32>,
    %c3_207 = arith.constant 3 : index
    %c0_208 = arith.constant 0 : index
    %c0_209 = arith.constant 0 : index
    %594 = vector.load %arg0[%c3_207, %c0_208, %c0_209] : memref<4x2x64xf32, #tpu.memory_space<vmem>>, vector<1x2x64xf32>
    %595 = vector.shape_cast %594 : vector<1x2x64xf32> to vector<2x64xf32>
    %c0_210 = arith.constant 0 : index
    %c0_211 = arith.constant 0 : index
    %596 = vector.load %arg5[%c0_210, %c0_211] : memref<32x64xf32, #tpu.memory_space<vmem>>, vector<32x64xf32>
    %cst_212 = arith.constant dense<0.000000e+00> : vector<2x64xf32>
    %597 = tpu.matmul %9, %596, %cst_212 {dimension_numbers = #tpu.dot_dimension_numbers<[1], [0], [0], [1], [0, 0, 1, 1], [], []>} : vector<2x32xf32>, vector<32x64xf32>, vector<2x64xf32> -> vector<2x64xf32>
    %c0_213 = arith.constant 0 : index
    %c0_214 = arith.constant 0 : index
    %598 = vector.load %arg6[%c0_213, %c0_214] : memref<1x64xf32, #tpu.memory_space<vmem>>, vector<1x64xf32>
    %599 = vector.broadcast %598 : vector<1x64xf32> to vector<2x64xf32>
    %600 = arith.addf %597, %599 : vector<2x64xf32>
    %601 = vector.extract_strided_slice %600 {offsets = [0, 0], sizes = [2, 32], strides = [1, 1]} : vector<2x64xf32> to vector<2x32xf32>
    %602 = arith.negf %601 : vector<2x32xf32>
    %603 = math.exp %602 : vector<2x32xf32>
    %cst_215 = arith.constant 1.000000e+00 : f32
    %604 = vector.broadcast %cst_215 : f32 to vector<2x32xf32>
    %605 = arith.addf %604, %603 : vector<2x32xf32>
    %606 = arith.divf %604, %605 : vector<2x32xf32>
    %607 = vector.extract_strided_slice %600 {offsets = [0, 32], sizes = [2, 32], strides = [1, 1]} : vector<2x64xf32> to vector<2x32xf32>
    %608 = math.tanh %607 : vector<2x32xf32>
    %cst_216 = arith.constant dense<0.000000e+00> : vector<16x32xf32>
    %609 = tpu.matmul %550, %606, %cst_216 {dimension_numbers = #tpu.dot_dimension_numbers<[0], [0], [1], [1], [0, 1, 1, 1], [], []>} : vector<2x16xf32>, vector<2x32xf32>, vector<16x32xf32> -> vector<16x32xf32>
    %cst_217 = arith.constant dense<0.000000e+00> : vector<16x32xf32>
    %610 = tpu.matmul %550, %608, %cst_217 {dimension_numbers = #tpu.dot_dimension_numbers<[0], [0], [1], [1], [0, 1, 1, 1], [], []>} : vector<2x16xf32>, vector<2x32xf32>, vector<16x32xf32> -> vector<16x32xf32>
    %cst_218 = arith.constant 1.000000e+00 : f32
    %611 = vector.broadcast %cst_218 : f32 to vector<16x32xf32>
    %612 = arith.subf %611, %609 : vector<16x32xf32>
    %613 = arith.mulf %590, %612 : vector<16x32xf32>
    %614 = arith.addf %613, %610 : vector<16x32xf32>
    %cst_219 = arith.constant dense<0.000000e+00> : vector<2x32xf32>
    %615 = tpu.matmul %572, %614, %cst_219 {dimension_numbers = #tpu.dot_dimension_numbers<[1], [0], [0], [1], [0, 0, 1, 1], [], []>} : vector<2x16xf32>, vector<16x32xf32>, vector<2x32xf32> -> vector<2x32xf32>
    %c0_220 = arith.constant 0 : index
    %c0_221 = arith.constant 0 : index
    %616 = vector.load %arg3[%c0_220, %c0_221] : memref<96x32xf32, #tpu.memory_space<vmem>>, vector<96x32xf32>
    %617 = vector.extract_strided_slice %616 {offsets = [0, 0], sizes = [64, 32], strides = [1, 1]} : vector<96x32xf32> to vector<64x32xf32>
    %cst_222 = arith.constant dense<0.000000e+00> : vector<2x32xf32>
    %618 = tpu.matmul %595, %617, %cst_222 {dimension_numbers = #tpu.dot_dimension_numbers<[1], [0], [0], [1], [0, 0, 1, 1], [], []>} : vector<2x64xf32>, vector<64x32xf32>, vector<2x32xf32> -> vector<2x32xf32>
    %619 = vector.extract_strided_slice %616 {offsets = [64, 0], sizes = [32, 32], strides = [1, 1]} : vector<96x32xf32> to vector<32x32xf32>
    %cst_223 = arith.constant dense<0.000000e+00> : vector<2x32xf32>
    %620 = tpu.matmul %615, %619, %cst_223 {dimension_numbers = #tpu.dot_dimension_numbers<[1], [0], [0], [1], [0, 0, 1, 1], [], []>} : vector<2x32xf32>, vector<32x32xf32>, vector<2x32xf32> -> vector<2x32xf32>
    %621 = arith.addf %618, %620 : vector<2x32xf32>
    %c0_224 = arith.constant 0 : index
    %c0_225 = arith.constant 0 : index
    %622 = vector.load %arg4[%c0_224, %c0_225] : memref<1x32xf32, #tpu.memory_space<vmem>>, vector<1x32xf32>
    %623 = vector.broadcast %622 : vector<1x32xf32> to vector<2x32xf32>
    %624 = arith.addf %621, %623 : vector<2x32xf32>
    %cst_226 = arith.constant 0.000000e+00 : f32
    %625 = vector.broadcast %cst_226 : f32 to vector<2x32xf32>
    %626 = arith.maximumf %624, %625 : vector<2x32xf32>
    %c0_227 = arith.constant 0 : index
    %c0_228 = arith.constant 0 : index
    %627 = vector.load %arg7[%c0_227, %c0_228] : memref<32x74xf32, #tpu.memory_space<vmem>>, vector<32x74xf32>
    %cst_229 = arith.constant dense<0.000000e+00> : vector<2x74xf32>
    %628 = tpu.matmul %626, %627, %cst_229 {dimension_numbers = #tpu.dot_dimension_numbers<[1], [0], [0], [1], [0, 0, 1, 1], [], []>} : vector<2x32xf32>, vector<32x74xf32>, vector<2x74xf32> -> vector<2x74xf32>
    %c0_230 = arith.constant 0 : index
    %c0_231 = arith.constant 0 : index
    %629 = vector.load %arg8[%c0_230, %c0_231] : memref<1x74xf32, #tpu.memory_space<vmem>>, vector<1x74xf32>
    %630 = vector.broadcast %629 : vector<1x74xf32> to vector<2x74xf32>
    %631 = arith.addf %628, %630 : vector<2x74xf32>
    %632 = vector.extract_strided_slice %631 {offsets = [0, 0], sizes = [2, 32], strides = [1, 1]} : vector<2x74xf32> to vector<2x32xf32>
    %633 = math.tanh %632 : vector<2x32xf32>
    %634 = vector.extract_strided_slice %631 {offsets = [0, 32], sizes = [2, 32], strides = [1, 1]} : vector<2x74xf32> to vector<2x32xf32>
    %635 = math.tanh %634 : vector<2x32xf32>
    %636 = vector.extract_strided_slice %631 {offsets = [0, 64], sizes = [2, 8], strides = [1, 1]} : vector<2x74xf32> to vector<2x8xf32>
    %637 = arith.negf %636 : vector<2x8xf32>
    %638 = math.exp %637 : vector<2x8xf32>
    %cst_232 = arith.constant 1.000000e+00 : f32
    %639 = vector.broadcast %cst_232 : f32 to vector<2x8xf32>
    %640 = arith.addf %639, %638 : vector<2x8xf32>
    %641 = arith.divf %639, %640 : vector<2x8xf32>
    %642 = vector.extract_strided_slice %631 {offsets = [0, 72], sizes = [2, 1], strides = [1, 1]} : vector<2x74xf32> to vector<2x1xf32>
    %cst_233 = arith.constant 0.000000e+00 : f32
    %643 = vector.broadcast %cst_233 : f32 to vector<2x1xf32>
    %644 = arith.maximumf %642, %643 : vector<2x1xf32>
    %645 = vector.broadcast %cst_233 : f32 to vector<2x1xf32>
    %646 = arith.subf %642, %645 : vector<2x1xf32>
    %647 = arith.cmpf one, %646, %646 : vector<2x1xf32>
    %648 = vector.broadcast %cst_233 : f32 to vector<2x1xf32>
    %649 = arith.addf %642, %648 : vector<2x1xf32>
    %650 = math.absf %646 : vector<2x1xf32>
    %cst_234 = arith.constant 0.000000e+00 : f32
    %651 = vector.broadcast %cst_234 : f32 to vector<2x1xf32>
    %652 = arith.subf %651, %650 : vector<2x1xf32>
    %653 = math.exp %652 : vector<2x1xf32>
    %654 = math.log1p %653 : vector<2x1xf32>
    %655 = arith.addf %644, %654 : vector<2x1xf32>
    %656 = arith.select %647, %649, %655 : vector<2x1xi1>, vector<2x1xf32>
    %657 = vector.extract_strided_slice %631 {offsets = [0, 73], sizes = [2, 1], strides = [1, 1]} : vector<2x74xf32> to vector<2x1xf32>
    %cst_235 = arith.constant 0.000000e+00 : f32
    %658 = vector.broadcast %cst_235 : f32 to vector<2x1xf32>
    %659 = arith.maximumf %657, %658 : vector<2x1xf32>
    %660 = vector.broadcast %cst_235 : f32 to vector<2x1xf32>
    %661 = arith.subf %657, %660 : vector<2x1xf32>
    %662 = arith.cmpf one, %661, %661 : vector<2x1xf32>
    %663 = vector.broadcast %cst_235 : f32 to vector<2x1xf32>
    %664 = arith.addf %657, %663 : vector<2x1xf32>
    %665 = math.absf %661 : vector<2x1xf32>
    %cst_236 = arith.constant 0.000000e+00 : f32
    %666 = vector.broadcast %cst_236 : f32 to vector<2x1xf32>
    %667 = arith.subf %666, %665 : vector<2x1xf32>
    %668 = math.exp %667 : vector<2x1xf32>
    %669 = math.log1p %668 : vector<2x1xf32>
    %670 = arith.addf %659, %669 : vector<2x1xf32>
    %671 = arith.select %662, %664, %670 : vector<2x1xi1>, vector<2x1xf32>
    %672 = arith.mulf %614, %614 : vector<16x32xf32>
    %cst_237 = arith.constant dense<0.000000e+00> : vector<16xf32>
    %673 = vector.multi_reduction <add>, %672, %cst_237 [1] : vector<16x32xf32> to vector<16xf32>
    %674 = vector.shape_cast %673 : vector<16xf32> to vector<16x1xf32>
    %cst_238 = arith.constant dense<0.000000e+00> : vector<2x16xf32>
    %675 = tpu.matmul %633, %614, %cst_238 {dimension_numbers = #tpu.dot_dimension_numbers<[1], [1], [0], [0], [0, 0, 1, 0], [], []>} : vector<2x32xf32>, vector<16x32xf32>, vector<2x16xf32> -> vector<2x16xf32>
    %676 = arith.mulf %633, %633 : vector<2x32xf32>
    %cst_239 = arith.constant dense<0.000000e+00> : vector<2xf32>
    %677 = vector.multi_reduction <add>, %676, %cst_239 [1] : vector<2x32xf32> to vector<2xf32>
    %678 = vector.shape_cast %677 : vector<2xf32> to vector<2x1xf32>
    %cst_240 = arith.constant dense<0.000000e+00> : vector<2x16xf32>
    %679 = tpu.matmul %678, %674, %cst_240 {dimension_numbers = #tpu.dot_dimension_numbers<[1], [1], [0], [0], [0, 0, 1, 0], [], []>} : vector<2x1xf32>, vector<16x1xf32>, vector<2x16xf32> -> vector<2x16xf32>
    %680 = math.sqrt %679 : vector<2x16xf32>
    %cst_241 = arith.constant 9.99999993E-9 : f32
    %681 = vector.broadcast %cst_241 : f32 to vector<2x16xf32>
    %682 = arith.addf %680, %681 : vector<2x16xf32>
    %683 = tpu.reciprocal %682 {approx = true} : vector<2x16xf32> -> vector<2x16xf32>
    %684 = arith.mulf %675, %683 : vector<2x16xf32>
    %685 = vector.broadcast %656 : vector<2x1xf32> to vector<2x16xf32>
    %686 = arith.mulf %685, %684 : vector<2x16xf32>
    %cst_242 = arith.constant dense<0xFF800000> : vector<2xf32>
    %687 = vector.multi_reduction <maximumf>, %686, %cst_242 [1] : vector<2x16xf32> to vector<2xf32>
    %688 = vector.shape_cast %687 : vector<2xf32> to vector<2x1xf32>
    %689 = vector.broadcast %688 : vector<2x1xf32> to vector<2x16xf32>
    %690 = arith.subf %686, %689 : vector<2x16xf32>
    %691 = math.exp %690 : vector<2x16xf32>
    %cst_243 = arith.constant dense<0.000000e+00> : vector<2xf32>
    %692 = vector.multi_reduction <add>, %691, %cst_243 [1] : vector<2x16xf32> to vector<2xf32>
    %693 = vector.shape_cast %692 : vector<2xf32> to vector<2x1xf32>
    %694 = tpu.reciprocal %693 {approx = true} : vector<2x1xf32> -> vector<2x1xf32>
    %695 = vector.broadcast %694 : vector<2x1xf32> to vector<2x16xf32>
    %696 = arith.mulf %691, %695 : vector<2x16xf32>
    %cst_244 = arith.constant dense<0.000000e+00> : vector<2x16xf32>
    %697 = tpu.matmul %635, %614, %cst_244 {dimension_numbers = #tpu.dot_dimension_numbers<[1], [1], [0], [0], [0, 0, 1, 0], [], []>} : vector<2x32xf32>, vector<16x32xf32>, vector<2x16xf32> -> vector<2x16xf32>
    %698 = arith.mulf %635, %635 : vector<2x32xf32>
    %cst_245 = arith.constant dense<0.000000e+00> : vector<2xf32>
    %699 = vector.multi_reduction <add>, %698, %cst_245 [1] : vector<2x32xf32> to vector<2xf32>
    %700 = vector.shape_cast %699 : vector<2xf32> to vector<2x1xf32>
    %cst_246 = arith.constant dense<0.000000e+00> : vector<2x16xf32>
    %701 = tpu.matmul %700, %674, %cst_246 {dimension_numbers = #tpu.dot_dimension_numbers<[1], [1], [0], [0], [0, 0, 1, 0], [], []>} : vector<2x1xf32>, vector<16x1xf32>, vector<2x16xf32> -> vector<2x16xf32>
    %702 = math.sqrt %701 : vector<2x16xf32>
    %cst_247 = arith.constant 9.99999993E-9 : f32
    %703 = vector.broadcast %cst_247 : f32 to vector<2x16xf32>
    %704 = arith.addf %702, %703 : vector<2x16xf32>
    %705 = tpu.reciprocal %704 {approx = true} : vector<2x16xf32> -> vector<2x16xf32>
    %706 = arith.mulf %697, %705 : vector<2x16xf32>
    %707 = vector.broadcast %671 : vector<2x1xf32> to vector<2x16xf32>
    %708 = arith.mulf %707, %706 : vector<2x16xf32>
    %cst_248 = arith.constant dense<0xFF800000> : vector<2xf32>
    %709 = vector.multi_reduction <maximumf>, %708, %cst_248 [1] : vector<2x16xf32> to vector<2xf32>
    %710 = vector.shape_cast %709 : vector<2xf32> to vector<2x1xf32>
    %711 = vector.broadcast %710 : vector<2x1xf32> to vector<2x16xf32>
    %712 = arith.subf %708, %711 : vector<2x16xf32>
    %713 = math.exp %712 : vector<2x16xf32>
    %cst_249 = arith.constant dense<0.000000e+00> : vector<2xf32>
    %714 = vector.multi_reduction <add>, %713, %cst_249 [1] : vector<2x16xf32> to vector<2xf32>
    %715 = vector.shape_cast %714 : vector<2xf32> to vector<2x1xf32>
    %716 = tpu.reciprocal %715 {approx = true} : vector<2x1xf32> -> vector<2x1xf32>
    %717 = vector.broadcast %716 : vector<2x1xf32> to vector<2x16xf32>
    %718 = arith.mulf %713, %717 : vector<2x16xf32>
    %cst_250 = arith.constant dense<0.000000e+00> : vector<32xf32>
    %719 = vector.multi_reduction <add>, %614, %cst_250 [0] : vector<16x32xf32> to vector<32xf32>
    %720 = vector.shape_cast %719 : vector<32xf32> to vector<1x32xf32>
    %cst_251 = arith.constant 1.600000e+01 : f32
    %721 = vector.broadcast %cst_251 : f32 to vector<1x32xf32>
    %722 = arith.divf %720, %721 : vector<1x32xf32>
    %723 = vector.broadcast %722 : vector<1x32xf32> to vector<16x32xf32>
    %724 = arith.subf %614, %723 : vector<16x32xf32>
    %725 = arith.mulf %724, %724 : vector<16x32xf32>
    %cst_252 = arith.constant dense<0.000000e+00> : vector<32xf32>
    %726 = vector.multi_reduction <add>, %725, %cst_252 [0] : vector<16x32xf32> to vector<32xf32>
    %727 = vector.shape_cast %726 : vector<32xf32> to vector<1x32xf32>
    %cst_253 = arith.constant 1.600000e+01 : f32
    %728 = vector.broadcast %cst_253 : f32 to vector<1x32xf32>
    %729 = arith.divf %727, %728 : vector<1x32xf32>
    %730 = vector.broadcast %722 : vector<1x32xf32> to vector<16x32xf32>
    %731 = arith.subf %614, %730 : vector<16x32xf32>
    %cst_254 = arith.constant 9.99999974E-6 : f32
    %732 = vector.broadcast %cst_254 : f32 to vector<1x32xf32>
    %733 = arith.addf %729, %732 : vector<1x32xf32>
    %734 = math.rsqrt %733 : vector<1x32xf32>
    %735 = vector.broadcast %734 : vector<1x32xf32> to vector<16x32xf32>
    %736 = arith.mulf %731, %735 : vector<16x32xf32>
    %c4 = arith.constant 4 : index
    %c0_255 = arith.constant 0 : index
    %c0_256 = arith.constant 0 : index
    %737 = vector.load %arg9[%c4, %c0_255, %c0_256] : memref<8x2x8xf32, #tpu.memory_space<vmem>>, vector<1x2x8xf32>
    %738 = vector.shape_cast %737 : vector<1x2x8xf32> to vector<2x8xf32>
    %739 = vector.shape_cast %641 : vector<2x8xf32> to vector<1x2x8xf32>
    tpu.vector_store %arg9[%c4, %c0_255, %c0_256], %739 {strides = array<i32>} : memref<8x2x8xf32, #tpu.memory_space<vmem>>, vector<1x2x8xf32>,
    %c2_257 = arith.constant 2 : index
    %c0_258 = arith.constant 0 : index
    %c0_259 = arith.constant 0 : index
    %740 = vector.load %arg0[%c2_257, %c0_258, %c0_259] : memref<4x2x64xf32, #tpu.memory_space<vmem>>, vector<1x2x64xf32>
    %741 = vector.shape_cast %740 : vector<1x2x64xf32> to vector<2x64xf32>
    %c0_260 = arith.constant 0 : index
    %c0_261 = arith.constant 0 : index
    %742 = vector.load %arg5[%c0_260, %c0_261] : memref<32x64xf32, #tpu.memory_space<vmem>>, vector<32x64xf32>
    %cst_262 = arith.constant dense<0.000000e+00> : vector<2x64xf32>
    %743 = tpu.matmul %9, %742, %cst_262 {dimension_numbers = #tpu.dot_dimension_numbers<[1], [0], [0], [1], [0, 0, 1, 1], [], []>} : vector<2x32xf32>, vector<32x64xf32>, vector<2x64xf32> -> vector<2x64xf32>
    %c0_263 = arith.constant 0 : index
    %c0_264 = arith.constant 0 : index
    %744 = vector.load %arg6[%c0_263, %c0_264] : memref<1x64xf32, #tpu.memory_space<vmem>>, vector<1x64xf32>
    %745 = vector.broadcast %744 : vector<1x64xf32> to vector<2x64xf32>
    %746 = arith.addf %743, %745 : vector<2x64xf32>
    %747 = vector.extract_strided_slice %746 {offsets = [0, 0], sizes = [2, 32], strides = [1, 1]} : vector<2x64xf32> to vector<2x32xf32>
    %748 = arith.negf %747 : vector<2x32xf32>
    %749 = math.exp %748 : vector<2x32xf32>
    %cst_265 = arith.constant 1.000000e+00 : f32
    %750 = vector.broadcast %cst_265 : f32 to vector<2x32xf32>
    %751 = arith.addf %750, %749 : vector<2x32xf32>
    %752 = arith.divf %750, %751 : vector<2x32xf32>
    %753 = vector.extract_strided_slice %746 {offsets = [0, 32], sizes = [2, 32], strides = [1, 1]} : vector<2x64xf32> to vector<2x32xf32>
    %754 = math.tanh %753 : vector<2x32xf32>
    %cst_266 = arith.constant dense<0.000000e+00> : vector<16x32xf32>
    %755 = tpu.matmul %696, %752, %cst_266 {dimension_numbers = #tpu.dot_dimension_numbers<[0], [0], [1], [1], [0, 1, 1, 1], [], []>} : vector<2x16xf32>, vector<2x32xf32>, vector<16x32xf32> -> vector<16x32xf32>
    %cst_267 = arith.constant dense<0.000000e+00> : vector<16x32xf32>
    %756 = tpu.matmul %696, %754, %cst_267 {dimension_numbers = #tpu.dot_dimension_numbers<[0], [0], [1], [1], [0, 1, 1, 1], [], []>} : vector<2x16xf32>, vector<2x32xf32>, vector<16x32xf32> -> vector<16x32xf32>
    %cst_268 = arith.constant 1.000000e+00 : f32
    %757 = vector.broadcast %cst_268 : f32 to vector<16x32xf32>
    %758 = arith.subf %757, %755 : vector<16x32xf32>
    %759 = arith.mulf %736, %758 : vector<16x32xf32>
    %760 = arith.addf %759, %756 : vector<16x32xf32>
    %cst_269 = arith.constant dense<0.000000e+00> : vector<2x32xf32>
    %761 = tpu.matmul %718, %760, %cst_269 {dimension_numbers = #tpu.dot_dimension_numbers<[1], [0], [0], [1], [0, 0, 1, 1], [], []>} : vector<2x16xf32>, vector<16x32xf32>, vector<2x32xf32> -> vector<2x32xf32>
    %c0_270 = arith.constant 0 : index
    %c0_271 = arith.constant 0 : index
    %762 = vector.load %arg3[%c0_270, %c0_271] : memref<96x32xf32, #tpu.memory_space<vmem>>, vector<96x32xf32>
    %763 = vector.extract_strided_slice %762 {offsets = [0, 0], sizes = [64, 32], strides = [1, 1]} : vector<96x32xf32> to vector<64x32xf32>
    %cst_272 = arith.constant dense<0.000000e+00> : vector<2x32xf32>
    %764 = tpu.matmul %741, %763, %cst_272 {dimension_numbers = #tpu.dot_dimension_numbers<[1], [0], [0], [1], [0, 0, 1, 1], [], []>} : vector<2x64xf32>, vector<64x32xf32>, vector<2x32xf32> -> vector<2x32xf32>
    %765 = vector.extract_strided_slice %762 {offsets = [64, 0], sizes = [32, 32], strides = [1, 1]} : vector<96x32xf32> to vector<32x32xf32>
    %cst_273 = arith.constant dense<0.000000e+00> : vector<2x32xf32>
    %766 = tpu.matmul %761, %765, %cst_273 {dimension_numbers = #tpu.dot_dimension_numbers<[1], [0], [0], [1], [0, 0, 1, 1], [], []>} : vector<2x32xf32>, vector<32x32xf32>, vector<2x32xf32> -> vector<2x32xf32>
    %767 = arith.addf %764, %766 : vector<2x32xf32>
    %c0_274 = arith.constant 0 : index
    %c0_275 = arith.constant 0 : index
    %768 = vector.load %arg4[%c0_274, %c0_275] : memref<1x32xf32, #tpu.memory_space<vmem>>, vector<1x32xf32>
    %769 = vector.broadcast %768 : vector<1x32xf32> to vector<2x32xf32>
    %770 = arith.addf %767, %769 : vector<2x32xf32>
    %cst_276 = arith.constant 0.000000e+00 : f32
    %771 = vector.broadcast %cst_276 : f32 to vector<2x32xf32>
    %772 = arith.maximumf %770, %771 : vector<2x32xf32>
    %c0_277 = arith.constant 0 : index
    %c0_278 = arith.constant 0 : index
    %773 = vector.load %arg7[%c0_277, %c0_278] : memref<32x74xf32, #tpu.memory_space<vmem>>, vector<32x74xf32>
    %cst_279 = arith.constant dense<0.000000e+00> : vector<2x74xf32>
    %774 = tpu.matmul %772, %773, %cst_279 {dimension_numbers = #tpu.dot_dimension_numbers<[1], [0], [0], [1], [0, 0, 1, 1], [], []>} : vector<2x32xf32>, vector<32x74xf32>, vector<2x74xf32> -> vector<2x74xf32>
    %c0_280 = arith.constant 0 : index
    %c0_281 = arith.constant 0 : index
    %775 = vector.load %arg8[%c0_280, %c0_281] : memref<1x74xf32, #tpu.memory_space<vmem>>, vector<1x74xf32>
    %776 = vector.broadcast %775 : vector<1x74xf32> to vector<2x74xf32>
    %777 = arith.addf %774, %776 : vector<2x74xf32>
    %778 = vector.extract_strided_slice %777 {offsets = [0, 0], sizes = [2, 32], strides = [1, 1]} : vector<2x74xf32> to vector<2x32xf32>
    %779 = math.tanh %778 : vector<2x32xf32>
    %780 = vector.extract_strided_slice %777 {offsets = [0, 32], sizes = [2, 32], strides = [1, 1]} : vector<2x74xf32> to vector<2x32xf32>
    %781 = math.tanh %780 : vector<2x32xf32>
    %782 = vector.extract_strided_slice %777 {offsets = [0, 64], sizes = [2, 8], strides = [1, 1]} : vector<2x74xf32> to vector<2x8xf32>
    %783 = arith.negf %782 : vector<2x8xf32>
    %784 = math.exp %783 : vector<2x8xf32>
    %cst_282 = arith.constant 1.000000e+00 : f32
    %785 = vector.broadcast %cst_282 : f32 to vector<2x8xf32>
    %786 = arith.addf %785, %784 : vector<2x8xf32>
    %787 = arith.divf %785, %786 : vector<2x8xf32>
    %788 = vector.extract_strided_slice %777 {offsets = [0, 72], sizes = [2, 1], strides = [1, 1]} : vector<2x74xf32> to vector<2x1xf32>
    %cst_283 = arith.constant 0.000000e+00 : f32
    %789 = vector.broadcast %cst_283 : f32 to vector<2x1xf32>
    %790 = arith.maximumf %788, %789 : vector<2x1xf32>
    %791 = vector.broadcast %cst_283 : f32 to vector<2x1xf32>
    %792 = arith.subf %788, %791 : vector<2x1xf32>
    %793 = arith.cmpf one, %792, %792 : vector<2x1xf32>
    %794 = vector.broadcast %cst_283 : f32 to vector<2x1xf32>
    %795 = arith.addf %788, %794 : vector<2x1xf32>
    %796 = math.absf %792 : vector<2x1xf32>
    %cst_284 = arith.constant 0.000000e+00 : f32
    %797 = vector.broadcast %cst_284 : f32 to vector<2x1xf32>
    %798 = arith.subf %797, %796 : vector<2x1xf32>
    %799 = math.exp %798 : vector<2x1xf32>
    %800 = math.log1p %799 : vector<2x1xf32>
    %801 = arith.addf %790, %800 : vector<2x1xf32>
    %802 = arith.select %793, %795, %801 : vector<2x1xi1>, vector<2x1xf32>
    %803 = vector.extract_strided_slice %777 {offsets = [0, 73], sizes = [2, 1], strides = [1, 1]} : vector<2x74xf32> to vector<2x1xf32>
    %cst_285 = arith.constant 0.000000e+00 : f32
    %804 = vector.broadcast %cst_285 : f32 to vector<2x1xf32>
    %805 = arith.maximumf %803, %804 : vector<2x1xf32>
    %806 = vector.broadcast %cst_285 : f32 to vector<2x1xf32>
    %807 = arith.subf %803, %806 : vector<2x1xf32>
    %808 = arith.cmpf one, %807, %807 : vector<2x1xf32>
    %809 = vector.broadcast %cst_285 : f32 to vector<2x1xf32>
    %810 = arith.addf %803, %809 : vector<2x1xf32>
    %811 = math.absf %807 : vector<2x1xf32>
    %cst_286 = arith.constant 0.000000e+00 : f32
    %812 = vector.broadcast %cst_286 : f32 to vector<2x1xf32>
    %813 = arith.subf %812, %811 : vector<2x1xf32>
    %814 = math.exp %813 : vector<2x1xf32>
    %815 = math.log1p %814 : vector<2x1xf32>
    %816 = arith.addf %805, %815 : vector<2x1xf32>
    %817 = arith.select %808, %810, %816 : vector<2x1xi1>, vector<2x1xf32>
    %818 = arith.mulf %760, %760 : vector<16x32xf32>
    %cst_287 = arith.constant dense<0.000000e+00> : vector<16xf32>
    %819 = vector.multi_reduction <add>, %818, %cst_287 [1] : vector<16x32xf32> to vector<16xf32>
    %820 = vector.shape_cast %819 : vector<16xf32> to vector<16x1xf32>
    %cst_288 = arith.constant dense<0.000000e+00> : vector<2x16xf32>
    %821 = tpu.matmul %779, %760, %cst_288 {dimension_numbers = #tpu.dot_dimension_numbers<[1], [1], [0], [0], [0, 0, 1, 0], [], []>} : vector<2x32xf32>, vector<16x32xf32>, vector<2x16xf32> -> vector<2x16xf32>
    %822 = arith.mulf %779, %779 : vector<2x32xf32>
    %cst_289 = arith.constant dense<0.000000e+00> : vector<2xf32>
    %823 = vector.multi_reduction <add>, %822, %cst_289 [1] : vector<2x32xf32> to vector<2xf32>
    %824 = vector.shape_cast %823 : vector<2xf32> to vector<2x1xf32>
    %cst_290 = arith.constant dense<0.000000e+00> : vector<2x16xf32>
    %825 = tpu.matmul %824, %820, %cst_290 {dimension_numbers = #tpu.dot_dimension_numbers<[1], [1], [0], [0], [0, 0, 1, 0], [], []>} : vector<2x1xf32>, vector<16x1xf32>, vector<2x16xf32> -> vector<2x16xf32>
    %826 = math.sqrt %825 : vector<2x16xf32>
    %cst_291 = arith.constant 9.99999993E-9 : f32
    %827 = vector.broadcast %cst_291 : f32 to vector<2x16xf32>
    %828 = arith.addf %826, %827 : vector<2x16xf32>
    %829 = tpu.reciprocal %828 {approx = true} : vector<2x16xf32> -> vector<2x16xf32>
    %830 = arith.mulf %821, %829 : vector<2x16xf32>
    %831 = vector.broadcast %802 : vector<2x1xf32> to vector<2x16xf32>
    %832 = arith.mulf %831, %830 : vector<2x16xf32>
    %cst_292 = arith.constant dense<0xFF800000> : vector<2xf32>
    %833 = vector.multi_reduction <maximumf>, %832, %cst_292 [1] : vector<2x16xf32> to vector<2xf32>
    %834 = vector.shape_cast %833 : vector<2xf32> to vector<2x1xf32>
    %835 = vector.broadcast %834 : vector<2x1xf32> to vector<2x16xf32>
    %836 = arith.subf %832, %835 : vector<2x16xf32>
    %837 = math.exp %836 : vector<2x16xf32>
    %cst_293 = arith.constant dense<0.000000e+00> : vector<2xf32>
    %838 = vector.multi_reduction <add>, %837, %cst_293 [1] : vector<2x16xf32> to vector<2xf32>
    %839 = vector.shape_cast %838 : vector<2xf32> to vector<2x1xf32>
    %840 = tpu.reciprocal %839 {approx = true} : vector<2x1xf32> -> vector<2x1xf32>
    %841 = vector.broadcast %840 : vector<2x1xf32> to vector<2x16xf32>
    %842 = arith.mulf %837, %841 : vector<2x16xf32>
    %cst_294 = arith.constant dense<0.000000e+00> : vector<2x16xf32>
    %843 = tpu.matmul %781, %760, %cst_294 {dimension_numbers = #tpu.dot_dimension_numbers<[1], [1], [0], [0], [0, 0, 1, 0], [], []>} : vector<2x32xf32>, vector<16x32xf32>, vector<2x16xf32> -> vector<2x16xf32>
    %844 = arith.mulf %781, %781 : vector<2x32xf32>
    %cst_295 = arith.constant dense<0.000000e+00> : vector<2xf32>
    %845 = vector.multi_reduction <add>, %844, %cst_295 [1] : vector<2x32xf32> to vector<2xf32>
    %846 = vector.shape_cast %845 : vector<2xf32> to vector<2x1xf32>
    %cst_296 = arith.constant dense<0.000000e+00> : vector<2x16xf32>
    %847 = tpu.matmul %846, %820, %cst_296 {dimension_numbers = #tpu.dot_dimension_numbers<[1], [1], [0], [0], [0, 0, 1, 0], [], []>} : vector<2x1xf32>, vector<16x1xf32>, vector<2x16xf32> -> vector<2x16xf32>
    %848 = math.sqrt %847 : vector<2x16xf32>
    %cst_297 = arith.constant 9.99999993E-9 : f32
    %849 = vector.broadcast %cst_297 : f32 to vector<2x16xf32>
    %850 = arith.addf %848, %849 : vector<2x16xf32>
    %851 = tpu.reciprocal %850 {approx = true} : vector<2x16xf32> -> vector<2x16xf32>
    %852 = arith.mulf %843, %851 : vector<2x16xf32>
    %853 = vector.broadcast %817 : vector<2x1xf32> to vector<2x16xf32>
    %854 = arith.mulf %853, %852 : vector<2x16xf32>
    %cst_298 = arith.constant dense<0xFF800000> : vector<2xf32>
    %855 = vector.multi_reduction <maximumf>, %854, %cst_298 [1] : vector<2x16xf32> to vector<2xf32>
    %856 = vector.shape_cast %855 : vector<2xf32> to vector<2x1xf32>
    %857 = vector.broadcast %856 : vector<2x1xf32> to vector<2x16xf32>
    %858 = arith.subf %854, %857 : vector<2x16xf32>
    %859 = math.exp %858 : vector<2x16xf32>
    %cst_299 = arith.constant dense<0.000000e+00> : vector<2xf32>
    %860 = vector.multi_reduction <add>, %859, %cst_299 [1] : vector<2x16xf32> to vector<2xf32>
    %861 = vector.shape_cast %860 : vector<2xf32> to vector<2x1xf32>
    %862 = tpu.reciprocal %861 {approx = true} : vector<2x1xf32> -> vector<2x1xf32>
    %863 = vector.broadcast %862 : vector<2x1xf32> to vector<2x16xf32>
    %864 = arith.mulf %859, %863 : vector<2x16xf32>
    %cst_300 = arith.constant dense<0.000000e+00> : vector<32xf32>
    %865 = vector.multi_reduction <add>, %760, %cst_300 [0] : vector<16x32xf32> to vector<32xf32>
    %866 = vector.shape_cast %865 : vector<32xf32> to vector<1x32xf32>
    %cst_301 = arith.constant 1.600000e+01 : f32
    %867 = vector.broadcast %cst_301 : f32 to vector<1x32xf32>
    %868 = arith.divf %866, %867 : vector<1x32xf32>
    %869 = vector.broadcast %868 : vector<1x32xf32> to vector<16x32xf32>
    %870 = arith.subf %760, %869 : vector<16x32xf32>
    %871 = arith.mulf %870, %870 : vector<16x32xf32>
    %cst_302 = arith.constant dense<0.000000e+00> : vector<32xf32>
    %872 = vector.multi_reduction <add>, %871, %cst_302 [0] : vector<16x32xf32> to vector<32xf32>
    %873 = vector.shape_cast %872 : vector<32xf32> to vector<1x32xf32>
    %cst_303 = arith.constant 1.600000e+01 : f32
    %874 = vector.broadcast %cst_303 : f32 to vector<1x32xf32>
    %875 = arith.divf %873, %874 : vector<1x32xf32>
    %876 = vector.broadcast %868 : vector<1x32xf32> to vector<16x32xf32>
    %877 = arith.subf %760, %876 : vector<16x32xf32>
    %cst_304 = arith.constant 9.99999974E-6 : f32
    %878 = vector.broadcast %cst_304 : f32 to vector<1x32xf32>
    %879 = arith.addf %875, %878 : vector<1x32xf32>
    %880 = math.rsqrt %879 : vector<1x32xf32>
    %881 = vector.broadcast %880 : vector<1x32xf32> to vector<16x32xf32>
    %882 = arith.mulf %877, %881 : vector<16x32xf32>
    %c5 = arith.constant 5 : index
    %c0_305 = arith.constant 0 : index
    %c0_306 = arith.constant 0 : index
    %883 = vector.load %arg9[%c5, %c0_305, %c0_306] : memref<8x2x8xf32, #tpu.memory_space<vmem>>, vector<1x2x8xf32>
    %884 = vector.shape_cast %883 : vector<1x2x8xf32> to vector<2x8xf32>
    %885 = vector.shape_cast %787 : vector<2x8xf32> to vector<1x2x8xf32>
    tpu.vector_store %arg9[%c5, %c0_305, %c0_306], %885 {strides = array<i32>} : memref<8x2x8xf32, #tpu.memory_space<vmem>>, vector<1x2x8xf32>,
    %c1_307 = arith.constant 1 : index
    %c0_308 = arith.constant 0 : index
    %c0_309 = arith.constant 0 : index
    %886 = vector.load %arg0[%c1_307, %c0_308, %c0_309] : memref<4x2x64xf32, #tpu.memory_space<vmem>>, vector<1x2x64xf32>
    %887 = vector.shape_cast %886 : vector<1x2x64xf32> to vector<2x64xf32>
    %c0_310 = arith.constant 0 : index
    %c0_311 = arith.constant 0 : index
    %888 = vector.load %arg5[%c0_310, %c0_311] : memref<32x64xf32, #tpu.memory_space<vmem>>, vector<32x64xf32>
    %cst_312 = arith.constant dense<0.000000e+00> : vector<2x64xf32>
    %889 = tpu.matmul %9, %888, %cst_312 {dimension_numbers = #tpu.dot_dimension_numbers<[1], [0], [0], [1], [0, 0, 1, 1], [], []>} : vector<2x32xf32>, vector<32x64xf32>, vector<2x64xf32> -> vector<2x64xf32>
    %c0_313 = arith.constant 0 : index
    %c0_314 = arith.constant 0 : index
    %890 = vector.load %arg6[%c0_313, %c0_314] : memref<1x64xf32, #tpu.memory_space<vmem>>, vector<1x64xf32>
    %891 = vector.broadcast %890 : vector<1x64xf32> to vector<2x64xf32>
    %892 = arith.addf %889, %891 : vector<2x64xf32>
    %893 = vector.extract_strided_slice %892 {offsets = [0, 0], sizes = [2, 32], strides = [1, 1]} : vector<2x64xf32> to vector<2x32xf32>
    %894 = arith.negf %893 : vector<2x32xf32>
    %895 = math.exp %894 : vector<2x32xf32>
    %cst_315 = arith.constant 1.000000e+00 : f32
    %896 = vector.broadcast %cst_315 : f32 to vector<2x32xf32>
    %897 = arith.addf %896, %895 : vector<2x32xf32>
    %898 = arith.divf %896, %897 : vector<2x32xf32>
    %899 = vector.extract_strided_slice %892 {offsets = [0, 32], sizes = [2, 32], strides = [1, 1]} : vector<2x64xf32> to vector<2x32xf32>
    %900 = math.tanh %899 : vector<2x32xf32>
    %cst_316 = arith.constant dense<0.000000e+00> : vector<16x32xf32>
    %901 = tpu.matmul %842, %898, %cst_316 {dimension_numbers = #tpu.dot_dimension_numbers<[0], [0], [1], [1], [0, 1, 1, 1], [], []>} : vector<2x16xf32>, vector<2x32xf32>, vector<16x32xf32> -> vector<16x32xf32>
    %cst_317 = arith.constant dense<0.000000e+00> : vector<16x32xf32>
    %902 = tpu.matmul %842, %900, %cst_317 {dimension_numbers = #tpu.dot_dimension_numbers<[0], [0], [1], [1], [0, 1, 1, 1], [], []>} : vector<2x16xf32>, vector<2x32xf32>, vector<16x32xf32> -> vector<16x32xf32>
    %cst_318 = arith.constant 1.000000e+00 : f32
    %903 = vector.broadcast %cst_318 : f32 to vector<16x32xf32>
    %904 = arith.subf %903, %901 : vector<16x32xf32>
    %905 = arith.mulf %882, %904 : vector<16x32xf32>
    %906 = arith.addf %905, %902 : vector<16x32xf32>
    %cst_319 = arith.constant dense<0.000000e+00> : vector<2x32xf32>
    %907 = tpu.matmul %864, %906, %cst_319 {dimension_numbers = #tpu.dot_dimension_numbers<[1], [0], [0], [1], [0, 0, 1, 1], [], []>} : vector<2x16xf32>, vector<16x32xf32>, vector<2x32xf32> -> vector<2x32xf32>
    %c0_320 = arith.constant 0 : index
    %c0_321 = arith.constant 0 : index
    %908 = vector.load %arg3[%c0_320, %c0_321] : memref<96x32xf32, #tpu.memory_space<vmem>>, vector<96x32xf32>
    %909 = vector.extract_strided_slice %908 {offsets = [0, 0], sizes = [64, 32], strides = [1, 1]} : vector<96x32xf32> to vector<64x32xf32>
    %cst_322 = arith.constant dense<0.000000e+00> : vector<2x32xf32>
    %910 = tpu.matmul %887, %909, %cst_322 {dimension_numbers = #tpu.dot_dimension_numbers<[1], [0], [0], [1], [0, 0, 1, 1], [], []>} : vector<2x64xf32>, vector<64x32xf32>, vector<2x32xf32> -> vector<2x32xf32>
    %911 = vector.extract_strided_slice %908 {offsets = [64, 0], sizes = [32, 32], strides = [1, 1]} : vector<96x32xf32> to vector<32x32xf32>
    %cst_323 = arith.constant dense<0.000000e+00> : vector<2x32xf32>
    %912 = tpu.matmul %907, %911, %cst_323 {dimension_numbers = #tpu.dot_dimension_numbers<[1], [0], [0], [1], [0, 0, 1, 1], [], []>} : vector<2x32xf32>, vector<32x32xf32>, vector<2x32xf32> -> vector<2x32xf32>
    %913 = arith.addf %910, %912 : vector<2x32xf32>
    %c0_324 = arith.constant 0 : index
    %c0_325 = arith.constant 0 : index
    %914 = vector.load %arg4[%c0_324, %c0_325] : memref<1x32xf32, #tpu.memory_space<vmem>>, vector<1x32xf32>
    %915 = vector.broadcast %914 : vector<1x32xf32> to vector<2x32xf32>
    %916 = arith.addf %913, %915 : vector<2x32xf32>
    %cst_326 = arith.constant 0.000000e+00 : f32
    %917 = vector.broadcast %cst_326 : f32 to vector<2x32xf32>
    %918 = arith.maximumf %916, %917 : vector<2x32xf32>
    %c0_327 = arith.constant 0 : index
    %c0_328 = arith.constant 0 : index
    %919 = vector.load %arg7[%c0_327, %c0_328] : memref<32x74xf32, #tpu.memory_space<vmem>>, vector<32x74xf32>
    %cst_329 = arith.constant dense<0.000000e+00> : vector<2x74xf32>
    %920 = tpu.matmul %918, %919, %cst_329 {dimension_numbers = #tpu.dot_dimension_numbers<[1], [0], [0], [1], [0, 0, 1, 1], [], []>} : vector<2x32xf32>, vector<32x74xf32>, vector<2x74xf32> -> vector<2x74xf32>
    %c0_330 = arith.constant 0 : index
    %c0_331 = arith.constant 0 : index
    %921 = vector.load %arg8[%c0_330, %c0_331] : memref<1x74xf32, #tpu.memory_space<vmem>>, vector<1x74xf32>
    %922 = vector.broadcast %921 : vector<1x74xf32> to vector<2x74xf32>
    %923 = arith.addf %920, %922 : vector<2x74xf32>
    %924 = vector.extract_strided_slice %923 {offsets = [0, 0], sizes = [2, 32], strides = [1, 1]} : vector<2x74xf32> to vector<2x32xf32>
    %925 = math.tanh %924 : vector<2x32xf32>
    %926 = vector.extract_strided_slice %923 {offsets = [0, 32], sizes = [2, 32], strides = [1, 1]} : vector<2x74xf32> to vector<2x32xf32>
    %927 = math.tanh %926 : vector<2x32xf32>
    %928 = vector.extract_strided_slice %923 {offsets = [0, 64], sizes = [2, 8], strides = [1, 1]} : vector<2x74xf32> to vector<2x8xf32>
    %929 = arith.negf %928 : vector<2x8xf32>
    %930 = math.exp %929 : vector<2x8xf32>
    %cst_332 = arith.constant 1.000000e+00 : f32
    %931 = vector.broadcast %cst_332 : f32 to vector<2x8xf32>
    %932 = arith.addf %931, %930 : vector<2x8xf32>
    %933 = arith.divf %931, %932 : vector<2x8xf32>
    %934 = vector.extract_strided_slice %923 {offsets = [0, 72], sizes = [2, 1], strides = [1, 1]} : vector<2x74xf32> to vector<2x1xf32>
    %cst_333 = arith.constant 0.000000e+00 : f32
    %935 = vector.broadcast %cst_333 : f32 to vector<2x1xf32>
    %936 = arith.maximumf %934, %935 : vector<2x1xf32>
    %937 = vector.broadcast %cst_333 : f32 to vector<2x1xf32>
    %938 = arith.subf %934, %937 : vector<2x1xf32>
    %939 = arith.cmpf one, %938, %938 : vector<2x1xf32>
    %940 = vector.broadcast %cst_333 : f32 to vector<2x1xf32>
    %941 = arith.addf %934, %940 : vector<2x1xf32>
    %942 = math.absf %938 : vector<2x1xf32>
    %cst_334 = arith.constant 0.000000e+00 : f32
    %943 = vector.broadcast %cst_334 : f32 to vector<2x1xf32>
    %944 = arith.subf %943, %942 : vector<2x1xf32>
    %945 = math.exp %944 : vector<2x1xf32>
    %946 = math.log1p %945 : vector<2x1xf32>
    %947 = arith.addf %936, %946 : vector<2x1xf32>
    %948 = arith.select %939, %941, %947 : vector<2x1xi1>, vector<2x1xf32>
    %949 = vector.extract_strided_slice %923 {offsets = [0, 73], sizes = [2, 1], strides = [1, 1]} : vector<2x74xf32> to vector<2x1xf32>
    %cst_335 = arith.constant 0.000000e+00 : f32
    %950 = vector.broadcast %cst_335 : f32 to vector<2x1xf32>
    %951 = arith.maximumf %949, %950 : vector<2x1xf32>
    %952 = vector.broadcast %cst_335 : f32 to vector<2x1xf32>
    %953 = arith.subf %949, %952 : vector<2x1xf32>
    %954 = arith.cmpf one, %953, %953 : vector<2x1xf32>
    %955 = vector.broadcast %cst_335 : f32 to vector<2x1xf32>
    %956 = arith.addf %949, %955 : vector<2x1xf32>
    %957 = math.absf %953 : vector<2x1xf32>
    %cst_336 = arith.constant 0.000000e+00 : f32
    %958 = vector.broadcast %cst_336 : f32 to vector<2x1xf32>
    %959 = arith.subf %958, %957 : vector<2x1xf32>
    %960 = math.exp %959 : vector<2x1xf32>
    %961 = math.log1p %960 : vector<2x1xf32>
    %962 = arith.addf %951, %961 : vector<2x1xf32>
    %963 = arith.select %954, %956, %962 : vector<2x1xi1>, vector<2x1xf32>
    %964 = arith.mulf %906, %906 : vector<16x32xf32>
    %cst_337 = arith.constant dense<0.000000e+00> : vector<16xf32>
    %965 = vector.multi_reduction <add>, %964, %cst_337 [1] : vector<16x32xf32> to vector<16xf32>
    %966 = vector.shape_cast %965 : vector<16xf32> to vector<16x1xf32>
    %cst_338 = arith.constant dense<0.000000e+00> : vector<2x16xf32>
    %967 = tpu.matmul %925, %906, %cst_338 {dimension_numbers = #tpu.dot_dimension_numbers<[1], [1], [0], [0], [0, 0, 1, 0], [], []>} : vector<2x32xf32>, vector<16x32xf32>, vector<2x16xf32> -> vector<2x16xf32>
    %968 = arith.mulf %925, %925 : vector<2x32xf32>
    %cst_339 = arith.constant dense<0.000000e+00> : vector<2xf32>
    %969 = vector.multi_reduction <add>, %968, %cst_339 [1] : vector<2x32xf32> to vector<2xf32>
    %970 = vector.shape_cast %969 : vector<2xf32> to vector<2x1xf32>
    %cst_340 = arith.constant dense<0.000000e+00> : vector<2x16xf32>
    %971 = tpu.matmul %970, %966, %cst_340 {dimension_numbers = #tpu.dot_dimension_numbers<[1], [1], [0], [0], [0, 0, 1, 0], [], []>} : vector<2x1xf32>, vector<16x1xf32>, vector<2x16xf32> -> vector<2x16xf32>
    %972 = math.sqrt %971 : vector<2x16xf32>
    %cst_341 = arith.constant 9.99999993E-9 : f32
    %973 = vector.broadcast %cst_341 : f32 to vector<2x16xf32>
    %974 = arith.addf %972, %973 : vector<2x16xf32>
    %975 = tpu.reciprocal %974 {approx = true} : vector<2x16xf32> -> vector<2x16xf32>
    %976 = arith.mulf %967, %975 : vector<2x16xf32>
    %977 = vector.broadcast %948 : vector<2x1xf32> to vector<2x16xf32>
    %978 = arith.mulf %977, %976 : vector<2x16xf32>
    %cst_342 = arith.constant dense<0xFF800000> : vector<2xf32>
    %979 = vector.multi_reduction <maximumf>, %978, %cst_342 [1] : vector<2x16xf32> to vector<2xf32>
    %980 = vector.shape_cast %979 : vector<2xf32> to vector<2x1xf32>
    %981 = vector.broadcast %980 : vector<2x1xf32> to vector<2x16xf32>
    %982 = arith.subf %978, %981 : vector<2x16xf32>
    %983 = math.exp %982 : vector<2x16xf32>
    %cst_343 = arith.constant dense<0.000000e+00> : vector<2xf32>
    %984 = vector.multi_reduction <add>, %983, %cst_343 [1] : vector<2x16xf32> to vector<2xf32>
    %985 = vector.shape_cast %984 : vector<2xf32> to vector<2x1xf32>
    %986 = tpu.reciprocal %985 {approx = true} : vector<2x1xf32> -> vector<2x1xf32>
    %987 = vector.broadcast %986 : vector<2x1xf32> to vector<2x16xf32>
    %988 = arith.mulf %983, %987 : vector<2x16xf32>
    %cst_344 = arith.constant dense<0.000000e+00> : vector<2x16xf32>
    %989 = tpu.matmul %927, %906, %cst_344 {dimension_numbers = #tpu.dot_dimension_numbers<[1], [1], [0], [0], [0, 0, 1, 0], [], []>} : vector<2x32xf32>, vector<16x32xf32>, vector<2x16xf32> -> vector<2x16xf32>
    %990 = arith.mulf %927, %927 : vector<2x32xf32>
    %cst_345 = arith.constant dense<0.000000e+00> : vector<2xf32>
    %991 = vector.multi_reduction <add>, %990, %cst_345 [1] : vector<2x32xf32> to vector<2xf32>
    %992 = vector.shape_cast %991 : vector<2xf32> to vector<2x1xf32>
    %cst_346 = arith.constant dense<0.000000e+00> : vector<2x16xf32>
    %993 = tpu.matmul %992, %966, %cst_346 {dimension_numbers = #tpu.dot_dimension_numbers<[1], [1], [0], [0], [0, 0, 1, 0], [], []>} : vector<2x1xf32>, vector<16x1xf32>, vector<2x16xf32> -> vector<2x16xf32>
    %994 = math.sqrt %993 : vector<2x16xf32>
    %cst_347 = arith.constant 9.99999993E-9 : f32
    %995 = vector.broadcast %cst_347 : f32 to vector<2x16xf32>
    %996 = arith.addf %994, %995 : vector<2x16xf32>
    %997 = tpu.reciprocal %996 {approx = true} : vector<2x16xf32> -> vector<2x16xf32>
    %998 = arith.mulf %989, %997 : vector<2x16xf32>
    %999 = vector.broadcast %963 : vector<2x1xf32> to vector<2x16xf32>
    %1000 = arith.mulf %999, %998 : vector<2x16xf32>
    %cst_348 = arith.constant dense<0xFF800000> : vector<2xf32>
    %1001 = vector.multi_reduction <maximumf>, %1000, %cst_348 [1] : vector<2x16xf32> to vector<2xf32>
    %1002 = vector.shape_cast %1001 : vector<2xf32> to vector<2x1xf32>
    %1003 = vector.broadcast %1002 : vector<2x1xf32> to vector<2x16xf32>
    %1004 = arith.subf %1000, %1003 : vector<2x16xf32>
    %1005 = math.exp %1004 : vector<2x16xf32>
    %cst_349 = arith.constant dense<0.000000e+00> : vector<2xf32>
    %1006 = vector.multi_reduction <add>, %1005, %cst_349 [1] : vector<2x16xf32> to vector<2xf32>
    %1007 = vector.shape_cast %1006 : vector<2xf32> to vector<2x1xf32>
    %1008 = tpu.reciprocal %1007 {approx = true} : vector<2x1xf32> -> vector<2x1xf32>
    %1009 = vector.broadcast %1008 : vector<2x1xf32> to vector<2x16xf32>
    %1010 = arith.mulf %1005, %1009 : vector<2x16xf32>
    %cst_350 = arith.constant dense<0.000000e+00> : vector<32xf32>
    %1011 = vector.multi_reduction <add>, %906, %cst_350 [0] : vector<16x32xf32> to vector<32xf32>
    %1012 = vector.shape_cast %1011 : vector<32xf32> to vector<1x32xf32>
    %cst_351 = arith.constant 1.600000e+01 : f32
    %1013 = vector.broadcast %cst_351 : f32 to vector<1x32xf32>
    %1014 = arith.divf %1012, %1013 : vector<1x32xf32>
    %1015 = vector.broadcast %1014 : vector<1x32xf32> to vector<16x32xf32>
    %1016 = arith.subf %906, %1015 : vector<16x32xf32>
    %1017 = arith.mulf %1016, %1016 : vector<16x32xf32>
    %cst_352 = arith.constant dense<0.000000e+00> : vector<32xf32>
    %1018 = vector.multi_reduction <add>, %1017, %cst_352 [0] : vector<16x32xf32> to vector<32xf32>
    %1019 = vector.shape_cast %1018 : vector<32xf32> to vector<1x32xf32>
    %cst_353 = arith.constant 1.600000e+01 : f32
    %1020 = vector.broadcast %cst_353 : f32 to vector<1x32xf32>
    %1021 = arith.divf %1019, %1020 : vector<1x32xf32>
    %1022 = vector.broadcast %1014 : vector<1x32xf32> to vector<16x32xf32>
    %1023 = arith.subf %906, %1022 : vector<16x32xf32>
    %cst_354 = arith.constant 9.99999974E-6 : f32
    %1024 = vector.broadcast %cst_354 : f32 to vector<1x32xf32>
    %1025 = arith.addf %1021, %1024 : vector<1x32xf32>
    %1026 = math.rsqrt %1025 : vector<1x32xf32>
    %1027 = vector.broadcast %1026 : vector<1x32xf32> to vector<16x32xf32>
    %1028 = arith.mulf %1023, %1027 : vector<16x32xf32>
    %c6 = arith.constant 6 : index
    %c0_355 = arith.constant 0 : index
    %c0_356 = arith.constant 0 : index
    %1029 = vector.load %arg9[%c6, %c0_355, %c0_356] : memref<8x2x8xf32, #tpu.memory_space<vmem>>, vector<1x2x8xf32>
    %1030 = vector.shape_cast %1029 : vector<1x2x8xf32> to vector<2x8xf32>
    %1031 = vector.shape_cast %933 : vector<2x8xf32> to vector<1x2x8xf32>
    tpu.vector_store %arg9[%c6, %c0_355, %c0_356], %1031 {strides = array<i32>} : memref<8x2x8xf32, #tpu.memory_space<vmem>>, vector<1x2x8xf32>,
    %c0_357 = arith.constant 0 : index
    %c0_358 = arith.constant 0 : index
    %c0_359 = arith.constant 0 : index
    %1032 = vector.load %arg0[%c0_357, %c0_358, %c0_359] : memref<4x2x64xf32, #tpu.memory_space<vmem>>, vector<1x2x64xf32>
    %1033 = vector.shape_cast %1032 : vector<1x2x64xf32> to vector<2x64xf32>
    %c0_360 = arith.constant 0 : index
    %c0_361 = arith.constant 0 : index
    %1034 = vector.load %arg5[%c0_360, %c0_361] : memref<32x64xf32, #tpu.memory_space<vmem>>, vector<32x64xf32>
    %cst_362 = arith.constant dense<0.000000e+00> : vector<2x64xf32>
    %1035 = tpu.matmul %9, %1034, %cst_362 {dimension_numbers = #tpu.dot_dimension_numbers<[1], [0], [0], [1], [0, 0, 1, 1], [], []>} : vector<2x32xf32>, vector<32x64xf32>, vector<2x64xf32> -> vector<2x64xf32>
    %c0_363 = arith.constant 0 : index
    %c0_364 = arith.constant 0 : index
    %1036 = vector.load %arg6[%c0_363, %c0_364] : memref<1x64xf32, #tpu.memory_space<vmem>>, vector<1x64xf32>
    %1037 = vector.broadcast %1036 : vector<1x64xf32> to vector<2x64xf32>
    %1038 = arith.addf %1035, %1037 : vector<2x64xf32>
    %1039 = vector.extract_strided_slice %1038 {offsets = [0, 0], sizes = [2, 32], strides = [1, 1]} : vector<2x64xf32> to vector<2x32xf32>
    %1040 = arith.negf %1039 : vector<2x32xf32>
    %1041 = math.exp %1040 : vector<2x32xf32>
    %cst_365 = arith.constant 1.000000e+00 : f32
    %1042 = vector.broadcast %cst_365 : f32 to vector<2x32xf32>
    %1043 = arith.addf %1042, %1041 : vector<2x32xf32>
    %1044 = arith.divf %1042, %1043 : vector<2x32xf32>
    %1045 = vector.extract_strided_slice %1038 {offsets = [0, 32], sizes = [2, 32], strides = [1, 1]} : vector<2x64xf32> to vector<2x32xf32>
    %1046 = math.tanh %1045 : vector<2x32xf32>
    %cst_366 = arith.constant dense<0.000000e+00> : vector<16x32xf32>
    %1047 = tpu.matmul %988, %1044, %cst_366 {dimension_numbers = #tpu.dot_dimension_numbers<[0], [0], [1], [1], [0, 1, 1, 1], [], []>} : vector<2x16xf32>, vector<2x32xf32>, vector<16x32xf32> -> vector<16x32xf32>
    %cst_367 = arith.constant dense<0.000000e+00> : vector<16x32xf32>
    %1048 = tpu.matmul %988, %1046, %cst_367 {dimension_numbers = #tpu.dot_dimension_numbers<[0], [0], [1], [1], [0, 1, 1, 1], [], []>} : vector<2x16xf32>, vector<2x32xf32>, vector<16x32xf32> -> vector<16x32xf32>
    %cst_368 = arith.constant 1.000000e+00 : f32
    %1049 = vector.broadcast %cst_368 : f32 to vector<16x32xf32>
    %1050 = arith.subf %1049, %1047 : vector<16x32xf32>
    %1051 = arith.mulf %1028, %1050 : vector<16x32xf32>
    %1052 = arith.addf %1051, %1048 : vector<16x32xf32>
    %cst_369 = arith.constant dense<0.000000e+00> : vector<2x32xf32>
    %1053 = tpu.matmul %1010, %1052, %cst_369 {dimension_numbers = #tpu.dot_dimension_numbers<[1], [0], [0], [1], [0, 0, 1, 1], [], []>} : vector<2x16xf32>, vector<16x32xf32>, vector<2x32xf32> -> vector<2x32xf32>
    %c0_370 = arith.constant 0 : index
    %c0_371 = arith.constant 0 : index
    %1054 = vector.load %arg3[%c0_370, %c0_371] : memref<96x32xf32, #tpu.memory_space<vmem>>, vector<96x32xf32>
    %1055 = vector.extract_strided_slice %1054 {offsets = [0, 0], sizes = [64, 32], strides = [1, 1]} : vector<96x32xf32> to vector<64x32xf32>
    %cst_372 = arith.constant dense<0.000000e+00> : vector<2x32xf32>
    %1056 = tpu.matmul %1033, %1055, %cst_372 {dimension_numbers = #tpu.dot_dimension_numbers<[1], [0], [0], [1], [0, 0, 1, 1], [], []>} : vector<2x64xf32>, vector<64x32xf32>, vector<2x32xf32> -> vector<2x32xf32>
    %1057 = vector.extract_strided_slice %1054 {offsets = [64, 0], sizes = [32, 32], strides = [1, 1]} : vector<96x32xf32> to vector<32x32xf32>
    %cst_373 = arith.constant dense<0.000000e+00> : vector<2x32xf32>
    %1058 = tpu.matmul %1053, %1057, %cst_373 {dimension_numbers = #tpu.dot_dimension_numbers<[1], [0], [0], [1], [0, 0, 1, 1], [], []>} : vector<2x32xf32>, vector<32x32xf32>, vector<2x32xf32> -> vector<2x32xf32>
    %1059 = arith.addf %1056, %1058 : vector<2x32xf32>
    %c0_374 = arith.constant 0 : index
    %c0_375 = arith.constant 0 : index
    %1060 = vector.load %arg4[%c0_374, %c0_375] : memref<1x32xf32, #tpu.memory_space<vmem>>, vector<1x32xf32>
    %1061 = vector.broadcast %1060 : vector<1x32xf32> to vector<2x32xf32>
    %1062 = arith.addf %1059, %1061 : vector<2x32xf32>
    %cst_376 = arith.constant 0.000000e+00 : f32
    %1063 = vector.broadcast %cst_376 : f32 to vector<2x32xf32>
    %1064 = arith.maximumf %1062, %1063 : vector<2x32xf32>
    %c0_377 = arith.constant 0 : index
    %c0_378 = arith.constant 0 : index
    %1065 = vector.load %arg7[%c0_377, %c0_378] : memref<32x74xf32, #tpu.memory_space<vmem>>, vector<32x74xf32>
    %cst_379 = arith.constant dense<0.000000e+00> : vector<2x74xf32>
    %1066 = tpu.matmul %1064, %1065, %cst_379 {dimension_numbers = #tpu.dot_dimension_numbers<[1], [0], [0], [1], [0, 0, 1, 1], [], []>} : vector<2x32xf32>, vector<32x74xf32>, vector<2x74xf32> -> vector<2x74xf32>
    %c0_380 = arith.constant 0 : index
    %c0_381 = arith.constant 0 : index
    %1067 = vector.load %arg8[%c0_380, %c0_381] : memref<1x74xf32, #tpu.memory_space<vmem>>, vector<1x74xf32>
    %1068 = vector.broadcast %1067 : vector<1x74xf32> to vector<2x74xf32>
    %1069 = arith.addf %1066, %1068 : vector<2x74xf32>
    %1070 = vector.extract_strided_slice %1069 {offsets = [0, 64], sizes = [2, 8], strides = [1, 1]} : vector<2x74xf32> to vector<2x8xf32>
    %1071 = arith.negf %1070 : vector<2x8xf32>
    %1072 = math.exp %1071 : vector<2x8xf32>
    %cst_382 = arith.constant 1.000000e+00 : f32
    %1073 = vector.broadcast %cst_382 : f32 to vector<2x8xf32>
    %1074 = arith.addf %1073, %1072 : vector<2x8xf32>
    %1075 = arith.divf %1073, %1074 : vector<2x8xf32>
    %c7 = arith.constant 7 : index
    %c0_383 = arith.constant 0 : index
    %c0_384 = arith.constant 0 : index
    %1076 = vector.load %arg9[%c7, %c0_383, %c0_384] : memref<8x2x8xf32, #tpu.memory_space<vmem>>, vector<1x2x8xf32>
    %1077 = vector.shape_cast %1076 : vector<1x2x8xf32> to vector<2x8xf32>
    %1078 = vector.shape_cast %1075 : vector<2x8xf32> to vector<1x2x8xf32>
    tpu.vector_store %arg9[%c7, %c0_383, %c0_384], %1078 {strides = array<i32>} : memref<8x2x8xf32, #tpu.memory_space<vmem>>, vector<1x2x8xf32>,
    return
  }
}

</mosaic_0001>

<llo_original>
// kernel: bidirectional_ntm_forward.1
$region0: #{bidirectional_ntm_forward.1}
  #allocation0 [shape = 'u32[]', space=smem, size = 0x4, offset = 0x4, fixed_abs, tag = 'smem constant byte address 0x4 - core index']
  #allocation1 [shape = 'u32[144,128]{1,0:T(1,128)}', space=vmem, size = 0x12000, scoped, tag = 'internal scratch']
  %s0 = inlined_call_operand.vmem [shape: f32[4,2,64], index: 0, kind: input, shape index: {}]
  %s1 = inlined_call_operand.vmem [shape: f32[16,32], index: 1, kind: input, shape index: {}]
  %s2 = inlined_call_operand.vmem [shape: f32[2,2,32], index: 2, kind: input, shape index: {}]
  %s3 = inlined_call_operand.vmem [shape: f32[96,32], index: 3, kind: input, shape index: {}]
  %s4 = inlined_call_operand.vmem [shape: f32[1,32], index: 4, kind: input, shape index: {}]
  %s5 = inlined_call_operand.vmem [shape: f32[32,64], index: 5, kind: input, shape index: {}]
  %s6 = inlined_call_operand.vmem [shape: f32[1,64], index: 6, kind: input, shape index: {}]
  %s7 = inlined_call_operand.vmem [shape: f32[32,74], index: 7, kind: input, shape index: {}]
  %s8 = inlined_call_operand.vmem [shape: f32[1,74], index: 8, kind: input, shape index: {}]
  %s9 = inlined_call_operand.hbm [shape: f32[8,2,8], index: 9, kind: output, shape index: {}]
  %s10 = sld [smem:[#allocation0]]
  $region46: #{bidirectional_ntm_forward.1} parent=0
    _
  %s12 = ssub.s32 1, %s10
  %s13 = scalar_select 0, %s12, %s10
  $region1: #{bidirectional_ntm_forward.1} parent=0
    #allocation2 [shape = 'u8[8192]{0}', space=vmem, size = 0x2000, scoped, tag = 'output window, operand 0, single buffered']
    #allocation3 [shape = 's32[1]{0}', space=sflag, size = 0x4, scoped, tag = 'scoped memory for bidirectional_ntm_forward.1']
    %14 = vsyncpa [#allocation3], 0
    // Predicated region
    $region2: #{bidirectional_ntm_forward.1} parent=1 // pred_check
      _
    $region3: #{bidirectional_ntm_forward.1} parent=1 // pred_check_branch
      %16 = sbr.rel (0) target = $region5
    $region4: #{bidirectional_ntm_forward.1} parent=1 // pred_region
      _
    $region5: #{bidirectional_ntm_forward.1} parent=1 // pred_fallthru
      _
    // Predicated region
    $region6: #{bidirectional_ntm_forward.1} parent=1 // pred_check
      _
    $region7: #{bidirectional_ntm_forward.1} parent=1 // pred_check_branch
      %18 = sbr.rel (0) target = $region9
    $region8: #{bidirectional_ntm_forward.1} parent=1 // pred_region
      _
    $region9: #{bidirectional_ntm_forward.1} parent=1 // pred_fallthru
      _
    // Predicated region
    $region10: #{bidirectional_ntm_forward.1} parent=1 // pred_check
      _
    $region11: #{bidirectional_ntm_forward.1} parent=1 // pred_check_branch
      %20 = sbr.rel (0) target = $region13
    $region12: #{bidirectional_ntm_forward.1} parent=1 // pred_region
      _
    $region13: #{bidirectional_ntm_forward.1} parent=1 // pred_fallthru
      _
    // Predicated region
    $region14: #{bidirectional_ntm_forward.1} parent=1 // pred_check
      _
    $region15: #{bidirectional_ntm_forward.1} parent=1 // pred_check_branch
      %22 = sbr.rel (0) target = $region17
    $region16: #{bidirectional_ntm_forward.1} parent=1 // pred_region
      _
    $region17: #{bidirectional_ntm_forward.1} parent=1 // pred_fallthru
      _
    // Predicated region
    $region18: #{bidirectional_ntm_forward.1} parent=1 // pred_check
      _
    $region19: #{bidirectional_ntm_forward.1} parent=1 // pred_check_branch
      %24 = sbr.rel (0) target = $region21
    $region20: #{bidirectional_ntm_forward.1} parent=1 // pred_region
      _
    $region21: #{bidirectional_ntm_forward.1} parent=1 // pred_fallthru
      _
    // Predicated region
    $region22: #{bidirectional_ntm_forward.1} parent=1 // pred_check
      _
    $region23: #{bidirectional_ntm_forward.1} parent=1 // pred_check_branch
      %26 = sbr.rel (0) target = $region25
    $region24: #{bidirectional_ntm_forward.1} parent=1 // pred_region
      _
    $region25: #{bidirectional_ntm_forward.1} parent=1 // pred_fallthru
      _
    // Predicated region
    $region26: #{bidirectional_ntm_forward.1} parent=1 // pred_check
      _
    $region27: #{bidirectional_ntm_forward.1} parent=1 // pred_check_branch
      %28 = sbr.rel (0) target = $region29
    $region28: #{bidirectional_ntm_forward.1} parent=1 // pred_region
      _
    $region29: #{bidirectional_ntm_forward.1} parent=1 // pred_fallthru
      _
    // Predicated region
    $region30: #{bidirectional_ntm_forward.1} parent=1 // pred_check
      _
    $region31: #{bidirectional_ntm_forward.1} parent=1 // pred_check_branch
      %30 = sbr.rel (0) target = $region33
    $region32: #{bidirectional_ntm_forward.1} parent=1 // pred_region
      _
    $region33: #{bidirectional_ntm_forward.1} parent=1 // pred_fallthru
      _
    // Predicated region
    $region34: #{bidirectional_ntm_forward.1} parent=1 // pred_check
      _
    $region35: #{bidirectional_ntm_forward.1} parent=1 // pred_check_branch
      %32 = sbr.rel (0) target = $region37
    $region36: #{bidirectional_ntm_forward.1} parent=1 // pred_region
      _
    $region37: #{bidirectional_ntm_forward.1} parent=1 // pred_fallthru
      _
    %v33 = vlaneseq
    %v34 = vshrl.u32 %v33, 7
    %v35 = vlaneseq
    %v36 = vand.u32 %v35, 127
    %vm37 = vcmp.eq.s32.totalorder %v34, %v36
    %v38 = vsel %vm37, 1, 0
    %v39 = vcvt.s32.f32 %v38
    %v40 = vld [vmem:[%s1] sm:$0xff]
    %v41 = vld [vmem:[%s1 + $0x8] sm:$0xff]
    %v42 = vld [vmem:[%s2] sm:$0x3]
    %s43 = scalar_lea.vmem %s2, 2
    %v44 = vld [vmem:[%s43] sm:$0x3]
    %v45 = vld [vmem:[%s0] sm:$0x3]
    %v46 = vld [vmem:[%s5] sm:$0xff]
    %v47 = vld [vmem:[%s5 + $0x8] sm:$0xff]
    %v48 = vld [vmem:[%s5 + $0x10] sm:$0xff]
    %v49 = vld [vmem:[%s5 + $0x18] sm:$0xff]
    %v50 = vld [vmem:[%s6] sm:$0x1]
    %v52 = vlaneseq
    %v53 = vshrl.u32 %v52, 7
    %v54 = vsub.s32 0, %v53
    %v55 = vrot.slane %v50, %v54
    %vm57 = vcmask 261120
    %v59 = vsel %vm57, %v42, 0
    %61 = vmatprep.subr.mxu0 0.0
    %62 = vmatpush1.msra.mxu0 0.0
    %63 = vmatprep.subr.mxu0 0.0
    %64 = vmatpush1.msra.mxu0 0.0
    %65 = vmatprep.subr.mxu0 0.0
    %66 = vmatpush1.msra.mxu0 0.0
    %67 = vmatprep.subr.mxu0 0.0
    %68 = vmatpush1.msra.mxu0 0.0
    %69 = vmatprep.subr.mxu0 0.0
    %70 = vmatpush1.msra.mxu0 0.0
    %71 = vmatprep.subr.mxu0 0.0
    %72 = vmatpush1.msra.mxu0 0.0
    %73 = vmatprep.subr.mxu0 0.0
    %74 = vmatpush1.msra.mxu0 0.0
    %75 = vmatprep.subr.mxu0 0.0
    %76 = vmatpush1.msra.mxu0 0.0
    %77 = vmatprep.subr.mxu0 0.0
    %78 = vmatpush1.msra.mxu0 0.0
    %79 = vmatprep.subr.mxu0 0.0
    %80 = vmatpush1.msra.mxu0 0.0
    %81 = vmatprep.subr.mxu0 0.0
    %82 = vmatpush1.msra.mxu0 0.0
    %83 = vmatprep.subr.mxu0 0.0
    %84 = vmatpush1.msra.mxu0 0.0
    %85 = vmatprep.subr.mxu0 0.0
    %86 = vmatpush1.msra.mxu0 %v49
    %87 = vmatprep.subr.mxu0 0.0
    %88 = vmatpush1.msra.mxu0 %v48
    %89 = vmatprep.subr.mxu0 0.0
    %90 = vmatpush1.msra.mxu0 %v47
    %91 = vmatprep.subr.mxu0 0.0
    %92 = vmatpush1.msra.mxu0 %v46
    %93 = vmatprep.subr.mxu0 0.0
    %94 = vmatpush2.msra.mxu0 0.0
    %95 = vmatprep.subr.mxu0 0.0
    %96 = vmatpush2.msra.mxu0 0.0
    %97 = vmatprep.subr.mxu0 0.0
    %98 = vmatpush2.msra.mxu0 0.0
    %99 = vmatprep.subr.mxu0 0.0
    %100 = vmatpush2.msra.mxu0 0.0
    %101 = vmatprep.subr.mxu0 0.0
    %102 = vmatpush2.msra.mxu0 0.0
    %103 = vmatprep.subr.mxu0 0.0
    %104 = vmatpush2.msra.mxu0 0.0
    %105 = vmatprep.subr.mxu0 0.0
    %106 = vmatpush2.msra.mxu0 0.0
    %107 = vmatprep.subr.mxu0 0.0
    %108 = vmatpush2.msra.mxu0 0.0
    %109 = vmatprep.subr.mxu0 0.0
    %110 = vmatpush2.msra.mxu0 0.0
    %111 = vmatprep.subr.mxu0 0.0
    %112 = vmatpush2.msra.mxu0 0.0
    %113 = vmatprep.subr.mxu0 0.0
    %114 = vmatpush2.msra.mxu0 0.0
    %115 = vmatprep.subr.mxu0 0.0
    %116 = vmatpush2.msra.mxu0 0.0
    %117 = vmatprep.subr.mxu0 0.0
    %118 = vmatpush2.msra.mxu0 0.0
    %119 = vmatprep.subr.mxu0 0.0
    %120 = vmatpush2.msra.mxu0 0.0
    %121 = vmatprep.subr.mxu0 0.0
    %122 = vmatpush2.msra.mxu0 0.0
    %123 = vmatprep.subr.mxu0 0.0
    %124 = vmatpush2.msra.mxu0 0.0
    %125 = vmatprep.mubr.f32.mxu0 0.0
    %126 = vmatmul.mubr.f32.gmra.mxu0 %v59
    %v127 = vpop.f32.mrf.mxu0
    %v128 = vadd.f32 %v55, %v127
    %v129 = vpop.f32.mrf.mxu0
    %130 = vdwg.mxu0
    %v131 = vxor.u32 %v128, 2147483648
    %v132 = vmul.f32 %v131, 1.442695
    %v133 = vpow.pop %v132
    %v134 = vadd.f32 %v133, 1.0
    %v135 = vrcp.pop %v134
    %v136 = vmul.f32 1.0, %v135
    %v137 = vtanh.pop %v128
    %138 = vxpose.xlu0.b32.start [1/16] %v39, 128
    %139 = vxpose.xlu0.b32.cont [2/16] 0.0, 128
    %140 = vxpose.xlu0.b32.cont [3/16] 0.0, 128
    %141 = vxpose.xlu0.b32.cont [4/16] 0.0, 128
    %142 = vxpose.xlu0.b32.cont [5/16] 0.0, 128
    %143 = vxpose.xlu0.b32.cont [6/16] 0.0, 128
    %144 = vxpose.xlu0.b32.cont [7/16] 0.0, 128
    %145 = vxpose.xlu0.b32.cont [8/16] 0.0, 128
    %146 = vxpose.xlu0.b32.cont [9/16] 0.0, 128
    %147 = vxpose.xlu0.b32.cont [10/16] 0.0, 128
    %148 = vxpose.xlu0.b32.cont [11/16] 0.0, 128
    %149 = vxpose.xlu0.b32.cont [12/16] 0.0, 128
    %150 = vxpose.xlu0.b32.cont [13/16] 0.0, 128
    %151 = vxpose.xlu0.b32.cont [14/16] 0.0, 128
    %152 = vxpose.xlu0.b32.cont [15/16] 0.0, 128
    %153 = vxpose.xlu0.b32.end [16/16] 0.0, 128
    %v154 = vpop.trf.xlu0
    %v155 = vpop.trf.xlu0
    %v156 = vpop.trf.xlu0
    %v157 = vpop.trf.xlu0
    %v158 = vpop.trf.xlu0
    %v159 = vpop.trf.xlu0
    %v160 = vpop.trf.xlu0
    %v161 = vpop.trf.xlu0
    %v162 = vpop.trf.xlu0
    %v163 = vpop.trf.xlu0
    %v164 = vpop.trf.xlu0
    %v165 = vpop.trf.xlu0
    %v166 = vpop.trf.xlu0
    %v167 = vpop.trf.xlu0
    %v168 = vpop.trf.xlu0
    %v169 = vpop.trf.xlu0
    %vm170 = vcmask 15360
    %v172 = vsel %vm170, %v154, 0
    %v175 = vsel %vm170, %v155, 0
    %vm177 = vcmask 1041408
    %v179 = vsel %vm177, %v136, 0
    %181 = vmatprep.subr.mxu0 0.0
    %182 = vmatpush1.msra.mxu0 0.0
    %183 = vmatprep.subr.mxu0 0.0
    %184 = vmatpush1.msra.mxu0 0.0
    %185 = vmatprep.subr.mxu0 0.0
    %186 = vmatpush1.msra.mxu0 0.0
    %187 = vmatprep.subr.mxu0 0.0
    %188 = vmatpush1.msra.mxu0 0.0
    %189 = vmatprep.subr.mxu0 0.0
    %190 = vmatpush1.msra.mxu0 0.0
    %191 = vmatprep.subr.mxu0 0.0
    %192 = vmatpush1.msra.mxu0 0.0
    %193 = vmatprep.subr.mxu0 0.0
    %194 = vmatpush1.msra.mxu0 0.0
    %195 = vmatprep.subr.mxu0 0.0
    %196 = vmatpush1.msra.mxu0 0.0
    %197 = vmatprep.subr.mxu0 0.0
    %198 = vmatpush1.msra.mxu0 0.0
    %199 = vmatprep.subr.mxu0 0.0
    %200 = vmatpush1.msra.mxu0 0.0
    %201 = vmatprep.subr.mxu0 0.0
    %202 = vmatpush1.msra.mxu0 0.0
    %203 = vmatprep.subr.mxu0 0.0
    %204 = vmatpush1.msra.mxu0 0.0
    %205 = vmatprep.subr.mxu0 0.0
    %206 = vmatpush1.msra.mxu0 0.0
    %207 = vmatprep.subr.mxu0 0.0
    %208 = vmatpush1.msra.mxu0 0.0
    %209 = vmatprep.subr.mxu0 0.0
    %210 = vmatpush1.msra.mxu0 0.0
    %211 = vmatprep.subr.mxu0 0.0
    %212 = vmatpush1.msra.mxu0 %v179
    %213 = vmatprep.subr.mxu0 0.0
    %214 = vmatpush2.msra.mxu0 0.0
    %215 = vmatprep.subr.mxu0 0.0
    %216 = vmatpush2.msra.mxu0 0.0
    %217 = vmatprep.subr.mxu0 0.0
    %218 = vmatpush2.msra.mxu0 0.0
    %219 = vmatprep.subr.mxu0 0.0
    %220 = vmatpush2.msra.mxu0 0.0
    %221 = vmatprep.subr.mxu0 0.0
    %222 = vmatpush2.msra.mxu0 0.0
    %223 = vmatprep.subr.mxu0 0.0
    %224 = vmatpush2.msra.mxu0 0.0
    %225 = vmatprep.subr.mxu0 0.0
    %226 = vmatpush2.msra.mxu0 0.0
    %227 = vmatprep.subr.mxu0 0.0
    %228 = vmatpush2.msra.mxu0 0.0
    %229 = vmatprep.subr.mxu0 0.0
    %230 = vmatpush2.msra.mxu0 0.0
    %231 = vmatprep.subr.mxu0 0.0
    %232 = vmatpush2.msra.mxu0 0.0
    %233 = vmatprep.subr.mxu0 0.0
    %234 = vmatpush2.msra.mxu0 0.0
    %235 = vmatprep.subr.mxu0 0.0
    %236 = vmatpush2.msra.mxu0 0.0
    %237 = vmatprep.subr.mxu0 0.0
    %238 = vmatpush2.msra.mxu0 0.0
    %239 = vmatprep.subr.mxu0 0.0
    %240 = vmatpush2.msra.mxu0 0.0
    %241 = vmatprep.subr.mxu0 0.0
    %242 = vmatpush2.msra.mxu0 0.0
    %243 = vmatprep.subr.mxu0 0.0
    %244 = vmatpush2.msra.mxu0 0.0
    %245 = vmatprep.mubr.f32.mxu0 0.0
    %246 = vmatmul.mubr.f32.gmra.mxu0 %v172
    %v247 = vpop.f32.mrf.mxu0
    %v248 = vadd.f32 0.0, %v247
    %v249 = vpop.f32.mrf.mxu0
    %250 = vmatprep.mubr.f32.mxu0 0.0
    %251 = vmatmul.mubr.f32.gmra.mxu0 %v175
    %v252 = vpop.f32.mrf.mxu0
    %v253 = vadd.f32 0.0, %v252
    %v254 = vpop.f32.mrf.mxu0
    %255 = vdwg.mxu0
    %257 = vrot.lane.b32.xlu0 %v137, 96
    %v258 = vpop.permute.xlu0 %257
    %v259 = vsel %vm177, %v258, 0
    %261 = vmatprep.subr.mxu0 0.0
    %262 = vmatpush1.msra.mxu0 0.0
    %263 = vmatprep.subr.mxu0 0.0
    %264 = vmatpush1.msra.mxu0 0.0
    %265 = vmatprep.subr.mxu0 0.0
    %266 = vmatpush1.msra.mxu0 0.0
    %267 = vmatprep.subr.mxu0 0.0
    %268 = vmatpush1.msra.mxu0 0.0
    %269 = vmatprep.subr.mxu0 0.0
    %270 = vmatpush1.msra.mxu0 0.0
    %271 = vmatprep.subr.mxu0 0.0
    %272 = vmatpush1.msra.mxu0 0.0
    %273 = vmatprep.subr.mxu0 0.0
    %274 = vmatpush1.msra.mxu0 0.0
    %275 = vmatprep.subr.mxu0 0.0
    %276 = vmatpush1.msra.mxu0 0.0
    %277 = vmatprep.subr.mxu0 0.0
    %278 = vmatpush1.msra.mxu0 0.0
    %279 = vmatprep.subr.mxu0 0.0
    %280 = vmatpush1.msra.mxu0 0.0
    %281 = vmatprep.subr.mxu0 0.0
    %282 = vmatpush1.msra.mxu0 0.0
    %283 = vmatprep.subr.mxu0 0.0
    %284 = vmatpush1.msra.mxu0 0.0
    %285 = vmatprep.subr.mxu0 0.0
    %286 = vmatpush1.msra.mxu0 0.0
    %287 = vmatprep.subr.mxu0 0.0
    %288 = vmatpush1.msra.mxu0 0.0
    %289 = vmatprep.subr.mxu0 0.0
    %290 = vmatpush1.msra.mxu0 0.0
    %291 = vmatprep.subr.mxu0 0.0
    %292 = vmatpush1.msra.mxu0 %v259
    %293 = vmatprep.subr.mxu0 0.0
    %294 = vmatpush2.msra.mxu0 0.0
    %295 = vmatprep.subr.mxu0 0.0
    %296 = vmatpush2.msra.mxu0 0.0
    %297 = vmatprep.subr.mxu0 0.0
    %298 = vmatpush2.msra.mxu0 0.0
    %299 = vmatprep.subr.mxu0 0.0
    %300 = vmatpush2.msra.mxu0 0.0
    %301 = vmatprep.subr.mxu0 0.0
    %302 = vmatpush2.msra.mxu0 0.0
    %303 = vmatprep.subr.mxu0 0.0
    %304 = vmatpush2.msra.mxu0 0.0
    %305 = vmatprep.subr.mxu0 0.0
    %306 = vmatpush2.msra.mxu0 0.0
    %307 = vmatprep.subr.mxu0 0.0
    %308 = vmatpush2.msra.mxu0 0.0
    %309 = vmatprep.subr.mxu0 0.0
    %310 = vmatpush2.msra.mxu0 0.0
    %311 = vmatprep.subr.mxu0 0.0
    %312 = vmatpush2.msra.mxu0 0.0
    %313 = vmatprep.subr.mxu0 0.0
    %314 = vmatpush2.msra.mxu0 0.0
    %315 = vmatprep.subr.mxu0 0.0
    %316 = vmatpush2.msra.mxu0 0.0
    %317 = vmatprep.subr.mxu0 0.0
    %318 = vmatpush2.msra.mxu0 0.0
    %319 = vmatprep.subr.mxu0 0.0
    %320 = vmatpush2.msra.mxu0 0.0
    %321 = vmatprep.subr.mxu0 0.0
    %322 = vmatpush2.msra.mxu0 0.0
    %323 = vmatprep.subr.mxu0 0.0
    %324 = vmatpush2.msra.mxu0 0.0
    %325 = vmatprep.mubr.f32.mxu0 0.0
    %326 = vmatmul.mubr.f32.gmra.mxu0 %v172
    %v327 = vpop.f32.mrf.mxu0
    %v328 = vadd.f32 0.0, %v327
    %v329 = vpop.f32.mrf.mxu0
    %330 = vmatprep.mubr.f32.mxu0 0.0
    %331 = vmatmul.mubr.f32.gmra.mxu0 %v175
    %v332 = vpop.f32.mrf.mxu0
    %v333 = vadd.f32 0.0, %v332
    %v334 = vpop.f32.mrf.mxu0
    %335 = vdwg.mxu0
    %v336 = vsub.f32 1.0, %v248
    %v337 = vsub.f32 1.0, %v253
    %v338 = vmul.f32 %v40, %v336
    %v339 = vmul.f32 %v41, %v337
    %v340 = vadd.f32 %v338, %v328
    %v341 = vadd.f32 %v339, %v333
    %vm342 = vcmask 130048
    %v344 = vsel %vm342, %v39, 0
    %346 = vmatprep.subr.mxu0 0.0
    %347 = vmatpush1.msra.mxu0 0.0
    %348 = vmatprep.subr.mxu0 0.0
    %349 = vmatpush1.msra.mxu0 0.0
    %350 = vmatprep.subr.mxu0 0.0
    %351 = vmatpush1.msra.mxu0 0.0
    %352 = vmatprep.subr.mxu0 0.0
    %353 = vmatpush1.msra.mxu0 0.0
    %354 = vmatprep.subr.mxu0 0.0
    %355 = vmatpush1.msra.mxu0 0.0
    %356 = vmatprep.subr.mxu0 0.0
    %357 = vmatpush1.msra.mxu0 0.0
    %358 = vmatprep.subr.mxu0 0.0
    %359 = vmatpush1.msra.mxu0 0.0
    %360 = vmatprep.subr.mxu0 0.0
    %361 = vmatpush1.msra.mxu0 0.0
    %362 = vmatprep.subr.mxu0 0.0
    %363 = vmatpush1.msra.mxu0 0.0
    %364 = vmatprep.subr.mxu0 0.0
    %365 = vmatpush1.msra.mxu0 0.0
    %366 = vmatprep.subr.mxu0 0.0
    %367 = vmatpush1.msra.mxu0 0.0
    %368 = vmatprep.subr.mxu0 0.0
    %369 = vmatpush1.msra.mxu0 0.0
    %370 = vmatprep.subr.mxu0 0.0
    %371 = vmatpush1.msra.mxu0 0.0
    %372 = vmatprep.subr.mxu0 0.0
    %373 = vmatpush1.msra.mxu0 0.0
    %374 = vmatprep.subr.mxu0 0.0
    %375 = vmatpush1.msra.mxu0 %v341
    %376 = vmatprep.subr.mxu0 0.0
    %377 = vmatpush1.msra.mxu0 %v340
    %378 = vmatprep.subr.mxu0 0.0
    %379 = vmatpush2.msra.mxu0 0.0
    %380 = vmatprep.subr.mxu0 0.0
    %381 = vmatpush2.msra.mxu0 0.0
    %382 = vmatprep.subr.mxu0 0.0
    %383 = vmatpush2.msra.mxu0 0.0
    %384 = vmatprep.subr.mxu0 0.0
    %385 = vmatpush2.msra.mxu0 0.0
    %386 = vmatprep.subr.mxu0 0.0
    %387 = vmatpush2.msra.mxu0 0.0
    %388 = vmatprep.subr.mxu0 0.0
    %389 = vmatpush2.msra.mxu0 0.0
    %390 = vmatprep.subr.mxu0 0.0
    %391 = vmatpush2.msra.mxu0 0.0
    %392 = vmatprep.subr.mxu0 0.0
    %393 = vmatpush2.msra.mxu0 0.0
    %394 = vmatprep.subr.mxu0 0.0
    %395 = vmatpush2.msra.mxu0 0.0
    %396 = vmatprep.subr.mxu0 0.0
    %397 = vmatpush2.msra.mxu0 0.0
    %398 = vmatprep.subr.mxu0 0.0
    %399 = vmatpush2.msra.mxu0 0.0
    %400 = vmatprep.subr.mxu0 0.0
    %401 = vmatpush2.msra.mxu0 0.0
    %402 = vmatprep.subr.mxu0 0.0
    %403 = vmatpush2.msra.mxu0 0.0
    %404 = vmatprep.subr.mxu0 0.0
    %405 = vmatpush2.msra.mxu0 0.0
    %406 = vmatprep.subr.mxu0 0.0
    %407 = vmatpush2.msra.mxu0 0.0
    %408 = vmatprep.subr.mxu0 0.0
    %409 = vmatpush2.msra.mxu0 0.0
    %410 = vmatprep.mubr.f32.mxu0 0.0
    %411 = vmatmul.mubr.f32.gmra.mxu0 %v344
    %v412 = vpop.f32.mrf.mxu0
    %v413 = vadd.f32 0.0, %v412
    %v414 = vpop.f32.mrf.mxu0
    %415 = vdwg.mxu0
    %v416 = vld [vmem:[%s3] sm:$0xff]
    %v417 = vld [vmem:[%s3 + $0x8] sm:$0xff]
    %v418 = vld [vmem:[%s3 + $0x10] sm:$0xff]
    %v419 = vld [vmem:[%s3 + $0x18] sm:$0xff]
    %v420 = vld [vmem:[%s3 + $0x20] sm:$0xff]
    %v421 = vld [vmem:[%s3 + $0x28] sm:$0xff]
    %v422 = vld [vmem:[%s3 + $0x30] sm:$0xff]
    %v423 = vld [vmem:[%s3 + $0x38] sm:$0xff]
    %v424 = vld [vmem:[%s3 + $0x40] sm:$0xff]
    %v425 = vld [vmem:[%s3 + $0x48] sm:$0xff]
    %v426 = vld [vmem:[%s3 + $0x50] sm:$0xff]
    %v427 = vld [vmem:[%s3 + $0x58] sm:$0xff]
    %v429 = vsel %vm57, %v413, 0
    %431 = vmatprep.subr.mxu0 0.0
    %432 = vmatpush1.msra.mxu0 0.0
    %433 = vmatprep.subr.mxu0 0.0
    %434 = vmatpush1.msra.mxu0 0.0
    %435 = vmatprep.subr.mxu0 0.0
    %436 = vmatpush1.msra.mxu0 0.0
    %437 = vmatprep.subr.mxu0 0.0
    %438 = vmatpush1.msra.mxu0 0.0
    %439 = vmatprep.subr.mxu0 0.0
    %440 = vmatpush1.msra.mxu0 0.0
    %441 = vmatprep.subr.mxu0 0.0
    %442 = vmatpush1.msra.mxu0 0.0
    %443 = vmatprep.subr.mxu0 0.0
    %444 = vmatpush1.msra.mxu0 0.0
    %445 = vmatprep.subr.mxu0 0.0
    %446 = vmatpush1.msra.mxu0 0.0
    %447 = vmatprep.subr.mxu0 0.0
    %448 = vmatpush1.msra.mxu0 0.0
    %449 = vmatprep.subr.mxu0 0.0
    %450 = vmatpush1.msra.mxu0 0.0
    %451 = vmatprep.subr.mxu0 0.0
    %452 = vmatpush1.msra.mxu0 0.0
    %453 = vmatprep.subr.mxu0 0.0
    %454 = vmatpush1.msra.mxu0 0.0
    %455 = vmatprep.subr.mxu0 0.0
    %456 = vmatpush1.msra.mxu0 %v427
    %457 = vmatprep.subr.mxu0 0.0
    %458 = vmatpush1.msra.mxu0 %v426
    %459 = vmatprep.subr.mxu0 0.0
    %460 = vmatpush1.msra.mxu0 %v425
    %461 = vmatprep.subr.mxu0 0.0
    %462 = vmatpush1.msra.mxu0 %v424
    %463 = vmatprep.subr.mxu0 0.0
    %464 = vmatpush2.msra.mxu0 0.0
    %465 = vmatprep.subr.mxu0 0.0
    %466 = vmatpush2.msra.mxu0 0.0
    %467 = vmatprep.subr.mxu0 0.0
    %468 = vmatpush2.msra.mxu0 0.0
    %469 = vmatprep.subr.mxu0 0.0
    %470 = vmatpush2.msra.mxu0 0.0
    %471 = vmatprep.subr.mxu0 0.0
    %472 = vmatpush2.msra.mxu0 0.0
    %473 = vmatprep.subr.mxu0 0.0
    %474 = vmatpush2.msra.mxu0 0.0
    %475 = vmatprep.subr.mxu0 0.0
    %476 = vmatpush2.msra.mxu0 0.0
    %477 = vmatprep.subr.mxu0 0.0
    %478 = vmatpush2.msra.mxu0 0.0
    %479 = vmatprep.subr.mxu0 0.0
    %480 = vmatpush2.msra.mxu0 0.0
    %481 = vmatprep.subr.mxu0 0.0
    %482 = vmatpush2.msra.mxu0 0.0
    %483 = vmatprep.subr.mxu0 0.0
    %484 = vmatpush2.msra.mxu0 0.0
    %485 = vmatprep.subr.mxu0 0.0
    %486 = vmatpush2.msra.mxu0 0.0
    %487 = vmatprep.subr.mxu0 0.0
    %488 = vmatpush2.msra.mxu0 0.0
    %489 = vmatprep.subr.mxu0 0.0
    %490 = vmatpush2.msra.mxu0 0.0
    %491 = vmatprep.subr.mxu0 0.0
    %492 = vmatpush2.msra.mxu0 0.0
    %493 = vmatprep.subr.mxu0 0.0
    %494 = vmatpush2.msra.mxu0 0.0
    %495 = vmatprep.mubr.f32.mxu0 0.0
    %496 = vmatmul.mubr.f32.gmra.mxu0 %v429
    %v497 = vpop.f32.mrf.mxu0
    %v498 = vadd.f32 0.0, %v497
    %v499 = vpop.f32.mrf.mxu0
    %500 = vdwg.mxu0
    %vm501 = vcmask 523264
    %v503 = vsel %vm501, %v45, 0
    %505 = vmatprep.subr.mxu0 0.0
    %506 = vmatpush1.msra.mxu0 0.0
    %507 = vmatprep.subr.mxu0 0.0
    %508 = vmatpush1.msra.mxu0 0.0
    %509 = vmatprep.subr.mxu0 0.0
    %510 = vmatpush1.msra.mxu0 0.0
    %511 = vmatprep.subr.mxu0 0.0
    %512 = vmatpush1.msra.mxu0 0.0
    %513 = vmatprep.subr.mxu0 0.0
    %514 = vmatpush1.msra.mxu0 0.0
    %515 = vmatprep.subr.mxu0 0.0
    %516 = vmatpush1.msra.mxu0 0.0
    %517 = vmatprep.subr.mxu0 0.0
    %518 = vmatpush1.msra.mxu0 0.0
    %519 = vmatprep.subr.mxu0 0.0
    %520 = vmatpush1.msra.mxu0 0.0
    %521 = vmatprep.subr.mxu0 0.0
    %522 = vmatpush1.msra.mxu0 %v423
    %523 = vmatprep.subr.mxu0 0.0
    %524 = vmatpush1.msra.mxu0 %v422
    %525 = vmatprep.subr.mxu0 0.0
    %526 = vmatpush1.msra.mxu0 %v421
    %527 = vmatprep.subr.mxu0 0.0
    %528 = vmatpush1.msra.mxu0 %v420
    %529 = vmatprep.subr.mxu0 0.0
    %530 = vmatpush1.msra.mxu0 %v419
    %531 = vmatprep.subr.mxu0 0.0
    %532 = vmatpush1.msra.mxu0 %v418
    %533 = vmatprep.subr.mxu0 0.0
    %534 = vmatpush1.msra.mxu0 %v417
    %535 = vmatprep.subr.mxu0 0.0
    %536 = vmatpush1.msra.mxu0 %v416
    %537 = vmatprep.subr.mxu0 0.0
    %538 = vmatpush2.msra.mxu0 0.0
    %539 = vmatprep.subr.mxu0 0.0
    %540 = vmatpush2.msra.mxu0 0.0
    %541 = vmatprep.subr.mxu0 0.0
    %542 = vmatpush2.msra.mxu0 0.0
    %543 = vmatprep.subr.mxu0 0.0
    %544 = vmatpush2.msra.mxu0 0.0
    %545 = vmatprep.subr.mxu0 0.0
    %546 = vmatpush2.msra.mxu0 0.0
    %547 = vmatprep.subr.mxu0 0.0
    %548 = vmatpush2.msra.mxu0 0.0
    %549 = vmatprep.subr.mxu0 0.0
    %550 = vmatpush2.msra.mxu0 0.0
    %551 = vmatprep.subr.mxu0 0.0
    %552 = vmatpush2.msra.mxu0 0.0
    %553 = vmatprep.subr.mxu0 0.0
    %554 = vmatpush2.msra.mxu0 0.0
    %555 = vmatprep.subr.mxu0 0.0
    %556 = vmatpush2.msra.mxu0 0.0
    %557 = vmatprep.subr.mxu0 0.0
    %558 = vmatpush2.msra.mxu0 0.0
    %559 = vmatprep.subr.mxu0 0.0
    %560 = vmatpush2.msra.mxu0 0.0
    %561 = vmatprep.subr.mxu0 0.0
    %562 = vmatpush2.msra.mxu0 0.0
    %563 = vmatprep.subr.mxu0 0.0
    %564 = vmatpush2.msra.mxu0 0.0
    %565 = vmatprep.subr.mxu0 0.0
    %566 = vmatpush2.msra.mxu0 0.0
    %567 = vmatprep.subr.mxu0 0.0
    %568 = vmatpush2.msra.mxu0 0.0
    %569 = vmatprep.mubr.f32.mxu0 0.0
    %570 = vmatmul.mubr.f32.gmra.mxu0 %v503
    %v571 = vpop.f32.mrf.mxu0
    %v572 = vadd.f32 %v498, %v571
    %v573 = vpop.f32.mrf.mxu0
    %574 = vdwg.mxu0
    %v575 = vld [vmem:[%s4] sm:$0x1]
    %v577 = vlaneseq
    %v578 = vshrl.u32 %v577, 7
    %v579 = vsub.s32 0, %v578
    %v580 = vrot.slane %v575, %v579
    %v582 = vadd.f32 %v572, %v580
    %v583 = vmax.f32 %v582, 0.0
    %v584 = vld [vmem:[%s7] sm:$0xff]
    %v585 = vld [vmem:[%s7 + $0x8] sm:$0xff]
    %v586 = vld [vmem:[%s7 + $0x10] sm:$0xff]
    %v587 = vld [vmem:[%s7 + $0x18] sm:$0xff]
    %v588 = vld [vmem:[%s8] sm:$0x1]
    %v590 = vlaneseq
    %v591 = vshrl.u32 %v590, 7
    %v592 = vsub.s32 0, %v591
    %v593 = vrot.slane %v588, %v592
    %v596 = vsel %vm57, %v583, 0
    %598 = vmatprep.subr.mxu0 0.0
    %599 = vmatpush1.msra.mxu0 0.0
    %600 = vmatprep.subr.mxu0 0.0
    %601 = vmatpush1.msra.mxu0 0.0
    %602 = vmatprep.subr.mxu0 0.0
    %603 = vmatpush1.msra.mxu0 0.0
    %604 = vmatprep.subr.mxu0 0.0
    %605 = vmatpush1.msra.mxu0 0.0
    %606 = vmatprep.subr.mxu0 0.0
    %607 = vmatpush1.msra.mxu0 0.0
    %608 = vmatprep.subr.mxu0 0.0
    %609 = vmatpush1.msra.mxu0 0.0
    %610 = vmatprep.subr.mxu0 0.0
    %611 = vmatpush1.msra.mxu0 0.0
    %612 = vmatprep.subr.mxu0 0.0
    %613 = vmatpush1.msra.mxu0 0.0
    %614 = vmatprep.subr.mxu0 0.0
    %615 = vmatpush1.msra.mxu0 0.0
    %616 = vmatprep.subr.mxu0 0.0
    %617 = vmatpush1.msra.mxu0 0.0
    %618 = vmatprep.subr.mxu0 0.0
    %619 = vmatpush1.msra.mxu0 0.0
    %620 = vmatprep.subr.mxu0 0.0
    %621 = vmatpush1.msra.mxu0 0.0
    %622 = vmatprep.subr.mxu0 0.0
    %623 = vmatpush1.msra.mxu0 %v587
    %624 = vmatprep.subr.mxu0 0.0
    %625 = vmatpush1.msra.mxu0 %v586
    %626 = vmatprep.subr.mxu0 0.0
    %627 = vmatpush1.msra.mxu0 %v585
    %628 = vmatprep.subr.mxu0 0.0
    %629 = vmatpush1.msra.mxu0 %v584
    %630 = vmatprep.subr.mxu0 0.0
    %631 = vmatpush2.msra.mxu0 0.0
    %632 = vmatprep.subr.mxu0 0.0
    %633 = vmatpush2.msra.mxu0 0.0
    %634 = vmatprep.subr.mxu0 0.0
    %635 = vmatpush2.msra.mxu0 0.0
    %636 = vmatprep.subr.mxu0 0.0
    %637 = vmatpush2.msra.mxu0 0.0
    %638 = vmatprep.subr.mxu0 0.0
    %639 = vmatpush2.msra.mxu0 0.0
    %640 = vmatprep.subr.mxu0 0.0
    %641 = vmatpush2.msra.mxu0 0.0
    %642 = vmatprep.subr.mxu0 0.0
    %643 = vmatpush2.msra.mxu0 0.0
    %644 = vmatprep.subr.mxu0 0.0
    %645 = vmatpush2.msra.mxu0 0.0
    %646 = vmatprep.subr.mxu0 0.0
    %647 = vmatpush2.msra.mxu0 0.0
    %648 = vmatprep.subr.mxu0 0.0
    %649 = vmatpush2.msra.mxu0 0.0
    %650 = vmatprep.subr.mxu0 0.0
    %651 = vmatpush2.msra.mxu0 0.0
    %652 = vmatprep.subr.mxu0 0.0
    %653 = vmatpush2.msra.mxu0 0.0
    %654 = vmatprep.subr.mxu0 0.0
    %655 = vmatpush2.msra.mxu0 0.0
    %656 = vmatprep.subr.mxu0 0.0
    %657 = vmatpush2.msra.mxu0 0.0
    %658 = vmatprep.subr.mxu0 0.0
    %659 = vmatpush2.msra.mxu0 0.0
    %660 = vmatprep.subr.mxu0 0.0
    %661 = vmatpush2.msra.mxu0 0.0
    %662 = vmatprep.mubr.f32.mxu0 0.0
    %663 = vmatmul.mubr.f32.gmra.mxu0 %v596
    %v664 = vpop.f32.mrf.mxu0
    %v665 = vadd.f32 %v593, %v664
    %v666 = vpop.f32.mrf.mxu0
    %667 = vdwg.mxu0
    %v668 = vtanh.pop %v665
    %v669 = vxor.u32 %v665, 2147483648
    %v670 = vmul.f32 %v669, 1.442695
    %v671 = vpow.pop %v670
    %v672 = vadd.f32 %v671, 1.0
    %v673 = vrcp.pop %v672
    %v674 = vmul.f32 1.0, %v673
    %v675 = vmax.f32 %v665, 0.0
    %vm676 = vcmp.ne.f32.partialorder %v665, %v665
    %v677 = vadd.f32 %v665, 0.0
    %v678 = vand.u32 2147483647, %v665
    %v679 = vsub.f32 0.0, %v678
    %v680 = vmul.f32 %v679, 1.442695
    %v681 = vpow.pop %v680
    %v682 = vadd.f32 %v681, 1.0
    %v683 = vlog2.pop %v682
    %v684 = vmul.f32 %v683, 0.6931472
    %v685 = vmul.f32 -0.5, %v681
    %v686 = vadd.f32 %v685, 1.0
    %v687 = vmul.f32 %v686, %v681
    %v688 = vand.u32 2147483647, %v681
    %vm689 = vcmp.lt.f32.partialorder %v688, 0.0004427343
    %v690 = vsel %vm689, %v687, %v684
    %v691 = vadd.f32 %v675, %v690
    %v692 = vsel %vm676, %v677, %v691
    %v693 = vmul.f32 %v340, %v340
    %v694 = vmul.f32 %v341, %v341
    %v695 = vsel %vm57, %v693, 0.0
    %696 = vadd.xlane.f32.xlu0 %v695
    %v697 = vpop.xlane.xlu0 %696
    %v698 = vsel %vm57, %v694, 0.0
    %699 = vadd.xlane.f32.xlu0 %v698
    %v700 = vpop.xlane.xlu0 %699
    %v702 = vsel %vm57, %v668, 0
    %v705 = vsel %vm57, %v340, 0
    %v708 = vsel %vm57, %v341, 0
    %710 = vmatprep.subr.mxu0 0.0
    %711 = vmatpush1.xpose.msra.mxu0 0.0
    %712 = vmatprep.subr.mxu0 0.0
    %713 = vmatpush1.xpose.msra.mxu0 0.0
    %714 = vmatprep.subr.mxu0 0.0
    %715 = vmatpush1.xpose.msra.mxu0 0.0
    %716 = vmatprep.subr.mxu0 0.0
    %717 = vmatpush1.xpose.msra.mxu0 0.0
    %718 = vmatprep.subr.mxu0 0.0
    %719 = vmatpush1.xpose.msra.mxu0 0.0
    %720 = vmatprep.subr.mxu0 0.0
    %721 = vmatpush1.xpose.msra.mxu0 0.0
    %722 = vmatprep.subr.mxu0 0.0
    %723 = vmatpush1.xpose.msra.mxu0 0.0
    %724 = vmatprep.subr.mxu0 0.0
    %725 = vmatpush1.xpose.msra.mxu0 0.0
    %726 = vmatprep.subr.mxu0 0.0
    %727 = vmatpush1.xpose.msra.mxu0 0.0
    %728 = vmatprep.subr.mxu0 0.0
    %729 = vmatpush1.xpose.msra.mxu0 0.0
    %730 = vmatprep.subr.mxu0 0.0
    %731 = vmatpush1.xpose.msra.mxu0 0.0
    %732 = vmatprep.subr.mxu0 0.0
    %733 = vmatpush1.xpose.msra.mxu0 0.0
    %734 = vmatprep.subr.mxu0 0.0
    %735 = vmatpush1.xpose.msra.mxu0 0.0
    %736 = vmatprep.subr.mxu0 0.0
    %737 = vmatpush1.xpose.msra.mxu0 0.0
    %738 = vmatprep.subr.mxu0 0.0
    %739 = vmatpush1.xpose.msra.mxu0 %v708
    %740 = vmatprep.subr.mxu0 0.0
    %741 = vmatpush1.xpose.msra.mxu0 %v705
    %742 = vmatprep.subr.mxu0 0.0
    %743 = vmatpush2.xpose.msra.mxu0 0.0
    %744 = vmatprep.subr.mxu0 0.0
    %745 = vmatpush2.xpose.msra.mxu0 0.0
    %746 = vmatprep.subr.mxu0 0.0
    %747 = vmatpush2.xpose.msra.mxu0 0.0
    %748 = vmatprep.subr.mxu0 0.0
    %749 = vmatpush2.xpose.msra.mxu0 0.0
    %750 = vmatprep.subr.mxu0 0.0
    %751 = vmatpush2.xpose.msra.mxu0 0.0
    %752 = vmatprep.subr.mxu0 0.0
    %753 = vmatpush2.xpose.msra.mxu0 0.0
    %754 = vmatprep.subr.mxu0 0.0
    %755 = vmatpush2.xpose.msra.mxu0 0.0
    %756 = vmatprep.subr.mxu0 0.0
    %757 = vmatpush2.xpose.msra.mxu0 0.0
    %758 = vmatprep.subr.mxu0 0.0
    %759 = vmatpush2.xpose.msra.mxu0 0.0
    %760 = vmatprep.subr.mxu0 0.0
    %761 = vmatpush2.xpose.msra.mxu0 0.0
    %762 = vmatprep.subr.mxu0 0.0
    %763 = vmatpush2.xpose.msra.mxu0 0.0
    %764 = vmatprep.subr.mxu0 0.0
    %765 = vmatpush2.xpose.msra.mxu0 0.0
    %766 = vmatprep.subr.mxu0 0.0
    %767 = vmatpush2.xpose.msra.mxu0 0.0
    %768 = vmatprep.subr.mxu0 0.0
    %769 = vmatpush2.xpose.msra.mxu0 0.0
    %770 = vmatprep.subr.mxu0 0.0
    %771 = vmatpush2.xpose.msra.mxu0 0.0
    %772 = vmatprep.subr.mxu0 0.0
    %773 = vmatpush2.xpose.msra.mxu0 0.0
    %774 = vmatprep.mubr.f32.mxu0 0.0
    %775 = vmatmul.mubr.f32.gmra.mxu0 %v702
    %v776 = vpop.f32.mrf.mxu0
    %v777 = vadd.f32 0.0, %v776
    %v778 = vpop.f32.mrf.mxu0
    %779 = vdwg.mxu0
    %v780 = vmul.f32 %v668, %v668
    %vm781 = vcmask 254976
    %v782 = vsel %vm781, %v780, 0.0
    %783 = vadd.xlane.f32.xlu0 %v782
    %v784 = vpop.xlane.xlu0 %783
    %vm785 = vcmask 7168
    %v787 = vsel %vm785, %v784, 0
    %v790 = vsel %vm785, %v697, 0
    %v793 = vsel %vm785, %v700, 0
    %795 = vmatprep.subr.mxu0 0.0
    %796 = vmatpush1.xpose.msra.mxu0 0.0
    %797 = vmatprep.subr.mxu0 0.0
    %798 = vmatpush1.xpose.msra.mxu0 0.0
    %799 = vmatprep.subr.mxu0 0.0
    %800 = vmatpush1.xpose.msra.mxu0 0.0
    %801 = vmatprep.subr.mxu0 0.0
    %802 = vmatpush1.xpose.msra.mxu0 0.0
    %803 = vmatprep.subr.mxu0 0.0
    %804 = vmatpush1.xpose.msra.mxu0 0.0
    %805 = vmatprep.subr.mxu0 0.0
    %806 = vmatpush1.xpose.msra.mxu0 0.0
    %807 = vmatprep.subr.mxu0 0.0
    %808 = vmatpush1.xpose.msra.mxu0 0.0
    %809 = vmatprep.subr.mxu0 0.0
    %810 = vmatpush1.xpose.msra.mxu0 0.0
    %811 = vmatprep.subr.mxu0 0.0
    %812 = vmatpush1.xpose.msra.mxu0 0.0
    %813 = vmatprep.subr.mxu0 0.0
    %814 = vmatpush1.xpose.msra.mxu0 0.0
    %815 = vmatprep.subr.mxu0 0.0
    %816 = vmatpush1.xpose.msra.mxu0 0.0
    %817 = vmatprep.subr.mxu0 0.0
    %818 = vmatpush1.xpose.msra.mxu0 0.0
    %819 = vmatprep.subr.mxu0 0.0
    %820 = vmatpush1.xpose.msra.mxu0 0.0
    %821 = vmatprep.subr.mxu0 0.0
    %822 = vmatpush1.xpose.msra.mxu0 0.0
    %823 = vmatprep.subr.mxu0 0.0
    %824 = vmatpush1.xpose.msra.mxu0 %v793
    %825 = vmatprep.subr.mxu0 0.0
    %826 = vmatpush1.xpose.msra.mxu0 %v790
    %827 = vmatprep.subr.mxu0 0.0
    %828 = vmatpush2.xpose.msra.mxu0 0.0
    %829 = vmatprep.subr.mxu0 0.0
    %830 = vmatpush2.xpose.msra.mxu0 0.0
    %831 = vmatprep.subr.mxu0 0.0
    %832 = vmatpush2.xpose.msra.mxu0 0.0
    %833 = vmatprep.subr.mxu0 0.0
    %834 = vmatpush2.xpose.msra.mxu0 0.0
    %835 = vmatprep.subr.mxu0 0.0
    %836 = vmatpush2.xpose.msra.mxu0 0.0
    %837 = vmatprep.subr.mxu0 0.0
    %838 = vmatpush2.xpose.msra.mxu0 0.0
    %839 = vmatprep.subr.mxu0 0.0
    %840 = vmatpush2.xpose.msra.mxu0 0.0
    %841 = vmatprep.subr.mxu0 0.0
    %842 = vmatpush2.xpose.msra.mxu0 0.0
    %843 = vmatprep.subr.mxu0 0.0
    %844 = vmatpush2.xpose.msra.mxu0 0.0
    %845 = vmatprep.subr.mxu0 0.0
    %846 = vmatpush2.xpose.msra.mxu0 0.0
    %847 = vmatprep.subr.mxu0 0.0
    %848 = vmatpush2.xpose.msra.mxu0 0.0
    %849 = vmatprep.subr.mxu0 0.0
    %850 = vmatpush2.xpose.msra.mxu0 0.0
    %851 = vmatprep.subr.mxu0 0.0
    %852 = vmatpush2.xpose.msra.mxu0 0.0
    %853 = vmatprep.subr.mxu0 0.0
    %854 = vmatpush2.xpose.msra.mxu0 0.0
    %855 = vmatprep.subr.mxu0 0.0
    %856 = vmatpush2.xpose.msra.mxu0 0.0
    %857 = vmatprep.subr.mxu0 0.0
    %858 = vmatpush2.xpose.msra.mxu0 0.0
    %859 = vmatprep.mubr.f32.mxu0 0.0
    %860 = vmatmul.mubr.f32.gmra.mxu0 %v787
    %v861 = vpop.f32.mrf.mxu0
    %v862 = vadd.f32 0.0, %v861
    %v863 = vpop.f32.mrf.mxu0
    %864 = vdwg.mxu0
    %v865 = vrsqrt.pop %v862
    %v866 = vmul.f32 %v862, %v865
    %vm867 = vcmp.eq.f32.partialorder %v862, inf
    %v868 = vsel %vm867, %v862, %v866
    %vm869 = vcmp.eq.f32.partialorder %v862, 0.0
    %v870 = vand.u32 %v862, 2147483648
    %v871 = vsel %vm869, %v870, %v868
    %v872 = vadd.f32 %v871, 1e-08
    %v873 = vrcp.pop %v872
    %v874 = vmul.f32 %v777, %v873
    %876 = vset.pattern.permute.xlu0 72
    %877 = vperm.xlu0 %876, %v692
    %v878 = vpop.permute.xlu0 %877
    %v880 = vmul.f32 %v878, %v874
    %vm881 = vcmask 123904
    %v882 = vsel %vm881, %v880, -inf
    %883 = vmax.xlane.f32.xlu0 %v882
    %v884 = vpop.xlane.xlu0 %883
    %v885 = vsub.f32 %v880, %v884
    %v886 = vmul.f32 %v885, 1.442695
    %v887 = vpow.pop %v886
    %v888 = vsel %vm881, %v887, 0.0
    %889 = vadd.xlane.f32.xlu0 %v888
    %v890 = vpop.xlane.xlu0 %889
    %v891 = vrcp.pop %v890
    %v892 = vmul.f32 %v887, %v891
    %893 = vrot.lane.b32.xlu0 %v668, 96
    %v894 = vpop.permute.xlu0 %893
    %v895 = vsel %vm57, %v894, 0
    %897 = vmatprep.subr.mxu0 0.0
    %898 = vmatpush1.xpose.msra.mxu0 0.0
    %899 = vmatprep.subr.mxu0 0.0
    %900 = vmatpush1.xpose.msra.mxu0 0.0
    %901 = vmatprep.subr.mxu0 0.0
    %902 = vmatpush1.xpose.msra.mxu0 0.0
    %903 = vmatprep.subr.mxu0 0.0
    %904 = vmatpush1.xpose.msra.mxu0 0.0
    %905 = vmatprep.subr.mxu0 0.0
    %906 = vmatpush1.xpose.msra.mxu0 0.0
    %907 = vmatprep.subr.mxu0 0.0
    %908 = vmatpush1.xpose.msra.mxu0 0.0
    %909 = vmatprep.subr.mxu0 0.0
    %910 = vmatpush1.xpose.msra.mxu0 0.0
    %911 = vmatprep.subr.mxu0 0.0
    %912 = vmatpush1.xpose.msra.mxu0 0.0
    %913 = vmatprep.subr.mxu0 0.0
    %914 = vmatpush1.xpose.msra.mxu0 0.0
    %915 = vmatprep.subr.mxu0 0.0
    %916 = vmatpush1.xpose.msra.mxu0 0.0
    %917 = vmatprep.subr.mxu0 0.0
    %918 = vmatpush1.xpose.msra.mxu0 0.0
    %919 = vmatprep.subr.mxu0 0.0
    %920 = vmatpush1.xpose.msra.mxu0 0.0
    %921 = vmatprep.subr.mxu0 0.0
    %922 = vmatpush1.xpose.msra.mxu0 0.0
    %923 = vmatprep.subr.mxu0 0.0
    %924 = vmatpush1.xpose.msra.mxu0 0.0
    %925 = vmatprep.subr.mxu0 0.0
    %926 = vmatpush1.xpose.msra.mxu0 %v708
    %927 = vmatprep.subr.mxu0 0.0
    %928 = vmatpush1.xpose.msra.mxu0 %v705
    %929 = vmatprep.subr.mxu0 0.0
    %930 = vmatpush2.xpose.msra.mxu0 0.0
    %931 = vmatprep.subr.mxu0 0.0
    %932 = vmatpush2.xpose.msra.mxu0 0.0
    %933 = vmatprep.subr.mxu0 0.0
    %934 = vmatpush2.xpose.msra.mxu0 0.0
    %935 = vmatprep.subr.mxu0 0.0
    %936 = vmatpush2.xpose.msra.mxu0 0.0
    %937 = vmatprep.subr.mxu0 0.0
    %938 = vmatpush2.xpose.msra.mxu0 0.0
    %939 = vmatprep.subr.mxu0 0.0
    %940 = vmatpush2.xpose.msra.mxu0 0.0
    %941 = vmatprep.subr.mxu0 0.0
    %942 = vmatpush2.xpose.msra.mxu0 0.0
    %943 = vmatprep.subr.mxu0 0.0
    %944 = vmatpush2.xpose.msra.mxu0 0.0
    %945 = vmatprep.subr.mxu0 0.0
    %946 = vmatpush2.xpose.msra.mxu0 0.0
    %947 = vmatprep.subr.mxu0 0.0
    %948 = vmatpush2.xpose.msra.mxu0 0.0
    %949 = vmatprep.subr.mxu0 0.0
    %950 = vmatpush2.xpose.msra.mxu0 0.0
    %951 = vmatprep.subr.mxu0 0.0
    %952 = vmatpush2.xpose.msra.mxu0 0.0
    %953 = vmatprep.subr.mxu0 0.0
    %954 = vmatpush2.xpose.msra.mxu0 0.0
    %955 = vmatprep.subr.mxu0 0.0
    %956 = vmatpush2.xpose.msra.mxu0 0.0
    %957 = vmatprep.subr.mxu0 0.0
    %958 = vmatpush2.xpose.msra.mxu0 0.0
    %959 = vmatprep.subr.mxu0 0.0
    %960 = vmatpush2.xpose.msra.mxu0 0.0
    %961 = vmatprep.mubr.f32.mxu0 0.0
    %962 = vmatmul.mubr.f32.gmra.mxu0 %v895
    %v963 = vpop.f32.mrf.mxu0
    %v964 = vadd.f32 0.0, %v963
    %v965 = vpop.f32.mrf.mxu0
    %966 = vdwg.mxu0
    %968 = vrot.lane.b32.xlu0 %v780, 96
    %v969 = vpop.permute.xlu0 %968
    %v971 = vsel %vm781, %v969, 0.0
    %972 = vadd.xlane.f32.xlu0 %v971
    %v973 = vpop.xlane.xlu0 %972
    %v975 = vsel %vm785, %v973, 0
    %977 = vmatprep.subr.mxu0 0.0
    %978 = vmatpush1.xpose.msra.mxu0 0.0
    %979 = vmatprep.subr.mxu0 0.0
    %980 = vmatpush1.xpose.msra.mxu0 0.0
    %981 = vmatprep.subr.mxu0 0.0
    %982 = vmatpush1.xpose.msra.mxu0 0.0
    %983 = vmatprep.subr.mxu0 0.0
    %984 = vmatpush1.xpose.msra.mxu0 0.0
    %985 = vmatprep.subr.mxu0 0.0
    %986 = vmatpush1.xpose.msra.mxu0 0.0
    %987 = vmatprep.subr.mxu0 0.0
    %988 = vmatpush1.xpose.msra.mxu0 0.0
    %989 = vmatprep.subr.mxu0 0.0
    %990 = vmatpush1.xpose.msra.mxu0 0.0
    %991 = vmatprep.subr.mxu0 0.0
    %992 = vmatpush1.xpose.msra.mxu0 0.0
    %993 = vmatprep.subr.mxu0 0.0
    %994 = vmatpush1.xpose.msra.mxu0 0.0
    %995 = vmatprep.subr.mxu0 0.0
    %996 = vmatpush1.xpose.msra.mxu0 0.0
    %997 = vmatprep.subr.mxu0 0.0
    %998 = vmatpush1.xpose.msra.mxu0 0.0
    %999 = vmatprep.subr.mxu0 0.0
    %1000 = vmatpush1.xpose.msra.mxu0 0.0
    %1001 = vmatprep.subr.mxu0 0.0
    %1002 = vmatpush1.xpose.msra.mxu0 0.0
    %1003 = vmatprep.subr.mxu0 0.0
    %1004 = vmatpush1.xpose.msra.mxu0 0.0
    %1005 = vmatprep.subr.mxu0 0.0
    %1006 = vmatpush1.xpose.msra.mxu0 %v793
    %1007 = vmatprep.subr.mxu0 0.0
    %1008 = vmatpush1.xpose.msra.mxu0 %v790
    %1009 = vmatprep.subr.mxu0 0.0
    %1010 = vmatpush2.xpose.msra.mxu0 0.0
    %1011 = vmatprep.subr.mxu0 0.0
    %1012 = vmatpush2.xpose.msra.mxu0 0.0
    %1013 = vmatprep.subr.mxu0 0.0
    %1014 = vmatpush2.xpose.msra.mxu0 0.0
    %1015 = vmatprep.subr.mxu0 0.0
    %1016 = vmatpush2.xpose.msra.mxu0 0.0
    %1017 = vmatprep.subr.mxu0 0.0
    %1018 = vmatpush2.xpose.msra.mxu0 0.0
    %1019 = vmatprep.subr.mxu0 0.0
    %1020 = vmatpush2.xpose.msra.mxu0 0.0
    %1021 = vmatprep.subr.mxu0 0.0
    %1022 = vmatpush2.xpose.msra.mxu0 0.0
    %1023 = vmatprep.subr.mxu0 0.0
    %1024 = vmatpush2.xpose.msra.mxu0 0.0
    %1025 = vmatprep.subr.mxu0 0.0
    %1026 = vmatpush2.xpose.msra.mxu0 0.0
    %1027 = vmatprep.subr.mxu0 0.0
    %1028 = vmatpush2.xpose.msra.mxu0 0.0
    %1029 = vmatprep.subr.mxu0 0.0
    %1030 = vmatpush2.xpose.msra.mxu0 0.0
    %1031 = vmatprep.subr.mxu0 0.0
    %1032 = vmatpush2.xpose.msra.mxu0 0.0
    %1033 = vmatprep.subr.mxu0 0.0
    %1034 = vmatpush2.xpose.msra.mxu0 0.0
    %1035 = vmatprep.subr.mxu0 0.0
    %1036 = vmatpush2.xpose.msra.mxu0 0.0
    %1037 = vmatprep.subr.mxu0 0.0
    %1038 = vmatpush2.xpose.msra.mxu0 0.0
    %1039 = vmatprep.subr.mxu0 0.0
    %1040 = vmatpush2.xpose.msra.mxu0 0.0
    %1041 = vmatprep.mubr.f32.mxu0 0.0
    %1042 = vmatmul.mubr.f32.gmra.mxu0 %v975
    %v1043 = vpop.f32.mrf.mxu0
    %v1044 = vadd.f32 0.0, %v1043
    %v1045 = vpop.f32.mrf.mxu0
    %1046 = vdwg.mxu0
    %v1047 = vrsqrt.pop %v1044
    %v1048 = vmul.f32 %v1044, %v1047
    %vm1049 = vcmp.eq.f32.partialorder %v1044, inf
    %v1050 = vsel %vm1049, %v1044, %v1048
    %vm1051 = vcmp.eq.f32.partialorder %v1044, 0.0
    %v1052 = vand.u32 %v1044, 2147483648
    %v1053 = vsel %vm1051, %v1052, %v1050
    %v1054 = vadd.f32 %v1053, 1e-08
    %v1055 = vrcp.pop %v1054
    %v1056 = vmul.f32 %v964, %v1055
    %1057 = vset.pattern.permute.xlu0 73
    %1058 = vperm.xlu0 %1057, %v692
    %v1059 = vpop.permute.xlu0 %1058
    %v1061 = vmul.f32 %v1059, %v1056
    %v1062 = vsel %vm881, %v1061, -inf
    %1063 = vmax.xlane.f32.xlu0 %v1062
    %v1064 = vpop.xlane.xlu0 %1063
    %v1065 = vsub.f32 %v1061, %v1064
    %v1066 = vmul.f32 %v1065, 1.442695
    %v1067 = vpow.pop %v1066
    %v1068 = vsel %vm881, %v1067, 0.0
    %1069 = vadd.xlane.f32.xlu0 %v1068
    %v1070 = vpop.xlane.xlu0 %1069
    %v1071 = vrcp.pop %v1070
    %v1072 = vmul.f32 %v1067, %v1071
    %v1073 = vsel %vm57, %v340, 0.0
    %v1074 = vsel %vm57, %v341, 0.0
    %v1075 = vadd.f32 %v1073, %v1074
    %v1076 = vrot.slane %v1075, 4
    %v1077 = vadd.f32 %v1075, %v1076
    %v1078 = vrot.slane %v1077, 2
    %v1079 = vadd.f32 %v1077, %v1078
    %v1080 = vrot.slane %v1079, 1
    %v1081 = vadd.f32 %v1079, %v1080
    %v1082 = vrcp.pop 16.0
    %v1083 = vmul.f32 %v1081, %v1082
    %v1084 = vsub.f32 %v340, %v1083
    %v1085 = vsub.f32 %v341, %v1083
    %v1086 = vmul.f32 %v1084, %v1084
    %v1087 = vmul.f32 %v1085, %v1085
    %v1088 = vsel %vm57, %v1086, 0.0
    %v1089 = vsel %vm57, %v1087, 0.0
    %v1090 = vadd.f32 %v1088, %v1089
    %v1091 = vrot.slane %v1090, 4
    %v1092 = vadd.f32 %v1090, %v1091
    %v1093 = vrot.slane %v1092, 2
    %v1094 = vadd.f32 %v1092, %v1093
    %v1095 = vrot.slane %v1094, 1
    %v1096 = vadd.f32 %v1094, %v1095
    %v1097 = vmul.f32 %v1096, %v1082
    %v1098 = vadd.f32 %v1097, 1e-05
    %v1099 = vrsqrt.pop %v1098
    %v1100 = vmul.f32 %v1084, %v1099
    %v1101 = vmul.f32 %v1085, %v1099
    %1103 = vrot.lane.b32.xlu0 %v674, 64
    %v1104 = vpop.permute.xlu0 %1103
    %vm1106 = vcmask 58368
    %1107 = vst.msk [vmem:[#allocation2] sm:$0x3] %vm1106, %v1104
    %s1108 = scalar_lea.vmem %s0, 2
    %v1109 = vld [vmem:[%s1108] sm:$0x3]
    %v1110 = vld [vmem:[%s5] sm:$0xff]
    %v1111 = vld [vmem:[%s5 + $0x8] sm:$0xff]
    %v1112 = vld [vmem:[%s5 + $0x10] sm:$0xff]
    %v1113 = vld [vmem:[%s5 + $0x18] sm:$0xff]
    %v1114 = vld [vmem:[%s6] sm:$0x1]
    %v1116 = vlaneseq
    %v1117 = vshrl.u32 %v1116, 7
    %v1118 = vsub.s32 0, %v1117
    %v1119 = vrot.slane %v1114, %v1118
    %1121 = vmatprep.subr.mxu0 0.0
    %1122 = vmatpush1.msra.mxu0 0.0
    %1123 = vmatprep.subr.mxu0 0.0
    %1124 = vmatpush1.msra.mxu0 0.0
    %1125 = vmatprep.subr.mxu0 0.0
    %1126 = vmatpush1.msra.mxu0 0.0
    %1127 = vmatprep.subr.mxu0 0.0
    %1128 = vmatpush1.msra.mxu0 0.0
    %1129 = vmatprep.subr.mxu0 0.0
    %1130 = vmatpush1.msra.mxu0 0.0
    %1131 = vmatprep.subr.mxu0 0.0
    %1132 = vmatpush1.msra.mxu0 0.0
    %1133 = vmatprep.subr.mxu0 0.0
    %1134 = vmatpush1.msra.mxu0 0.0
    %1135 = vmatprep.subr.mxu0 0.0
    %1136 = vmatpush1.msra.mxu0 0.0
    %1137 = vmatprep.subr.mxu0 0.0
    %1138 = vmatpush1.msra.mxu0 0.0
    %1139 = vmatprep.subr.mxu0 0.0
    %1140 = vmatpush1.msra.mxu0 0.0
    %1141 = vmatprep.subr.mxu0 0.0
    %1142 = vmatpush1.msra.mxu0 0.0
    %1143 = vmatprep.subr.mxu0 0.0
    %1144 = vmatpush1.msra.mxu0 0.0
    %1145 = vmatprep.subr.mxu0 0.0
    %1146 = vmatpush1.msra.mxu0 %v1113
    %1147 = vmatprep.subr.mxu0 0.0
    %1148 = vmatpush1.msra.mxu0 %v1112
    %1149 = vmatprep.subr.mxu0 0.0
    %1150 = vmatpush1.msra.mxu0 %v1111
    %1151 = vmatprep.subr.mxu0 0.0
    %1152 = vmatpush1.msra.mxu0 %v1110
    %1153 = vmatprep.subr.mxu0 0.0
    %1154 = vmatpush2.msra.mxu0 0.0
    %1155 = vmatprep.subr.mxu0 0.0
    %1156 = vmatpush2.msra.mxu0 0.0
    %1157 = vmatprep.subr.mxu0 0.0
    %1158 = vmatpush2.msra.mxu0 0.0
    %1159 = vmatprep.subr.mxu0 0.0
    %1160 = vmatpush2.msra.mxu0 0.0
    %1161 = vmatprep.subr.mxu0 0.0
    %1162 = vmatpush2.msra.mxu0 0.0
    %1163 = vmatprep.subr.mxu0 0.0
    %1164 = vmatpush2.msra.mxu0 0.0
    %1165 = vmatprep.subr.mxu0 0.0
    %1166 = vmatpush2.msra.mxu0 0.0
    %1167 = vmatprep.subr.mxu0 0.0
    %1168 = vmatpush2.msra.mxu0 0.0
    %1169 = vmatprep.subr.mxu0 0.0
    %1170 = vmatpush2.msra.mxu0 0.0
    %1171 = vmatprep.subr.mxu0 0.0
    %1172 = vmatpush2.msra.mxu0 0.0
    %1173 = vmatprep.subr.mxu0 0.0
    %1174 = vmatpush2.msra.mxu0 0.0
    %1175 = vmatprep.subr.mxu0 0.0
    %1176 = vmatpush2.msra.mxu0 0.0
    %1177 = vmatprep.subr.mxu0 0.0
    %1178 = vmatpush2.msra.mxu0 0.0
    %1179 = vmatprep.subr.mxu0 0.0
    %1180 = vmatpush2.msra.mxu0 0.0
    %1181 = vmatprep.subr.mxu0 0.0
    %1182 = vmatpush2.msra.mxu0 0.0
    %1183 = vmatprep.subr.mxu0 0.0
    %1184 = vmatpush2.msra.mxu0 0.0
    %1185 = vmatprep.mubr.f32.mxu0 0.0
    %1186 = vmatmul.mubr.f32.gmra.mxu0 %v596
    %v1187 = vpop.f32.mrf.mxu0
    %v1188 = vadd.f32 %v1119, %v1187
    %v1189 = vpop.f32.mrf.mxu0
    %1190 = vdwg.mxu0
    %v1191 = vxor.u32 %v1188, 2147483648
    %v1192 = vmul.f32 %v1191, 1.442695
    %v1193 = vpow.pop %v1192
    %v1194 = vadd.f32 %v1193, 1.0
    %v1195 = vrcp.pop %v1194
    %v1196 = vmul.f32 1.0, %v1195
    %v1197 = vtanh.pop %v1188
    %1198 = vxpose.xlu0.b32.start [1/16] %v892, 128
    %1199 = vxpose.xlu0.b32.cont [2/16] 0.0, 128
    %1200 = vxpose.xlu0.b32.cont [3/16] 0.0, 128
    %1201 = vxpose.xlu0.b32.cont [4/16] 0.0, 128
    %1202 = vxpose.xlu0.b32.cont [5/16] 0.0, 128
    %1203 = vxpose.xlu0.b32.cont [6/16] 0.0, 128
    %1204 = vxpose.xlu0.b32.cont [7/16] 0.0, 128
    %1205 = vxpose.xlu0.b32.cont [8/16] 0.0, 128
    %1206 = vxpose.xlu0.b32.cont [9/16] 0.0, 128
    %1207 = vxpose.xlu0.b32.cont [10/16] 0.0, 128
    %1208 = vxpose.xlu0.b32.cont [11/16] 0.0, 128
    %1209 = vxpose.xlu0.b32.cont [12/16] 0.0, 128
    %1210 = vxpose.xlu0.b32.cont [13/16] 0.0, 128
    %1211 = vxpose.xlu0.b32.cont [14/16] 0.0, 128
    %1212 = vxpose.xlu0.b32.cont [15/16] 0.0, 128
    %1213 = vxpose.xlu0.b32.end [16/16] 0.0, 128
    %v1214 = vpop.trf.xlu0
    %v1215 = vpop.trf.xlu0
    %v1216 = vpop.trf.xlu0
    %v1217 = vpop.trf.xlu0
    %v1218 = vpop.trf.xlu0
    %v1219 = vpop.trf.xlu0
    %v1220 = vpop.trf.xlu0
    %v1221 = vpop.trf.xlu0
    %v1222 = vpop.trf.xlu0
    %v1223 = vpop.trf.xlu0
    %v1224 = vpop.trf.xlu0
    %v1225 = vpop.trf.xlu0
    %v1226 = vpop.trf.xlu0
    %v1227 = vpop.trf.xlu0
    %v1228 = vpop.trf.xlu0
    %v1229 = vpop.trf.xlu0
    %v1231 = vsel %vm170, %v1214, 0
    %v1234 = vsel %vm170, %v1215, 0
    %v1237 = vsel %vm177, %v1196, 0
    %1239 = vmatprep.subr.mxu0 0.0
    %1240 = vmatpush1.msra.mxu0 0.0
    %1241 = vmatprep.subr.mxu0 0.0
    %1242 = vmatpush1.msra.mxu0 0.0
    %1243 = vmatprep.subr.mxu0 0.0
    %1244 = vmatpush1.msra.mxu0 0.0
    %1245 = vmatprep.subr.mxu0 0.0
    %1246 = vmatpush1.msra.mxu0 0.0
    %1247 = vmatprep.subr.mxu0 0.0
    %1248 = vmatpush1.msra.mxu0 0.0
    %1249 = vmatprep.subr.mxu0 0.0
    %1250 = vmatpush1.msra.mxu0 0.0
    %1251 = vmatprep.subr.mxu0 0.0
    %1252 = vmatpush1.msra.mxu0 0.0
    %1253 = vmatprep.subr.mxu0 0.0
    %1254 = vmatpush1.msra.mxu0 0.0
    %1255 = vmatprep.subr.mxu0 0.0
    %1256 = vmatpush1.msra.mxu0 0.0
    %1257 = vmatprep.subr.mxu0 0.0
    %1258 = vmatpush1.msra.mxu0 0.0
    %1259 = vmatprep.subr.mxu0 0.0
    %1260 = vmatpush1.msra.mxu0 0.0
    %1261 = vmatprep.subr.mxu0 0.0
    %1262 = vmatpush1.msra.mxu0 0.0
    %1263 = vmatprep.subr.mxu0 0.0
    %1264 = vmatpush1.msra.mxu0 0.0
    %1265 = vmatprep.subr.mxu0 0.0
    %1266 = vmatpush1.msra.mxu0 0.0
    %1267 = vmatprep.subr.mxu0 0.0
    %1268 = vmatpush1.msra.mxu0 0.0
    %1269 = vmatprep.subr.mxu0 0.0
    %1270 = vmatpush1.msra.mxu0 %v1237
    %1271 = vmatprep.subr.mxu0 0.0
    %1272 = vmatpush2.msra.mxu0 0.0
    %1273 = vmatprep.subr.mxu0 0.0
    %1274 = vmatpush2.msra.mxu0 0.0
    %1275 = vmatprep.subr.mxu0 0.0
    %1276 = vmatpush2.msra.mxu0 0.0
    %1277 = vmatprep.subr.mxu0 0.0
    %1278 = vmatpush2.msra.mxu0 0.0
    %1279 = vmatprep.subr.mxu0 0.0
    %1280 = vmatpush2.msra.mxu0 0.0
    %1281 = vmatprep.subr.mxu0 0.0
    %1282 = vmatpush2.msra.mxu0 0.0
    %1283 = vmatprep.subr.mxu0 0.0
    %1284 = vmatpush2.msra.mxu0 0.0
    %1285 = vmatprep.subr.mxu0 0.0
    %1286 = vmatpush2.msra.mxu0 0.0
    %1287 = vmatprep.subr.mxu0 0.0
    %1288 = vmatpush2.msra.mxu0 0.0
    %1289 = vmatprep.subr.mxu0 0.0
    %1290 = vmatpush2.msra.mxu0 0.0
    %1291 = vmatprep.subr.mxu0 0.0
    %1292 = vmatpush2.msra.mxu0 0.0
    %1293 = vmatprep.subr.mxu0 0.0
    %1294 = vmatpush2.msra.mxu0 0.0
    %1295 = vmatprep.subr.mxu0 0.0
    %1296 = vmatpush2.msra.mxu0 0.0
    %1297 = vmatprep.subr.mxu0 0.0
    %1298 = vmatpush2.msra.mxu0 0.0
    %1299 = vmatprep.subr.mxu0 0.0
    %1300 = vmatpush2.msra.mxu0 0.0
    %1301 = vmatprep.subr.mxu0 0.0
    %1302 = vmatpush2.msra.mxu0 0.0
    %1303 = vmatprep.mubr.f32.mxu0 0.0
    %1304 = vmatmul.mubr.f32.gmra.mxu0 %v1231
    %v1305 = vpop.f32.mrf.mxu0
    %v1306 = vadd.f32 0.0, %v1305
    %v1307 = vpop.f32.mrf.mxu0
    %1308 = vmatprep.mubr.f32.mxu0 0.0
    %1309 = vmatmul.mubr.f32.gmra.mxu0 %v1234
    %v1310 = vpop.f32.mrf.mxu0
    %v1311 = vadd.f32 0.0, %v1310
    %v1312 = vpop.f32.mrf.mxu0
    %1313 = vdwg.mxu0
    %1315 = vrot.lane.b32.xlu0 %v1197, 96
    %v1316 = vpop.permute.xlu0 %1315
    %v1317 = vsel %vm177, %v1316, 0
    %1319 = vmatprep.subr.mxu0 0.0
    %1320 = vmatpush1.msra.mxu0 0.0
    %1321 = vmatprep.subr.mxu0 0.0
    %1322 = vmatpush1.msra.mxu0 0.0
    %1323 = vmatprep.subr.mxu0 0.0
    %1324 = vmatpush1.msra.mxu0 0.0
    %1325 = vmatprep.subr.mxu0 0.0
    %1326 = vmatpush1.msra.mxu0 0.0
    %1327 = vmatprep.subr.mxu0 0.0
    %1328 = vmatpush1.msra.mxu0 0.0
    %1329 = vmatprep.subr.mxu0 0.0
    %1330 = vmatpush1.msra.mxu0 0.0
    %1331 = vmatprep.subr.mxu0 0.0
    %1332 = vmatpush1.msra.mxu0 0.0
    %1333 = vmatprep.subr.mxu0 0.0
    %1334 = vmatpush1.msra.mxu0 0.0
    %1335 = vmatprep.subr.mxu0 0.0
    %1336 = vmatpush1.msra.mxu0 0.0
    %1337 = vmatprep.subr.mxu0 0.0
    %1338 = vmatpush1.msra.mxu0 0.0
    %1339 = vmatprep.subr.mxu0 0.0
    %1340 = vmatpush1.msra.mxu0 0.0
    %1341 = vmatprep.subr.mxu0 0.0
    %1342 = vmatpush1.msra.mxu0 0.0
    %1343 = vmatprep.subr.mxu0 0.0
    %1344 = vmatpush1.msra.mxu0 0.0
    %1345 = vmatprep.subr.mxu0 0.0
    %1346 = vmatpush1.msra.mxu0 0.0
    %1347 = vmatprep.subr.mxu0 0.0
    %1348 = vmatpush1.msra.mxu0 0.0
    %1349 = vmatprep.subr.mxu0 0.0
    %1350 = vmatpush1.msra.mxu0 %v1317
    %1351 = vmatprep.subr.mxu0 0.0
    %1352 = vmatpush2.msra.mxu0 0.0
    %1353 = vmatprep.subr.mxu0 0.0
    %1354 = vmatpush2.msra.mxu0 0.0
    %1355 = vmatprep.subr.mxu0 0.0
    %1356 = vmatpush2.msra.mxu0 0.0
    %1357 = vmatprep.subr.mxu0 0.0
    %1358 = vmatpush2.msra.mxu0 0.0
    %1359 = vmatprep.subr.mxu0 0.0
    %1360 = vmatpush2.msra.mxu0 0.0
    %1361 = vmatprep.subr.mxu0 0.0
    %1362 = vmatpush2.msra.mxu0 0.0
    %1363 = vmatprep.subr.mxu0 0.0
    %1364 = vmatpush2.msra.mxu0 0.0
    %1365 = vmatprep.subr.mxu0 0.0
    %1366 = vmatpush2.msra.mxu0 0.0
    %1367 = vmatprep.subr.mxu0 0.0
    %1368 = vmatpush2.msra.mxu0 0.0
    %1369 = vmatprep.subr.mxu0 0.0
    %1370 = vmatpush2.msra.mxu0 0.0
    %1371 = vmatprep.subr.mxu0 0.0
    %1372 = vmatpush2.msra.mxu0 0.0
    %1373 = vmatprep.subr.mxu0 0.0
    %1374 = vmatpush2.msra.mxu0 0.0
    %1375 = vmatprep.subr.mxu0 0.0
    %1376 = vmatpush2.msra.mxu0 0.0
    %1377 = vmatprep.subr.mxu0 0.0
    %1378 = vmatpush2.msra.mxu0 0.0
    %1379 = vmatprep.subr.mxu0 0.0
    %1380 = vmatpush2.msra.mxu0 0.0
    %1381 = vmatprep.subr.mxu0 0.0
    %1382 = vmatpush2.msra.mxu0 0.0
    %1383 = vmatprep.mubr.f32.mxu0 0.0
    %1384 = vmatmul.mubr.f32.gmra.mxu0 %v1231
    %v1385 = vpop.f32.mrf.mxu0
    %v1386 = vadd.f32 0.0, %v1385
    %v1387 = vpop.f32.mrf.mxu0
    %1388 = vmatprep.mubr.f32.mxu0 0.0
    %1389 = vmatmul.mubr.f32.gmra.mxu0 %v1234
    %v1390 = vpop.f32.mrf.mxu0
    %v1391 = vadd.f32 0.0, %v1390
    %v1392 = vpop.f32.mrf.mxu0
    %1393 = vdwg.mxu0
    %v1394 = vsub.f32 1.0, %v1306
    %v1395 = vsub.f32 1.0, %v1311
    %v1396 = vmul.f32 %v1100, %v1394
    %v1397 = vmul.f32 %v1101, %v1395
    %v1398 = vadd.f32 %v1396, %v1386
    %v1399 = vadd.f32 %v1397, %v1391
    %v1401 = vsel %vm342, %v1072, 0
    %1403 = vmatprep.subr.mxu0 0.0
    %1404 = vmatpush1.msra.mxu0 0.0
    %1405 = vmatprep.subr.mxu0 0.0
    %1406 = vmatpush1.msra.mxu0 0.0
    %1407 = vmatprep.subr.mxu0 0.0
    %1408 = vmatpush1.msra.mxu0 0.0
    %1409 = vmatprep.subr.mxu0 0.0
    %1410 = vmatpush1.msra.mxu0 0.0
    %1411 = vmatprep.subr.mxu0 0.0
    %1412 = vmatpush1.msra.mxu0 0.0
    %1413 = vmatprep.subr.mxu0 0.0
    %1414 = vmatpush1.msra.mxu0 0.0
    %1415 = vmatprep.subr.mxu0 0.0
    %1416 = vmatpush1.msra.mxu0 0.0
    %1417 = vmatprep.subr.mxu0 0.0
    %1418 = vmatpush1.msra.mxu0 0.0
    %1419 = vmatprep.subr.mxu0 0.0
    %1420 = vmatpush1.msra.mxu0 0.0
    %1421 = vmatprep.subr.mxu0 0.0
    %1422 = vmatpush1.msra.mxu0 0.0
    %1423 = vmatprep.subr.mxu0 0.0
    %1424 = vmatpush1.msra.mxu0 0.0
    %1425 = vmatprep.subr.mxu0 0.0
    %1426 = vmatpush1.msra.mxu0 0.0
    %1427 = vmatprep.subr.mxu0 0.0
    %1428 = vmatpush1.msra.mxu0 0.0
    %1429 = vmatprep.subr.mxu0 0.0
    %1430 = vmatpush1.msra.mxu0 0.0
    %1431 = vmatprep.subr.mxu0 0.0
    %1432 = vmatpush1.msra.mxu0 %v1399
    %1433 = vmatprep.subr.mxu0 0.0
    %1434 = vmatpush1.msra.mxu0 %v1398
    %1435 = vmatprep.subr.mxu0 0.0
    %1436 = vmatpush2.msra.mxu0 0.0
    %1437 = vmatprep.subr.mxu0 0.0
    %1438 = vmatpush2.msra.mxu0 0.0
    %1439 = vmatprep.subr.mxu0 0.0
    %1440 = vmatpush2.msra.mxu0 0.0
    %1441 = vmatprep.subr.mxu0 0.0
    %1442 = vmatpush2.msra.mxu0 0.0
    %1443 = vmatprep.subr.mxu0 0.0
    %1444 = vmatpush2.msra.mxu0 0.0
    %1445 = vmatprep.subr.mxu0 0.0
    %1446 = vmatpush2.msra.mxu0 0.0
    %1447 = vmatprep.subr.mxu0 0.0
    %1448 = vmatpush2.msra.mxu0 0.0
    %1449 = vmatprep.subr.mxu0 0.0
    %1450 = vmatpush2.msra.mxu0 0.0
    %1451 = vmatprep.subr.mxu0 0.0
    %1452 = vmatpush2.msra.mxu0 0.0
    %1453 = vmatprep.subr.mxu0 0.0
    %1454 = vmatpush2.msra.mxu0 0.0
    %1455 = vmatprep.subr.mxu0 0.0
    %1456 = vmatpush2.msra.mxu0 0.0
    %1457 = vmatprep.subr.mxu0 0.0
    %1458 = vmatpush2.msra.mxu0 0.0
    %1459 = vmatprep.subr.mxu0 0.0
    %1460 = vmatpush2.msra.mxu0 0.0
    %1461 = vmatprep.subr.mxu0 0.0
    %1462 = vmatpush2.msra.mxu0 0.0
    %1463 = vmatprep.subr.mxu0 0.0
    %1464 = vmatpush2.msra.mxu0 0.0
    %1465 = vmatprep.subr.mxu0 0.0
    %1466 = vmatpush2.msra.mxu0 0.0
    %1467 = vmatprep.mubr.f32.mxu0 0.0
    %1468 = vmatmul.mubr.f32.gmra.mxu0 %v1401
    %v1469 = vpop.f32.mrf.mxu0
    %v1470 = vadd.f32 0.0, %v1469
    %v1471 = vpop.f32.mrf.mxu0
    %1472 = vdwg.mxu0
    %v1473 = vld [vmem:[%s3] sm:$0xff]
    %v1474 = vld [vmem:[%s3 + $0x8] sm:$0xff]
    %v1475 = vld [vmem:[%s3 + $0x10] sm:$0xff]
    %v1476 = vld [vmem:[%s3 + $0x18] sm:$0xff]
    %v1477 = vld [vmem:[%s3 + $0x20] sm:$0xff]
    %v1478 = vld [vmem:[%s3 + $0x28] sm:$0xff]
    %v1479 = vld [vmem:[%s3 + $0x30] sm:$0xff]
    %v1480 = vld [vmem:[%s3 + $0x38] sm:$0xff]
    %v1481 = vld [vmem:[%s3 + $0x40] sm:$0xff]
    %v1482 = vld [vmem:[%s3 + $0x48] sm:$0xff]
    %v1483 = vld [vmem:[%s3 + $0x50] sm:$0xff]
    %v1484 = vld [vmem:[%s3 + $0x58] sm:$0xff]
    %v1486 = vsel %vm57, %v1470, 0
    %1488 = vmatprep.subr.mxu0 0.0
    %1489 = vmatpush1.msra.mxu0 0.0
    %1490 = vmatprep.subr.mxu0 0.0
    %1491 = vmatpush1.msra.mxu0 0.0
    %1492 = vmatprep.subr.mxu0 0.0
    %1493 = vmatpush1.msra.mxu0 0.0
    %1494 = vmatprep.subr.mxu0 0.0
    %1495 = vmatpush1.msra.mxu0 0.0
    %1496 = vmatprep.subr.mxu0 0.0
    %1497 = vmatpush1.msra.mxu0 0.0
    %1498 = vmatprep.subr.mxu0 0.0
    %1499 = vmatpush1.msra.mxu0 0.0
    %1500 = vmatprep.subr.mxu0 0.0
    %1501 = vmatpush1.msra.mxu0 0.0
    %1502 = vmatprep.subr.mxu0 0.0
    %1503 = vmatpush1.msra.mxu0 0.0
    %1504 = vmatprep.subr.mxu0 0.0
    %1505 = vmatpush1.msra.mxu0 0.0
    %1506 = vmatprep.subr.mxu0 0.0
    %1507 = vmatpush1.msra.mxu0 0.0
    %1508 = vmatprep.subr.mxu0 0.0
    %1509 = vmatpush1.msra.mxu0 0.0
    %1510 = vmatprep.subr.mxu0 0.0
    %1511 = vmatpush1.msra.mxu0 0.0
    %1512 = vmatprep.subr.mxu0 0.0
    %1513 = vmatpush1.msra.mxu0 %v1484
    %1514 = vmatprep.subr.mxu0 0.0
    %1515 = vmatpush1.msra.mxu0 %v1483
    %1516 = vmatprep.subr.mxu0 0.0
    %1517 = vmatpush1.msra.mxu0 %v1482
    %1518 = vmatprep.subr.mxu0 0.0
    %1519 = vmatpush1.msra.mxu0 %v1481
    %1520 = vmatprep.subr.mxu0 0.0
    %1521 = vmatpush2.msra.mxu0 0.0
    %1522 = vmatprep.subr.mxu0 0.0
    %1523 = vmatpush2.msra.mxu0 0.0
    %1524 = vmatprep.subr.mxu0 0.0
    %1525 = vmatpush2.msra.mxu0 0.0
    %1526 = vmatprep.subr.mxu0 0.0
    %1527 = vmatpush2.msra.mxu0 0.0
    %1528 = vmatprep.subr.mxu0 0.0
    %1529 = vmatpush2.msra.mxu0 0.0
    %1530 = vmatprep.subr.mxu0 0.0
    %1531 = vmatpush2.msra.mxu0 0.0
    %1532 = vmatprep.subr.mxu0 0.0
    %1533 = vmatpush2.msra.mxu0 0.0
    %1534 = vmatprep.subr.mxu0 0.0
    %1535 = vmatpush2.msra.mxu0 0.0
    %1536 = vmatprep.subr.mxu0 0.0
    %1537 = vmatpush2.msra.mxu0 0.0
    %1538 = vmatprep.subr.mxu0 0.0
    %1539 = vmatpush2.msra.mxu0 0.0
    %1540 = vmatprep.subr.mxu0 0.0
    %1541 = vmatpush2.msra.mxu0 0.0
    %1542 = vmatprep.subr.mxu0 0.0
    %1543 = vmatpush2.msra.mxu0 0.0
    %1544 = vmatprep.subr.mxu0 0.0
    %1545 = vmatpush2.msra.mxu0 0.0
    %1546 = vmatprep.subr.mxu0 0.0
    %1547 = vmatpush2.msra.mxu0 0.0
    %1548 = vmatprep.subr.mxu0 0.0
    %1549 = vmatpush2.msra.mxu0 0.0
    %1550 = vmatprep.subr.mxu0 0.0
    %1551 = vmatpush2.msra.mxu0 0.0
    %1552 = vmatprep.mubr.f32.mxu0 0.0
    %1553 = vmatmul.mubr.f32.gmra.mxu0 %v1486
    %v1554 = vpop.f32.mrf.mxu0
    %v1555 = vadd.f32 0.0, %v1554
    %v1556 = vpop.f32.mrf.mxu0
    %1557 = vdwg.mxu0
    %v1559 = vsel %vm501, %v1109, 0
    %1561 = vmatprep.subr.mxu0 0.0
    %1562 = vmatpush1.msra.mxu0 0.0
    %1563 = vmatprep.subr.mxu0 0.0
    %1564 = vmatpush1.msra.mxu0 0.0
    %1565 = vmatprep.subr.mxu0 0.0
    %1566 = vmatpush1.msra.mxu0 0.0
    %1567 = vmatprep.subr.mxu0 0.0
    %1568 = vmatpush1.msra.mxu0 0.0
    %1569 = vmatprep.subr.mxu0 0.0
    %1570 = vmatpush1.msra.mxu0 0.0
    %1571 = vmatprep.subr.mxu0 0.0
    %1572 = vmatpush1.msra.mxu0 0.0
    %1573 = vmatprep.subr.mxu0 0.0
    %1574 = vmatpush1.msra.mxu0 0.0
    %1575 = vmatprep.subr.mxu0 0.0
    %1576 = vmatpush1.msra.mxu0 0.0
    %1577 = vmatprep.subr.mxu0 0.0
    %1578 = vmatpush1.msra.mxu0 %v1480
    %1579 = vmatprep.subr.mxu0 0.0
    %1580 = vmatpush1.msra.mxu0 %v1479
    %1581 = vmatprep.subr.mxu0 0.0
    %1582 = vmatpush1.msra.mxu0 %v1478
    %1583 = vmatprep.subr.mxu0 0.0
    %1584 = vmatpush1.msra.mxu0 %v1477
    %1585 = vmatprep.subr.mxu0 0.0
    %1586 = vmatpush1.msra.mxu0 %v1476
    %1587 = vmatprep.subr.mxu0 0.0
    %1588 = vmatpush1.msra.mxu0 %v1475
    %1589 = vmatprep.subr.mxu0 0.0
    %1590 = vmatpush1.msra.mxu0 %v1474
    %1591 = vmatprep.subr.mxu0 0.0
    %1592 = vmatpush1.msra.mxu0 %v1473
    %1593 = vmatprep.subr.mxu0 0.0
    %1594 = vmatpush2.msra.mxu0 0.0
    %1595 = vmatprep.subr.mxu0 0.0
    %1596 = vmatpush2.msra.mxu0 0.0
    %1597 = vmatprep.subr.mxu0 0.0
    %1598 = vmatpush2.msra.mxu0 0.0
    %1599 = vmatprep.subr.mxu0 0.0
    %1600 = vmatpush2.msra.mxu0 0.0
    %1601 = vmatprep.subr.mxu0 0.0
    %1602 = vmatpush2.msra.mxu0 0.0
    %1603 = vmatprep.subr.mxu0 0.0
    %1604 = vmatpush2.msra.mxu0 0.0
    %1605 = vmatprep.subr.mxu0 0.0
    %1606 = vmatpush2.msra.mxu0 0.0
    %1607 = vmatprep.subr.mxu0 0.0
    %1608 = vmatpush2.msra.mxu0 0.0
    %1609 = vmatprep.subr.mxu0 0.0
    %1610 = vmatpush2.msra.mxu0 0.0
    %1611 = vmatprep.subr.mxu0 0.0
    %1612 = vmatpush2.msra.mxu0 0.0
    %1613 = vmatprep.subr.mxu0 0.0
    %1614 = vmatpush2.msra.mxu0 0.0
    %1615 = vmatprep.subr.mxu0 0.0
    %1616 = vmatpush2.msra.mxu0 0.0
    %1617 = vmatprep.subr.mxu0 0.0
    %1618 = vmatpush2.msra.mxu0 0.0
    %1619 = vmatprep.subr.mxu0 0.0
    %1620 = vmatpush2.msra.mxu0 0.0
    %1621 = vmatprep.subr.mxu0 0.0
    %1622 = vmatpush2.msra.mxu0 0.0
    %1623 = vmatprep.subr.mxu0 0.0
    %1624 = vmatpush2.msra.mxu0 0.0
    %1625 = vmatprep.mubr.f32.mxu0 0.0
    %1626 = vmatmul.mubr.f32.gmra.mxu0 %v1559
    %v1627 = vpop.f32.mrf.mxu0
    %v1628 = vadd.f32 %v1555, %v1627
    %v1629 = vpop.f32.mrf.mxu0
    %1630 = vdwg.mxu0
    %v1631 = vld [vmem:[%s4] sm:$0x1]
    %v1633 = vlaneseq
    %v1634 = vshrl.u32 %v1633, 7
    %v1635 = vsub.s32 0, %v1634
    %v1636 = vrot.slane %v1631, %v1635
    %v1638 = vadd.f32 %v1628, %v1636
    %v1639 = vmax.f32 %v1638, 0.0
    %v1640 = vld [vmem:[%s7] sm:$0xff]
    %v1641 = vld [vmem:[%s7 + $0x8] sm:$0xff]
    %v1642 = vld [vmem:[%s7 + $0x10] sm:$0xff]
    %v1643 = vld [vmem:[%s7 + $0x18] sm:$0xff]
    %v1644 = vld [vmem:[%s8] sm:$0x1]
    %v1646 = vlaneseq
    %v1647 = vshrl.u32 %v1646, 7
    %v1648 = vsub.s32 0, %v1647
    %v1649 = vrot.slane %v1644, %v1648
    %v1652 = vsel %vm57, %v1639, 0
    %1654 = vmatprep.subr.mxu0 0.0
    %1655 = vmatpush1.msra.mxu0 0.0
    %1656 = vmatprep.subr.mxu0 0.0
    %1657 = vmatpush1.msra.mxu0 0.0
    %1658 = vmatprep.subr.mxu0 0.0
    %1659 = vmatpush1.msra.mxu0 0.0
    %1660 = vmatprep.subr.mxu0 0.0
    %1661 = vmatpush1.msra.mxu0 0.0
    %1662 = vmatprep.subr.mxu0 0.0
    %1663 = vmatpush1.msra.mxu0 0.0
    %1664 = vmatprep.subr.mxu0 0.0
    %1665 = vmatpush1.msra.mxu0 0.0
    %1666 = vmatprep.subr.mxu0 0.0
    %1667 = vmatpush1.msra.mxu0 0.0
    %1668 = vmatprep.subr.mxu0 0.0
    %1669 = vmatpush1.msra.mxu0 0.0
    %1670 = vmatprep.subr.mxu0 0.0
    %1671 = vmatpush1.msra.mxu0 0.0
    %1672 = vmatprep.subr.mxu0 0.0
    %1673 = vmatpush1.msra.mxu0 0.0
    %1674 = vmatprep.subr.mxu0 0.0
    %1675 = vmatpush1.msra.mxu0 0.0
    %1676 = vmatprep.subr.mxu0 0.0
    %1677 = vmatpush1.msra.mxu0 0.0
    %1678 = vmatprep.subr.mxu0 0.0
    %1679 = vmatpush1.msra.mxu0 %v1643
    %1680 = vmatprep.subr.mxu0 0.0
    %1681 = vmatpush1.msra.mxu0 %v1642
    %1682 = vmatprep.subr.mxu0 0.0
    %1683 = vmatpush1.msra.mxu0 %v1641
    %1684 = vmatprep.subr.mxu0 0.0
    %1685 = vmatpush1.msra.mxu0 %v1640
    %1686 = vmatprep.subr.mxu0 0.0
    %1687 = vmatpush2.msra.mxu0 0.0
    %1688 = vmatprep.subr.mxu0 0.0
    %1689 = vmatpush2.msra.mxu0 0.0
    %1690 = vmatprep.subr.mxu0 0.0
    %1691 = vmatpush2.msra.mxu0 0.0
    %1692 = vmatprep.subr.mxu0 0.0
    %1693 = vmatpush2.msra.mxu0 0.0
    %1694 = vmatprep.subr.mxu0 0.0
    %1695 = vmatpush2.msra.mxu0 0.0
    %1696 = vmatprep.subr.mxu0 0.0
    %1697 = vmatpush2.msra.mxu0 0.0
    %1698 = vmatprep.subr.mxu0 0.0
    %1699 = vmatpush2.msra.mxu0 0.0
    %1700 = vmatprep.subr.mxu0 0.0
    %1701 = vmatpush2.msra.mxu0 0.0
    %1702 = vmatprep.subr.mxu0 0.0
    %1703 = vmatpush2.msra.mxu0 0.0
    %1704 = vmatprep.subr.mxu0 0.0
    %1705 = vmatpush2.msra.mxu0 0.0
    %1706 = vmatprep.subr.mxu0 0.0
    %1707 = vmatpush2.msra.mxu0 0.0
    %1708 = vmatprep.subr.mxu0 0.0
    %1709 = vmatpush2.msra.mxu0 0.0
    %1710 = vmatprep.subr.mxu0 0.0
    %1711 = vmatpush2.msra.mxu0 0.0
    %1712 = vmatprep.subr.mxu0 0.0
    %1713 = vmatpush2.msra.mxu0 0.0
    %1714 = vmatprep.subr.mxu0 0.0
    %1715 = vmatpush2.msra.mxu0 0.0
    %1716 = vmatprep.subr.mxu0 0.0
    %1717 = vmatpush2.msra.mxu0 0.0
    %1718 = vmatprep.mubr.f32.mxu0 0.0
    %1719 = vmatmul.mubr.f32.gmra.mxu0 %v1652
    %v1720 = vpop.f32.mrf.mxu0
    %v1721 = vadd.f32 %v1649, %v1720
    %v1722 = vpop.f32.mrf.mxu0
    %1723 = vdwg.mxu0
    %v1724 = vtanh.pop %v1721
    %v1725 = vxor.u32 %v1721, 2147483648
    %v1726 = vmul.f32 %v1725, 1.442695
    %v1727 = vpow.pop %v1726
    %v1728 = vadd.f32 %v1727, 1.0
    %v1729 = vrcp.pop %v1728
    %v1730 = vmul.f32 1.0, %v1729
    %v1731 = vmax.f32 %v1721, 0.0
    %vm1732 = vcmp.ne.f32.partialorder %v1721, %v1721
    %v1733 = vadd.f32 %v1721, 0.0
    %v1734 = vand.u32 2147483647, %v1721
    %v1735 = vsub.f32 0.0, %v1734
    %v1736 = vmul.f32 %v1735, 1.442695
    %v1737 = vpow.pop %v1736
    %v1738 = vadd.f32 %v1737, 1.0
    %v1739 = vlog2.pop %v1738
    %v1740 = vmul.f32 %v1739, 0.6931472
    %v1741 = vmul.f32 -0.5, %v1737
    %v1742 = vadd.f32 %v1741, 1.0
    %v1743 = vmul.f32 %v1742, %v1737
    %v1744 = vand.u32 2147483647, %v1737
    %vm1745 = vcmp.lt.f32.partialorder %v1744, 0.0004427343
    %v1746 = vsel %vm1745, %v1743, %v1740
    %v1747 = vadd.f32 %v1731, %v1746
    %v1748 = vsel %vm1732, %v1733, %v1747
    %v1749 = vmul.f32 %v1398, %v1398
    %v1750 = vmul.f32 %v1399, %v1399
    %v1751 = vsel %vm57, %v1749, 0.0
    %1752 = vadd.xlane.f32.xlu0 %v1751
    %v1753 = vpop.xlane.xlu0 %1752
    %v1754 = vsel %vm57, %v1750, 0.0
    %1755 = vadd.xlane.f32.xlu0 %v1754
    %v1756 = vpop.xlane.xlu0 %1755
    %v1758 = vsel %vm57, %v1724, 0
    %v1761 = vsel %vm57, %v1398, 0
    %v1764 = vsel %vm57, %v1399, 0
    %1766 = vmatprep.subr.mxu0 0.0
    %1767 = vmatpush1.xpose.msra.mxu0 0.0
    %1768 = vmatprep.subr.mxu0 0.0
    %1769 = vmatpush1.xpose.msra.mxu0 0.0
    %1770 = vmatprep.subr.mxu0 0.0
    %1771 = vmatpush1.xpose.msra.mxu0 0.0
    %1772 = vmatprep.subr.mxu0 0.0
    %1773 = vmatpush1.xpose.msra.mxu0 0.0
    %1774 = vmatprep.subr.mxu0 0.0
    %1775 = vmatpush1.xpose.msra.mxu0 0.0
    %1776 = vmatprep.subr.mxu0 0.0
    %1777 = vmatpush1.xpose.msra.mxu0 0.0
    %1778 = vmatprep.subr.mxu0 0.0
    %1779 = vmatpush1.xpose.msra.mxu0 0.0
    %1780 = vmatprep.subr.mxu0 0.0
    %1781 = vmatpush1.xpose.msra.mxu0 0.0
    %1782 = vmatprep.subr.mxu0 0.0
    %1783 = vmatpush1.xpose.msra.mxu0 0.0
    %1784 = vmatprep.subr.mxu0 0.0
    %1785 = vmatpush1.xpose.msra.mxu0 0.0
    %1786 = vmatprep.subr.mxu0 0.0
    %1787 = vmatpush1.xpose.msra.mxu0 0.0
    %1788 = vmatprep.subr.mxu0 0.0
    %1789 = vmatpush1.xpose.msra.mxu0 0.0
    %1790 = vmatprep.subr.mxu0 0.0
    %1791 = vmatpush1.xpose.msra.mxu0 0.0
    %1792 = vmatprep.subr.mxu0 0.0
    %1793 = vmatpush1.xpose.msra.mxu0 0.0
    %1794 = vmatprep.subr.mxu0 0.0
    %1795 = vmatpush1.xpose.msra.mxu0 %v1764
    %1796 = vmatprep.subr.mxu0 0.0
    %1797 = vmatpush1.xpose.msra.mxu0 %v1761
    %1798 = vmatprep.subr.mxu0 0.0
    %1799 = vmatpush2.xpose.msra.mxu0 0.0
    %1800 = vmatprep.subr.mxu0 0.0
    %1801 = vmatpush2.xpose.msra.mxu0 0.0
    %1802 = vmatprep.subr.mxu0 0.0
    %1803 = vmatpush2.xpose.msra.mxu0 0.0
    %1804 = vmatprep.subr.mxu0 0.0
    %1805 = vmatpush2.xpose.msra.mxu0 0.0
    %1806 = vmatprep.subr.mxu0 0.0
    %1807 = vmatpush2.xpose.msra.mxu0 0.0
    %1808 = vmatprep.subr.mxu0 0.0
    %1809 = vmatpush2.xpose.msra.mxu0 0.0
    %1810 = vmatprep.subr.mxu0 0.0
    %1811 = vmatpush2.xpose.msra.mxu0 0.0
    %1812 = vmatprep.subr.mxu0 0.0
    %1813 = vmatpush2.xpose.msra.mxu0 0.0
    %1814 = vmatprep.subr.mxu0 0.0
    %1815 = vmatpush2.xpose.msra.mxu0 0.0
    %1816 = vmatprep.subr.mxu0 0.0
    %1817 = vmatpush2.xpose.msra.mxu0 0.0
    %1818 = vmatprep.subr.mxu0 0.0
    %1819 = vmatpush2.xpose.msra.mxu0 0.0
    %1820 = vmatprep.subr.mxu0 0.0
    %1821 = vmatpush2.xpose.msra.mxu0 0.0
    %1822 = vmatprep.subr.mxu0 0.0
    %1823 = vmatpush2.xpose.msra.mxu0 0.0
    %1824 = vmatprep.subr.mxu0 0.0
    %1825 = vmatpush2.xpose.msra.mxu0 0.0
    %1826 = vmatprep.subr.mxu0 0.0
    %1827 = vmatpush2.xpose.msra.mxu0 0.0
    %1828 = vmatprep.subr.mxu0 0.0
    %1829 = vmatpush2.xpose.msra.mxu0 0.0
    %1830 = vmatprep.mubr.f32.mxu0 0.0
    %1831 = vmatmul.mubr.f32.gmra.mxu0 %v1758
    %v1832 = vpop.f32.mrf.mxu0
    %v1833 = vadd.f32 0.0, %v1832
    %v1834 = vpop.f32.mrf.mxu0
    %1835 = vdwg.mxu0
    %v1836 = vmul.f32 %v1724, %v1724
    %v1837 = vsel %vm781, %v1836, 0.0
    %1838 = vadd.xlane.f32.xlu0 %v1837
    %v1839 = vpop.xlane.xlu0 %1838
    %v1841 = vsel %vm785, %v1839, 0
    %v1844 = vsel %vm785, %v1753, 0
    %v1847 = vsel %vm785, %v1756, 0
    %1849 = vmatprep.subr.mxu0 0.0
    %1850 = vmatpush1.xpose.msra.mxu0 0.0
    %1851 = vmatprep.subr.mxu0 0.0
    %1852 = vmatpush1.xpose.msra.mxu0 0.0
    %1853 = vmatprep.subr.mxu0 0.0
    %1854 = vmatpush1.xpose.msra.mxu0 0.0
    %1855 = vmatprep.subr.mxu0 0.0
    %1856 = vmatpush1.xpose.msra.mxu0 0.0
    %1857 = vmatprep.subr.mxu0 0.0
    %1858 = vmatpush1.xpose.msra.mxu0 0.0
    %1859 = vmatprep.subr.mxu0 0.0
    %1860 = vmatpush1.xpose.msra.mxu0 0.0
    %1861 = vmatprep.subr.mxu0 0.0
    %1862 = vmatpush1.xpose.msra.mxu0 0.0
    %1863 = vmatprep.subr.mxu0 0.0
    %1864 = vmatpush1.xpose.msra.mxu0 0.0
    %1865 = vmatprep.subr.mxu0 0.0
    %1866 = vmatpush1.xpose.msra.mxu0 0.0
    %1867 = vmatprep.subr.mxu0 0.0
    %1868 = vmatpush1.xpose.msra.mxu0 0.0
    %1869 = vmatprep.subr.mxu0 0.0
    %1870 = vmatpush1.xpose.msra.mxu0 0.0
    %1871 = vmatprep.subr.mxu0 0.0
    %1872 = vmatpush1.xpose.msra.mxu0 0.0
    %1873 = vmatprep.subr.mxu0 0.0
    %1874 = vmatpush1.xpose.msra.mxu0 0.0
    %1875 = vmatprep.subr.mxu0 0.0
    %1876 = vmatpush1.xpose.msra.mxu0 0.0
    %1877 = vmatprep.subr.mxu0 0.0
    %1878 = vmatpush1.xpose.msra.mxu0 %v1847
    %1879 = vmatprep.subr.mxu0 0.0
    %1880 = vmatpush1.xpose.msra.mxu0 %v1844
    %1881 = vmatprep.subr.mxu0 0.0
    %1882 = vmatpush2.xpose.msra.mxu0 0.0
    %1883 = vmatprep.subr.mxu0 0.0
    %1884 = vmatpush2.xpose.msra.mxu0 0.0
    %1885 = vmatprep.subr.mxu0 0.0
    %1886 = vmatpush2.xpose.msra.mxu0 0.0
    %1887 = vmatprep.subr.mxu0 0.0
    %1888 = vmatpush2.xpose.msra.mxu0 0.0
    %1889 = vmatprep.subr.mxu0 0.0
    %1890 = vmatpush2.xpose.msra.mxu0 0.0
    %1891 = vmatprep.subr.mxu0 0.0
    %1892 = vmatpush2.xpose.msra.mxu0 0.0
    %1893 = vmatprep.subr.mxu0 0.0
    %1894 = vmatpush2.xpose.msra.mxu0 0.0
    %1895 = vmatprep.subr.mxu0 0.0
    %1896 = vmatpush2.xpose.msra.mxu0 0.0
    %1897 = vmatprep.subr.mxu0 0.0
    %1898 = vmatpush2.xpose.msra.mxu0 0.0
    %1899 = vmatprep.subr.mxu0 0.0
    %1900 = vmatpush2.xpose.msra.mxu0 0.0
    %1901 = vmatprep.subr.mxu0 0.0
    %1902 = vmatpush2.xpose.msra.mxu0 0.0
    %1903 = vmatprep.subr.mxu0 0.0
    %1904 = vmatpush2.xpose.msra.mxu0 0.0
    %1905 = vmatprep.subr.mxu0 0.0
    %1906 = vmatpush2.xpose.msra.mxu0 0.0
    %1907 = vmatprep.subr.mxu0 0.0
    %1908 = vmatpush2.xpose.msra.mxu0 0.0
    %1909 = vmatprep.subr.mxu0 0.0
    %1910 = vmatpush2.xpose.msra.mxu0 0.0
    %1911 = vmatprep.subr.mxu0 0.0
    %1912 = vmatpush2.xpose.msra.mxu0 0.0
    %1913 = vmatprep.mubr.f32.mxu0 0.0
    %1914 = vmatmul.mubr.f32.gmra.mxu0 %v1841
    %v1915 = vpop.f32.mrf.mxu0
    %v1916 = vadd.f32 0.0, %v1915
    %v1917 = vpop.f32.mrf.mxu0
    %1918 = vdwg.mxu0
    %v1919 = vrsqrt.pop %v1916
    %v1920 = vmul.f32 %v1916, %v1919
    %vm1921 = vcmp.eq.f32.partialorder %v1916, inf
    %v1922 = vsel %vm1921, %v1916, %v1920
    %vm1923 = vcmp.eq.f32.partialorder %v1916, 0.0
    %v1924 = vand.u32 %v1916, 2147483648
    %v1925 = vsel %vm1923, %v1924, %v1922
    %v1926 = vadd.f32 %v1925, 1e-08
    %v1927 = vrcp.pop %v1926
    %v1928 = vmul.f32 %v1833, %v1927
    %1930 = vset.pattern.permute.xlu0 72
    %1931 = vperm.xlu0 %1930, %v1748
    %v1932 = vpop.permute.xlu0 %1931
    %v1934 = vmul.f32 %v1932, %v1928
    %v1935 = vsel %vm881, %v1934, -inf
    %1936 = vmax.xlane.f32.xlu0 %v1935
    %v1937 = vpop.xlane.xlu0 %1936
    %v1938 = vsub.f32 %v1934, %v1937
    %v1939 = vmul.f32 %v1938, 1.442695
    %v1940 = vpow.pop %v1939
    %v1941 = vsel %vm881, %v1940, 0.0
    %1942 = vadd.xlane.f32.xlu0 %v1941
    %v1943 = vpop.xlane.xlu0 %1942
    %v1944 = vrcp.pop %v1943
    %v1945 = vmul.f32 %v1940, %v1944
    %1946 = vrot.lane.b32.xlu0 %v1724, 96
    %v1947 = vpop.permute.xlu0 %1946
    %v1948 = vsel %vm57, %v1947, 0
    %1950 = vmatprep.subr.mxu0 0.0
    %1951 = vmatpush1.xpose.msra.mxu0 0.0
    %1952 = vmatprep.subr.mxu0 0.0
    %1953 = vmatpush1.xpose.msra.mxu0 0.0
    %1954 = vmatprep.subr.mxu0 0.0
    %1955 = vmatpush1.xpose.msra.mxu0 0.0
    %1956 = vmatprep.subr.mxu0 0.0
    %1957 = vmatpush1.xpose.msra.mxu0 0.0
    %1958 = vmatprep.subr.mxu0 0.0
    %1959 = vmatpush1.xpose.msra.mxu0 0.0
    %1960 = vmatprep.subr.mxu0 0.0
    %1961 = vmatpush1.xpose.msra.mxu0 0.0
    %1962 = vmatprep.subr.mxu0 0.0
    %1963 = vmatpush1.xpose.msra.mxu0 0.0
    %1964 = vmatprep.subr.mxu0 0.0
    %1965 = vmatpush1.xpose.msra.mxu0 0.0
    %1966 = vmatprep.subr.mxu0 0.0
    %1967 = vmatpush1.xpose.msra.mxu0 0.0
    %1968 = vmatprep.subr.mxu0 0.0
    %1969 = vmatpush1.xpose.msra.mxu0 0.0
    %1970 = vmatprep.subr.mxu0 0.0
    %1971 = vmatpush1.xpose.msra.mxu0 0.0
    %1972 = vmatprep.subr.mxu0 0.0
    %1973 = vmatpush1.xpose.msra.mxu0 0.0
    %1974 = vmatprep.subr.mxu0 0.0
    %1975 = vmatpush1.xpose.msra.mxu0 0.0
    %1976 = vmatprep.subr.mxu0 0.0
    %1977 = vmatpush1.xpose.msra.mxu0 0.0
    %1978 = vmatprep.subr.mxu0 0.0
    %1979 = vmatpush1.xpose.msra.mxu0 %v1764
    %1980 = vmatprep.subr.mxu0 0.0
    %1981 = vmatpush1.xpose.msra.mxu0 %v1761
    %1982 = vmatprep.subr.mxu0 0.0
    %1983 = vmatpush2.xpose.msra.mxu0 0.0
    %1984 = vmatprep.subr.mxu0 0.0
    %1985 = vmatpush2.xpose.msra.mxu0 0.0
    %1986 = vmatprep.subr.mxu0 0.0
    %1987 = vmatpush2.xpose.msra.mxu0 0.0
    %1988 = vmatprep.subr.mxu0 0.0
    %1989 = vmatpush2.xpose.msra.mxu0 0.0
    %1990 = vmatprep.subr.mxu0 0.0
    %1991 = vmatpush2.xpose.msra.mxu0 0.0
    %1992 = vmatprep.subr.mxu0 0.0
    %1993 = vmatpush2.xpose.msra.mxu0 0.0
    %1994 = vmatprep.subr.mxu0 0.0
    %1995 = vmatpush2.xpose.msra.mxu0 0.0
    %1996 = vmatprep.subr.mxu0 0.0
    %1997 = vmatpush2.xpose.msra.mxu0 0.0
    %1998 = vmatprep.subr.mxu0 0.0
    %1999 = vmatpush2.xpose.msra.mxu0 0.0
    %2000 = vmatprep.subr.mxu0 0.0
    %2001 = vmatpush2.xpose.msra.mxu0 0.0
    %2002 = vmatprep.subr.mxu0 0.0
    %2003 = vmatpush2.xpose.msra.mxu0 0.0
    %2004 = vmatprep.subr.mxu0 0.0
    %2005 = vmatpush2.xpose.msra.mxu0 0.0
    %2006 = vmatprep.subr.mxu0 0.0
    %2007 = vmatpush2.xpose.msra.mxu0 0.0
    %2008 = vmatprep.subr.mxu0 0.0
    %2009 = vmatpush2.xpose.msra.mxu0 0.0
    %2010 = vmatprep.subr.mxu0 0.0
    %2011 = vmatpush2.xpose.msra.mxu0 0.0
    %2012 = vmatprep.subr.mxu0 0.0
    %2013 = vmatpush2.xpose.msra.mxu0 0.0
    %2014 = vmatprep.mubr.f32.mxu0 0.0
    %2015 = vmatmul.mubr.f32.gmra.mxu0 %v1948
    %v2016 = vpop.f32.mrf.mxu0
    %v2017 = vadd.f32 0.0, %v2016
    %v2018 = vpop.f32.mrf.mxu0
    %2019 = vdwg.mxu0
    %2021 = vrot.lane.b32.xlu0 %v1836, 96
    %v2022 = vpop.permute.xlu0 %2021
    %v2024 = vsel %vm781, %v2022, 0.0
    %2025 = vadd.xlane.f32.xlu0 %v2024
    %v2026 = vpop.xlane.xlu0 %2025
    %v2028 = vsel %vm785, %v2026, 0
    %2030 = vmatprep.subr.mxu0 0.0
    %2031 = vmatpush1.xpose.msra.mxu0 0.0
    %2032 = vmatprep.subr.mxu0 0.0
    %2033 = vmatpush1.xpose.msra.mxu0 0.0
    %2034 = vmatprep.subr.mxu0 0.0
    %2035 = vmatpush1.xpose.msra.mxu0 0.0
    %2036 = vmatprep.subr.mxu0 0.0
    %2037 = vmatpush1.xpose.msra.mxu0 0.0
    %2038 = vmatprep.subr.mxu0 0.0
    %2039 = vmatpush1.xpose.msra.mxu0 0.0
    %2040 = vmatprep.subr.mxu0 0.0
    %2041 = vmatpush1.xpose.msra.mxu0 0.0
    %2042 = vmatprep.subr.mxu0 0.0
    %2043 = vmatpush1.xpose.msra.mxu0 0.0
    %2044 = vmatprep.subr.mxu0 0.0
    %2045 = vmatpush1.xpose.msra.mxu0 0.0
    %2046 = vmatprep.subr.mxu0 0.0
    %2047 = vmatpush1.xpose.msra.mxu0 0.0
    %2048 = vmatprep.subr.mxu0 0.0
    %2049 = vmatpush1.xpose.msra.mxu0 0.0
    %2050 = vmatprep.subr.mxu0 0.0
    %2051 = vmatpush1.xpose.msra.mxu0 0.0
    %2052 = vmatprep.subr.mxu0 0.0
    %2053 = vmatpush1.xpose.msra.mxu0 0.0
    %2054 = vmatprep.subr.mxu0 0.0
    %2055 = vmatpush1.xpose.msra.mxu0 0.0
    %2056 = vmatprep.subr.mxu0 0.0
    %2057 = vmatpush1.xpose.msra.mxu0 0.0
    %2058 = vmatprep.subr.mxu0 0.0
    %2059 = vmatpush1.xpose.msra.mxu0 %v1847
    %2060 = vmatprep.subr.mxu0 0.0
    %2061 = vmatpush1.xpose.msra.mxu0 %v1844
    %2062 = vmatprep.subr.mxu0 0.0
    %2063 = vmatpush2.xpose.msra.mxu0 0.0
    %2064 = vmatprep.subr.mxu0 0.0
    %2065 = vmatpush2.xpose.msra.mxu0 0.0
    %2066 = vmatprep.subr.mxu0 0.0
    %2067 = vmatpush2.xpose.msra.mxu0 0.0
    %2068 = vmatprep.subr.mxu0 0.0
    %2069 = vmatpush2.xpose.msra.mxu0 0.0
    %2070 = vmatprep.subr.mxu0 0.0
    %2071 = vmatpush2.xpose.msra.mxu0 0.0
    %2072 = vmatprep.subr.mxu0 0.0
    %2073 = vmatpush2.xpose.msra.mxu0 0.0
    %2074 = vmatprep.subr.mxu0 0.0
    %2075 = vmatpush2.xpose.msra.mxu0 0.0
    %2076 = vmatprep.subr.mxu0 0.0
    %2077 = vmatpush2.xpose.msra.mxu0 0.0
    %2078 = vmatprep.subr.mxu0 0.0
    %2079 = vmatpush2.xpose.msra.mxu0 0.0
    %2080 = vmatprep.subr.mxu0 0.0
    %2081 = vmatpush2.xpose.msra.mxu0 0.0
    %2082 = vmatprep.subr.mxu0 0.0
    %2083 = vmatpush2.xpose.msra.mxu0 0.0
    %2084 = vmatprep.subr.mxu0 0.0
    %2085 = vmatpush2.xpose.msra.mxu0 0.0
    %2086 = vmatprep.subr.mxu0 0.0
    %2087 = vmatpush2.xpose.msra.mxu0 0.0
    %2088 = vmatprep.subr.mxu0 0.0
    %2089 = vmatpush2.xpose.msra.mxu0 0.0
    %2090 = vmatprep.subr.mxu0 0.0
    %2091 = vmatpush2.xpose.msra.mxu0 0.0
    %2092 = vmatprep.subr.mxu0 0.0
    %2093 = vmatpush2.xpose.msra.mxu0 0.0
    %2094 = vmatprep.mubr.f32.mxu0 0.0
    %2095 = vmatmul.mubr.f32.gmra.mxu0 %v2028
    %v2096 = vpop.f32.mrf.mxu0
    %v2097 = vadd.f32 0.0, %v2096
    %v2098 = vpop.f32.mrf.mxu0
    %2099 = vdwg.mxu0
    %v2100 = vrsqrt.pop %v2097
    %v2101 = vmul.f32 %v2097, %v2100
    %vm2102 = vcmp.eq.f32.partialorder %v2097, inf
    %v2103 = vsel %vm2102, %v2097, %v2101
    %vm2104 = vcmp.eq.f32.partialorder %v2097, 0.0
    %v2105 = vand.u32 %v2097, 2147483648
    %v2106 = vsel %vm2104, %v2105, %v2103
    %v2107 = vadd.f32 %v2106, 1e-08
    %v2108 = vrcp.pop %v2107
    %v2109 = vmul.f32 %v2017, %v2108
    %2110 = vset.pattern.permute.xlu0 73
    %2111 = vperm.xlu0 %2110, %v1748
    %v2112 = vpop.permute.xlu0 %2111
    %v2114 = vmul.f32 %v2112, %v2109
    %v2115 = vsel %vm881, %v2114, -inf
    %2116 = vmax.xlane.f32.xlu0 %v2115
    %v2117 = vpop.xlane.xlu0 %2116
    %v2118 = vsub.f32 %v2114, %v2117
    %v2119 = vmul.f32 %v2118, 1.442695
    %v2120 = vpow.pop %v2119
    %v2121 = vsel %vm881, %v2120, 0.0
    %2122 = vadd.xlane.f32.xlu0 %v2121
    %v2123 = vpop.xlane.xlu0 %2122
    %v2124 = vrcp.pop %v2123
    %v2125 = vmul.f32 %v2120, %v2124
    %v2126 = vsel %vm57, %v1398, 0.0
    %v2127 = vsel %vm57, %v1399, 0.0
    %v2128 = vadd.f32 %v2126, %v2127
    %v2129 = vrot.slane %v2128, 4
    %v2130 = vadd.f32 %v2128, %v2129
    %v2131 = vrot.slane %v2130, 2
    %v2132 = vadd.f32 %v2130, %v2131
    %v2133 = vrot.slane %v2132, 1
    %v2134 = vadd.f32 %v2132, %v2133
    %v2135 = vmul.f32 %v2134, %v1082
    %v2136 = vsub.f32 %v1398, %v2135
    %v2137 = vsub.f32 %v1399, %v2135
    %v2138 = vmul.f32 %v2136, %v2136
    %v2139 = vmul.f32 %v2137, %v2137
    %v2140 = vsel %vm57, %v2138, 0.0
    %v2141 = vsel %vm57, %v2139, 0.0
    %v2142 = vadd.f32 %v2140, %v2141
    %v2143 = vrot.slane %v2142, 4
    %v2144 = vadd.f32 %v2142, %v2143
    %v2145 = vrot.slane %v2144, 2
    %v2146 = vadd.f32 %v2144, %v2145
    %v2147 = vrot.slane %v2146, 1
    %v2148 = vadd.f32 %v2146, %v2147
    %v2149 = vmul.f32 %v2148, %v1082
    %v2150 = vadd.f32 %v2149, 1e-05
    %v2151 = vrsqrt.pop %v2150
    %v2152 = vmul.f32 %v2136, %v2151
    %v2153 = vmul.f32 %v2137, %v2151
    %2155 = vrot.lane.b32.xlu0 %v1730, 64
    %v2156 = vpop.permute.xlu0 %2155
    %s2158 = scalar_lea.vmem [#allocation2], 2
    %2159 = vst.msk [vmem:[%s2158] sm:$0x3] %vm1106, %v2156
    %s2160 = scalar_lea.vmem %s0, 4
    %v2161 = vld [vmem:[%s2160] sm:$0x3]
    %v2162 = vld [vmem:[%s5] sm:$0xff]
    %v2163 = vld [vmem:[%s5 + $0x8] sm:$0xff]
    %v2164 = vld [vmem:[%s5 + $0x10] sm:$0xff]
    %v2165 = vld [vmem:[%s5 + $0x18] sm:$0xff]
    %v2166 = vld [vmem:[%s6] sm:$0x1]
    %v2168 = vlaneseq
    %v2169 = vshrl.u32 %v2168, 7
    %v2170 = vsub.s32 0, %v2169
    %v2171 = vrot.slane %v2166, %v2170
    %2173 = vmatprep.subr.mxu0 0.0
    %2174 = vmatpush1.msra.mxu0 0.0
    %2175 = vmatprep.subr.mxu0 0.0
    %2176 = vmatpush1.msra.mxu0 0.0
    %2177 = vmatprep.subr.mxu0 0.0
    %2178 = vmatpush1.msra.mxu0 0.0
    %2179 = vmatprep.subr.mxu0 0.0
    %2180 = vmatpush1.msra.mxu0 0.0
    %2181 = vmatprep.subr.mxu0 0.0
    %2182 = vmatpush1.msra.mxu0 0.0
    %2183 = vmatprep.subr.mxu0 0.0
    %2184 = vmatpush1.msra.mxu0 0.0
    %2185 = vmatprep.subr.mxu0 0.0
    %2186 = vmatpush1.msra.mxu0 0.0
    %2187 = vmatprep.subr.mxu0 0.0
    %2188 = vmatpush1.msra.mxu0 0.0
    %2189 = vmatprep.subr.mxu0 0.0
    %2190 = vmatpush1.msra.mxu0 0.0
    %2191 = vmatprep.subr.mxu0 0.0
    %2192 = vmatpush1.msra.mxu0 0.0
    %2193 = vmatprep.subr.mxu0 0.0
    %2194 = vmatpush1.msra.mxu0 0.0
    %2195 = vmatprep.subr.mxu0 0.0
    %2196 = vmatpush1.msra.mxu0 0.0
    %2197 = vmatprep.subr.mxu0 0.0
    %2198 = vmatpush1.msra.mxu0 %v2165
    %2199 = vmatprep.subr.mxu0 0.0
    %2200 = vmatpush1.msra.mxu0 %v2164
    %2201 = vmatprep.subr.mxu0 0.0
    %2202 = vmatpush1.msra.mxu0 %v2163
    %2203 = vmatprep.subr.mxu0 0.0
    %2204 = vmatpush1.msra.mxu0 %v2162
    %2205 = vmatprep.subr.mxu0 0.0
    %2206 = vmatpush2.msra.mxu0 0.0
    %2207 = vmatprep.subr.mxu0 0.0
    %2208 = vmatpush2.msra.mxu0 0.0
    %2209 = vmatprep.subr.mxu0 0.0
    %2210 = vmatpush2.msra.mxu0 0.0
    %2211 = vmatprep.subr.mxu0 0.0
    %2212 = vmatpush2.msra.mxu0 0.0
    %2213 = vmatprep.subr.mxu0 0.0
    %2214 = vmatpush2.msra.mxu0 0.0
    %2215 = vmatprep.subr.mxu0 0.0
    %2216 = vmatpush2.msra.mxu0 0.0
    %2217 = vmatprep.subr.mxu0 0.0
    %2218 = vmatpush2.msra.mxu0 0.0
    %2219 = vmatprep.subr.mxu0 0.0
    %2220 = vmatpush2.msra.mxu0 0.0
    %2221 = vmatprep.subr.mxu0 0.0
    %2222 = vmatpush2.msra.mxu0 0.0
    %2223 = vmatprep.subr.mxu0 0.0
    %2224 = vmatpush2.msra.mxu0 0.0
    %2225 = vmatprep.subr.mxu0 0.0
    %2226 = vmatpush2.msra.mxu0 0.0
    %2227 = vmatprep.subr.mxu0 0.0
    %2228 = vmatpush2.msra.mxu0 0.0
    %2229 = vmatprep.subr.mxu0 0.0
    %2230 = vmatpush2.msra.mxu0 0.0
    %2231 = vmatprep.subr.mxu0 0.0
    %2232 = vmatpush2.msra.mxu0 0.0
    %2233 = vmatprep.subr.mxu0 0.0
    %2234 = vmatpush2.msra.mxu0 0.0
    %2235 = vmatprep.subr.mxu0 0.0
    %2236 = vmatpush2.msra.mxu0 0.0
    %2237 = vmatprep.mubr.f32.mxu0 0.0
    %2238 = vmatmul.mubr.f32.gmra.mxu0 %v1652
    %v2239 = vpop.f32.mrf.mxu0
    %v2240 = vadd.f32 %v2171, %v2239
    %v2241 = vpop.f32.mrf.mxu0
    %2242 = vdwg.mxu0
    %v2243 = vxor.u32 %v2240, 2147483648
    %v2244 = vmul.f32 %v2243, 1.442695
    %v2245 = vpow.pop %v2244
    %v2246 = vadd.f32 %v2245, 1.0
    %v2247 = vrcp.pop %v2246
    %v2248 = vmul.f32 1.0, %v2247
    %v2249 = vtanh.pop %v2240
    %2250 = vxpose.xlu0.b32.start [1/16] %v1945, 128
    %2251 = vxpose.xlu0.b32.cont [2/16] 0.0, 128
    %2252 = vxpose.xlu0.b32.cont [3/16] 0.0, 128
    %2253 = vxpose.xlu0.b32.cont [4/16] 0.0, 128
    %2254 = vxpose.xlu0.b32.cont [5/16] 0.0, 128
    %2255 = vxpose.xlu0.b32.cont [6/16] 0.0, 128
    %2256 = vxpose.xlu0.b32.cont [7/16] 0.0, 128
    %2257 = vxpose.xlu0.b32.cont [8/16] 0.0, 128
    %2258 = vxpose.xlu0.b32.cont [9/16] 0.0, 128
    %2259 = vxpose.xlu0.b32.cont [10/16] 0.0, 128
    %2260 = vxpose.xlu0.b32.cont [11/16] 0.0, 128
    %2261 = vxpose.xlu0.b32.cont [12/16] 0.0, 128
    %2262 = vxpose.xlu0.b32.cont [13/16] 0.0, 128
    %2263 = vxpose.xlu0.b32.cont [14/16] 0.0, 128
    %2264 = vxpose.xlu0.b32.cont [15/16] 0.0, 128
    %2265 = vxpose.xlu0.b32.end [16/16] 0.0, 128
    %v2266 = vpop.trf.xlu0
    %v2267 = vpop.trf.xlu0
    %v2268 = vpop.trf.xlu0
    %v2269 = vpop.trf.xlu0
    %v2270 = vpop.trf.xlu0
    %v2271 = vpop.trf.xlu0
    %v2272 = vpop.trf.xlu0
    %v2273 = vpop.trf.xlu0
    %v2274 = vpop.trf.xlu0
    %v2275 = vpop.trf.xlu0
    %v2276 = vpop.trf.xlu0
    %v2277 = vpop.trf.xlu0
    %v2278 = vpop.trf.xlu0
    %v2279 = vpop.trf.xlu0
    %v2280 = vpop.trf.xlu0
    %v2281 = vpop.trf.xlu0
    %v2283 = vsel %vm170, %v2266, 0
    %v2286 = vsel %vm170, %v2267, 0
    %v2289 = vsel %vm177, %v2248, 0
    %2291 = vmatprep.subr.mxu0 0.0
    %2292 = vmatpush1.msra.mxu0 0.0
    %2293 = vmatprep.subr.mxu0 0.0
    %2294 = vmatpush1.msra.mxu0 0.0
    %2295 = vmatprep.subr.mxu0 0.0
    %2296 = vmatpush1.msra.mxu0 0.0
    %2297 = vmatprep.subr.mxu0 0.0
    %2298 = vmatpush1.msra.mxu0 0.0
    %2299 = vmatprep.subr.mxu0 0.0
    %2300 = vmatpush1.msra.mxu0 0.0
    %2301 = vmatprep.subr.mxu0 0.0
    %2302 = vmatpush1.msra.mxu0 0.0
    %2303 = vmatprep.subr.mxu0 0.0
    %2304 = vmatpush1.msra.mxu0 0.0
    %2305 = vmatprep.subr.mxu0 0.0
    %2306 = vmatpush1.msra.mxu0 0.0
    %2307 = vmatprep.subr.mxu0 0.0
    %2308 = vmatpush1.msra.mxu0 0.0
    %2309 = vmatprep.subr.mxu0 0.0
    %2310 = vmatpush1.msra.mxu0 0.0
    %2311 = vmatprep.subr.mxu0 0.0
    %2312 = vmatpush1.msra.mxu0 0.0
    %2313 = vmatprep.subr.mxu0 0.0
    %2314 = vmatpush1.msra.mxu0 0.0
    %2315 = vmatprep.subr.mxu0 0.0
    %2316 = vmatpush1.msra.mxu0 0.0
    %2317 = vmatprep.subr.mxu0 0.0
    %2318 = vmatpush1.msra.mxu0 0.0
    %2319 = vmatprep.subr.mxu0 0.0
    %2320 = vmatpush1.msra.mxu0 0.0
    %2321 = vmatprep.subr.mxu0 0.0
    %2322 = vmatpush1.msra.mxu0 %v2289
    %2323 = vmatprep.subr.mxu0 0.0
    %2324 = vmatpush2.msra.mxu0 0.0
    %2325 = vmatprep.subr.mxu0 0.0
    %2326 = vmatpush2.msra.mxu0 0.0
    %2327 = vmatprep.subr.mxu0 0.0
    %2328 = vmatpush2.msra.mxu0 0.0
    %2329 = vmatprep.subr.mxu0 0.0
    %2330 = vmatpush2.msra.mxu0 0.0
    %2331 = vmatprep.subr.mxu0 0.0
    %2332 = vmatpush2.msra.mxu0 0.0
    %2333 = vmatprep.subr.mxu0 0.0
    %2334 = vmatpush2.msra.mxu0 0.0
    %2335 = vmatprep.subr.mxu0 0.0
    %2336 = vmatpush2.msra.mxu0 0.0
    %2337 = vmatprep.subr.mxu0 0.0
    %2338 = vmatpush2.msra.mxu0 0.0
    %2339 = vmatprep.subr.mxu0 0.0
    %2340 = vmatpush2.msra.mxu0 0.0
    %2341 = vmatprep.subr.mxu0 0.0
    %2342 = vmatpush2.msra.mxu0 0.0
    %2343 = vmatprep.subr.mxu0 0.0
    %2344 = vmatpush2.msra.mxu0 0.0
    %2345 = vmatprep.subr.mxu0 0.0
    %2346 = vmatpush2.msra.mxu0 0.0
    %2347 = vmatprep.subr.mxu0 0.0
    %2348 = vmatpush2.msra.mxu0 0.0
    %2349 = vmatprep.subr.mxu0 0.0
    %2350 = vmatpush2.msra.mxu0 0.0
    %2351 = vmatprep.subr.mxu0 0.0
    %2352 = vmatpush2.msra.mxu0 0.0
    %2353 = vmatprep.subr.mxu0 0.0
    %2354 = vmatpush2.msra.mxu0 0.0
    %2355 = vmatprep.mubr.f32.mxu0 0.0
    %2356 = vmatmul.mubr.f32.gmra.mxu0 %v2283
    %v2357 = vpop.f32.mrf.mxu0
    %v2358 = vadd.f32 0.0, %v2357
    %v2359 = vpop.f32.mrf.mxu0
    %2360 = vmatprep.mubr.f32.mxu0 0.0
    %2361 = vmatmul.mubr.f32.gmra.mxu0 %v2286
    %v2362 = vpop.f32.mrf.mxu0
    %v2363 = vadd.f32 0.0, %v2362
    %v2364 = vpop.f32.mrf.mxu0
    %2365 = vdwg.mxu0
    %2367 = vrot.lane.b32.xlu0 %v2249, 96
    %v2368 = vpop.permute.xlu0 %2367
    %v2369 = vsel %vm177, %v2368, 0
    %2371 = vmatprep.subr.mxu0 0.0
    %2372 = vmatpush1.msra.mxu0 0.0
    %2373 = vmatprep.subr.mxu0 0.0
    %2374 = vmatpush1.msra.mxu0 0.0
    %2375 = vmatprep.subr.mxu0 0.0
    %2376 = vmatpush1.msra.mxu0 0.0
    %2377 = vmatprep.subr.mxu0 0.0
    %2378 = vmatpush1.msra.mxu0 0.0
    %2379 = vmatprep.subr.mxu0 0.0
    %2380 = vmatpush1.msra.mxu0 0.0
    %2381 = vmatprep.subr.mxu0 0.0
    %2382 = vmatpush1.msra.mxu0 0.0
    %2383 = vmatprep.subr.mxu0 0.0
    %2384 = vmatpush1.msra.mxu0 0.0
    %2385 = vmatprep.subr.mxu0 0.0
    %2386 = vmatpush1.msra.mxu0 0.0
    %2387 = vmatprep.subr.mxu0 0.0
    %2388 = vmatpush1.msra.mxu0 0.0
    %2389 = vmatprep.subr.mxu0 0.0
    %2390 = vmatpush1.msra.mxu0 0.0
    %2391 = vmatprep.subr.mxu0 0.0
    %2392 = vmatpush1.msra.mxu0 0.0
    %2393 = vmatprep.subr.mxu0 0.0
    %2394 = vmatpush1.msra.mxu0 0.0
    %2395 = vmatprep.subr.mxu0 0.0
    %2396 = vmatpush1.msra.mxu0 0.0
    %2397 = vmatprep.subr.mxu0 0.0
    %2398 = vmatpush1.msra.mxu0 0.0
    %2399 = vmatprep.subr.mxu0 0.0
    %2400 = vmatpush1.msra.mxu0 0.0
    %2401 = vmatprep.subr.mxu0 0.0
    %2402 = vmatpush1.msra.mxu0 %v2369
    %2403 = vmatprep.subr.mxu0 0.0
    %2404 = vmatpush2.msra.mxu0 0.0
    %2405 = vmatprep.subr.mxu0 0.0
    %2406 = vmatpush2.msra.mxu0 0.0
    %2407 = vmatprep.subr.mxu0 0.0
    %2408 = vmatpush2.msra.mxu0 0.0
    %2409 = vmatprep.subr.mxu0 0.0
    %2410 = vmatpush2.msra.mxu0 0.0
    %2411 = vmatprep.subr.mxu0 0.0
    %2412 = vmatpush2.msra.mxu0 0.0
    %2413 = vmatprep.subr.mxu0 0.0
    %2414 = vmatpush2.msra.mxu0 0.0
    %2415 = vmatprep.subr.mxu0 0.0
    %2416 = vmatpush2.msra.mxu0 0.0
    %2417 = vmatprep.subr.mxu0 0.0
    %2418 = vmatpush2.msra.mxu0 0.0
    %2419 = vmatprep.subr.mxu0 0.0
    %2420 = vmatpush2.msra.mxu0 0.0
    %2421 = vmatprep.subr.mxu0 0.0
    %2422 = vmatpush2.msra.mxu0 0.0
    %2423 = vmatprep.subr.mxu0 0.0
    %2424 = vmatpush2.msra.mxu0 0.0
    %2425 = vmatprep.subr.mxu0 0.0
    %2426 = vmatpush2.msra.mxu0 0.0
    %2427 = vmatprep.subr.mxu0 0.0
    %2428 = vmatpush2.msra.mxu0 0.0
    %2429 = vmatprep.subr.mxu0 0.0
    %2430 = vmatpush2.msra.mxu0 0.0
    %2431 = vmatprep.subr.mxu0 0.0
    %2432 = vmatpush2.msra.mxu0 0.0
    %2433 = vmatprep.subr.mxu0 0.0
    %2434 = vmatpush2.msra.mxu0 0.0
    %2435 = vmatprep.mubr.f32.mxu0 0.0
    %2436 = vmatmul.mubr.f32.gmra.mxu0 %v2283
    %v2437 = vpop.f32.mrf.mxu0
    %v2438 = vadd.f32 0.0, %v2437
    %v2439 = vpop.f32.mrf.mxu0
    %2440 = vmatprep.mubr.f32.mxu0 0.0
    %2441 = vmatmul.mubr.f32.gmra.mxu0 %v2286
    %v2442 = vpop.f32.mrf.mxu0
    %v2443 = vadd.f32 0.0, %v2442
    %v2444 = vpop.f32.mrf.mxu0
    %2445 = vdwg.mxu0
    %v2446 = vsub.f32 1.0, %v2358
    %v2447 = vsub.f32 1.0, %v2363
    %v2448 = vmul.f32 %v2152, %v2446
    %v2449 = vmul.f32 %v2153, %v2447
    %v2450 = vadd.f32 %v2448, %v2438
    %v2451 = vadd.f32 %v2449, %v2443
    %v2453 = vsel %vm342, %v2125, 0
    %2455 = vmatprep.subr.mxu0 0.0
    %2456 = vmatpush1.msra.mxu0 0.0
    %2457 = vmatprep.subr.mxu0 0.0
    %2458 = vmatpush1.msra.mxu0 0.0
    %2459 = vmatprep.subr.mxu0 0.0
    %2460 = vmatpush1.msra.mxu0 0.0
    %2461 = vmatprep.subr.mxu0 0.0
    %2462 = vmatpush1.msra.mxu0 0.0
    %2463 = vmatprep.subr.mxu0 0.0
    %2464 = vmatpush1.msra.mxu0 0.0
    %2465 = vmatprep.subr.mxu0 0.0
    %2466 = vmatpush1.msra.mxu0 0.0
    %2467 = vmatprep.subr.mxu0 0.0
    %2468 = vmatpush1.msra.mxu0 0.0
    %2469 = vmatprep.subr.mxu0 0.0
    %2470 = vmatpush1.msra.mxu0 0.0
    %2471 = vmatprep.subr.mxu0 0.0
    %2472 = vmatpush1.msra.mxu0 0.0
    %2473 = vmatprep.subr.mxu0 0.0
    %2474 = vmatpush1.msra.mxu0 0.0
    %2475 = vmatprep.subr.mxu0 0.0
    %2476 = vmatpush1.msra.mxu0 0.0
    %2477 = vmatprep.subr.mxu0 0.0
    %2478 = vmatpush1.msra.mxu0 0.0
    %2479 = vmatprep.subr.mxu0 0.0
    %2480 = vmatpush1.msra.mxu0 0.0
    %2481 = vmatprep.subr.mxu0 0.0
    %2482 = vmatpush1.msra.mxu0 0.0
    %2483 = vmatprep.subr.mxu0 0.0
    %2484 = vmatpush1.msra.mxu0 %v2451
    %2485 = vmatprep.subr.mxu0 0.0
    %2486 = vmatpush1.msra.mxu0 %v2450
    %2487 = vmatprep.subr.mxu0 0.0
    %2488 = vmatpush2.msra.mxu0 0.0
    %2489 = vmatprep.subr.mxu0 0.0
    %2490 = vmatpush2.msra.mxu0 0.0
    %2491 = vmatprep.subr.mxu0 0.0
    %2492 = vmatpush2.msra.mxu0 0.0
    %2493 = vmatprep.subr.mxu0 0.0
    %2494 = vmatpush2.msra.mxu0 0.0
    %2495 = vmatprep.subr.mxu0 0.0
    %2496 = vmatpush2.msra.mxu0 0.0
    %2497 = vmatprep.subr.mxu0 0.0
    %2498 = vmatpush2.msra.mxu0 0.0
    %2499 = vmatprep.subr.mxu0 0.0
    %2500 = vmatpush2.msra.mxu0 0.0
    %2501 = vmatprep.subr.mxu0 0.0
    %2502 = vmatpush2.msra.mxu0 0.0
    %2503 = vmatprep.subr.mxu0 0.0
    %2504 = vmatpush2.msra.mxu0 0.0
    %2505 = vmatprep.subr.mxu0 0.0
    %2506 = vmatpush2.msra.mxu0 0.0
    %2507 = vmatprep.subr.mxu0 0.0
    %2508 = vmatpush2.msra.mxu0 0.0
    %2509 = vmatprep.subr.mxu0 0.0
    %2510 = vmatpush2.msra.mxu0 0.0
    %2511 = vmatprep.subr.mxu0 0.0
    %2512 = vmatpush2.msra.mxu0 0.0
    %2513 = vmatprep.subr.mxu0 0.0
    %2514 = vmatpush2.msra.mxu0 0.0
    %2515 = vmatprep.subr.mxu0 0.0
    %2516 = vmatpush2.msra.mxu0 0.0
    %2517 = vmatprep.subr.mxu0 0.0
    %2518 = vmatpush2.msra.mxu0 0.0
    %2519 = vmatprep.mubr.f32.mxu0 0.0
    %2520 = vmatmul.mubr.f32.gmra.mxu0 %v2453
    %v2521 = vpop.f32.mrf.mxu0
    %v2522 = vadd.f32 0.0, %v2521
    %v2523 = vpop.f32.mrf.mxu0
    %2524 = vdwg.mxu0
    %v2525 = vld [vmem:[%s3] sm:$0xff]
    %v2526 = vld [vmem:[%s3 + $0x8] sm:$0xff]
    %v2527 = vld [vmem:[%s3 + $0x10] sm:$0xff]
    %v2528 = vld [vmem:[%s3 + $0x18] sm:$0xff]
    %v2529 = vld [vmem:[%s3 + $0x20] sm:$0xff]
    %v2530 = vld [vmem:[%s3 + $0x28] sm:$0xff]
    %v2531 = vld [vmem:[%s3 + $0x30] sm:$0xff]
    %v2532 = vld [vmem:[%s3 + $0x38] sm:$0xff]
    %v2533 = vld [vmem:[%s3 + $0x40] sm:$0xff]
    %v2534 = vld [vmem:[%s3 + $0x48] sm:$0xff]
    %v2535 = vld [vmem:[%s3 + $0x50] sm:$0xff]
    %v2536 = vld [vmem:[%s3 + $0x58] sm:$0xff]
    %v2538 = vsel %vm57, %v2522, 0
    %2540 = vmatprep.subr.mxu0 0.0
    %2541 = vmatpush1.msra.mxu0 0.0
    %2542 = vmatprep.subr.mxu0 0.0
    %2543 = vmatpush1.msra.mxu0 0.0
    %2544 = vmatprep.subr.mxu0 0.0
    %2545 = vmatpush1.msra.mxu0 0.0
    %2546 = vmatprep.subr.mxu0 0.0
    %2547 = vmatpush1.msra.mxu0 0.0
    %2548 = vmatprep.subr.mxu0 0.0
    %2549 = vmatpush1.msra.mxu0 0.0
    %2550 = vmatprep.subr.mxu0 0.0
    %2551 = vmatpush1.msra.mxu0 0.0
    %2552 = vmatprep.subr.mxu0 0.0
    %2553 = vmatpush1.msra.mxu0 0.0
    %2554 = vmatprep.subr.mxu0 0.0
    %2555 = vmatpush1.msra.mxu0 0.0
    %2556 = vmatprep.subr.mxu0 0.0
    %2557 = vmatpush1.msra.mxu0 0.0
    %2558 = vmatprep.subr.mxu0 0.0
    %2559 = vmatpush1.msra.mxu0 0.0
    %2560 = vmatprep.subr.mxu0 0.0
    %2561 = vmatpush1.msra.mxu0 0.0
    %2562 = vmatprep.subr.mxu0 0.0
    %2563 = vmatpush1.msra.mxu0 0.0
    %2564 = vmatprep.subr.mxu0 0.0
    %2565 = vmatpush1.msra.mxu0 %v2536
    %2566 = vmatprep.subr.mxu0 0.0
    %2567 = vmatpush1.msra.mxu0 %v2535
    %2568 = vmatprep.subr.mxu0 0.0
    %2569 = vmatpush1.msra.mxu0 %v2534
    %2570 = vmatprep.subr.mxu0 0.0
    %2571 = vmatpush1.msra.mxu0 %v2533
    %2572 = vmatprep.subr.mxu0 0.0
    %2573 = vmatpush2.msra.mxu0 0.0
    %2574 = vmatprep.subr.mxu0 0.0
    %2575 = vmatpush2.msra.mxu0 0.0
    %2576 = vmatprep.subr.mxu0 0.0
    %2577 = vmatpush2.msra.mxu0 0.0
    %2578 = vmatprep.subr.mxu0 0.0
    %2579 = vmatpush2.msra.mxu0 0.0
    %2580 = vmatprep.subr.mxu0 0.0
    %2581 = vmatpush2.msra.mxu0 0.0
    %2582 = vmatprep.subr.mxu0 0.0
    %2583 = vmatpush2.msra.mxu0 0.0
    %2584 = vmatprep.subr.mxu0 0.0
    %2585 = vmatpush2.msra.mxu0 0.0
    %2586 = vmatprep.subr.mxu0 0.0
    %2587 = vmatpush2.msra.mxu0 0.0
    %2588 = vmatprep.subr.mxu0 0.0
    %2589 = vmatpush2.msra.mxu0 0.0
    %2590 = vmatprep.subr.mxu0 0.0
    %2591 = vmatpush2.msra.mxu0 0.0
    %2592 = vmatprep.subr.mxu0 0.0
    %2593 = vmatpush2.msra.mxu0 0.0
    %2594 = vmatprep.subr.mxu0 0.0
    %2595 = vmatpush2.msra.mxu0 0.0
    %2596 = vmatprep.subr.mxu0 0.0
    %2597 = vmatpush2.msra.mxu0 0.0
    %2598 = vmatprep.subr.mxu0 0.0
    %2599 = vmatpush2.msra.mxu0 0.0
    %2600 = vmatprep.subr.mxu0 0.0
    %2601 = vmatpush2.msra.mxu0 0.0
    %2602 = vmatprep.subr.mxu0 0.0
    %2603 = vmatpush2.msra.mxu0 0.0
    %2604 = vmatprep.mubr.f32.mxu0 0.0
    %2605 = vmatmul.mubr.f32.gmra.mxu0 %v2538
    %v2606 = vpop.f32.mrf.mxu0
    %v2607 = vadd.f32 0.0, %v2606
    %v2608 = vpop.f32.mrf.mxu0
    %2609 = vdwg.mxu0
    %v2611 = vsel %vm501, %v2161, 0
    %2613 = vmatprep.subr.mxu0 0.0
    %2614 = vmatpush1.msra.mxu0 0.0
    %2615 = vmatprep.subr.mxu0 0.0
    %2616 = vmatpush1.msra.mxu0 0.0
    %2617 = vmatprep.subr.mxu0 0.0
    %2618 = vmatpush1.msra.mxu0 0.0
    %2619 = vmatprep.subr.mxu0 0.0
    %2620 = vmatpush1.msra.mxu0 0.0
    %2621 = vmatprep.subr.mxu0 0.0
    %2622 = vmatpush1.msra.mxu0 0.0
    %2623 = vmatprep.subr.mxu0 0.0
    %2624 = vmatpush1.msra.mxu0 0.0
    %2625 = vmatprep.subr.mxu0 0.0
    %2626 = vmatpush1.msra.mxu0 0.0
    %2627 = vmatprep.subr.mxu0 0.0
    %2628 = vmatpush1.msra.mxu0 0.0
    %2629 = vmatprep.subr.mxu0 0.0
    %2630 = vmatpush1.msra.mxu0 %v2532
    %2631 = vmatprep.subr.mxu0 0.0
    %2632 = vmatpush1.msra.mxu0 %v2531
    %2633 = vmatprep.subr.mxu0 0.0
    %2634 = vmatpush1.msra.mxu0 %v2530
    %2635 = vmatprep.subr.mxu0 0.0
    %2636 = vmatpush1.msra.mxu0 %v2529
    %2637 = vmatprep.subr.mxu0 0.0
    %2638 = vmatpush1.msra.mxu0 %v2528
    %2639 = vmatprep.subr.mxu0 0.0
    %2640 = vmatpush1.msra.mxu0 %v2527
    %2641 = vmatprep.subr.mxu0 0.0
    %2642 = vmatpush1.msra.mxu0 %v2526
    %2643 = vmatprep.subr.mxu0 0.0
    %2644 = vmatpush1.msra.mxu0 %v2525
    %2645 = vmatprep.subr.mxu0 0.0
    %2646 = vmatpush2.msra.mxu0 0.0
    %2647 = vmatprep.subr.mxu0 0.0
    %2648 = vmatpush2.msra.mxu0 0.0
    %2649 = vmatprep.subr.mxu0 0.0
    %2650 = vmatpush2.msra.mxu0 0.0
    %2651 = vmatprep.subr.mxu0 0.0
    %2652 = vmatpush2.msra.mxu0 0.0
    %2653 = vmatprep.subr.mxu0 0.0
    %2654 = vmatpush2.msra.mxu0 0.0
    %2655 = vmatprep.subr.mxu0 0.0
    %2656 = vmatpush2.msra.mxu0 0.0
    %2657 = vmatprep.subr.mxu0 0.0
    %2658 = vmatpush2.msra.mxu0 0.0
    %2659 = vmatprep.subr.mxu0 0.0
    %2660 = vmatpush2.msra.mxu0 0.0
    %2661 = vmatprep.subr.mxu0 0.0
    %2662 = vmatpush2.msra.mxu0 0.0
    %2663 = vmatprep.subr.mxu0 0.0
    %2664 = vmatpush2.msra.mxu0 0.0
    %2665 = vmatprep.subr.mxu0 0.0
    %2666 = vmatpush2.msra.mxu0 0.0
    %2667 = vmatprep.subr.mxu0 0.0
    %2668 = vmatpush2.msra.mxu0 0.0
    %2669 = vmatprep.subr.mxu0 0.0
    %2670 = vmatpush2.msra.mxu0 0.0
    %2671 = vmatprep.subr.mxu0 0.0
    %2672 = vmatpush2.msra.mxu0 0.0
    %2673 = vmatprep.subr.mxu0 0.0
    %2674 = vmatpush2.msra.mxu0 0.0
    %2675 = vmatprep.subr.mxu0 0.0
    %2676 = vmatpush2.msra.mxu0 0.0
    %2677 = vmatprep.mubr.f32.mxu0 0.0
    %2678 = vmatmul.mubr.f32.gmra.mxu0 %v2611
    %v2679 = vpop.f32.mrf.mxu0
    %v2680 = vadd.f32 %v2607, %v2679
    %v2681 = vpop.f32.mrf.mxu0
    %2682 = vdwg.mxu0
    %v2683 = vld [vmem:[%s4] sm:$0x1]
    %v2685 = vlaneseq
    %v2686 = vshrl.u32 %v2685, 7
    %v2687 = vsub.s32 0, %v2686
    %v2688 = vrot.slane %v2683, %v2687
    %v2690 = vadd.f32 %v2680, %v2688
    %v2691 = vmax.f32 %v2690, 0.0
    %v2692 = vld [vmem:[%s7] sm:$0xff]
    %v2693 = vld [vmem:[%s7 + $0x8] sm:$0xff]
    %v2694 = vld [vmem:[%s7 + $0x10] sm:$0xff]
    %v2695 = vld [vmem:[%s7 + $0x18] sm:$0xff]
    %v2696 = vld [vmem:[%s8] sm:$0x1]
    %v2698 = vlaneseq
    %v2699 = vshrl.u32 %v2698, 7
    %v2700 = vsub.s32 0, %v2699
    %v2701 = vrot.slane %v2696, %v2700
    %v2704 = vsel %vm57, %v2691, 0
    %2706 = vmatprep.subr.mxu0 0.0
    %2707 = vmatpush1.msra.mxu0 0.0
    %2708 = vmatprep.subr.mxu0 0.0
    %2709 = vmatpush1.msra.mxu0 0.0
    %2710 = vmatprep.subr.mxu0 0.0
    %2711 = vmatpush1.msra.mxu0 0.0
    %2712 = vmatprep.subr.mxu0 0.0
    %2713 = vmatpush1.msra.mxu0 0.0
    %2714 = vmatprep.subr.mxu0 0.0
    %2715 = vmatpush1.msra.mxu0 0.0
    %2716 = vmatprep.subr.mxu0 0.0
    %2717 = vmatpush1.msra.mxu0 0.0
    %2718 = vmatprep.subr.mxu0 0.0
    %2719 = vmatpush1.msra.mxu0 0.0
    %2720 = vmatprep.subr.mxu0 0.0
    %2721 = vmatpush1.msra.mxu0 0.0
    %2722 = vmatprep.subr.mxu0 0.0
    %2723 = vmatpush1.msra.mxu0 0.0
    %2724 = vmatprep.subr.mxu0 0.0
    %2725 = vmatpush1.msra.mxu0 0.0
    %2726 = vmatprep.subr.mxu0 0.0
    %2727 = vmatpush1.msra.mxu0 0.0
    %2728 = vmatprep.subr.mxu0 0.0
    %2729 = vmatpush1.msra.mxu0 0.0
    %2730 = vmatprep.subr.mxu0 0.0
    %2731 = vmatpush1.msra.mxu0 %v2695
    %2732 = vmatprep.subr.mxu0 0.0
    %2733 = vmatpush1.msra.mxu0 %v2694
    %2734 = vmatprep.subr.mxu0 0.0
    %2735 = vmatpush1.msra.mxu0 %v2693
    %2736 = vmatprep.subr.mxu0 0.0
    %2737 = vmatpush1.msra.mxu0 %v2692
    %2738 = vmatprep.subr.mxu0 0.0
    %2739 = vmatpush2.msra.mxu0 0.0
    %2740 = vmatprep.subr.mxu0 0.0
    %2741 = vmatpush2.msra.mxu0 0.0
    %2742 = vmatprep.subr.mxu0 0.0
    %2743 = vmatpush2.msra.mxu0 0.0
    %2744 = vmatprep.subr.mxu0 0.0
    %2745 = vmatpush2.msra.mxu0 0.0
    %2746 = vmatprep.subr.mxu0 0.0
    %2747 = vmatpush2.msra.mxu0 0.0
    %2748 = vmatprep.subr.mxu0 0.0
    %2749 = vmatpush2.msra.mxu0 0.0
    %2750 = vmatprep.subr.mxu0 0.0
    %2751 = vmatpush2.msra.mxu0 0.0
    %2752 = vmatprep.subr.mxu0 0.0
    %2753 = vmatpush2.msra.mxu0 0.0
    %2754 = vmatprep.subr.mxu0 0.0
    %2755 = vmatpush2.msra.mxu0 0.0
    %2756 = vmatprep.subr.mxu0 0.0
    %2757 = vmatpush2.msra.mxu0 0.0
    %2758 = vmatprep.subr.mxu0 0.0
    %2759 = vmatpush2.msra.mxu0 0.0
    %2760 = vmatprep.subr.mxu0 0.0
    %2761 = vmatpush2.msra.mxu0 0.0
    %2762 = vmatprep.subr.mxu0 0.0
    %2763 = vmatpush2.msra.mxu0 0.0
    %2764 = vmatprep.subr.mxu0 0.0
    %2765 = vmatpush2.msra.mxu0 0.0
    %2766 = vmatprep.subr.mxu0 0.0
    %2767 = vmatpush2.msra.mxu0 0.0
    %2768 = vmatprep.subr.mxu0 0.0
    %2769 = vmatpush2.msra.mxu0 0.0
    %2770 = vmatprep.mubr.f32.mxu0 0.0
    %2771 = vmatmul.mubr.f32.gmra.mxu0 %v2704
    %v2772 = vpop.f32.mrf.mxu0
    %v2773 = vadd.f32 %v2701, %v2772
    %v2774 = vpop.f32.mrf.mxu0
    %2775 = vdwg.mxu0
    %v2776 = vtanh.pop %v2773
    %v2777 = vxor.u32 %v2773, 2147483648
    %v2778 = vmul.f32 %v2777, 1.442695
    %v2779 = vpow.pop %v2778
    %v2780 = vadd.f32 %v2779, 1.0
    %v2781 = vrcp.pop %v2780
    %v2782 = vmul.f32 1.0, %v2781
    %v2783 = vmax.f32 %v2773, 0.0
    %vm2784 = vcmp.ne.f32.partialorder %v2773, %v2773
    %v2785 = vadd.f32 %v2773, 0.0
    %v2786 = vand.u32 2147483647, %v2773
    %v2787 = vsub.f32 0.0, %v2786
    %v2788 = vmul.f32 %v2787, 1.442695
    %v2789 = vpow.pop %v2788
    %v2790 = vadd.f32 %v2789, 1.0
    %v2791 = vlog2.pop %v2790
    %v2792 = vmul.f32 %v2791, 0.6931472
    %v2793 = vmul.f32 -0.5, %v2789
    %v2794 = vadd.f32 %v2793, 1.0
    %v2795 = vmul.f32 %v2794, %v2789
    %v2796 = vand.u32 2147483647, %v2789
    %vm2797 = vcmp.lt.f32.partialorder %v2796, 0.0004427343
    %v2798 = vsel %vm2797, %v2795, %v2792
    %v2799 = vadd.f32 %v2783, %v2798
    %v2800 = vsel %vm2784, %v2785, %v2799
    %v2801 = vmul.f32 %v2450, %v2450
    %v2802 = vmul.f32 %v2451, %v2451
    %v2803 = vsel %vm57, %v2801, 0.0
    %2804 = vadd.xlane.f32.xlu0 %v2803
    %v2805 = vpop.xlane.xlu0 %2804
    %v2806 = vsel %vm57, %v2802, 0.0
    %2807 = vadd.xlane.f32.xlu0 %v2806
    %v2808 = vpop.xlane.xlu0 %2807
    %v2810 = vsel %vm57, %v2776, 0
    %v2813 = vsel %vm57, %v2450, 0
    %v2816 = vsel %vm57, %v2451, 0
    %2818 = vmatprep.subr.mxu0 0.0
    %2819 = vmatpush1.xpose.msra.mxu0 0.0
    %2820 = vmatprep.subr.mxu0 0.0
    %2821 = vmatpush1.xpose.msra.mxu0 0.0
    %2822 = vmatprep.subr.mxu0 0.0
    %2823 = vmatpush1.xpose.msra.mxu0 0.0
    %2824 = vmatprep.subr.mxu0 0.0
    %2825 = vmatpush1.xpose.msra.mxu0 0.0
    %2826 = vmatprep.subr.mxu0 0.0
    %2827 = vmatpush1.xpose.msra.mxu0 0.0
    %2828 = vmatprep.subr.mxu0 0.0
    %2829 = vmatpush1.xpose.msra.mxu0 0.0
    %2830 = vmatprep.subr.mxu0 0.0
    %2831 = vmatpush1.xpose.msra.mxu0 0.0
    %2832 = vmatprep.subr.mxu0 0.0
    %2833 = vmatpush1.xpose.msra.mxu0 0.0
    %2834 = vmatprep.subr.mxu0 0.0
    %2835 = vmatpush1.xpose.msra.mxu0 0.0
    %2836 = vmatprep.subr.mxu0 0.0
    %2837 = vmatpush1.xpose.msra.mxu0 0.0
    %2838 = vmatprep.subr.mxu0 0.0
    %2839 = vmatpush1.xpose.msra.mxu0 0.0
    %2840 = vmatprep.subr.mxu0 0.0
    %2841 = vmatpush1.xpose.msra.mxu0 0.0
    %2842 = vmatprep.subr.mxu0 0.0
    %2843 = vmatpush1.xpose.msra.mxu0 0.0
    %2844 = vmatprep.subr.mxu0 0.0
    %2845 = vmatpush1.xpose.msra.mxu0 0.0
    %2846 = vmatprep.subr.mxu0 0.0
    %2847 = vmatpush1.xpose.msra.mxu0 %v2816
    %2848 = vmatprep.subr.mxu0 0.0
    %2849 = vmatpush1.xpose.msra.mxu0 %v2813
    %2850 = vmatprep.subr.mxu0 0.0
    %2851 = vmatpush2.xpose.msra.mxu0 0.0
    %2852 = vmatprep.subr.mxu0 0.0
    %2853 = vmatpush2.xpose.msra.mxu0 0.0
    %2854 = vmatprep.subr.mxu0 0.0
    %2855 = vmatpush2.xpose.msra.mxu0 0.0
    %2856 = vmatprep.subr.mxu0 0.0
    %2857 = vmatpush2.xpose.msra.mxu0 0.0
    %2858 = vmatprep.subr.mxu0 0.0
    %2859 = vmatpush2.xpose.msra.mxu0 0.0
    %2860 = vmatprep.subr.mxu0 0.0
    %2861 = vmatpush2.xpose.msra.mxu0 0.0
    %2862 = vmatprep.subr.mxu0 0.0
    %2863 = vmatpush2.xpose.msra.mxu0 0.0
    %2864 = vmatprep.subr.mxu0 0.0
    %2865 = vmatpush2.xpose.msra.mxu0 0.0
    %2866 = vmatprep.subr.mxu0 0.0
    %2867 = vmatpush2.xpose.msra.mxu0 0.0
    %2868 = vmatprep.subr.mxu0 0.0
    %2869 = vmatpush2.xpose.msra.mxu0 0.0
    %2870 = vmatprep.subr.mxu0 0.0
    %2871 = vmatpush2.xpose.msra.mxu0 0.0
    %2872 = vmatprep.subr.mxu0 0.0
    %2873 = vmatpush2.xpose.msra.mxu0 0.0
    %2874 = vmatprep.subr.mxu0 0.0
    %2875 = vmatpush2.xpose.msra.mxu0 0.0
    %2876 = vmatprep.subr.mxu0 0.0
    %2877 = vmatpush2.xpose.msra.mxu0 0.0
    %2878 = vmatprep.subr.mxu0 0.0
    %2879 = vmatpush2.xpose.msra.mxu0 0.0
    %2880 = vmatprep.subr.mxu0 0.0
    %2881 = vmatpush2.xpose.msra.mxu0 0.0
    %2882 = vmatprep.mubr.f32.mxu0 0.0
    %2883 = vmatmul.mubr.f32.gmra.mxu0 %v2810
    %v2884 = vpop.f32.mrf.mxu0
    %v2885 = vadd.f32 0.0, %v2884
    %v2886 = vpop.f32.mrf.mxu0
    %2887 = vdwg.mxu0
    %v2888 = vmul.f32 %v2776, %v2776
    %v2889 = vsel %vm781, %v2888, 0.0
    %2890 = vadd.xlane.f32.xlu0 %v2889
    %v2891 = vpop.xlane.xlu0 %2890
    %v2893 = vsel %vm785, %v2891, 0
    %v2896 = vsel %vm785, %v2805, 0
    %v2899 = vsel %vm785, %v2808, 0
    %2901 = vmatprep.subr.mxu0 0.0
    %2902 = vmatpush1.xpose.msra.mxu0 0.0
    %2903 = vmatprep.subr.mxu0 0.0
    %2904 = vmatpush1.xpose.msra.mxu0 0.0
    %2905 = vmatprep.subr.mxu0 0.0
    %2906 = vmatpush1.xpose.msra.mxu0 0.0
    %2907 = vmatprep.subr.mxu0 0.0
    %2908 = vmatpush1.xpose.msra.mxu0 0.0
    %2909 = vmatprep.subr.mxu0 0.0
    %2910 = vmatpush1.xpose.msra.mxu0 0.0
    %2911 = vmatprep.subr.mxu0 0.0
    %2912 = vmatpush1.xpose.msra.mxu0 0.0
    %2913 = vmatprep.subr.mxu0 0.0
    %2914 = vmatpush1.xpose.msra.mxu0 0.0
    %2915 = vmatprep.subr.mxu0 0.0
    %2916 = vmatpush1.xpose.msra.mxu0 0.0
    %2917 = vmatprep.subr.mxu0 0.0
    %2918 = vmatpush1.xpose.msra.mxu0 0.0
    %2919 = vmatprep.subr.mxu0 0.0
    %2920 = vmatpush1.xpose.msra.mxu0 0.0
    %2921 = vmatprep.subr.mxu0 0.0
    %2922 = vmatpush1.xpose.msra.mxu0 0.0
    %2923 = vmatprep.subr.mxu0 0.0
    %2924 = vmatpush1.xpose.msra.mxu0 0.0
    %2925 = vmatprep.subr.mxu0 0.0
    %2926 = vmatpush1.xpose.msra.mxu0 0.0
    %2927 = vmatprep.subr.mxu0 0.0
    %2928 = vmatpush1.xpose.msra.mxu0 0.0
    %2929 = vmatprep.subr.mxu0 0.0
    %2930 = vmatpush1.xpose.msra.mxu0 %v2899
    %2931 = vmatprep.subr.mxu0 0.0
    %2932 = vmatpush1.xpose.msra.mxu0 %v2896
    %2933 = vmatprep.subr.mxu0 0.0
    %2934 = vmatpush2.xpose.msra.mxu0 0.0
    %2935 = vmatprep.subr.mxu0 0.0
    %2936 = vmatpush2.xpose.msra.mxu0 0.0
    %2937 = vmatprep.subr.mxu0 0.0
    %2938 = vmatpush2.xpose.msra.mxu0 0.0
    %2939 = vmatprep.subr.mxu0 0.0
    %2940 = vmatpush2.xpose.msra.mxu0 0.0
    %2941 = vmatprep.subr.mxu0 0.0
    %2942 = vmatpush2.xpose.msra.mxu0 0.0
    %2943 = vmatprep.subr.mxu0 0.0
    %2944 = vmatpush2.xpose.msra.mxu0 0.0
    %2945 = vmatprep.subr.mxu0 0.0
    %2946 = vmatpush2.xpose.msra.mxu0 0.0
    %2947 = vmatprep.subr.mxu0 0.0
    %2948 = vmatpush2.xpose.msra.mxu0 0.0
    %2949 = vmatprep.subr.mxu0 0.0
    %2950 = vmatpush2.xpose.msra.mxu0 0.0
    %2951 = vmatprep.subr.mxu0 0.0
    %2952 = vmatpush2.xpose.msra.mxu0 0.0
    %2953 = vmatprep.subr.mxu0 0.0
    %2954 = vmatpush2.xpose.msra.mxu0 0.0
    %2955 = vmatprep.subr.mxu0 0.0
    %2956 = vmatpush2.xpose.msra.mxu0 0.0
    %2957 = vmatprep.subr.mxu0 0.0
    %2958 = vmatpush2.xpose.msra.mxu0 0.0
    %2959 = vmatprep.subr.mxu0 0.0
    %2960 = vmatpush2.xpose.msra.mxu0 0.0
    %2961 = vmatprep.subr.mxu0 0.0
    %2962 = vmatpush2.xpose.msra.mxu0 0.0
    %2963 = vmatprep.subr.mxu0 0.0
    %2964 = vmatpush2.xpose.msra.mxu0 0.0
    %2965 = vmatprep.mubr.f32.mxu0 0.0
    %2966 = vmatmul.mubr.f32.gmra.mxu0 %v2893
    %v2967 = vpop.f32.mrf.mxu0
    %v2968 = vadd.f32 0.0, %v2967
    %v2969 = vpop.f32.mrf.mxu0
    %2970 = vdwg.mxu0
    %v2971 = vrsqrt.pop %v2968
    %v2972 = vmul.f32 %v2968, %v2971
    %vm2973 = vcmp.eq.f32.partialorder %v2968, inf
    %v2974 = vsel %vm2973, %v2968, %v2972
    %vm2975 = vcmp.eq.f32.partialorder %v2968, 0.0
    %v2976 = vand.u32 %v2968, 2147483648
    %v2977 = vsel %vm2975, %v2976, %v2974
    %v2978 = vadd.f32 %v2977, 1e-08
    %v2979 = vrcp.pop %v2978
    %v2980 = vmul.f32 %v2885, %v2979
    %2982 = vset.pattern.permute.xlu0 72
    %2983 = vperm.xlu0 %2982, %v2800
    %v2984 = vpop.permute.xlu0 %2983
    %v2986 = vmul.f32 %v2984, %v2980
    %v2987 = vsel %vm881, %v2986, -inf
    %2988 = vmax.xlane.f32.xlu0 %v2987
    %v2989 = vpop.xlane.xlu0 %2988
    %v2990 = vsub.f32 %v2986, %v2989
    %v2991 = vmul.f32 %v2990, 1.442695
    %v2992 = vpow.pop %v2991
    %v2993 = vsel %vm881, %v2992, 0.0
    %2994 = vadd.xlane.f32.xlu0 %v2993
    %v2995 = vpop.xlane.xlu0 %2994
    %v2996 = vrcp.pop %v2995
    %v2997 = vmul.f32 %v2992, %v2996
    %2998 = vrot.lane.b32.xlu0 %v2776, 96
    %v2999 = vpop.permute.xlu0 %2998
    %v3000 = vsel %vm57, %v2999, 0
    %3002 = vmatprep.subr.mxu0 0.0
    %3003 = vmatpush1.xpose.msra.mxu0 0.0
    %3004 = vmatprep.subr.mxu0 0.0
    %3005 = vmatpush1.xpose.msra.mxu0 0.0
    %3006 = vmatprep.subr.mxu0 0.0
    %3007 = vmatpush1.xpose.msra.mxu0 0.0
    %3008 = vmatprep.subr.mxu0 0.0
    %3009 = vmatpush1.xpose.msra.mxu0 0.0
    %3010 = vmatprep.subr.mxu0 0.0
    %3011 = vmatpush1.xpose.msra.mxu0 0.0
    %3012 = vmatprep.subr.mxu0 0.0
    %3013 = vmatpush1.xpose.msra.mxu0 0.0
    %3014 = vmatprep.subr.mxu0 0.0
    %3015 = vmatpush1.xpose.msra.mxu0 0.0
    %3016 = vmatprep.subr.mxu0 0.0
    %3017 = vmatpush1.xpose.msra.mxu0 0.0
    %3018 = vmatprep.subr.mxu0 0.0
    %3019 = vmatpush1.xpose.msra.mxu0 0.0
    %3020 = vmatprep.subr.mxu0 0.0
    %3021 = vmatpush1.xpose.msra.mxu0 0.0
    %3022 = vmatprep.subr.mxu0 0.0
    %3023 = vmatpush1.xpose.msra.mxu0 0.0
    %3024 = vmatprep.subr.mxu0 0.0
    %3025 = vmatpush1.xpose.msra.mxu0 0.0
    %3026 = vmatprep.subr.mxu0 0.0
    %3027 = vmatpush1.xpose.msra.mxu0 0.0
    %3028 = vmatprep.subr.mxu0 0.0
    %3029 = vmatpush1.xpose.msra.mxu0 0.0
    %3030 = vmatprep.subr.mxu0 0.0
    %3031 = vmatpush1.xpose.msra.mxu0 %v2816
    %3032 = vmatprep.subr.mxu0 0.0
    %3033 = vmatpush1.xpose.msra.mxu0 %v2813
    %3034 = vmatprep.subr.mxu0 0.0
    %3035 = vmatpush2.xpose.msra.mxu0 0.0
    %3036 = vmatprep.subr.mxu0 0.0
    %3037 = vmatpush2.xpose.msra.mxu0 0.0
    %3038 = vmatprep.subr.mxu0 0.0
    %3039 = vmatpush2.xpose.msra.mxu0 0.0
    %3040 = vmatprep.subr.mxu0 0.0
    %3041 = vmatpush2.xpose.msra.mxu0 0.0
    %3042 = vmatprep.subr.mxu0 0.0
    %3043 = vmatpush2.xpose.msra.mxu0 0.0
    %3044 = vmatprep.subr.mxu0 0.0
    %3045 = vmatpush2.xpose.msra.mxu0 0.0
    %3046 = vmatprep.subr.mxu0 0.0
    %3047 = vmatpush2.xpose.msra.mxu0 0.0
    %3048 = vmatprep.subr.mxu0 0.0
    %3049 = vmatpush2.xpose.msra.mxu0 0.0
    %3050 = vmatprep.subr.mxu0 0.0
    %3051 = vmatpush2.xpose.msra.mxu0 0.0
    %3052 = vmatprep.subr.mxu0 0.0
    %3053 = vmatpush2.xpose.msra.mxu0 0.0
    %3054 = vmatprep.subr.mxu0 0.0
    %3055 = vmatpush2.xpose.msra.mxu0 0.0
    %3056 = vmatprep.subr.mxu0 0.0
    %3057 = vmatpush2.xpose.msra.mxu0 0.0
    %3058 = vmatprep.subr.mxu0 0.0
    %3059 = vmatpush2.xpose.msra.mxu0 0.0
    %3060 = vmatprep.subr.mxu0 0.0
    %3061 = vmatpush2.xpose.msra.mxu0 0.0
    %3062 = vmatprep.subr.mxu0 0.0
    %3063 = vmatpush2.xpose.msra.mxu0 0.0
    %3064 = vmatprep.subr.mxu0 0.0
    %3065 = vmatpush2.xpose.msra.mxu0 0.0
    %3066 = vmatprep.mubr.f32.mxu0 0.0
    %3067 = vmatmul.mubr.f32.gmra.mxu0 %v3000
    %v3068 = vpop.f32.mrf.mxu0
    %v3069 = vadd.f32 0.0, %v3068
    %v3070 = vpop.f32.mrf.mxu0
    %3071 = vdwg.mxu0
    %3073 = vrot.lane.b32.xlu0 %v2888, 96
    %v3074 = vpop.permute.xlu0 %3073
    %v3076 = vsel %vm781, %v3074, 0.0
    %3077 = vadd.xlane.f32.xlu0 %v3076
    %v3078 = vpop.xlane.xlu0 %3077
    %v3080 = vsel %vm785, %v3078, 0
    %3082 = vmatprep.subr.mxu0 0.0
    %3083 = vmatpush1.xpose.msra.mxu0 0.0
    %3084 = vmatprep.subr.mxu0 0.0
    %3085 = vmatpush1.xpose.msra.mxu0 0.0
    %3086 = vmatprep.subr.mxu0 0.0
    %3087 = vmatpush1.xpose.msra.mxu0 0.0
    %3088 = vmatprep.subr.mxu0 0.0
    %3089 = vmatpush1.xpose.msra.mxu0 0.0
    %3090 = vmatprep.subr.mxu0 0.0
    %3091 = vmatpush1.xpose.msra.mxu0 0.0
    %3092 = vmatprep.subr.mxu0 0.0
    %3093 = vmatpush1.xpose.msra.mxu0 0.0
    %3094 = vmatprep.subr.mxu0 0.0
    %3095 = vmatpush1.xpose.msra.mxu0 0.0
    %3096 = vmatprep.subr.mxu0 0.0
    %3097 = vmatpush1.xpose.msra.mxu0 0.0
    %3098 = vmatprep.subr.mxu0 0.0
    %3099 = vmatpush1.xpose.msra.mxu0 0.0
    %3100 = vmatprep.subr.mxu0 0.0
    %3101 = vmatpush1.xpose.msra.mxu0 0.0
    %3102 = vmatprep.subr.mxu0 0.0
    %3103 = vmatpush1.xpose.msra.mxu0 0.0
    %3104 = vmatprep.subr.mxu0 0.0
    %3105 = vmatpush1.xpose.msra.mxu0 0.0
    %3106 = vmatprep.subr.mxu0 0.0
    %3107 = vmatpush1.xpose.msra.mxu0 0.0
    %3108 = vmatprep.subr.mxu0 0.0
    %3109 = vmatpush1.xpose.msra.mxu0 0.0
    %3110 = vmatprep.subr.mxu0 0.0
    %3111 = vmatpush1.xpose.msra.mxu0 %v2899
    %3112 = vmatprep.subr.mxu0 0.0
    %3113 = vmatpush1.xpose.msra.mxu0 %v2896
    %3114 = vmatprep.subr.mxu0 0.0
    %3115 = vmatpush2.xpose.msra.mxu0 0.0
    %3116 = vmatprep.subr.mxu0 0.0
    %3117 = vmatpush2.xpose.msra.mxu0 0.0
    %3118 = vmatprep.subr.mxu0 0.0
    %3119 = vmatpush2.xpose.msra.mxu0 0.0
    %3120 = vmatprep.subr.mxu0 0.0
    %3121 = vmatpush2.xpose.msra.mxu0 0.0
    %3122 = vmatprep.subr.mxu0 0.0
    %3123 = vmatpush2.xpose.msra.mxu0 0.0
    %3124 = vmatprep.subr.mxu0 0.0
    %3125 = vmatpush2.xpose.msra.mxu0 0.0
    %3126 = vmatprep.subr.mxu0 0.0
    %3127 = vmatpush2.xpose.msra.mxu0 0.0
    %3128 = vmatprep.subr.mxu0 0.0
    %3129 = vmatpush2.xpose.msra.mxu0 0.0
    %3130 = vmatprep.subr.mxu0 0.0
    %3131 = vmatpush2.xpose.msra.mxu0 0.0
    %3132 = vmatprep.subr.mxu0 0.0
    %3133 = vmatpush2.xpose.msra.mxu0 0.0
    %3134 = vmatprep.subr.mxu0 0.0
    %3135 = vmatpush2.xpose.msra.mxu0 0.0
    %3136 = vmatprep.subr.mxu0 0.0
    %3137 = vmatpush2.xpose.msra.mxu0 0.0
    %3138 = vmatprep.subr.mxu0 0.0
    %3139 = vmatpush2.xpose.msra.mxu0 0.0
    %3140 = vmatprep.subr.mxu0 0.0
    %3141 = vmatpush2.xpose.msra.mxu0 0.0
    %3142 = vmatprep.subr.mxu0 0.0
    %3143 = vmatpush2.xpose.msra.mxu0 0.0
    %3144 = vmatprep.subr.mxu0 0.0
    %3145 = vmatpush2.xpose.msra.mxu0 0.0
    %3146 = vmatprep.mubr.f32.mxu0 0.0
    %3147 = vmatmul.mubr.f32.gmra.mxu0 %v3080
    %v3148 = vpop.f32.mrf.mxu0
    %v3149 = vadd.f32 0.0, %v3148
    %v3150 = vpop.f32.mrf.mxu0
    %3151 = vdwg.mxu0
    %v3152 = vrsqrt.pop %v3149
    %v3153 = vmul.f32 %v3149, %v3152
    %vm3154 = vcmp.eq.f32.partialorder %v3149, inf
    %v3155 = vsel %vm3154, %v3149, %v3153
    %vm3156 = vcmp.eq.f32.partialorder %v3149, 0.0
    %v3157 = vand.u32 %v3149, 2147483648
    %v3158 = vsel %vm3156, %v3157, %v3155
    %v3159 = vadd.f32 %v3158, 1e-08
    %v3160 = vrcp.pop %v3159
    %v3161 = vmul.f32 %v3069, %v3160
    %3162 = vset.pattern.permute.xlu0 73
    %3163 = vperm.xlu0 %3162, %v2800
    %v3164 = vpop.permute.xlu0 %3163
    %v3166 = vmul.f32 %v3164, %v3161
    %v3167 = vsel %vm881, %v3166, -inf
    %3168 = vmax.xlane.f32.xlu0 %v3167
    %v3169 = vpop.xlane.xlu0 %3168
    %v3170 = vsub.f32 %v3166, %v3169
    %v3171 = vmul.f32 %v3170, 1.442695
    %v3172 = vpow.pop %v3171
    %v3173 = vsel %vm881, %v3172, 0.0
    %3174 = vadd.xlane.f32.xlu0 %v3173
    %v3175 = vpop.xlane.xlu0 %3174
    %v3176 = vrcp.pop %v3175
    %v3177 = vmul.f32 %v3172, %v3176
    %v3178 = vsel %vm57, %v2450, 0.0
    %v3179 = vsel %vm57, %v2451, 0.0
    %v3180 = vadd.f32 %v3178, %v3179
    %v3181 = vrot.slane %v3180, 4
    %v3182 = vadd.f32 %v3180, %v3181
    %v3183 = vrot.slane %v3182, 2
    %v3184 = vadd.f32 %v3182, %v3183
    %v3185 = vrot.slane %v3184, 1
    %v3186 = vadd.f32 %v3184, %v3185
    %v3187 = vmul.f32 %v3186, %v1082
    %v3188 = vsub.f32 %v2450, %v3187
    %v3189 = vsub.f32 %v2451, %v3187
    %v3190 = vmul.f32 %v3188, %v3188
    %v3191 = vmul.f32 %v3189, %v3189
    %v3192 = vsel %vm57, %v3190, 0.0
    %v3193 = vsel %vm57, %v3191, 0.0
    %v3194 = vadd.f32 %v3192, %v3193
    %v3195 = vrot.slane %v3194, 4
    %v3196 = vadd.f32 %v3194, %v3195
    %v3197 = vrot.slane %v3196, 2
    %v3198 = vadd.f32 %v3196, %v3197
    %v3199 = vrot.slane %v3198, 1
    %v3200 = vadd.f32 %v3198, %v3199
    %v3201 = vmul.f32 %v3200, %v1082
    %v3202 = vadd.f32 %v3201, 1e-05
    %v3203 = vrsqrt.pop %v3202
    %v3204 = vmul.f32 %v3188, %v3203
    %v3205 = vmul.f32 %v3189, %v3203
    %3207 = vrot.lane.b32.xlu0 %v2782, 64
    %v3208 = vpop.permute.xlu0 %3207
    %s3210 = scalar_lea.vmem [#allocation2], 4
    %3211 = vst.msk [vmem:[%s3210] sm:$0x3] %vm1106, %v3208
    %s3212 = scalar_lea.vmem %s0, 6
    %v3213 = vld [vmem:[%s3212] sm:$0x3]
    %v3214 = vld [vmem:[%s5] sm:$0xff]
    %v3215 = vld [vmem:[%s5 + $0x8] sm:$0xff]
    %v3216 = vld [vmem:[%s5 + $0x10] sm:$0xff]
    %v3217 = vld [vmem:[%s5 + $0x18] sm:$0xff]
    %v3218 = vld [vmem:[%s6] sm:$0x1]
    %v3220 = vlaneseq
    %v3221 = vshrl.u32 %v3220, 7
    %v3222 = vsub.s32 0, %v3221
    %v3223 = vrot.slane %v3218, %v3222
    %3225 = vmatprep.subr.mxu0 0.0
    %3226 = vmatpush1.msra.mxu0 0.0
    %3227 = vmatprep.subr.mxu0 0.0
    %3228 = vmatpush1.msra.mxu0 0.0
    %3229 = vmatprep.subr.mxu0 0.0
    %3230 = vmatpush1.msra.mxu0 0.0
    %3231 = vmatprep.subr.mxu0 0.0
    %3232 = vmatpush1.msra.mxu0 0.0
    %3233 = vmatprep.subr.mxu0 0.0
    %3234 = vmatpush1.msra.mxu0 0.0
    %3235 = vmatprep.subr.mxu0 0.0
    %3236 = vmatpush1.msra.mxu0 0.0
    %3237 = vmatprep.subr.mxu0 0.0
    %3238 = vmatpush1.msra.mxu0 0.0
    %3239 = vmatprep.subr.mxu0 0.0
    %3240 = vmatpush1.msra.mxu0 0.0
    %3241 = vmatprep.subr.mxu0 0.0
    %3242 = vmatpush1.msra.mxu0 0.0
    %3243 = vmatprep.subr.mxu0 0.0
    %3244 = vmatpush1.msra.mxu0 0.0
    %3245 = vmatprep.subr.mxu0 0.0
    %3246 = vmatpush1.msra.mxu0 0.0
    %3247 = vmatprep.subr.mxu0 0.0
    %3248 = vmatpush1.msra.mxu0 0.0
    %3249 = vmatprep.subr.mxu0 0.0
    %3250 = vmatpush1.msra.mxu0 %v3217
    %3251 = vmatprep.subr.mxu0 0.0
    %3252 = vmatpush1.msra.mxu0 %v3216
    %3253 = vmatprep.subr.mxu0 0.0
    %3254 = vmatpush1.msra.mxu0 %v3215
    %3255 = vmatprep.subr.mxu0 0.0
    %3256 = vmatpush1.msra.mxu0 %v3214
    %3257 = vmatprep.subr.mxu0 0.0
    %3258 = vmatpush2.msra.mxu0 0.0
    %3259 = vmatprep.subr.mxu0 0.0
    %3260 = vmatpush2.msra.mxu0 0.0
    %3261 = vmatprep.subr.mxu0 0.0
    %3262 = vmatpush2.msra.mxu0 0.0
    %3263 = vmatprep.subr.mxu0 0.0
    %3264 = vmatpush2.msra.mxu0 0.0
    %3265 = vmatprep.subr.mxu0 0.0
    %3266 = vmatpush2.msra.mxu0 0.0
    %3267 = vmatprep.subr.mxu0 0.0
    %3268 = vmatpush2.msra.mxu0 0.0
    %3269 = vmatprep.subr.mxu0 0.0
    %3270 = vmatpush2.msra.mxu0 0.0
    %3271 = vmatprep.subr.mxu0 0.0
    %3272 = vmatpush2.msra.mxu0 0.0
    %3273 = vmatprep.subr.mxu0 0.0
    %3274 = vmatpush2.msra.mxu0 0.0
    %3275 = vmatprep.subr.mxu0 0.0
    %3276 = vmatpush2.msra.mxu0 0.0
    %3277 = vmatprep.subr.mxu0 0.0
    %3278 = vmatpush2.msra.mxu0 0.0
    %3279 = vmatprep.subr.mxu0 0.0
    %3280 = vmatpush2.msra.mxu0 0.0
    %3281 = vmatprep.subr.mxu0 0.0
    %3282 = vmatpush2.msra.mxu0 0.0
    %3283 = vmatprep.subr.mxu0 0.0
    %3284 = vmatpush2.msra.mxu0 0.0
    %3285 = vmatprep.subr.mxu0 0.0
    %3286 = vmatpush2.msra.mxu0 0.0
    %3287 = vmatprep.subr.mxu0 0.0
    %3288 = vmatpush2.msra.mxu0 0.0
    %3289 = vmatprep.mubr.f32.mxu0 0.0
    %3290 = vmatmul.mubr.f32.gmra.mxu0 %v2704
    %v3291 = vpop.f32.mrf.mxu0
    %v3292 = vadd.f32 %v3223, %v3291
    %v3293 = vpop.f32.mrf.mxu0
    %3294 = vdwg.mxu0
    %v3295 = vxor.u32 %v3292, 2147483648
    %v3296 = vmul.f32 %v3295, 1.442695
    %v3297 = vpow.pop %v3296
    %v3298 = vadd.f32 %v3297, 1.0
    %v3299 = vrcp.pop %v3298
    %v3300 = vmul.f32 1.0, %v3299
    %v3301 = vtanh.pop %v3292
    %3302 = vxpose.xlu0.b32.start [1/16] %v2997, 128
    %3303 = vxpose.xlu0.b32.cont [2/16] 0.0, 128
    %3304 = vxpose.xlu0.b32.cont [3/16] 0.0, 128
    %3305 = vxpose.xlu0.b32.cont [4/16] 0.0, 128
    %3306 = vxpose.xlu0.b32.cont [5/16] 0.0, 128
    %3307 = vxpose.xlu0.b32.cont [6/16] 0.0, 128
    %3308 = vxpose.xlu0.b32.cont [7/16] 0.0, 128
    %3309 = vxpose.xlu0.b32.cont [8/16] 0.0, 128
    %3310 = vxpose.xlu0.b32.cont [9/16] 0.0, 128
    %3311 = vxpose.xlu0.b32.cont [10/16] 0.0, 128
    %3312 = vxpose.xlu0.b32.cont [11/16] 0.0, 128
    %3313 = vxpose.xlu0.b32.cont [12/16] 0.0, 128
    %3314 = vxpose.xlu0.b32.cont [13/16] 0.0, 128
    %3315 = vxpose.xlu0.b32.cont [14/16] 0.0, 128
    %3316 = vxpose.xlu0.b32.cont [15/16] 0.0, 128
    %3317 = vxpose.xlu0.b32.end [16/16] 0.0, 128
    %v3318 = vpop.trf.xlu0
    %v3319 = vpop.trf.xlu0
    %v3320 = vpop.trf.xlu0
    %v3321 = vpop.trf.xlu0
    %v3322 = vpop.trf.xlu0
    %v3323 = vpop.trf.xlu0
    %v3324 = vpop.trf.xlu0
    %v3325 = vpop.trf.xlu0
    %v3326 = vpop.trf.xlu0
    %v3327 = vpop.trf.xlu0
    %v3328 = vpop.trf.xlu0
    %v3329 = vpop.trf.xlu0
    %v3330 = vpop.trf.xlu0
    %v3331 = vpop.trf.xlu0
    %v3332 = vpop.trf.xlu0
    %v3333 = vpop.trf.xlu0
    %v3335 = vsel %vm170, %v3318, 0
    %v3338 = vsel %vm170, %v3319, 0
    %v3341 = vsel %vm177, %v3300, 0
    %3343 = vmatprep.subr.mxu0 0.0
    %3344 = vmatpush1.msra.mxu0 0.0
    %3345 = vmatprep.subr.mxu0 0.0
    %3346 = vmatpush1.msra.mxu0 0.0
    %3347 = vmatprep.subr.mxu0 0.0
    %3348 = vmatpush1.msra.mxu0 0.0
    %3349 = vmatprep.subr.mxu0 0.0
    %3350 = vmatpush1.msra.mxu0 0.0
    %3351 = vmatprep.subr.mxu0 0.0
    %3352 = vmatpush1.msra.mxu0 0.0
    %3353 = vmatprep.subr.mxu0 0.0
    %3354 = vmatpush1.msra.mxu0 0.0
    %3355 = vmatprep.subr.mxu0 0.0
    %3356 = vmatpush1.msra.mxu0 0.0
    %3357 = vmatprep.subr.mxu0 0.0
    %3358 = vmatpush1.msra.mxu0 0.0
    %3359 = vmatprep.subr.mxu0 0.0
    %3360 = vmatpush1.msra.mxu0 0.0
    %3361 = vmatprep.subr.mxu0 0.0
    %3362 = vmatpush1.msra.mxu0 0.0
    %3363 = vmatprep.subr.mxu0 0.0
    %3364 = vmatpush1.msra.mxu0 0.0
    %3365 = vmatprep.subr.mxu0 0.0
    %3366 = vmatpush1.msra.mxu0 0.0
    %3367 = vmatprep.subr.mxu0 0.0
    %3368 = vmatpush1.msra.mxu0 0.0
    %3369 = vmatprep.subr.mxu0 0.0
    %3370 = vmatpush1.msra.mxu0 0.0
    %3371 = vmatprep.subr.mxu0 0.0
    %3372 = vmatpush1.msra.mxu0 0.0
    %3373 = vmatprep.subr.mxu0 0.0
    %3374 = vmatpush1.msra.mxu0 %v3341
    %3375 = vmatprep.subr.mxu0 0.0
    %3376 = vmatpush2.msra.mxu0 0.0
    %3377 = vmatprep.subr.mxu0 0.0
    %3378 = vmatpush2.msra.mxu0 0.0
    %3379 = vmatprep.subr.mxu0 0.0
    %3380 = vmatpush2.msra.mxu0 0.0
    %3381 = vmatprep.subr.mxu0 0.0
    %3382 = vmatpush2.msra.mxu0 0.0
    %3383 = vmatprep.subr.mxu0 0.0
    %3384 = vmatpush2.msra.mxu0 0.0
    %3385 = vmatprep.subr.mxu0 0.0
    %3386 = vmatpush2.msra.mxu0 0.0
    %3387 = vmatprep.subr.mxu0 0.0
    %3388 = vmatpush2.msra.mxu0 0.0
    %3389 = vmatprep.subr.mxu0 0.0
    %3390 = vmatpush2.msra.mxu0 0.0
    %3391 = vmatprep.subr.mxu0 0.0
    %3392 = vmatpush2.msra.mxu0 0.0
    %3393 = vmatprep.subr.mxu0 0.0
    %3394 = vmatpush2.msra.mxu0 0.0
    %3395 = vmatprep.subr.mxu0 0.0
    %3396 = vmatpush2.msra.mxu0 0.0
    %3397 = vmatprep.subr.mxu0 0.0
    %3398 = vmatpush2.msra.mxu0 0.0
    %3399 = vmatprep.subr.mxu0 0.0
    %3400 = vmatpush2.msra.mxu0 0.0
    %3401 = vmatprep.subr.mxu0 0.0
    %3402 = vmatpush2.msra.mxu0 0.0
    %3403 = vmatprep.subr.mxu0 0.0
    %3404 = vmatpush2.msra.mxu0 0.0
    %3405 = vmatprep.subr.mxu0 0.0
    %3406 = vmatpush2.msra.mxu0 0.0
    %3407 = vmatprep.mubr.f32.mxu0 0.0
    %3408 = vmatmul.mubr.f32.gmra.mxu0 %v3335
    %v3409 = vpop.f32.mrf.mxu0
    %v3410 = vadd.f32 0.0, %v3409
    %v3411 = vpop.f32.mrf.mxu0
    %3412 = vmatprep.mubr.f32.mxu0 0.0
    %3413 = vmatmul.mubr.f32.gmra.mxu0 %v3338
    %v3414 = vpop.f32.mrf.mxu0
    %v3415 = vadd.f32 0.0, %v3414
    %v3416 = vpop.f32.mrf.mxu0
    %3417 = vdwg.mxu0
    %3419 = vrot.lane.b32.xlu0 %v3301, 96
    %v3420 = vpop.permute.xlu0 %3419
    %v3421 = vsel %vm177, %v3420, 0
    %3423 = vmatprep.subr.mxu0 0.0
    %3424 = vmatpush1.msra.mxu0 0.0
    %3425 = vmatprep.subr.mxu0 0.0
    %3426 = vmatpush1.msra.mxu0 0.0
    %3427 = vmatprep.subr.mxu0 0.0
    %3428 = vmatpush1.msra.mxu0 0.0
    %3429 = vmatprep.subr.mxu0 0.0
    %3430 = vmatpush1.msra.mxu0 0.0
    %3431 = vmatprep.subr.mxu0 0.0
    %3432 = vmatpush1.msra.mxu0 0.0
    %3433 = vmatprep.subr.mxu0 0.0
    %3434 = vmatpush1.msra.mxu0 0.0
    %3435 = vmatprep.subr.mxu0 0.0
    %3436 = vmatpush1.msra.mxu0 0.0
    %3437 = vmatprep.subr.mxu0 0.0
    %3438 = vmatpush1.msra.mxu0 0.0
    %3439 = vmatprep.subr.mxu0 0.0
    %3440 = vmatpush1.msra.mxu0 0.0
    %3441 = vmatprep.subr.mxu0 0.0
    %3442 = vmatpush1.msra.mxu0 0.0
    %3443 = vmatprep.subr.mxu0 0.0
    %3444 = vmatpush1.msra.mxu0 0.0
    %3445 = vmatprep.subr.mxu0 0.0
    %3446 = vmatpush1.msra.mxu0 0.0
    %3447 = vmatprep.subr.mxu0 0.0
    %3448 = vmatpush1.msra.mxu0 0.0
    %3449 = vmatprep.subr.mxu0 0.0
    %3450 = vmatpush1.msra.mxu0 0.0
    %3451 = vmatprep.subr.mxu0 0.0
    %3452 = vmatpush1.msra.mxu0 0.0
    %3453 = vmatprep.subr.mxu0 0.0
    %3454 = vmatpush1.msra.mxu0 %v3421
    %3455 = vmatprep.subr.mxu0 0.0
    %3456 = vmatpush2.msra.mxu0 0.0
    %3457 = vmatprep.subr.mxu0 0.0
    %3458 = vmatpush2.msra.mxu0 0.0
    %3459 = vmatprep.subr.mxu0 0.0
    %3460 = vmatpush2.msra.mxu0 0.0
    %3461 = vmatprep.subr.mxu0 0.0
    %3462 = vmatpush2.msra.mxu0 0.0
    %3463 = vmatprep.subr.mxu0 0.0
    %3464 = vmatpush2.msra.mxu0 0.0
    %3465 = vmatprep.subr.mxu0 0.0
    %3466 = vmatpush2.msra.mxu0 0.0
    %3467 = vmatprep.subr.mxu0 0.0
    %3468 = vmatpush2.msra.mxu0 0.0
    %3469 = vmatprep.subr.mxu0 0.0
    %3470 = vmatpush2.msra.mxu0 0.0
    %3471 = vmatprep.subr.mxu0 0.0
    %3472 = vmatpush2.msra.mxu0 0.0
    %3473 = vmatprep.subr.mxu0 0.0
    %3474 = vmatpush2.msra.mxu0 0.0
    %3475 = vmatprep.subr.mxu0 0.0
    %3476 = vmatpush2.msra.mxu0 0.0
    %3477 = vmatprep.subr.mxu0 0.0
    %3478 = vmatpush2.msra.mxu0 0.0
    %3479 = vmatprep.subr.mxu0 0.0
    %3480 = vmatpush2.msra.mxu0 0.0
    %3481 = vmatprep.subr.mxu0 0.0
    %3482 = vmatpush2.msra.mxu0 0.0
    %3483 = vmatprep.subr.mxu0 0.0
    %3484 = vmatpush2.msra.mxu0 0.0
    %3485 = vmatprep.subr.mxu0 0.0
    %3486 = vmatpush2.msra.mxu0 0.0
    %3487 = vmatprep.mubr.f32.mxu0 0.0
    %3488 = vmatmul.mubr.f32.gmra.mxu0 %v3335
    %v3489 = vpop.f32.mrf.mxu0
    %v3490 = vadd.f32 0.0, %v3489
    %v3491 = vpop.f32.mrf.mxu0
    %3492 = vmatprep.mubr.f32.mxu0 0.0
    %3493 = vmatmul.mubr.f32.gmra.mxu0 %v3338
    %v3494 = vpop.f32.mrf.mxu0
    %v3495 = vadd.f32 0.0, %v3494
    %v3496 = vpop.f32.mrf.mxu0
    %3497 = vdwg.mxu0
    %v3498 = vsub.f32 1.0, %v3410
    %v3499 = vsub.f32 1.0, %v3415
    %v3500 = vmul.f32 %v3204, %v3498
    %v3501 = vmul.f32 %v3205, %v3499
    %v3502 = vadd.f32 %v3500, %v3490
    %v3503 = vadd.f32 %v3501, %v3495
    %v3505 = vsel %vm342, %v3177, 0
    %3507 = vmatprep.subr.mxu0 0.0
    %3508 = vmatpush1.msra.mxu0 0.0
    %3509 = vmatprep.subr.mxu0 0.0
    %3510 = vmatpush1.msra.mxu0 0.0
    %3511 = vmatprep.subr.mxu0 0.0
    %3512 = vmatpush1.msra.mxu0 0.0
    %3513 = vmatprep.subr.mxu0 0.0
    %3514 = vmatpush1.msra.mxu0 0.0
    %3515 = vmatprep.subr.mxu0 0.0
    %3516 = vmatpush1.msra.mxu0 0.0
    %3517 = vmatprep.subr.mxu0 0.0
    %3518 = vmatpush1.msra.mxu0 0.0
    %3519 = vmatprep.subr.mxu0 0.0
    %3520 = vmatpush1.msra.mxu0 0.0
    %3521 = vmatprep.subr.mxu0 0.0
    %3522 = vmatpush1.msra.mxu0 0.0
    %3523 = vmatprep.subr.mxu0 0.0
    %3524 = vmatpush1.msra.mxu0 0.0
    %3525 = vmatprep.subr.mxu0 0.0
    %3526 = vmatpush1.msra.mxu0 0.0
    %3527 = vmatprep.subr.mxu0 0.0
    %3528 = vmatpush1.msra.mxu0 0.0
    %3529 = vmatprep.subr.mxu0 0.0
    %3530 = vmatpush1.msra.mxu0 0.0
    %3531 = vmatprep.subr.mxu0 0.0
    %3532 = vmatpush1.msra.mxu0 0.0
    %3533 = vmatprep.subr.mxu0 0.0
    %3534 = vmatpush1.msra.mxu0 0.0
    %3535 = vmatprep.subr.mxu0 0.0
    %3536 = vmatpush1.msra.mxu0 %v3503
    %3537 = vmatprep.subr.mxu0 0.0
    %3538 = vmatpush1.msra.mxu0 %v3502
    %3539 = vmatprep.subr.mxu0 0.0
    %3540 = vmatpush2.msra.mxu0 0.0
    %3541 = vmatprep.subr.mxu0 0.0
    %3542 = vmatpush2.msra.mxu0 0.0
    %3543 = vmatprep.subr.mxu0 0.0
    %3544 = vmatpush2.msra.mxu0 0.0
    %3545 = vmatprep.subr.mxu0 0.0
    %3546 = vmatpush2.msra.mxu0 0.0
    %3547 = vmatprep.subr.mxu0 0.0
    %3548 = vmatpush2.msra.mxu0 0.0
    %3549 = vmatprep.subr.mxu0 0.0
    %3550 = vmatpush2.msra.mxu0 0.0
    %3551 = vmatprep.subr.mxu0 0.0
    %3552 = vmatpush2.msra.mxu0 0.0
    %3553 = vmatprep.subr.mxu0 0.0
    %3554 = vmatpush2.msra.mxu0 0.0
    %3555 = vmatprep.subr.mxu0 0.0
    %3556 = vmatpush2.msra.mxu0 0.0
    %3557 = vmatprep.subr.mxu0 0.0
    %3558 = vmatpush2.msra.mxu0 0.0
    %3559 = vmatprep.subr.mxu0 0.0
    %3560 = vmatpush2.msra.mxu0 0.0
    %3561 = vmatprep.subr.mxu0 0.0
    %3562 = vmatpush2.msra.mxu0 0.0
    %3563 = vmatprep.subr.mxu0 0.0
    %3564 = vmatpush2.msra.mxu0 0.0
    %3565 = vmatprep.subr.mxu0 0.0
    %3566 = vmatpush2.msra.mxu0 0.0
    %3567 = vmatprep.subr.mxu0 0.0
    %3568 = vmatpush2.msra.mxu0 0.0
    %3569 = vmatprep.subr.mxu0 0.0
    %3570 = vmatpush2.msra.mxu0 0.0
    %3571 = vmatprep.mubr.f32.mxu0 0.0
    %3572 = vmatmul.mubr.f32.gmra.mxu0 %v3505
    %v3573 = vpop.f32.mrf.mxu0
    %v3574 = vadd.f32 0.0, %v3573
    %v3575 = vpop.f32.mrf.mxu0
    %3576 = vdwg.mxu0
    %v3577 = vld [vmem:[%s3] sm:$0xff]
    %v3578 = vld [vmem:[%s3 + $0x8] sm:$0xff]
    %v3579 = vld [vmem:[%s3 + $0x10] sm:$0xff]
    %v3580 = vld [vmem:[%s3 + $0x18] sm:$0xff]
    %v3581 = vld [vmem:[%s3 + $0x20] sm:$0xff]
    %v3582 = vld [vmem:[%s3 + $0x28] sm:$0xff]
    %v3583 = vld [vmem:[%s3 + $0x30] sm:$0xff]
    %v3584 = vld [vmem:[%s3 + $0x38] sm:$0xff]
    %v3585 = vld [vmem:[%s3 + $0x40] sm:$0xff]
    %v3586 = vld [vmem:[%s3 + $0x48] sm:$0xff]
    %v3587 = vld [vmem:[%s3 + $0x50] sm:$0xff]
    %v3588 = vld [vmem:[%s3 + $0x58] sm:$0xff]
    %v3590 = vsel %vm57, %v3574, 0
    %3592 = vmatprep.subr.mxu0 0.0
    %3593 = vmatpush1.msra.mxu0 0.0
    %3594 = vmatprep.subr.mxu0 0.0
    %3595 = vmatpush1.msra.mxu0 0.0
    %3596 = vmatprep.subr.mxu0 0.0
    %3597 = vmatpush1.msra.mxu0 0.0
    %3598 = vmatprep.subr.mxu0 0.0
    %3599 = vmatpush1.msra.mxu0 0.0
    %3600 = vmatprep.subr.mxu0 0.0
    %3601 = vmatpush1.msra.mxu0 0.0
    %3602 = vmatprep.subr.mxu0 0.0
    %3603 = vmatpush1.msra.mxu0 0.0
    %3604 = vmatprep.subr.mxu0 0.0
    %3605 = vmatpush1.msra.mxu0 0.0
    %3606 = vmatprep.subr.mxu0 0.0
    %3607 = vmatpush1.msra.mxu0 0.0
    %3608 = vmatprep.subr.mxu0 0.0
    %3609 = vmatpush1.msra.mxu0 0.0
    %3610 = vmatprep.subr.mxu0 0.0
    %3611 = vmatpush1.msra.mxu0 0.0
    %3612 = vmatprep.subr.mxu0 0.0
    %3613 = vmatpush1.msra.mxu0 0.0
    %3614 = vmatprep.subr.mxu0 0.0
    %3615 = vmatpush1.msra.mxu0 0.0
    %3616 = vmatprep.subr.mxu0 0.0
    %3617 = vmatpush1.msra.mxu0 %v3588
    %3618 = vmatprep.subr.mxu0 0.0
    %3619 = vmatpush1.msra.mxu0 %v3587
    %3620 = vmatprep.subr.mxu0 0.0
    %3621 = vmatpush1.msra.mxu0 %v3586
    %3622 = vmatprep.subr.mxu0 0.0
    %3623 = vmatpush1.msra.mxu0 %v3585
    %3624 = vmatprep.subr.mxu0 0.0
    %3625 = vmatpush2.msra.mxu0 0.0
    %3626 = vmatprep.subr.mxu0 0.0
    %3627 = vmatpush2.msra.mxu0 0.0
    %3628 = vmatprep.subr.mxu0 0.0
    %3629 = vmatpush2.msra.mxu0 0.0
    %3630 = vmatprep.subr.mxu0 0.0
    %3631 = vmatpush2.msra.mxu0 0.0
    %3632 = vmatprep.subr.mxu0 0.0
    %3633 = vmatpush2.msra.mxu0 0.0
    %3634 = vmatprep.subr.mxu0 0.0
    %3635 = vmatpush2.msra.mxu0 0.0
    %3636 = vmatprep.subr.mxu0 0.0
    %3637 = vmatpush2.msra.mxu0 0.0
    %3638 = vmatprep.subr.mxu0 0.0
    %3639 = vmatpush2.msra.mxu0 0.0
    %3640 = vmatprep.subr.mxu0 0.0
    %3641 = vmatpush2.msra.mxu0 0.0
    %3642 = vmatprep.subr.mxu0 0.0
    %3643 = vmatpush2.msra.mxu0 0.0
    %3644 = vmatprep.subr.mxu0 0.0
    %3645 = vmatpush2.msra.mxu0 0.0
    %3646 = vmatprep.subr.mxu0 0.0
    %3647 = vmatpush2.msra.mxu0 0.0
    %3648 = vmatprep.subr.mxu0 0.0
    %3649 = vmatpush2.msra.mxu0 0.0
    %3650 = vmatprep.subr.mxu0 0.0
    %3651 = vmatpush2.msra.mxu0 0.0
    %3652 = vmatprep.subr.mxu0 0.0
    %3653 = vmatpush2.msra.mxu0 0.0
    %3654 = vmatprep.subr.mxu0 0.0
    %3655 = vmatpush2.msra.mxu0 0.0
    %3656 = vmatprep.mubr.f32.mxu0 0.0
    %3657 = vmatmul.mubr.f32.gmra.mxu0 %v3590
    %v3658 = vpop.f32.mrf.mxu0
    %v3659 = vadd.f32 0.0, %v3658
    %v3660 = vpop.f32.mrf.mxu0
    %3661 = vdwg.mxu0
    %v3663 = vsel %vm501, %v3213, 0
    %3665 = vmatprep.subr.mxu0 0.0
    %3666 = vmatpush1.msra.mxu0 0.0
    %3667 = vmatprep.subr.mxu0 0.0
    %3668 = vmatpush1.msra.mxu0 0.0
    %3669 = vmatprep.subr.mxu0 0.0
    %3670 = vmatpush1.msra.mxu0 0.0
    %3671 = vmatprep.subr.mxu0 0.0
    %3672 = vmatpush1.msra.mxu0 0.0
    %3673 = vmatprep.subr.mxu0 0.0
    %3674 = vmatpush1.msra.mxu0 0.0
    %3675 = vmatprep.subr.mxu0 0.0
    %3676 = vmatpush1.msra.mxu0 0.0
    %3677 = vmatprep.subr.mxu0 0.0
    %3678 = vmatpush1.msra.mxu0 0.0
    %3679 = vmatprep.subr.mxu0 0.0
    %3680 = vmatpush1.msra.mxu0 0.0
    %3681 = vmatprep.subr.mxu0 0.0
    %3682 = vmatpush1.msra.mxu0 %v3584
    %3683 = vmatprep.subr.mxu0 0.0
    %3684 = vmatpush1.msra.mxu0 %v3583
    %3685 = vmatprep.subr.mxu0 0.0
    %3686 = vmatpush1.msra.mxu0 %v3582
    %3687 = vmatprep.subr.mxu0 0.0
    %3688 = vmatpush1.msra.mxu0 %v3581
    %3689 = vmatprep.subr.mxu0 0.0
    %3690 = vmatpush1.msra.mxu0 %v3580
    %3691 = vmatprep.subr.mxu0 0.0
    %3692 = vmatpush1.msra.mxu0 %v3579
    %3693 = vmatprep.subr.mxu0 0.0
    %3694 = vmatpush1.msra.mxu0 %v3578
    %3695 = vmatprep.subr.mxu0 0.0
    %3696 = vmatpush1.msra.mxu0 %v3577
    %3697 = vmatprep.subr.mxu0 0.0
    %3698 = vmatpush2.msra.mxu0 0.0
    %3699 = vmatprep.subr.mxu0 0.0
    %3700 = vmatpush2.msra.mxu0 0.0
    %3701 = vmatprep.subr.mxu0 0.0
    %3702 = vmatpush2.msra.mxu0 0.0
    %3703 = vmatprep.subr.mxu0 0.0
    %3704 = vmatpush2.msra.mxu0 0.0
    %3705 = vmatprep.subr.mxu0 0.0
    %3706 = vmatpush2.msra.mxu0 0.0
    %3707 = vmatprep.subr.mxu0 0.0
    %3708 = vmatpush2.msra.mxu0 0.0
    %3709 = vmatprep.subr.mxu0 0.0
    %3710 = vmatpush2.msra.mxu0 0.0
    %3711 = vmatprep.subr.mxu0 0.0
    %3712 = vmatpush2.msra.mxu0 0.0
    %3713 = vmatprep.subr.mxu0 0.0
    %3714 = vmatpush2.msra.mxu0 0.0
    %3715 = vmatprep.subr.mxu0 0.0
    %3716 = vmatpush2.msra.mxu0 0.0
    %3717 = vmatprep.subr.mxu0 0.0
    %3718 = vmatpush2.msra.mxu0 0.0
    %3719 = vmatprep.subr.mxu0 0.0
    %3720 = vmatpush2.msra.mxu0 0.0
    %3721 = vmatprep.subr.mxu0 0.0
    %3722 = vmatpush2.msra.mxu0 0.0
    %3723 = vmatprep.subr.mxu0 0.0
    %3724 = vmatpush2.msra.mxu0 0.0
    %3725 = vmatprep.subr.mxu0 0.0
    %3726 = vmatpush2.msra.mxu0 0.0
    %3727 = vmatprep.subr.mxu0 0.0
    %3728 = vmatpush2.msra.mxu0 0.0
    %3729 = vmatprep.mubr.f32.mxu0 0.0
    %3730 = vmatmul.mubr.f32.gmra.mxu0 %v3663
    %v3731 = vpop.f32.mrf.mxu0
    %v3732 = vadd.f32 %v3659, %v3731
    %v3733 = vpop.f32.mrf.mxu0
    %3734 = vdwg.mxu0
    %v3735 = vld [vmem:[%s4] sm:$0x1]
    %v3737 = vlaneseq
    %v3738 = vshrl.u32 %v3737, 7
    %v3739 = vsub.s32 0, %v3738
    %v3740 = vrot.slane %v3735, %v3739
    %v3742 = vadd.f32 %v3732, %v3740
    %v3743 = vmax.f32 %v3742, 0.0
    %v3744 = vld [vmem:[%s7] sm:$0xff]
    %v3745 = vld [vmem:[%s7 + $0x8] sm:$0xff]
    %v3746 = vld [vmem:[%s7 + $0x10] sm:$0xff]
    %v3747 = vld [vmem:[%s7 + $0x18] sm:$0xff]
    %v3748 = vld [vmem:[%s8] sm:$0x1]
    %v3750 = vlaneseq
    %v3751 = vshrl.u32 %v3750, 7
    %v3752 = vsub.s32 0, %v3751
    %v3753 = vrot.slane %v3748, %v3752
    %v3756 = vsel %vm57, %v3743, 0
    %3758 = vmatprep.subr.mxu0 0.0
    %3759 = vmatpush1.msra.mxu0 0.0
    %3760 = vmatprep.subr.mxu0 0.0
    %3761 = vmatpush1.msra.mxu0 0.0
    %3762 = vmatprep.subr.mxu0 0.0
    %3763 = vmatpush1.msra.mxu0 0.0
    %3764 = vmatprep.subr.mxu0 0.0
    %3765 = vmatpush1.msra.mxu0 0.0
    %3766 = vmatprep.subr.mxu0 0.0
    %3767 = vmatpush1.msra.mxu0 0.0
    %3768 = vmatprep.subr.mxu0 0.0
    %3769 = vmatpush1.msra.mxu0 0.0
    %3770 = vmatprep.subr.mxu0 0.0
    %3771 = vmatpush1.msra.mxu0 0.0
    %3772 = vmatprep.subr.mxu0 0.0
    %3773 = vmatpush1.msra.mxu0 0.0
    %3774 = vmatprep.subr.mxu0 0.0
    %3775 = vmatpush1.msra.mxu0 0.0
    %3776 = vmatprep.subr.mxu0 0.0
    %3777 = vmatpush1.msra.mxu0 0.0
    %3778 = vmatprep.subr.mxu0 0.0
    %3779 = vmatpush1.msra.mxu0 0.0
    %3780 = vmatprep.subr.mxu0 0.0
    %3781 = vmatpush1.msra.mxu0 0.0
    %3782 = vmatprep.subr.mxu0 0.0
    %3783 = vmatpush1.msra.mxu0 %v3747
    %3784 = vmatprep.subr.mxu0 0.0
    %3785 = vmatpush1.msra.mxu0 %v3746
    %3786 = vmatprep.subr.mxu0 0.0
    %3787 = vmatpush1.msra.mxu0 %v3745
    %3788 = vmatprep.subr.mxu0 0.0
    %3789 = vmatpush1.msra.mxu0 %v3744
    %3790 = vmatprep.subr.mxu0 0.0
    %3791 = vmatpush2.msra.mxu0 0.0
    %3792 = vmatprep.subr.mxu0 0.0
    %3793 = vmatpush2.msra.mxu0 0.0
    %3794 = vmatprep.subr.mxu0 0.0
    %3795 = vmatpush2.msra.mxu0 0.0
    %3796 = vmatprep.subr.mxu0 0.0
    %3797 = vmatpush2.msra.mxu0 0.0
    %3798 = vmatprep.subr.mxu0 0.0
    %3799 = vmatpush2.msra.mxu0 0.0
    %3800 = vmatprep.subr.mxu0 0.0
    %3801 = vmatpush2.msra.mxu0 0.0
    %3802 = vmatprep.subr.mxu0 0.0
    %3803 = vmatpush2.msra.mxu0 0.0
    %3804 = vmatprep.subr.mxu0 0.0
    %3805 = vmatpush2.msra.mxu0 0.0
    %3806 = vmatprep.subr.mxu0 0.0
    %3807 = vmatpush2.msra.mxu0 0.0
    %3808 = vmatprep.subr.mxu0 0.0
    %3809 = vmatpush2.msra.mxu0 0.0
    %3810 = vmatprep.subr.mxu0 0.0
    %3811 = vmatpush2.msra.mxu0 0.0
    %3812 = vmatprep.subr.mxu0 0.0
    %3813 = vmatpush2.msra.mxu0 0.0
    %3814 = vmatprep.subr.mxu0 0.0
    %3815 = vmatpush2.msra.mxu0 0.0
    %3816 = vmatprep.subr.mxu0 0.0
    %3817 = vmatpush2.msra.mxu0 0.0
    %3818 = vmatprep.subr.mxu0 0.0
    %3819 = vmatpush2.msra.mxu0 0.0
    %3820 = vmatprep.subr.mxu0 0.0
    %3821 = vmatpush2.msra.mxu0 0.0
    %3822 = vmatprep.mubr.f32.mxu0 0.0
    %3823 = vmatmul.mubr.f32.gmra.mxu0 %v3756
    %v3824 = vpop.f32.mrf.mxu0
    %v3825 = vadd.f32 %v3753, %v3824
    %v3826 = vpop.f32.mrf.mxu0
    %3827 = vdwg.mxu0
    %v3828 = vtanh.pop %v3825
    %v3829 = vxor.u32 %v3825, 2147483648
    %v3830 = vmul.f32 %v3829, 1.442695
    %v3831 = vpow.pop %v3830
    %v3832 = vadd.f32 %v3831, 1.0
    %v3833 = vrcp.pop %v3832
    %v3834 = vmul.f32 1.0, %v3833
    %v3835 = vmax.f32 %v3825, 0.0
    %vm3836 = vcmp.ne.f32.partialorder %v3825, %v3825
    %v3837 = vadd.f32 %v3825, 0.0
    %v3838 = vand.u32 2147483647, %v3825
    %v3839 = vsub.f32 0.0, %v3838
    %v3840 = vmul.f32 %v3839, 1.442695
    %v3841 = vpow.pop %v3840
    %v3842 = vadd.f32 %v3841, 1.0
    %v3843 = vlog2.pop %v3842
    %v3844 = vmul.f32 %v3843, 0.6931472
    %v3845 = vmul.f32 -0.5, %v3841
    %v3846 = vadd.f32 %v3845, 1.0
    %v3847 = vmul.f32 %v3846, %v3841
    %v3848 = vand.u32 2147483647, %v3841
    %vm3849 = vcmp.lt.f32.partialorder %v3848, 0.0004427343
    %v3850 = vsel %vm3849, %v3847, %v3844
    %v3851 = vadd.f32 %v3835, %v3850
    %v3852 = vsel %vm3836, %v3837, %v3851
    %v3853 = vmul.f32 %v3502, %v3502
    %v3854 = vmul.f32 %v3503, %v3503
    %v3855 = vsel %vm57, %v3853, 0.0
    %3856 = vadd.xlane.f32.xlu0 %v3855
    %v3857 = vpop.xlane.xlu0 %3856
    %v3858 = vsel %vm57, %v3854, 0.0
    %3859 = vadd.xlane.f32.xlu0 %v3858
    %v3860 = vpop.xlane.xlu0 %3859
    %v3862 = vsel %vm57, %v3828, 0
    %v3865 = vsel %vm57, %v3502, 0
    %v3868 = vsel %vm57, %v3503, 0
    %3870 = vmatprep.subr.mxu0 0.0
    %3871 = vmatpush1.xpose.msra.mxu0 0.0
    %3872 = vmatprep.subr.mxu0 0.0
    %3873 = vmatpush1.xpose.msra.mxu0 0.0
    %3874 = vmatprep.subr.mxu0 0.0
    %3875 = vmatpush1.xpose.msra.mxu0 0.0
    %3876 = vmatprep.subr.mxu0 0.0
    %3877 = vmatpush1.xpose.msra.mxu0 0.0
    %3878 = vmatprep.subr.mxu0 0.0
    %3879 = vmatpush1.xpose.msra.mxu0 0.0
    %3880 = vmatprep.subr.mxu0 0.0
    %3881 = vmatpush1.xpose.msra.mxu0 0.0
    %3882 = vmatprep.subr.mxu0 0.0
    %3883 = vmatpush1.xpose.msra.mxu0 0.0
    %3884 = vmatprep.subr.mxu0 0.0
    %3885 = vmatpush1.xpose.msra.mxu0 0.0
    %3886 = vmatprep.subr.mxu0 0.0
    %3887 = vmatpush1.xpose.msra.mxu0 0.0
    %3888 = vmatprep.subr.mxu0 0.0
    %3889 = vmatpush1.xpose.msra.mxu0 0.0
    %3890 = vmatprep.subr.mxu0 0.0
    %3891 = vmatpush1.xpose.msra.mxu0 0.0
    %3892 = vmatprep.subr.mxu0 0.0
    %3893 = vmatpush1.xpose.msra.mxu0 0.0
    %3894 = vmatprep.subr.mxu0 0.0
    %3895 = vmatpush1.xpose.msra.mxu0 0.0
    %3896 = vmatprep.subr.mxu0 0.0
    %3897 = vmatpush1.xpose.msra.mxu0 0.0
    %3898 = vmatprep.subr.mxu0 0.0
    %3899 = vmatpush1.xpose.msra.mxu0 %v3868
    %3900 = vmatprep.subr.mxu0 0.0
    %3901 = vmatpush1.xpose.msra.mxu0 %v3865
    %3902 = vmatprep.subr.mxu0 0.0
    %3903 = vmatpush2.xpose.msra.mxu0 0.0
    %3904 = vmatprep.subr.mxu0 0.0
    %3905 = vmatpush2.xpose.msra.mxu0 0.0
    %3906 = vmatprep.subr.mxu0 0.0
    %3907 = vmatpush2.xpose.msra.mxu0 0.0
    %3908 = vmatprep.subr.mxu0 0.0
    %3909 = vmatpush2.xpose.msra.mxu0 0.0
    %3910 = vmatprep.subr.mxu0 0.0
    %3911 = vmatpush2.xpose.msra.mxu0 0.0
    %3912 = vmatprep.subr.mxu0 0.0
    %3913 = vmatpush2.xpose.msra.mxu0 0.0
    %3914 = vmatprep.subr.mxu0 0.0
    %3915 = vmatpush2.xpose.msra.mxu0 0.0
    %3916 = vmatprep.subr.mxu0 0.0
    %3917 = vmatpush2.xpose.msra.mxu0 0.0
    %3918 = vmatprep.subr.mxu0 0.0
    %3919 = vmatpush2.xpose.msra.mxu0 0.0
    %3920 = vmatprep.subr.mxu0 0.0
    %3921 = vmatpush2.xpose.msra.mxu0 0.0
    %3922 = vmatprep.subr.mxu0 0.0
    %3923 = vmatpush2.xpose.msra.mxu0 0.0
    %3924 = vmatprep.subr.mxu0 0.0
    %3925 = vmatpush2.xpose.msra.mxu0 0.0
    %3926 = vmatprep.subr.mxu0 0.0
    %3927 = vmatpush2.xpose.msra.mxu0 0.0
    %3928 = vmatprep.subr.mxu0 0.0
    %3929 = vmatpush2.xpose.msra.mxu0 0.0
    %3930 = vmatprep.subr.mxu0 0.0
    %3931 = vmatpush2.xpose.msra.mxu0 0.0
    %3932 = vmatprep.subr.mxu0 0.0
    %3933 = vmatpush2.xpose.msra.mxu0 0.0
    %3934 = vmatprep.mubr.f32.mxu0 0.0
    %3935 = vmatmul.mubr.f32.gmra.mxu0 %v3862
    %v3936 = vpop.f32.mrf.mxu0
    %v3937 = vadd.f32 0.0, %v3936
    %v3938 = vpop.f32.mrf.mxu0
    %3939 = vdwg.mxu0
    %v3940 = vmul.f32 %v3828, %v3828
    %v3941 = vsel %vm781, %v3940, 0.0
    %3942 = vadd.xlane.f32.xlu0 %v3941
    %v3943 = vpop.xlane.xlu0 %3942
    %v3945 = vsel %vm785, %v3943, 0
    %v3948 = vsel %vm785, %v3857, 0
    %v3951 = vsel %vm785, %v3860, 0
    %3953 = vmatprep.subr.mxu0 0.0
    %3954 = vmatpush1.xpose.msra.mxu0 0.0
    %3955 = vmatprep.subr.mxu0 0.0
    %3956 = vmatpush1.xpose.msra.mxu0 0.0
    %3957 = vmatprep.subr.mxu0 0.0
    %3958 = vmatpush1.xpose.msra.mxu0 0.0
    %3959 = vmatprep.subr.mxu0 0.0
    %3960 = vmatpush1.xpose.msra.mxu0 0.0
    %3961 = vmatprep.subr.mxu0 0.0
    %3962 = vmatpush1.xpose.msra.mxu0 0.0
    %3963 = vmatprep.subr.mxu0 0.0
    %3964 = vmatpush1.xpose.msra.mxu0 0.0
    %3965 = vmatprep.subr.mxu0 0.0
    %3966 = vmatpush1.xpose.msra.mxu0 0.0
    %3967 = vmatprep.subr.mxu0 0.0
    %3968 = vmatpush1.xpose.msra.mxu0 0.0
    %3969 = vmatprep.subr.mxu0 0.0
    %3970 = vmatpush1.xpose.msra.mxu0 0.0
    %3971 = vmatprep.subr.mxu0 0.0
    %3972 = vmatpush1.xpose.msra.mxu0 0.0
    %3973 = vmatprep.subr.mxu0 0.0
    %3974 = vmatpush1.xpose.msra.mxu0 0.0
    %3975 = vmatprep.subr.mxu0 0.0
    %3976 = vmatpush1.xpose.msra.mxu0 0.0
    %3977 = vmatprep.subr.mxu0 0.0
    %3978 = vmatpush1.xpose.msra.mxu0 0.0
    %3979 = vmatprep.subr.mxu0 0.0
    %3980 = vmatpush1.xpose.msra.mxu0 0.0
    %3981 = vmatprep.subr.mxu0 0.0
    %3982 = vmatpush1.xpose.msra.mxu0 %v3951
    %3983 = vmatprep.subr.mxu0 0.0
    %3984 = vmatpush1.xpose.msra.mxu0 %v3948
    %3985 = vmatprep.subr.mxu0 0.0
    %3986 = vmatpush2.xpose.msra.mxu0 0.0
    %3987 = vmatprep.subr.mxu0 0.0
    %3988 = vmatpush2.xpose.msra.mxu0 0.0
    %3989 = vmatprep.subr.mxu0 0.0
    %3990 = vmatpush2.xpose.msra.mxu0 0.0
    %3991 = vmatprep.subr.mxu0 0.0
    %3992 = vmatpush2.xpose.msra.mxu0 0.0
    %3993 = vmatprep.subr.mxu0 0.0
    %3994 = vmatpush2.xpose.msra.mxu0 0.0
    %3995 = vmatprep.subr.mxu0 0.0
    %3996 = vmatpush2.xpose.msra.mxu0 0.0
    %3997 = vmatprep.subr.mxu0 0.0
    %3998 = vmatpush2.xpose.msra.mxu0 0.0
    %3999 = vmatprep.subr.mxu0 0.0
    %4000 = vmatpush2.xpose.msra.mxu0 0.0
    %4001 = vmatprep.subr.mxu0 0.0
    %4002 = vmatpush2.xpose.msra.mxu0 0.0
    %4003 = vmatprep.subr.mxu0 0.0
    %4004 = vmatpush2.xpose.msra.mxu0 0.0
    %4005 = vmatprep.subr.mxu0 0.0
    %4006 = vmatpush2.xpose.msra.mxu0 0.0
    %4007 = vmatprep.subr.mxu0 0.0
    %4008 = vmatpush2.xpose.msra.mxu0 0.0
    %4009 = vmatprep.subr.mxu0 0.0
    %4010 = vmatpush2.xpose.msra.mxu0 0.0
    %4011 = vmatprep.subr.mxu0 0.0
    %4012 = vmatpush2.xpose.msra.mxu0 0.0
    %4013 = vmatprep.subr.mxu0 0.0
    %4014 = vmatpush2.xpose.msra.mxu0 0.0
    %4015 = vmatprep.subr.mxu0 0.0
    %4016 = vmatpush2.xpose.msra.mxu0 0.0
    %4017 = vmatprep.mubr.f32.mxu0 0.0
    %4018 = vmatmul.mubr.f32.gmra.mxu0 %v3945
    %v4019 = vpop.f32.mrf.mxu0
    %v4020 = vadd.f32 0.0, %v4019
    %v4021 = vpop.f32.mrf.mxu0
    %4022 = vdwg.mxu0
    %v4023 = vrsqrt.pop %v4020
    %v4024 = vmul.f32 %v4020, %v4023
    %vm4025 = vcmp.eq.f32.partialorder %v4020, inf
    %v4026 = vsel %vm4025, %v4020, %v4024
    %vm4027 = vcmp.eq.f32.partialorder %v4020, 0.0
    %v4028 = vand.u32 %v4020, 2147483648
    %v4029 = vsel %vm4027, %v4028, %v4026
    %v4030 = vadd.f32 %v4029, 1e-08
    %v4031 = vrcp.pop %v4030
    %v4032 = vmul.f32 %v3937, %v4031
    %4034 = vset.pattern.permute.xlu0 72
    %4035 = vperm.xlu0 %4034, %v3852
    %v4036 = vpop.permute.xlu0 %4035
    %v4038 = vmul.f32 %v4036, %v4032
    %v4039 = vsel %vm881, %v4038, -inf
    %4040 = vmax.xlane.f32.xlu0 %v4039
    %v4041 = vpop.xlane.xlu0 %4040
    %v4042 = vsub.f32 %v4038, %v4041
    %v4043 = vmul.f32 %v4042, 1.442695
    %v4044 = vpow.pop %v4043
    %v4045 = vsel %vm881, %v4044, 0.0
    %4046 = vadd.xlane.f32.xlu0 %v4045
    %v4047 = vpop.xlane.xlu0 %4046
    %v4048 = vrcp.pop %v4047
    %v4049 = vmul.f32 %v4044, %v4048
    %4050 = vrot.lane.b32.xlu0 %v3828, 96
    %v4051 = vpop.permute.xlu0 %4050
    %v4052 = vsel %vm57, %v4051, 0
    %4054 = vmatprep.subr.mxu0 0.0
    %4055 = vmatpush1.xpose.msra.mxu0 0.0
    %4056 = vmatprep.subr.mxu0 0.0
    %4057 = vmatpush1.xpose.msra.mxu0 0.0
    %4058 = vmatprep.subr.mxu0 0.0
    %4059 = vmatpush1.xpose.msra.mxu0 0.0
    %4060 = vmatprep.subr.mxu0 0.0
    %4061 = vmatpush1.xpose.msra.mxu0 0.0
    %4062 = vmatprep.subr.mxu0 0.0
    %4063 = vmatpush1.xpose.msra.mxu0 0.0
    %4064 = vmatprep.subr.mxu0 0.0
    %4065 = vmatpush1.xpose.msra.mxu0 0.0
    %4066 = vmatprep.subr.mxu0 0.0
    %4067 = vmatpush1.xpose.msra.mxu0 0.0
    %4068 = vmatprep.subr.mxu0 0.0
    %4069 = vmatpush1.xpose.msra.mxu0 0.0
    %4070 = vmatprep.subr.mxu0 0.0
    %4071 = vmatpush1.xpose.msra.mxu0 0.0
    %4072 = vmatprep.subr.mxu0 0.0
    %4073 = vmatpush1.xpose.msra.mxu0 0.0
    %4074 = vmatprep.subr.mxu0 0.0
    %4075 = vmatpush1.xpose.msra.mxu0 0.0
    %4076 = vmatprep.subr.mxu0 0.0
    %4077 = vmatpush1.xpose.msra.mxu0 0.0
    %4078 = vmatprep.subr.mxu0 0.0
    %4079 = vmatpush1.xpose.msra.mxu0 0.0
    %4080 = vmatprep.subr.mxu0 0.0
    %4081 = vmatpush1.xpose.msra.mxu0 0.0
    %4082 = vmatprep.subr.mxu0 0.0
    %4083 = vmatpush1.xpose.msra.mxu0 %v3868
    %4084 = vmatprep.subr.mxu0 0.0
    %4085 = vmatpush1.xpose.msra.mxu0 %v3865
    %4086 = vmatprep.subr.mxu0 0.0
    %4087 = vmatpush2.xpose.msra.mxu0 0.0
    %4088 = vmatprep.subr.mxu0 0.0
    %4089 = vmatpush2.xpose.msra.mxu0 0.0
    %4090 = vmatprep.subr.mxu0 0.0
    %4091 = vmatpush2.xpose.msra.mxu0 0.0
    %4092 = vmatprep.subr.mxu0 0.0
    %4093 = vmatpush2.xpose.msra.mxu0 0.0
    %4094 = vmatprep.subr.mxu0 0.0
    %4095 = vmatpush2.xpose.msra.mxu0 0.0
    %4096 = vmatprep.subr.mxu0 0.0
    %4097 = vmatpush2.xpose.msra.mxu0 0.0
    %4098 = vmatprep.subr.mxu0 0.0
    %4099 = vmatpush2.xpose.msra.mxu0 0.0
    %4100 = vmatprep.subr.mxu0 0.0
    %4101 = vmatpush2.xpose.msra.mxu0 0.0
    %4102 = vmatprep.subr.mxu0 0.0
    %4103 = vmatpush2.xpose.msra.mxu0 0.0
    %4104 = vmatprep.subr.mxu0 0.0
    %4105 = vmatpush2.xpose.msra.mxu0 0.0
    %4106 = vmatprep.subr.mxu0 0.0
    %4107 = vmatpush2.xpose.msra.mxu0 0.0
    %4108 = vmatprep.subr.mxu0 0.0
    %4109 = vmatpush2.xpose.msra.mxu0 0.0
    %4110 = vmatprep.subr.mxu0 0.0
    %4111 = vmatpush2.xpose.msra.mxu0 0.0
    %4112 = vmatprep.subr.mxu0 0.0
    %4113 = vmatpush2.xpose.msra.mxu0 0.0
    %4114 = vmatprep.subr.mxu0 0.0
    %4115 = vmatpush2.xpose.msra.mxu0 0.0
    %4116 = vmatprep.subr.mxu0 0.0
    %4117 = vmatpush2.xpose.msra.mxu0 0.0
    %4118 = vmatprep.mubr.f32.mxu0 0.0
    %4119 = vmatmul.mubr.f32.gmra.mxu0 %v4052
    %v4120 = vpop.f32.mrf.mxu0
    %v4121 = vadd.f32 0.0, %v4120
    %v4122 = vpop.f32.mrf.mxu0
    %4123 = vdwg.mxu0
    %4125 = vrot.lane.b32.xlu0 %v3940, 96
    %v4126 = vpop.permute.xlu0 %4125
    %v4128 = vsel %vm781, %v4126, 0.0
    %4129 = vadd.xlane.f32.xlu0 %v4128
    %v4130 = vpop.xlane.xlu0 %4129
    %v4132 = vsel %vm785, %v4130, 0
    %4134 = vmatprep.subr.mxu0 0.0
    %4135 = vmatpush1.xpose.msra.mxu0 0.0
    %4136 = vmatprep.subr.mxu0 0.0
    %4137 = vmatpush1.xpose.msra.mxu0 0.0
    %4138 = vmatprep.subr.mxu0 0.0
    %4139 = vmatpush1.xpose.msra.mxu0 0.0
    %4140 = vmatprep.subr.mxu0 0.0
    %4141 = vmatpush1.xpose.msra.mxu0 0.0
    %4142 = vmatprep.subr.mxu0 0.0
    %4143 = vmatpush1.xpose.msra.mxu0 0.0
    %4144 = vmatprep.subr.mxu0 0.0
    %4145 = vmatpush1.xpose.msra.mxu0 0.0
    %4146 = vmatprep.subr.mxu0 0.0
    %4147 = vmatpush1.xpose.msra.mxu0 0.0
    %4148 = vmatprep.subr.mxu0 0.0
    %4149 = vmatpush1.xpose.msra.mxu0 0.0
    %4150 = vmatprep.subr.mxu0 0.0
    %4151 = vmatpush1.xpose.msra.mxu0 0.0
    %4152 = vmatprep.subr.mxu0 0.0
    %4153 = vmatpush1.xpose.msra.mxu0 0.0
    %4154 = vmatprep.subr.mxu0 0.0
    %4155 = vmatpush1.xpose.msra.mxu0 0.0
    %4156 = vmatprep.subr.mxu0 0.0
    %4157 = vmatpush1.xpose.msra.mxu0 0.0
    %4158 = vmatprep.subr.mxu0 0.0
    %4159 = vmatpush1.xpose.msra.mxu0 0.0
    %4160 = vmatprep.subr.mxu0 0.0
    %4161 = vmatpush1.xpose.msra.mxu0 0.0
    %4162 = vmatprep.subr.mxu0 0.0
    %4163 = vmatpush1.xpose.msra.mxu0 %v3951
    %4164 = vmatprep.subr.mxu0 0.0
    %4165 = vmatpush1.xpose.msra.mxu0 %v3948
    %4166 = vmatprep.subr.mxu0 0.0
    %4167 = vmatpush2.xpose.msra.mxu0 0.0
    %4168 = vmatprep.subr.mxu0 0.0
    %4169 = vmatpush2.xpose.msra.mxu0 0.0
    %4170 = vmatprep.subr.mxu0 0.0
    %4171 = vmatpush2.xpose.msra.mxu0 0.0
    %4172 = vmatprep.subr.mxu0 0.0
    %4173 = vmatpush2.xpose.msra.mxu0 0.0
    %4174 = vmatprep.subr.mxu0 0.0
    %4175 = vmatpush2.xpose.msra.mxu0 0.0
    %4176 = vmatprep.subr.mxu0 0.0
    %4177 = vmatpush2.xpose.msra.mxu0 0.0
    %4178 = vmatprep.subr.mxu0 0.0
    %4179 = vmatpush2.xpose.msra.mxu0 0.0
    %4180 = vmatprep.subr.mxu0 0.0
    %4181 = vmatpush2.xpose.msra.mxu0 0.0
    %4182 = vmatprep.subr.mxu0 0.0
    %4183 = vmatpush2.xpose.msra.mxu0 0.0
    %4184 = vmatprep.subr.mxu0 0.0
    %4185 = vmatpush2.xpose.msra.mxu0 0.0
    %4186 = vmatprep.subr.mxu0 0.0
    %4187 = vmatpush2.xpose.msra.mxu0 0.0
    %4188 = vmatprep.subr.mxu0 0.0
    %4189 = vmatpush2.xpose.msra.mxu0 0.0
    %4190 = vmatprep.subr.mxu0 0.0
    %4191 = vmatpush2.xpose.msra.mxu0 0.0
    %4192 = vmatprep.subr.mxu0 0.0
    %4193 = vmatpush2.xpose.msra.mxu0 0.0
    %4194 = vmatprep.subr.mxu0 0.0
    %4195 = vmatpush2.xpose.msra.mxu0 0.0
    %4196 = vmatprep.subr.mxu0 0.0
    %4197 = vmatpush2.xpose.msra.mxu0 0.0
    %4198 = vmatprep.mubr.f32.mxu0 0.0
    %4199 = vmatmul.mubr.f32.gmra.mxu0 %v4132
    %v4200 = vpop.f32.mrf.mxu0
    %v4201 = vadd.f32 0.0, %v4200
    %v4202 = vpop.f32.mrf.mxu0
    %4203 = vdwg.mxu0
    %v4204 = vrsqrt.pop %v4201
    %v4205 = vmul.f32 %v4201, %v4204
    %vm4206 = vcmp.eq.f32.partialorder %v4201, inf
    %v4207 = vsel %vm4206, %v4201, %v4205
    %vm4208 = vcmp.eq.f32.partialorder %v4201, 0.0
    %v4209 = vand.u32 %v4201, 2147483648
    %v4210 = vsel %vm4208, %v4209, %v4207
    %v4211 = vadd.f32 %v4210, 1e-08
    %v4212 = vrcp.pop %v4211
    %v4213 = vmul.f32 %v4121, %v4212
    %4214 = vset.pattern.permute.xlu0 73
    %4215 = vperm.xlu0 %4214, %v3852
    %v4216 = vpop.permute.xlu0 %4215
    %v4218 = vmul.f32 %v4216, %v4213
    %v4219 = vsel %vm881, %v4218, -inf
    %4220 = vmax.xlane.f32.xlu0 %v4219
    %v4221 = vpop.xlane.xlu0 %4220
    %v4222 = vsub.f32 %v4218, %v4221
    %v4223 = vmul.f32 %v4222, 1.442695
    %v4224 = vpow.pop %v4223
    %v4225 = vsel %vm881, %v4224, 0.0
    %4226 = vadd.xlane.f32.xlu0 %v4225
    %v4227 = vpop.xlane.xlu0 %4226
    %v4228 = vrcp.pop %v4227
    %v4229 = vmul.f32 %v4224, %v4228
    %v4230 = vsel %vm57, %v3502, 0.0
    %v4231 = vsel %vm57, %v3503, 0.0
    %v4232 = vadd.f32 %v4230, %v4231
    %v4233 = vrot.slane %v4232, 4
    %v4234 = vadd.f32 %v4232, %v4233
    %v4235 = vrot.slane %v4234, 2
    %v4236 = vadd.f32 %v4234, %v4235
    %v4237 = vrot.slane %v4236, 1
    %v4238 = vadd.f32 %v4236, %v4237
    %v4239 = vmul.f32 %v4238, %v1082
    %v4240 = vsub.f32 %v3502, %v4239
    %v4241 = vsub.f32 %v3503, %v4239
    %v4242 = vmul.f32 %v4240, %v4240
    %v4243 = vmul.f32 %v4241, %v4241
    %v4244 = vsel %vm57, %v4242, 0.0
    %v4245 = vsel %vm57, %v4243, 0.0
    %v4246 = vadd.f32 %v4244, %v4245
    %v4247 = vrot.slane %v4246, 4
    %v4248 = vadd.f32 %v4246, %v4247
    %v4249 = vrot.slane %v4248, 2
    %v4250 = vadd.f32 %v4248, %v4249
    %v4251 = vrot.slane %v4250, 1
    %v4252 = vadd.f32 %v4250, %v4251
    %v4253 = vmul.f32 %v4252, %v1082
    %v4254 = vadd.f32 %v4253, 1e-05
    %v4255 = vrsqrt.pop %v4254
    %v4256 = vmul.f32 %v4240, %v4255
    %v4257 = vmul.f32 %v4241, %v4255
    %4259 = vrot.lane.b32.xlu0 %v3834, 64
    %v4260 = vpop.permute.xlu0 %4259
    %s4262 = scalar_lea.vmem [#allocation2], 6
    %4263 = vst.msk [vmem:[%s4262] sm:$0x3] %vm1106, %v4260
    %v4264 = vld [vmem:[%s3212] sm:$0x3]
    %v4265 = vld [vmem:[%s5] sm:$0xff]
    %v4266 = vld [vmem:[%s5 + $0x8] sm:$0xff]
    %v4267 = vld [vmem:[%s5 + $0x10] sm:$0xff]
    %v4268 = vld [vmem:[%s5 + $0x18] sm:$0xff]
    %v4269 = vld [vmem:[%s6] sm:$0x1]
    %v4271 = vlaneseq
    %v4272 = vshrl.u32 %v4271, 7
    %v4273 = vsub.s32 0, %v4272
    %v4274 = vrot.slane %v4269, %v4273
    %v4277 = vsel %vm57, %v44, 0
    %4279 = vmatprep.subr.mxu0 0.0
    %4280 = vmatpush1.msra.mxu0 0.0
    %4281 = vmatprep.subr.mxu0 0.0
    %4282 = vmatpush1.msra.mxu0 0.0
    %4283 = vmatprep.subr.mxu0 0.0
    %4284 = vmatpush1.msra.mxu0 0.0
    %4285 = vmatprep.subr.mxu0 0.0
    %4286 = vmatpush1.msra.mxu0 0.0
    %4287 = vmatprep.subr.mxu0 0.0
    %4288 = vmatpush1.msra.mxu0 0.0
    %4289 = vmatprep.subr.mxu0 0.0
    %4290 = vmatpush1.msra.mxu0 0.0
    %4291 = vmatprep.subr.mxu0 0.0
    %4292 = vmatpush1.msra.mxu0 0.0
    %4293 = vmatprep.subr.mxu0 0.0
    %4294 = vmatpush1.msra.mxu0 0.0
    %4295 = vmatprep.subr.mxu0 0.0
    %4296 = vmatpush1.msra.mxu0 0.0
    %4297 = vmatprep.subr.mxu0 0.0
    %4298 = vmatpush1.msra.mxu0 0.0
    %4299 = vmatprep.subr.mxu0 0.0
    %4300 = vmatpush1.msra.mxu0 0.0
    %4301 = vmatprep.subr.mxu0 0.0
    %4302 = vmatpush1.msra.mxu0 0.0
    %4303 = vmatprep.subr.mxu0 0.0
    %4304 = vmatpush1.msra.mxu0 %v4268
    %4305 = vmatprep.subr.mxu0 0.0
    %4306 = vmatpush1.msra.mxu0 %v4267
    %4307 = vmatprep.subr.mxu0 0.0
    %4308 = vmatpush1.msra.mxu0 %v4266
    %4309 = vmatprep.subr.mxu0 0.0
    %4310 = vmatpush1.msra.mxu0 %v4265
    %4311 = vmatprep.subr.mxu0 0.0
    %4312 = vmatpush2.msra.mxu0 0.0
    %4313 = vmatprep.subr.mxu0 0.0
    %4314 = vmatpush2.msra.mxu0 0.0
    %4315 = vmatprep.subr.mxu0 0.0
    %4316 = vmatpush2.msra.mxu0 0.0
    %4317 = vmatprep.subr.mxu0 0.0
    %4318 = vmatpush2.msra.mxu0 0.0
    %4319 = vmatprep.subr.mxu0 0.0
    %4320 = vmatpush2.msra.mxu0 0.0
    %4321 = vmatprep.subr.mxu0 0.0
    %4322 = vmatpush2.msra.mxu0 0.0
    %4323 = vmatprep.subr.mxu0 0.0
    %4324 = vmatpush2.msra.mxu0 0.0
    %4325 = vmatprep.subr.mxu0 0.0
    %4326 = vmatpush2.msra.mxu0 0.0
    %4327 = vmatprep.subr.mxu0 0.0
    %4328 = vmatpush2.msra.mxu0 0.0
    %4329 = vmatprep.subr.mxu0 0.0
    %4330 = vmatpush2.msra.mxu0 0.0
    %4331 = vmatprep.subr.mxu0 0.0
    %4332 = vmatpush2.msra.mxu0 0.0
    %4333 = vmatprep.subr.mxu0 0.0
    %4334 = vmatpush2.msra.mxu0 0.0
    %4335 = vmatprep.subr.mxu0 0.0
    %4336 = vmatpush2.msra.mxu0 0.0
    %4337 = vmatprep.subr.mxu0 0.0
    %4338 = vmatpush2.msra.mxu0 0.0
    %4339 = vmatprep.subr.mxu0 0.0
    %4340 = vmatpush2.msra.mxu0 0.0
    %4341 = vmatprep.subr.mxu0 0.0
    %4342 = vmatpush2.msra.mxu0 0.0
    %4343 = vmatprep.mubr.f32.mxu0 0.0
    %4344 = vmatmul.mubr.f32.gmra.mxu0 %v4277
    %v4345 = vpop.f32.mrf.mxu0
    %v4346 = vadd.f32 %v4274, %v4345
    %v4347 = vpop.f32.mrf.mxu0
    %4348 = vdwg.mxu0
    %v4349 = vxor.u32 %v4346, 2147483648
    %v4350 = vmul.f32 %v4349, 1.442695
    %v4351 = vpow.pop %v4350
    %v4352 = vadd.f32 %v4351, 1.0
    %v4353 = vrcp.pop %v4352
    %v4354 = vmul.f32 1.0, %v4353
    %v4355 = vtanh.pop %v4346
    %4356 = vxpose.xlu0.b32.start [1/16] %v4049, 128
    %4357 = vxpose.xlu0.b32.cont [2/16] 0.0, 128
    %4358 = vxpose.xlu0.b32.cont [3/16] 0.0, 128
    %4359 = vxpose.xlu0.b32.cont [4/16] 0.0, 128
    %4360 = vxpose.xlu0.b32.cont [5/16] 0.0, 128
    %4361 = vxpose.xlu0.b32.cont [6/16] 0.0, 128
    %4362 = vxpose.xlu0.b32.cont [7/16] 0.0, 128
    %4363 = vxpose.xlu0.b32.cont [8/16] 0.0, 128
    %4364 = vxpose.xlu0.b32.cont [9/16] 0.0, 128
    %4365 = vxpose.xlu0.b32.cont [10/16] 0.0, 128
    %4366 = vxpose.xlu0.b32.cont [11/16] 0.0, 128
    %4367 = vxpose.xlu0.b32.cont [12/16] 0.0, 128
    %4368 = vxpose.xlu0.b32.cont [13/16] 0.0, 128
    %4369 = vxpose.xlu0.b32.cont [14/16] 0.0, 128
    %4370 = vxpose.xlu0.b32.cont [15/16] 0.0, 128
    %4371 = vxpose.xlu0.b32.end [16/16] 0.0, 128
    %v4372 = vpop.trf.xlu0
    %v4373 = vpop.trf.xlu0
    %v4374 = vpop.trf.xlu0
    %v4375 = vpop.trf.xlu0
    %v4376 = vpop.trf.xlu0
    %v4377 = vpop.trf.xlu0
    %v4378 = vpop.trf.xlu0
    %v4379 = vpop.trf.xlu0
    %v4380 = vpop.trf.xlu0
    %v4381 = vpop.trf.xlu0
    %v4382 = vpop.trf.xlu0
    %v4383 = vpop.trf.xlu0
    %v4384 = vpop.trf.xlu0
    %v4385 = vpop.trf.xlu0
    %v4386 = vpop.trf.xlu0
    %v4387 = vpop.trf.xlu0
    %v4389 = vsel %vm170, %v4372, 0
    %v4392 = vsel %vm170, %v4373, 0
    %v4395 = vsel %vm177, %v4354, 0
    %4397 = vmatprep.subr.mxu0 0.0
    %4398 = vmatpush1.msra.mxu0 0.0
    %4399 = vmatprep.subr.mxu0 0.0
    %4400 = vmatpush1.msra.mxu0 0.0
    %4401 = vmatprep.subr.mxu0 0.0
    %4402 = vmatpush1.msra.mxu0 0.0
    %4403 = vmatprep.subr.mxu0 0.0
    %4404 = vmatpush1.msra.mxu0 0.0
    %4405 = vmatprep.subr.mxu0 0.0
    %4406 = vmatpush1.msra.mxu0 0.0
    %4407 = vmatprep.subr.mxu0 0.0
    %4408 = vmatpush1.msra.mxu0 0.0
    %4409 = vmatprep.subr.mxu0 0.0
    %4410 = vmatpush1.msra.mxu0 0.0
    %4411 = vmatprep.subr.mxu0 0.0
    %4412 = vmatpush1.msra.mxu0 0.0
    %4413 = vmatprep.subr.mxu0 0.0
    %4414 = vmatpush1.msra.mxu0 0.0
    %4415 = vmatprep.subr.mxu0 0.0
    %4416 = vmatpush1.msra.mxu0 0.0
    %4417 = vmatprep.subr.mxu0 0.0
    %4418 = vmatpush1.msra.mxu0 0.0
    %4419 = vmatprep.subr.mxu0 0.0
    %4420 = vmatpush1.msra.mxu0 0.0
    %4421 = vmatprep.subr.mxu0 0.0
    %4422 = vmatpush1.msra.mxu0 0.0
    %4423 = vmatprep.subr.mxu0 0.0
    %4424 = vmatpush1.msra.mxu0 0.0
    %4425 = vmatprep.subr.mxu0 0.0
    %4426 = vmatpush1.msra.mxu0 0.0
    %4427 = vmatprep.subr.mxu0 0.0
    %4428 = vmatpush1.msra.mxu0 %v4395
    %4429 = vmatprep.subr.mxu0 0.0
    %4430 = vmatpush2.msra.mxu0 0.0
    %4431 = vmatprep.subr.mxu0 0.0
    %4432 = vmatpush2.msra.mxu0 0.0
    %4433 = vmatprep.subr.mxu0 0.0
    %4434 = vmatpush2.msra.mxu0 0.0
    %4435 = vmatprep.subr.mxu0 0.0
    %4436 = vmatpush2.msra.mxu0 0.0
    %4437 = vmatprep.subr.mxu0 0.0
    %4438 = vmatpush2.msra.mxu0 0.0
    %4439 = vmatprep.subr.mxu0 0.0
    %4440 = vmatpush2.msra.mxu0 0.0
    %4441 = vmatprep.subr.mxu0 0.0
    %4442 = vmatpush2.msra.mxu0 0.0
    %4443 = vmatprep.subr.mxu0 0.0
    %4444 = vmatpush2.msra.mxu0 0.0
    %4445 = vmatprep.subr.mxu0 0.0
    %4446 = vmatpush2.msra.mxu0 0.0
    %4447 = vmatprep.subr.mxu0 0.0
    %4448 = vmatpush2.msra.mxu0 0.0
    %4449 = vmatprep.subr.mxu0 0.0
    %4450 = vmatpush2.msra.mxu0 0.0
    %4451 = vmatprep.subr.mxu0 0.0
    %4452 = vmatpush2.msra.mxu0 0.0
    %4453 = vmatprep.subr.mxu0 0.0
    %4454 = vmatpush2.msra.mxu0 0.0
    %4455 = vmatprep.subr.mxu0 0.0
    %4456 = vmatpush2.msra.mxu0 0.0
    %4457 = vmatprep.subr.mxu0 0.0
    %4458 = vmatpush2.msra.mxu0 0.0
    %4459 = vmatprep.subr.mxu0 0.0
    %4460 = vmatpush2.msra.mxu0 0.0
    %4461 = vmatprep.mubr.f32.mxu0 0.0
    %4462 = vmatmul.mubr.f32.gmra.mxu0 %v4389
    %v4463 = vpop.f32.mrf.mxu0
    %v4464 = vadd.f32 0.0, %v4463
    %v4465 = vpop.f32.mrf.mxu0
    %4466 = vmatprep.mubr.f32.mxu0 0.0
    %4467 = vmatmul.mubr.f32.gmra.mxu0 %v4392
    %v4468 = vpop.f32.mrf.mxu0
    %v4469 = vadd.f32 0.0, %v4468
    %v4470 = vpop.f32.mrf.mxu0
    %4471 = vdwg.mxu0
    %4473 = vrot.lane.b32.xlu0 %v4355, 96
    %v4474 = vpop.permute.xlu0 %4473
    %v4475 = vsel %vm177, %v4474, 0
    %4477 = vmatprep.subr.mxu0 0.0
    %4478 = vmatpush1.msra.mxu0 0.0
    %4479 = vmatprep.subr.mxu0 0.0
    %4480 = vmatpush1.msra.mxu0 0.0
    %4481 = vmatprep.subr.mxu0 0.0
    %4482 = vmatpush1.msra.mxu0 0.0
    %4483 = vmatprep.subr.mxu0 0.0
    %4484 = vmatpush1.msra.mxu0 0.0
    %4485 = vmatprep.subr.mxu0 0.0
    %4486 = vmatpush1.msra.mxu0 0.0
    %4487 = vmatprep.subr.mxu0 0.0
    %4488 = vmatpush1.msra.mxu0 0.0
    %4489 = vmatprep.subr.mxu0 0.0
    %4490 = vmatpush1.msra.mxu0 0.0
    %4491 = vmatprep.subr.mxu0 0.0
    %4492 = vmatpush1.msra.mxu0 0.0
    %4493 = vmatprep.subr.mxu0 0.0
    %4494 = vmatpush1.msra.mxu0 0.0
    %4495 = vmatprep.subr.mxu0 0.0
    %4496 = vmatpush1.msra.mxu0 0.0
    %4497 = vmatprep.subr.mxu0 0.0
    %4498 = vmatpush1.msra.mxu0 0.0
    %4499 = vmatprep.subr.mxu0 0.0
    %4500 = vmatpush1.msra.mxu0 0.0
    %4501 = vmatprep.subr.mxu0 0.0
    %4502 = vmatpush1.msra.mxu0 0.0
    %4503 = vmatprep.subr.mxu0 0.0
    %4504 = vmatpush1.msra.mxu0 0.0
    %4505 = vmatprep.subr.mxu0 0.0
    %4506 = vmatpush1.msra.mxu0 0.0
    %4507 = vmatprep.subr.mxu0 0.0
    %4508 = vmatpush1.msra.mxu0 %v4475
    %4509 = vmatprep.subr.mxu0 0.0
    %4510 = vmatpush2.msra.mxu0 0.0
    %4511 = vmatprep.subr.mxu0 0.0
    %4512 = vmatpush2.msra.mxu0 0.0
    %4513 = vmatprep.subr.mxu0 0.0
    %4514 = vmatpush2.msra.mxu0 0.0
    %4515 = vmatprep.subr.mxu0 0.0
    %4516 = vmatpush2.msra.mxu0 0.0
    %4517 = vmatprep.subr.mxu0 0.0
    %4518 = vmatpush2.msra.mxu0 0.0
    %4519 = vmatprep.subr.mxu0 0.0
    %4520 = vmatpush2.msra.mxu0 0.0
    %4521 = vmatprep.subr.mxu0 0.0
    %4522 = vmatpush2.msra.mxu0 0.0
    %4523 = vmatprep.subr.mxu0 0.0
    %4524 = vmatpush2.msra.mxu0 0.0
    %4525 = vmatprep.subr.mxu0 0.0
    %4526 = vmatpush2.msra.mxu0 0.0
    %4527 = vmatprep.subr.mxu0 0.0
    %4528 = vmatpush2.msra.mxu0 0.0
    %4529 = vmatprep.subr.mxu0 0.0
    %4530 = vmatpush2.msra.mxu0 0.0
    %4531 = vmatprep.subr.mxu0 0.0
    %4532 = vmatpush2.msra.mxu0 0.0
    %4533 = vmatprep.subr.mxu0 0.0
    %4534 = vmatpush2.msra.mxu0 0.0
    %4535 = vmatprep.subr.mxu0 0.0
    %4536 = vmatpush2.msra.mxu0 0.0
    %4537 = vmatprep.subr.mxu0 0.0
    %4538 = vmatpush2.msra.mxu0 0.0
    %4539 = vmatprep.subr.mxu0 0.0
    %4540 = vmatpush2.msra.mxu0 0.0
    %4541 = vmatprep.mubr.f32.mxu0 0.0
    %4542 = vmatmul.mubr.f32.gmra.mxu0 %v4389
    %v4543 = vpop.f32.mrf.mxu0
    %v4544 = vadd.f32 0.0, %v4543
    %v4545 = vpop.f32.mrf.mxu0
    %4546 = vmatprep.mubr.f32.mxu0 0.0
    %4547 = vmatmul.mubr.f32.gmra.mxu0 %v4392
    %v4548 = vpop.f32.mrf.mxu0
    %v4549 = vadd.f32 0.0, %v4548
    %v4550 = vpop.f32.mrf.mxu0
    %4551 = vdwg.mxu0
    %v4552 = vsub.f32 1.0, %v4464
    %v4553 = vsub.f32 1.0, %v4469
    %v4554 = vmul.f32 %v4256, %v4552
    %v4555 = vmul.f32 %v4257, %v4553
    %v4556 = vadd.f32 %v4554, %v4544
    %v4557 = vadd.f32 %v4555, %v4549
    %v4559 = vsel %vm342, %v4229, 0
    %4561 = vmatprep.subr.mxu0 0.0
    %4562 = vmatpush1.msra.mxu0 0.0
    %4563 = vmatprep.subr.mxu0 0.0
    %4564 = vmatpush1.msra.mxu0 0.0
    %4565 = vmatprep.subr.mxu0 0.0
    %4566 = vmatpush1.msra.mxu0 0.0
    %4567 = vmatprep.subr.mxu0 0.0
    %4568 = vmatpush1.msra.mxu0 0.0
    %4569 = vmatprep.subr.mxu0 0.0
    %4570 = vmatpush1.msra.mxu0 0.0
    %4571 = vmatprep.subr.mxu0 0.0
    %4572 = vmatpush1.msra.mxu0 0.0
    %4573 = vmatprep.subr.mxu0 0.0
    %4574 = vmatpush1.msra.mxu0 0.0
    %4575 = vmatprep.subr.mxu0 0.0
    %4576 = vmatpush1.msra.mxu0 0.0
    %4577 = vmatprep.subr.mxu0 0.0
    %4578 = vmatpush1.msra.mxu0 0.0
    %4579 = vmatprep.subr.mxu0 0.0
    %4580 = vmatpush1.msra.mxu0 0.0
    %4581 = vmatprep.subr.mxu0 0.0
    %4582 = vmatpush1.msra.mxu0 0.0
    %4583 = vmatprep.subr.mxu0 0.0
    %4584 = vmatpush1.msra.mxu0 0.0
    %4585 = vmatprep.subr.mxu0 0.0
    %4586 = vmatpush1.msra.mxu0 0.0
    %4587 = vmatprep.subr.mxu0 0.0
    %4588 = vmatpush1.msra.mxu0 0.0
    %4589 = vmatprep.subr.mxu0 0.0
    %4590 = vmatpush1.msra.mxu0 %v4557
    %4591 = vmatprep.subr.mxu0 0.0
    %4592 = vmatpush1.msra.mxu0 %v4556
    %4593 = vmatprep.subr.mxu0 0.0
    %4594 = vmatpush2.msra.mxu0 0.0
    %4595 = vmatprep.subr.mxu0 0.0
    %4596 = vmatpush2.msra.mxu0 0.0
    %4597 = vmatprep.subr.mxu0 0.0
    %4598 = vmatpush2.msra.mxu0 0.0
    %4599 = vmatprep.subr.mxu0 0.0
    %4600 = vmatpush2.msra.mxu0 0.0
    %4601 = vmatprep.subr.mxu0 0.0
    %4602 = vmatpush2.msra.mxu0 0.0
    %4603 = vmatprep.subr.mxu0 0.0
    %4604 = vmatpush2.msra.mxu0 0.0
    %4605 = vmatprep.subr.mxu0 0.0
    %4606 = vmatpush2.msra.mxu0 0.0
    %4607 = vmatprep.subr.mxu0 0.0
    %4608 = vmatpush2.msra.mxu0 0.0
    %4609 = vmatprep.subr.mxu0 0.0
    %4610 = vmatpush2.msra.mxu0 0.0
    %4611 = vmatprep.subr.mxu0 0.0
    %4612 = vmatpush2.msra.mxu0 0.0
    %4613 = vmatprep.subr.mxu0 0.0
    %4614 = vmatpush2.msra.mxu0 0.0
    %4615 = vmatprep.subr.mxu0 0.0
    %4616 = vmatpush2.msra.mxu0 0.0
    %4617 = vmatprep.subr.mxu0 0.0
    %4618 = vmatpush2.msra.mxu0 0.0
    %4619 = vmatprep.subr.mxu0 0.0
    %4620 = vmatpush2.msra.mxu0 0.0
    %4621 = vmatprep.subr.mxu0 0.0
    %4622 = vmatpush2.msra.mxu0 0.0
    %4623 = vmatprep.subr.mxu0 0.0
    %4624 = vmatpush2.msra.mxu0 0.0
    %4625 = vmatprep.mubr.f32.mxu0 0.0
    %4626 = vmatmul.mubr.f32.gmra.mxu0 %v4559
    %v4627 = vpop.f32.mrf.mxu0
    %v4628 = vadd.f32 0.0, %v4627
    %v4629 = vpop.f32.mrf.mxu0
    %4630 = vdwg.mxu0
    %v4631 = vld [vmem:[%s3] sm:$0xff]
    %v4632 = vld [vmem:[%s3 + $0x8] sm:$0xff]
    %v4633 = vld [vmem:[%s3 + $0x10] sm:$0xff]
    %v4634 = vld [vmem:[%s3 + $0x18] sm:$0xff]
    %v4635 = vld [vmem:[%s3 + $0x20] sm:$0xff]
    %v4636 = vld [vmem:[%s3 + $0x28] sm:$0xff]
    %v4637 = vld [vmem:[%s3 + $0x30] sm:$0xff]
    %v4638 = vld [vmem:[%s3 + $0x38] sm:$0xff]
    %v4639 = vld [vmem:[%s3 + $0x40] sm:$0xff]
    %v4640 = vld [vmem:[%s3 + $0x48] sm:$0xff]
    %v4641 = vld [vmem:[%s3 + $0x50] sm:$0xff]
    %v4642 = vld [vmem:[%s3 + $0x58] sm:$0xff]
    %v4644 = vsel %vm57, %v4628, 0
    %4646 = vmatprep.subr.mxu0 0.0
    %4647 = vmatpush1.msra.mxu0 0.0
    %4648 = vmatprep.subr.mxu0 0.0
    %4649 = vmatpush1.msra.mxu0 0.0
    %4650 = vmatprep.subr.mxu0 0.0
    %4651 = vmatpush1.msra.mxu0 0.0
    %4652 = vmatprep.subr.mxu0 0.0
    %4653 = vmatpush1.msra.mxu0 0.0
    %4654 = vmatprep.subr.mxu0 0.0
    %4655 = vmatpush1.msra.mxu0 0.0
    %4656 = vmatprep.subr.mxu0 0.0
    %4657 = vmatpush1.msra.mxu0 0.0
    %4658 = vmatprep.subr.mxu0 0.0
    %4659 = vmatpush1.msra.mxu0 0.0
    %4660 = vmatprep.subr.mxu0 0.0
    %4661 = vmatpush1.msra.mxu0 0.0
    %4662 = vmatprep.subr.mxu0 0.0
    %4663 = vmatpush1.msra.mxu0 0.0
    %4664 = vmatprep.subr.mxu0 0.0
    %4665 = vmatpush1.msra.mxu0 0.0
    %4666 = vmatprep.subr.mxu0 0.0
    %4667 = vmatpush1.msra.mxu0 0.0
    %4668 = vmatprep.subr.mxu0 0.0
    %4669 = vmatpush1.msra.mxu0 0.0
    %4670 = vmatprep.subr.mxu0 0.0
    %4671 = vmatpush1.msra.mxu0 %v4642
    %4672 = vmatprep.subr.mxu0 0.0
    %4673 = vmatpush1.msra.mxu0 %v4641
    %4674 = vmatprep.subr.mxu0 0.0
    %4675 = vmatpush1.msra.mxu0 %v4640
    %4676 = vmatprep.subr.mxu0 0.0
    %4677 = vmatpush1.msra.mxu0 %v4639
    %4678 = vmatprep.subr.mxu0 0.0
    %4679 = vmatpush2.msra.mxu0 0.0
    %4680 = vmatprep.subr.mxu0 0.0
    %4681 = vmatpush2.msra.mxu0 0.0
    %4682 = vmatprep.subr.mxu0 0.0
    %4683 = vmatpush2.msra.mxu0 0.0
    %4684 = vmatprep.subr.mxu0 0.0
    %4685 = vmatpush2.msra.mxu0 0.0
    %4686 = vmatprep.subr.mxu0 0.0
    %4687 = vmatpush2.msra.mxu0 0.0
    %4688 = vmatprep.subr.mxu0 0.0
    %4689 = vmatpush2.msra.mxu0 0.0
    %4690 = vmatprep.subr.mxu0 0.0
    %4691 = vmatpush2.msra.mxu0 0.0
    %4692 = vmatprep.subr.mxu0 0.0
    %4693 = vmatpush2.msra.mxu0 0.0
    %4694 = vmatprep.subr.mxu0 0.0
    %4695 = vmatpush2.msra.mxu0 0.0
    %4696 = vmatprep.subr.mxu0 0.0
    %4697 = vmatpush2.msra.mxu0 0.0
    %4698 = vmatprep.subr.mxu0 0.0
    %4699 = vmatpush2.msra.mxu0 0.0
    %4700 = vmatprep.subr.mxu0 0.0
    %4701 = vmatpush2.msra.mxu0 0.0
    %4702 = vmatprep.subr.mxu0 0.0
    %4703 = vmatpush2.msra.mxu0 0.0
    %4704 = vmatprep.subr.mxu0 0.0
    %4705 = vmatpush2.msra.mxu0 0.0
    %4706 = vmatprep.subr.mxu0 0.0
    %4707 = vmatpush2.msra.mxu0 0.0
    %4708 = vmatprep.subr.mxu0 0.0
    %4709 = vmatpush2.msra.mxu0 0.0
    %4710 = vmatprep.mubr.f32.mxu0 0.0
    %4711 = vmatmul.mubr.f32.gmra.mxu0 %v4644
    %v4712 = vpop.f32.mrf.mxu0
    %v4713 = vadd.f32 0.0, %v4712
    %v4714 = vpop.f32.mrf.mxu0
    %4715 = vdwg.mxu0
    %v4717 = vsel %vm501, %v4264, 0
    %4719 = vmatprep.subr.mxu0 0.0
    %4720 = vmatpush1.msra.mxu0 0.0
    %4721 = vmatprep.subr.mxu0 0.0
    %4722 = vmatpush1.msra.mxu0 0.0
    %4723 = vmatprep.subr.mxu0 0.0
    %4724 = vmatpush1.msra.mxu0 0.0
    %4725 = vmatprep.subr.mxu0 0.0
    %4726 = vmatpush1.msra.mxu0 0.0
    %4727 = vmatprep.subr.mxu0 0.0
    %4728 = vmatpush1.msra.mxu0 0.0
    %4729 = vmatprep.subr.mxu0 0.0
    %4730 = vmatpush1.msra.mxu0 0.0
    %4731 = vmatprep.subr.mxu0 0.0
    %4732 = vmatpush1.msra.mxu0 0.0
    %4733 = vmatprep.subr.mxu0 0.0
    %4734 = vmatpush1.msra.mxu0 0.0
    %4735 = vmatprep.subr.mxu0 0.0
    %4736 = vmatpush1.msra.mxu0 %v4638
    %4737 = vmatprep.subr.mxu0 0.0
    %4738 = vmatpush1.msra.mxu0 %v4637
    %4739 = vmatprep.subr.mxu0 0.0
    %4740 = vmatpush1.msra.mxu0 %v4636
    %4741 = vmatprep.subr.mxu0 0.0
    %4742 = vmatpush1.msra.mxu0 %v4635
    %4743 = vmatprep.subr.mxu0 0.0
    %4744 = vmatpush1.msra.mxu0 %v4634
    %4745 = vmatprep.subr.mxu0 0.0
    %4746 = vmatpush1.msra.mxu0 %v4633
    %4747 = vmatprep.subr.mxu0 0.0
    %4748 = vmatpush1.msra.mxu0 %v4632
    %4749 = vmatprep.subr.mxu0 0.0
    %4750 = vmatpush1.msra.mxu0 %v4631
    %4751 = vmatprep.subr.mxu0 0.0
    %4752 = vmatpush2.msra.mxu0 0.0
    %4753 = vmatprep.subr.mxu0 0.0
    %4754 = vmatpush2.msra.mxu0 0.0
    %4755 = vmatprep.subr.mxu0 0.0
    %4756 = vmatpush2.msra.mxu0 0.0
    %4757 = vmatprep.subr.mxu0 0.0
    %4758 = vmatpush2.msra.mxu0 0.0
    %4759 = vmatprep.subr.mxu0 0.0
    %4760 = vmatpush2.msra.mxu0 0.0
    %4761 = vmatprep.subr.mxu0 0.0
    %4762 = vmatpush2.msra.mxu0 0.0
    %4763 = vmatprep.subr.mxu0 0.0
    %4764 = vmatpush2.msra.mxu0 0.0
    %4765 = vmatprep.subr.mxu0 0.0
    %4766 = vmatpush2.msra.mxu0 0.0
    %4767 = vmatprep.subr.mxu0 0.0
    %4768 = vmatpush2.msra.mxu0 0.0
    %4769 = vmatprep.subr.mxu0 0.0
    %4770 = vmatpush2.msra.mxu0 0.0
    %4771 = vmatprep.subr.mxu0 0.0
    %4772 = vmatpush2.msra.mxu0 0.0
    %4773 = vmatprep.subr.mxu0 0.0
    %4774 = vmatpush2.msra.mxu0 0.0
    %4775 = vmatprep.subr.mxu0 0.0
    %4776 = vmatpush2.msra.mxu0 0.0
    %4777 = vmatprep.subr.mxu0 0.0
    %4778 = vmatpush2.msra.mxu0 0.0
    %4779 = vmatprep.subr.mxu0 0.0
    %4780 = vmatpush2.msra.mxu0 0.0
    %4781 = vmatprep.subr.mxu0 0.0
    %4782 = vmatpush2.msra.mxu0 0.0
    %4783 = vmatprep.mubr.f32.mxu0 0.0
    %4784 = vmatmul.mubr.f32.gmra.mxu0 %v4717
    %v4785 = vpop.f32.mrf.mxu0
    %v4786 = vadd.f32 %v4713, %v4785
    %v4787 = vpop.f32.mrf.mxu0
    %4788 = vdwg.mxu0
    %v4789 = vld [vmem:[%s4] sm:$0x1]
    %v4791 = vlaneseq
    %v4792 = vshrl.u32 %v4791, 7
    %v4793 = vsub.s32 0, %v4792
    %v4794 = vrot.slane %v4789, %v4793
    %v4796 = vadd.f32 %v4786, %v4794
    %v4797 = vmax.f32 %v4796, 0.0
    %v4798 = vld [vmem:[%s7] sm:$0xff]
    %v4799 = vld [vmem:[%s7 + $0x8] sm:$0xff]
    %v4800 = vld [vmem:[%s7 + $0x10] sm:$0xff]
    %v4801 = vld [vmem:[%s7 + $0x18] sm:$0xff]
    %v4802 = vld [vmem:[%s8] sm:$0x1]
    %v4804 = vlaneseq
    %v4805 = vshrl.u32 %v4804, 7
    %v4806 = vsub.s32 0, %v4805
    %v4807 = vrot.slane %v4802, %v4806
    %v4810 = vsel %vm57, %v4797, 0
    %4812 = vmatprep.subr.mxu0 0.0
    %4813 = vmatpush1.msra.mxu0 0.0
    %4814 = vmatprep.subr.mxu0 0.0
    %4815 = vmatpush1.msra.mxu0 0.0
    %4816 = vmatprep.subr.mxu0 0.0
    %4817 = vmatpush1.msra.mxu0 0.0
    %4818 = vmatprep.subr.mxu0 0.0
    %4819 = vmatpush1.msra.mxu0 0.0
    %4820 = vmatprep.subr.mxu0 0.0
    %4821 = vmatpush1.msra.mxu0 0.0
    %4822 = vmatprep.subr.mxu0 0.0
    %4823 = vmatpush1.msra.mxu0 0.0
    %4824 = vmatprep.subr.mxu0 0.0
    %4825 = vmatpush1.msra.mxu0 0.0
    %4826 = vmatprep.subr.mxu0 0.0
    %4827 = vmatpush1.msra.mxu0 0.0
    %4828 = vmatprep.subr.mxu0 0.0
    %4829 = vmatpush1.msra.mxu0 0.0
    %4830 = vmatprep.subr.mxu0 0.0
    %4831 = vmatpush1.msra.mxu0 0.0
    %4832 = vmatprep.subr.mxu0 0.0
    %4833 = vmatpush1.msra.mxu0 0.0
    %4834 = vmatprep.subr.mxu0 0.0
    %4835 = vmatpush1.msra.mxu0 0.0
    %4836 = vmatprep.subr.mxu0 0.0
    %4837 = vmatpush1.msra.mxu0 %v4801
    %4838 = vmatprep.subr.mxu0 0.0
    %4839 = vmatpush1.msra.mxu0 %v4800
    %4840 = vmatprep.subr.mxu0 0.0
    %4841 = vmatpush1.msra.mxu0 %v4799
    %4842 = vmatprep.subr.mxu0 0.0
    %4843 = vmatpush1.msra.mxu0 %v4798
    %4844 = vmatprep.subr.mxu0 0.0
    %4845 = vmatpush2.msra.mxu0 0.0
    %4846 = vmatprep.subr.mxu0 0.0
    %4847 = vmatpush2.msra.mxu0 0.0
    %4848 = vmatprep.subr.mxu0 0.0
    %4849 = vmatpush2.msra.mxu0 0.0
    %4850 = vmatprep.subr.mxu0 0.0
    %4851 = vmatpush2.msra.mxu0 0.0
    %4852 = vmatprep.subr.mxu0 0.0
    %4853 = vmatpush2.msra.mxu0 0.0
    %4854 = vmatprep.subr.mxu0 0.0
    %4855 = vmatpush2.msra.mxu0 0.0
    %4856 = vmatprep.subr.mxu0 0.0
    %4857 = vmatpush2.msra.mxu0 0.0
    %4858 = vmatprep.subr.mxu0 0.0
    %4859 = vmatpush2.msra.mxu0 0.0
    %4860 = vmatprep.subr.mxu0 0.0
    %4861 = vmatpush2.msra.mxu0 0.0
    %4862 = vmatprep.subr.mxu0 0.0
    %4863 = vmatpush2.msra.mxu0 0.0
    %4864 = vmatprep.subr.mxu0 0.0
    %4865 = vmatpush2.msra.mxu0 0.0
    %4866 = vmatprep.subr.mxu0 0.0
    %4867 = vmatpush2.msra.mxu0 0.0
    %4868 = vmatprep.subr.mxu0 0.0
    %4869 = vmatpush2.msra.mxu0 0.0
    %4870 = vmatprep.subr.mxu0 0.0
    %4871 = vmatpush2.msra.mxu0 0.0
    %4872 = vmatprep.subr.mxu0 0.0
    %4873 = vmatpush2.msra.mxu0 0.0
    %4874 = vmatprep.subr.mxu0 0.0
    %4875 = vmatpush2.msra.mxu0 0.0
    %4876 = vmatprep.mubr.f32.mxu0 0.0
    %4877 = vmatmul.mubr.f32.gmra.mxu0 %v4810
    %v4878 = vpop.f32.mrf.mxu0
    %v4879 = vadd.f32 %v4807, %v4878
    %v4880 = vpop.f32.mrf.mxu0
    %4881 = vdwg.mxu0
    %v4882 = vtanh.pop %v4879
    %v4883 = vxor.u32 %v4879, 2147483648
    %v4884 = vmul.f32 %v4883, 1.442695
    %v4885 = vpow.pop %v4884
    %v4886 = vadd.f32 %v4885, 1.0
    %v4887 = vrcp.pop %v4886
    %v4888 = vmul.f32 1.0, %v4887
    %v4889 = vmax.f32 %v4879, 0.0
    %vm4890 = vcmp.ne.f32.partialorder %v4879, %v4879
    %v4891 = vadd.f32 %v4879, 0.0
    %v4892 = vand.u32 2147483647, %v4879
    %v4893 = vsub.f32 0.0, %v4892
    %v4894 = vmul.f32 %v4893, 1.442695
    %v4895 = vpow.pop %v4894
    %v4896 = vadd.f32 %v4895, 1.0
    %v4897 = vlog2.pop %v4896
    %v4898 = vmul.f32 %v4897, 0.6931472
    %v4899 = vmul.f32 -0.5, %v4895
    %v4900 = vadd.f32 %v4899, 1.0
    %v4901 = vmul.f32 %v4900, %v4895
    %v4902 = vand.u32 2147483647, %v4895
    %vm4903 = vcmp.lt.f32.partialorder %v4902, 0.0004427343
    %v4904 = vsel %vm4903, %v4901, %v4898
    %v4905 = vadd.f32 %v4889, %v4904
    %v4906 = vsel %vm4890, %v4891, %v4905
    %v4907 = vmul.f32 %v4556, %v4556
    %v4908 = vmul.f32 %v4557, %v4557
    %v4909 = vsel %vm57, %v4907, 0.0
    %4910 = vadd.xlane.f32.xlu0 %v4909
    %v4911 = vpop.xlane.xlu0 %4910
    %v4912 = vsel %vm57, %v4908, 0.0
    %4913 = vadd.xlane.f32.xlu0 %v4912
    %v4914 = vpop.xlane.xlu0 %4913
    %v4916 = vsel %vm57, %v4882, 0
    %v4919 = vsel %vm57, %v4556, 0
    %v4922 = vsel %vm57, %v4557, 0
    %4924 = vmatprep.subr.mxu0 0.0
    %4925 = vmatpush1.xpose.msra.mxu0 0.0
    %4926 = vmatprep.subr.mxu0 0.0
    %4927 = vmatpush1.xpose.msra.mxu0 0.0
    %4928 = vmatprep.subr.mxu0 0.0
    %4929 = vmatpush1.xpose.msra.mxu0 0.0
    %4930 = vmatprep.subr.mxu0 0.0
    %4931 = vmatpush1.xpose.msra.mxu0 0.0
    %4932 = vmatprep.subr.mxu0 0.0
    %4933 = vmatpush1.xpose.msra.mxu0 0.0
    %4934 = vmatprep.subr.mxu0 0.0
    %4935 = vmatpush1.xpose.msra.mxu0 0.0
    %4936 = vmatprep.subr.mxu0 0.0
    %4937 = vmatpush1.xpose.msra.mxu0 0.0
    %4938 = vmatprep.subr.mxu0 0.0
    %4939 = vmatpush1.xpose.msra.mxu0 0.0
    %4940 = vmatprep.subr.mxu0 0.0
    %4941 = vmatpush1.xpose.msra.mxu0 0.0
    %4942 = vmatprep.subr.mxu0 0.0
    %4943 = vmatpush1.xpose.msra.mxu0 0.0
    %4944 = vmatprep.subr.mxu0 0.0
    %4945 = vmatpush1.xpose.msra.mxu0 0.0
    %4946 = vmatprep.subr.mxu0 0.0
    %4947 = vmatpush1.xpose.msra.mxu0 0.0
    %4948 = vmatprep.subr.mxu0 0.0
    %4949 = vmatpush1.xpose.msra.mxu0 0.0
    %4950 = vmatprep.subr.mxu0 0.0
    %4951 = vmatpush1.xpose.msra.mxu0 0.0
    %4952 = vmatprep.subr.mxu0 0.0
    %4953 = vmatpush1.xpose.msra.mxu0 %v4922
    %4954 = vmatprep.subr.mxu0 0.0
    %4955 = vmatpush1.xpose.msra.mxu0 %v4919
    %4956 = vmatprep.subr.mxu0 0.0
    %4957 = vmatpush2.xpose.msra.mxu0 0.0
    %4958 = vmatprep.subr.mxu0 0.0
    %4959 = vmatpush2.xpose.msra.mxu0 0.0
    %4960 = vmatprep.subr.mxu0 0.0
    %4961 = vmatpush2.xpose.msra.mxu0 0.0
    %4962 = vmatprep.subr.mxu0 0.0
    %4963 = vmatpush2.xpose.msra.mxu0 0.0
    %4964 = vmatprep.subr.mxu0 0.0
    %4965 = vmatpush2.xpose.msra.mxu0 0.0
    %4966 = vmatprep.subr.mxu0 0.0
    %4967 = vmatpush2.xpose.msra.mxu0 0.0
    %4968 = vmatprep.subr.mxu0 0.0
    %4969 = vmatpush2.xpose.msra.mxu0 0.0
    %4970 = vmatprep.subr.mxu0 0.0
    %4971 = vmatpush2.xpose.msra.mxu0 0.0
    %4972 = vmatprep.subr.mxu0 0.0
    %4973 = vmatpush2.xpose.msra.mxu0 0.0
    %4974 = vmatprep.subr.mxu0 0.0
    %4975 = vmatpush2.xpose.msra.mxu0 0.0
    %4976 = vmatprep.subr.mxu0 0.0
    %4977 = vmatpush2.xpose.msra.mxu0 0.0
    %4978 = vmatprep.subr.mxu0 0.0
    %4979 = vmatpush2.xpose.msra.mxu0 0.0
    %4980 = vmatprep.subr.mxu0 0.0
    %4981 = vmatpush2.xpose.msra.mxu0 0.0
    %4982 = vmatprep.subr.mxu0 0.0
    %4983 = vmatpush2.xpose.msra.mxu0 0.0
    %4984 = vmatprep.subr.mxu0 0.0
    %4985 = vmatpush2.xpose.msra.mxu0 0.0
    %4986 = vmatprep.subr.mxu0 0.0
    %4987 = vmatpush2.xpose.msra.mxu0 0.0
    %4988 = vmatprep.mubr.f32.mxu0 0.0
    %4989 = vmatmul.mubr.f32.gmra.mxu0 %v4916
    %v4990 = vpop.f32.mrf.mxu0
    %v4991 = vadd.f32 0.0, %v4990
    %v4992 = vpop.f32.mrf.mxu0
    %4993 = vdwg.mxu0
    %v4994 = vmul.f32 %v4882, %v4882
    %v4995 = vsel %vm781, %v4994, 0.0
    %4996 = vadd.xlane.f32.xlu0 %v4995
    %v4997 = vpop.xlane.xlu0 %4996
    %v4999 = vsel %vm785, %v4997, 0
    %v5002 = vsel %vm785, %v4911, 0
    %v5005 = vsel %vm785, %v4914, 0
    %5007 = vmatprep.subr.mxu0 0.0
    %5008 = vmatpush1.xpose.msra.mxu0 0.0
    %5009 = vmatprep.subr.mxu0 0.0
    %5010 = vmatpush1.xpose.msra.mxu0 0.0
    %5011 = vmatprep.subr.mxu0 0.0
    %5012 = vmatpush1.xpose.msra.mxu0 0.0
    %5013 = vmatprep.subr.mxu0 0.0
    %5014 = vmatpush1.xpose.msra.mxu0 0.0
    %5015 = vmatprep.subr.mxu0 0.0
    %5016 = vmatpush1.xpose.msra.mxu0 0.0
    %5017 = vmatprep.subr.mxu0 0.0
    %5018 = vmatpush1.xpose.msra.mxu0 0.0
    %5019 = vmatprep.subr.mxu0 0.0
    %5020 = vmatpush1.xpose.msra.mxu0 0.0
    %5021 = vmatprep.subr.mxu0 0.0
    %5022 = vmatpush1.xpose.msra.mxu0 0.0
    %5023 = vmatprep.subr.mxu0 0.0
    %5024 = vmatpush1.xpose.msra.mxu0 0.0
    %5025 = vmatprep.subr.mxu0 0.0
    %5026 = vmatpush1.xpose.msra.mxu0 0.0
    %5027 = vmatprep.subr.mxu0 0.0
    %5028 = vmatpush1.xpose.msra.mxu0 0.0
    %5029 = vmatprep.subr.mxu0 0.0
    %5030 = vmatpush1.xpose.msra.mxu0 0.0
    %5031 = vmatprep.subr.mxu0 0.0
    %5032 = vmatpush1.xpose.msra.mxu0 0.0
    %5033 = vmatprep.subr.mxu0 0.0
    %5034 = vmatpush1.xpose.msra.mxu0 0.0
    %5035 = vmatprep.subr.mxu0 0.0
    %5036 = vmatpush1.xpose.msra.mxu0 %v5005
    %5037 = vmatprep.subr.mxu0 0.0
    %5038 = vmatpush1.xpose.msra.mxu0 %v5002
    %5039 = vmatprep.subr.mxu0 0.0
    %5040 = vmatpush2.xpose.msra.mxu0 0.0
    %5041 = vmatprep.subr.mxu0 0.0
    %5042 = vmatpush2.xpose.msra.mxu0 0.0
    %5043 = vmatprep.subr.mxu0 0.0
    %5044 = vmatpush2.xpose.msra.mxu0 0.0
    %5045 = vmatprep.subr.mxu0 0.0
    %5046 = vmatpush2.xpose.msra.mxu0 0.0
    %5047 = vmatprep.subr.mxu0 0.0
    %5048 = vmatpush2.xpose.msra.mxu0 0.0
    %5049 = vmatprep.subr.mxu0 0.0
    %5050 = vmatpush2.xpose.msra.mxu0 0.0
    %5051 = vmatprep.subr.mxu0 0.0
    %5052 = vmatpush2.xpose.msra.mxu0 0.0
    %5053 = vmatprep.subr.mxu0 0.0
    %5054 = vmatpush2.xpose.msra.mxu0 0.0
    %5055 = vmatprep.subr.mxu0 0.0
    %5056 = vmatpush2.xpose.msra.mxu0 0.0
    %5057 = vmatprep.subr.mxu0 0.0
    %5058 = vmatpush2.xpose.msra.mxu0 0.0
    %5059 = vmatprep.subr.mxu0 0.0
    %5060 = vmatpush2.xpose.msra.mxu0 0.0
    %5061 = vmatprep.subr.mxu0 0.0
    %5062 = vmatpush2.xpose.msra.mxu0 0.0
    %5063 = vmatprep.subr.mxu0 0.0
    %5064 = vmatpush2.xpose.msra.mxu0 0.0
    %5065 = vmatprep.subr.mxu0 0.0
    %5066 = vmatpush2.xpose.msra.mxu0 0.0
    %5067 = vmatprep.subr.mxu0 0.0
    %5068 = vmatpush2.xpose.msra.mxu0 0.0
    %5069 = vmatprep.subr.mxu0 0.0
    %5070 = vmatpush2.xpose.msra.mxu0 0.0
    %5071 = vmatprep.mubr.f32.mxu0 0.0
    %5072 = vmatmul.mubr.f32.gmra.mxu0 %v4999
    %v5073 = vpop.f32.mrf.mxu0
    %v5074 = vadd.f32 0.0, %v5073
    %v5075 = vpop.f32.mrf.mxu0
    %5076 = vdwg.mxu0
    %v5077 = vrsqrt.pop %v5074
    %v5078 = vmul.f32 %v5074, %v5077
    %vm5079 = vcmp.eq.f32.partialorder %v5074, inf
    %v5080 = vsel %vm5079, %v5074, %v5078
    %vm5081 = vcmp.eq.f32.partialorder %v5074, 0.0
    %v5082 = vand.u32 %v5074, 2147483648
    %v5083 = vsel %vm5081, %v5082, %v5080
    %v5084 = vadd.f32 %v5083, 1e-08
    %v5085 = vrcp.pop %v5084
    %v5086 = vmul.f32 %v4991, %v5085
    %5088 = vset.pattern.permute.xlu0 72
    %5089 = vperm.xlu0 %5088, %v4906
    %v5090 = vpop.permute.xlu0 %5089
    %v5092 = vmul.f32 %v5090, %v5086
    %v5093 = vsel %vm881, %v5092, -inf
    %5094 = vmax.xlane.f32.xlu0 %v5093
    %v5095 = vpop.xlane.xlu0 %5094
    %v5096 = vsub.f32 %v5092, %v5095
    %v5097 = vmul.f32 %v5096, 1.442695
    %v5098 = vpow.pop %v5097
    %v5099 = vsel %vm881, %v5098, 0.0
    %5100 = vadd.xlane.f32.xlu0 %v5099
    %v5101 = vpop.xlane.xlu0 %5100
    %v5102 = vrcp.pop %v5101
    %v5103 = vmul.f32 %v5098, %v5102
    %5104 = vrot.lane.b32.xlu0 %v4882, 96
    %v5105 = vpop.permute.xlu0 %5104
    %v5106 = vsel %vm57, %v5105, 0
    %5108 = vmatprep.subr.mxu0 0.0
    %5109 = vmatpush1.xpose.msra.mxu0 0.0
    %5110 = vmatprep.subr.mxu0 0.0
    %5111 = vmatpush1.xpose.msra.mxu0 0.0
    %5112 = vmatprep.subr.mxu0 0.0
    %5113 = vmatpush1.xpose.msra.mxu0 0.0
    %5114 = vmatprep.subr.mxu0 0.0
    %5115 = vmatpush1.xpose.msra.mxu0 0.0
    %5116 = vmatprep.subr.mxu0 0.0
    %5117 = vmatpush1.xpose.msra.mxu0 0.0
    %5118 = vmatprep.subr.mxu0 0.0
    %5119 = vmatpush1.xpose.msra.mxu0 0.0
    %5120 = vmatprep.subr.mxu0 0.0
    %5121 = vmatpush1.xpose.msra.mxu0 0.0
    %5122 = vmatprep.subr.mxu0 0.0
    %5123 = vmatpush1.xpose.msra.mxu0 0.0
    %5124 = vmatprep.subr.mxu0 0.0
    %5125 = vmatpush1.xpose.msra.mxu0 0.0
    %5126 = vmatprep.subr.mxu0 0.0
    %5127 = vmatpush1.xpose.msra.mxu0 0.0
    %5128 = vmatprep.subr.mxu0 0.0
    %5129 = vmatpush1.xpose.msra.mxu0 0.0
    %5130 = vmatprep.subr.mxu0 0.0
    %5131 = vmatpush1.xpose.msra.mxu0 0.0
    %5132 = vmatprep.subr.mxu0 0.0
    %5133 = vmatpush1.xpose.msra.mxu0 0.0
    %5134 = vmatprep.subr.mxu0 0.0
    %5135 = vmatpush1.xpose.msra.mxu0 0.0
    %5136 = vmatprep.subr.mxu0 0.0
    %5137 = vmatpush1.xpose.msra.mxu0 %v4922
    %5138 = vmatprep.subr.mxu0 0.0
    %5139 = vmatpush1.xpose.msra.mxu0 %v4919
    %5140 = vmatprep.subr.mxu0 0.0
    %5141 = vmatpush2.xpose.msra.mxu0 0.0
    %5142 = vmatprep.subr.mxu0 0.0
    %5143 = vmatpush2.xpose.msra.mxu0 0.0
    %5144 = vmatprep.subr.mxu0 0.0
    %5145 = vmatpush2.xpose.msra.mxu0 0.0
    %5146 = vmatprep.subr.mxu0 0.0
    %5147 = vmatpush2.xpose.msra.mxu0 0.0
    %5148 = vmatprep.subr.mxu0 0.0
    %5149 = vmatpush2.xpose.msra.mxu0 0.0
    %5150 = vmatprep.subr.mxu0 0.0
    %5151 = vmatpush2.xpose.msra.mxu0 0.0
    %5152 = vmatprep.subr.mxu0 0.0
    %5153 = vmatpush2.xpose.msra.mxu0 0.0
    %5154 = vmatprep.subr.mxu0 0.0
    %5155 = vmatpush2.xpose.msra.mxu0 0.0
    %5156 = vmatprep.subr.mxu0 0.0
    %5157 = vmatpush2.xpose.msra.mxu0 0.0
    %5158 = vmatprep.subr.mxu0 0.0
    %5159 = vmatpush2.xpose.msra.mxu0 0.0
    %5160 = vmatprep.subr.mxu0 0.0
    %5161 = vmatpush2.xpose.msra.mxu0 0.0
    %5162 = vmatprep.subr.mxu0 0.0
    %5163 = vmatpush2.xpose.msra.mxu0 0.0
    %5164 = vmatprep.subr.mxu0 0.0
    %5165 = vmatpush2.xpose.msra.mxu0 0.0
    %5166 = vmatprep.subr.mxu0 0.0
    %5167 = vmatpush2.xpose.msra.mxu0 0.0
    %5168 = vmatprep.subr.mxu0 0.0
    %5169 = vmatpush2.xpose.msra.mxu0 0.0
    %5170 = vmatprep.subr.mxu0 0.0
    %5171 = vmatpush2.xpose.msra.mxu0 0.0
    %5172 = vmatprep.mubr.f32.mxu0 0.0
    %5173 = vmatmul.mubr.f32.gmra.mxu0 %v5106
    %v5174 = vpop.f32.mrf.mxu0
    %v5175 = vadd.f32 0.0, %v5174
    %v5176 = vpop.f32.mrf.mxu0
    %5177 = vdwg.mxu0
    %5179 = vrot.lane.b32.xlu0 %v4994, 96
    %v5180 = vpop.permute.xlu0 %5179
    %v5182 = vsel %vm781, %v5180, 0.0
    %5183 = vadd.xlane.f32.xlu0 %v5182
    %v5184 = vpop.xlane.xlu0 %5183
    %v5186 = vsel %vm785, %v5184, 0
    %5188 = vmatprep.subr.mxu0 0.0
    %5189 = vmatpush1.xpose.msra.mxu0 0.0
    %5190 = vmatprep.subr.mxu0 0.0
    %5191 = vmatpush1.xpose.msra.mxu0 0.0
    %5192 = vmatprep.subr.mxu0 0.0
    %5193 = vmatpush1.xpose.msra.mxu0 0.0
    %5194 = vmatprep.subr.mxu0 0.0
    %5195 = vmatpush1.xpose.msra.mxu0 0.0
    %5196 = vmatprep.subr.mxu0 0.0
    %5197 = vmatpush1.xpose.msra.mxu0 0.0
    %5198 = vmatprep.subr.mxu0 0.0
    %5199 = vmatpush1.xpose.msra.mxu0 0.0
    %5200 = vmatprep.subr.mxu0 0.0
    %5201 = vmatpush1.xpose.msra.mxu0 0.0
    %5202 = vmatprep.subr.mxu0 0.0
    %5203 = vmatpush1.xpose.msra.mxu0 0.0
    %5204 = vmatprep.subr.mxu0 0.0
    %5205 = vmatpush1.xpose.msra.mxu0 0.0
    %5206 = vmatprep.subr.mxu0 0.0
    %5207 = vmatpush1.xpose.msra.mxu0 0.0
    %5208 = vmatprep.subr.mxu0 0.0
    %5209 = vmatpush1.xpose.msra.mxu0 0.0
    %5210 = vmatprep.subr.mxu0 0.0
    %5211 = vmatpush1.xpose.msra.mxu0 0.0
    %5212 = vmatprep.subr.mxu0 0.0
    %5213 = vmatpush1.xpose.msra.mxu0 0.0
    %5214 = vmatprep.subr.mxu0 0.0
    %5215 = vmatpush1.xpose.msra.mxu0 0.0
    %5216 = vmatprep.subr.mxu0 0.0
    %5217 = vmatpush1.xpose.msra.mxu0 %v5005
    %5218 = vmatprep.subr.mxu0 0.0
    %5219 = vmatpush1.xpose.msra.mxu0 %v5002
    %5220 = vmatprep.subr.mxu0 0.0
    %5221 = vmatpush2.xpose.msra.mxu0 0.0
    %5222 = vmatprep.subr.mxu0 0.0
    %5223 = vmatpush2.xpose.msra.mxu0 0.0
    %5224 = vmatprep.subr.mxu0 0.0
    %5225 = vmatpush2.xpose.msra.mxu0 0.0
    %5226 = vmatprep.subr.mxu0 0.0
    %5227 = vmatpush2.xpose.msra.mxu0 0.0
    %5228 = vmatprep.subr.mxu0 0.0
    %5229 = vmatpush2.xpose.msra.mxu0 0.0
    %5230 = vmatprep.subr.mxu0 0.0
    %5231 = vmatpush2.xpose.msra.mxu0 0.0
    %5232 = vmatprep.subr.mxu0 0.0
    %5233 = vmatpush2.xpose.msra.mxu0 0.0
    %5234 = vmatprep.subr.mxu0 0.0
    %5235 = vmatpush2.xpose.msra.mxu0 0.0
    %5236 = vmatprep.subr.mxu0 0.0
    %5237 = vmatpush2.xpose.msra.mxu0 0.0
    %5238 = vmatprep.subr.mxu0 0.0
    %5239 = vmatpush2.xpose.msra.mxu0 0.0
    %5240 = vmatprep.subr.mxu0 0.0
    %5241 = vmatpush2.xpose.msra.mxu0 0.0
    %5242 = vmatprep.subr.mxu0 0.0
    %5243 = vmatpush2.xpose.msra.mxu0 0.0
    %5244 = vmatprep.subr.mxu0 0.0
    %5245 = vmatpush2.xpose.msra.mxu0 0.0
    %5246 = vmatprep.subr.mxu0 0.0
    %5247 = vmatpush2.xpose.msra.mxu0 0.0
    %5248 = vmatprep.subr.mxu0 0.0
    %5249 = vmatpush2.xpose.msra.mxu0 0.0
    %5250 = vmatprep.subr.mxu0 0.0
    %5251 = vmatpush2.xpose.msra.mxu0 0.0
    %5252 = vmatprep.mubr.f32.mxu0 0.0
    %5253 = vmatmul.mubr.f32.gmra.mxu0 %v5186
    %v5254 = vpop.f32.mrf.mxu0
    %v5255 = vadd.f32 0.0, %v5254
    %v5256 = vpop.f32.mrf.mxu0
    %5257 = vdwg.mxu0
    %v5258 = vrsqrt.pop %v5255
    %v5259 = vmul.f32 %v5255, %v5258
    %vm5260 = vcmp.eq.f32.partialorder %v5255, inf
    %v5261 = vsel %vm5260, %v5255, %v5259
    %vm5262 = vcmp.eq.f32.partialorder %v5255, 0.0
    %v5263 = vand.u32 %v5255, 2147483648
    %v5264 = vsel %vm5262, %v5263, %v5261
    %v5265 = vadd.f32 %v5264, 1e-08
    %v5266 = vrcp.pop %v5265
    %v5267 = vmul.f32 %v5175, %v5266
    %5268 = vset.pattern.permute.xlu0 73
    %5269 = vperm.xlu0 %5268, %v4906
    %v5270 = vpop.permute.xlu0 %5269
    %v5272 = vmul.f32 %v5270, %v5267
    %v5273 = vsel %vm881, %v5272, -inf
    %5274 = vmax.xlane.f32.xlu0 %v5273
    %v5275 = vpop.xlane.xlu0 %5274
    %v5276 = vsub.f32 %v5272, %v5275
    %v5277 = vmul.f32 %v5276, 1.442695
    %v5278 = vpow.pop %v5277
    %v5279 = vsel %vm881, %v5278, 0.0
    %5280 = vadd.xlane.f32.xlu0 %v5279
    %v5281 = vpop.xlane.xlu0 %5280
    %v5282 = vrcp.pop %v5281
    %v5283 = vmul.f32 %v5278, %v5282
    %v5284 = vsel %vm57, %v4556, 0.0
    %v5285 = vsel %vm57, %v4557, 0.0
    %v5286 = vadd.f32 %v5284, %v5285
    %v5287 = vrot.slane %v5286, 4
    %v5288 = vadd.f32 %v5286, %v5287
    %v5289 = vrot.slane %v5288, 2
    %v5290 = vadd.f32 %v5288, %v5289
    %v5291 = vrot.slane %v5290, 1
    %v5292 = vadd.f32 %v5290, %v5291
    %v5293 = vmul.f32 %v5292, %v1082
    %v5294 = vsub.f32 %v4556, %v5293
    %v5295 = vsub.f32 %v4557, %v5293
    %v5296 = vmul.f32 %v5294, %v5294
    %v5297 = vmul.f32 %v5295, %v5295
    %v5298 = vsel %vm57, %v5296, 0.0
    %v5299 = vsel %vm57, %v5297, 0.0
    %v5300 = vadd.f32 %v5298, %v5299
    %v5301 = vrot.slane %v5300, 4
    %v5302 = vadd.f32 %v5300, %v5301
    %v5303 = vrot.slane %v5302, 2
    %v5304 = vadd.f32 %v5302, %v5303
    %v5305 = vrot.slane %v5304, 1
    %v5306 = vadd.f32 %v5304, %v5305
    %v5307 = vmul.f32 %v5306, %v1082
    %v5308 = vadd.f32 %v5307, 1e-05
    %v5309 = vrsqrt.pop %v5308
    %v5310 = vmul.f32 %v5294, %v5309
    %v5311 = vmul.f32 %v5295, %v5309
    %5313 = vrot.lane.b32.xlu0 %v4888, 64
    %v5314 = vpop.permute.xlu0 %5313
    %s5316 = scalar_lea.vmem [#allocation2], 8
    %5317 = vst.msk [vmem:[%s5316] sm:$0x3] %vm1106, %v5314
    %v5318 = vld [vmem:[%s2160] sm:$0x3]
    %v5319 = vld [vmem:[%s5] sm:$0xff]
    %v5320 = vld [vmem:[%s5 + $0x8] sm:$0xff]
    %v5321 = vld [vmem:[%s5 + $0x10] sm:$0xff]
    %v5322 = vld [vmem:[%s5 + $0x18] sm:$0xff]
    %v5323 = vld [vmem:[%s6] sm:$0x1]
    %v5325 = vlaneseq
    %v5326 = vshrl.u32 %v5325, 7
    %v5327 = vsub.s32 0, %v5326
    %v5328 = vrot.slane %v5323, %v5327
    %5330 = vmatprep.subr.mxu0 0.0
    %5331 = vmatpush1.msra.mxu0 0.0
    %5332 = vmatprep.subr.mxu0 0.0
    %5333 = vmatpush1.msra.mxu0 0.0
    %5334 = vmatprep.subr.mxu0 0.0
    %5335 = vmatpush1.msra.mxu0 0.0
    %5336 = vmatprep.subr.mxu0 0.0
    %5337 = vmatpush1.msra.mxu0 0.0
    %5338 = vmatprep.subr.mxu0 0.0
    %5339 = vmatpush1.msra.mxu0 0.0
    %5340 = vmatprep.subr.mxu0 0.0
    %5341 = vmatpush1.msra.mxu0 0.0
    %5342 = vmatprep.subr.mxu0 0.0
    %5343 = vmatpush1.msra.mxu0 0.0
    %5344 = vmatprep.subr.mxu0 0.0
    %5345 = vmatpush1.msra.mxu0 0.0
    %5346 = vmatprep.subr.mxu0 0.0
    %5347 = vmatpush1.msra.mxu0 0.0
    %5348 = vmatprep.subr.mxu0 0.0
    %5349 = vmatpush1.msra.mxu0 0.0
    %5350 = vmatprep.subr.mxu0 0.0
    %5351 = vmatpush1.msra.mxu0 0.0
    %5352 = vmatprep.subr.mxu0 0.0
    %5353 = vmatpush1.msra.mxu0 0.0
    %5354 = vmatprep.subr.mxu0 0.0
    %5355 = vmatpush1.msra.mxu0 %v5322
    %5356 = vmatprep.subr.mxu0 0.0
    %5357 = vmatpush1.msra.mxu0 %v5321
    %5358 = vmatprep.subr.mxu0 0.0
    %5359 = vmatpush1.msra.mxu0 %v5320
    %5360 = vmatprep.subr.mxu0 0.0
    %5361 = vmatpush1.msra.mxu0 %v5319
    %5362 = vmatprep.subr.mxu0 0.0
    %5363 = vmatpush2.msra.mxu0 0.0
    %5364 = vmatprep.subr.mxu0 0.0
    %5365 = vmatpush2.msra.mxu0 0.0
    %5366 = vmatprep.subr.mxu0 0.0
    %5367 = vmatpush2.msra.mxu0 0.0
    %5368 = vmatprep.subr.mxu0 0.0
    %5369 = vmatpush2.msra.mxu0 0.0
    %5370 = vmatprep.subr.mxu0 0.0
    %5371 = vmatpush2.msra.mxu0 0.0
    %5372 = vmatprep.subr.mxu0 0.0
    %5373 = vmatpush2.msra.mxu0 0.0
    %5374 = vmatprep.subr.mxu0 0.0
    %5375 = vmatpush2.msra.mxu0 0.0
    %5376 = vmatprep.subr.mxu0 0.0
    %5377 = vmatpush2.msra.mxu0 0.0
    %5378 = vmatprep.subr.mxu0 0.0
    %5379 = vmatpush2.msra.mxu0 0.0
    %5380 = vmatprep.subr.mxu0 0.0
    %5381 = vmatpush2.msra.mxu0 0.0
    %5382 = vmatprep.subr.mxu0 0.0
    %5383 = vmatpush2.msra.mxu0 0.0
    %5384 = vmatprep.subr.mxu0 0.0
    %5385 = vmatpush2.msra.mxu0 0.0
    %5386 = vmatprep.subr.mxu0 0.0
    %5387 = vmatpush2.msra.mxu0 0.0
    %5388 = vmatprep.subr.mxu0 0.0
    %5389 = vmatpush2.msra.mxu0 0.0
    %5390 = vmatprep.subr.mxu0 0.0
    %5391 = vmatpush2.msra.mxu0 0.0
    %5392 = vmatprep.subr.mxu0 0.0
    %5393 = vmatpush2.msra.mxu0 0.0
    %5394 = vmatprep.mubr.f32.mxu0 0.0
    %5395 = vmatmul.mubr.f32.gmra.mxu0 %v4277
    %v5396 = vpop.f32.mrf.mxu0
    %v5397 = vadd.f32 %v5328, %v5396
    %v5398 = vpop.f32.mrf.mxu0
    %5399 = vdwg.mxu0
    %v5400 = vxor.u32 %v5397, 2147483648
    %v5401 = vmul.f32 %v5400, 1.442695
    %v5402 = vpow.pop %v5401
    %v5403 = vadd.f32 %v5402, 1.0
    %v5404 = vrcp.pop %v5403
    %v5405 = vmul.f32 1.0, %v5404
    %v5406 = vtanh.pop %v5397
    %5407 = vxpose.xlu0.b32.start [1/16] %v5103, 128
    %5408 = vxpose.xlu0.b32.cont [2/16] 0.0, 128
    %5409 = vxpose.xlu0.b32.cont [3/16] 0.0, 128
    %5410 = vxpose.xlu0.b32.cont [4/16] 0.0, 128
    %5411 = vxpose.xlu0.b32.cont [5/16] 0.0, 128
    %5412 = vxpose.xlu0.b32.cont [6/16] 0.0, 128
    %5413 = vxpose.xlu0.b32.cont [7/16] 0.0, 128
    %5414 = vxpose.xlu0.b32.cont [8/16] 0.0, 128
    %5415 = vxpose.xlu0.b32.cont [9/16] 0.0, 128
    %5416 = vxpose.xlu0.b32.cont [10/16] 0.0, 128
    %5417 = vxpose.xlu0.b32.cont [11/16] 0.0, 128
    %5418 = vxpose.xlu0.b32.cont [12/16] 0.0, 128
    %5419 = vxpose.xlu0.b32.cont [13/16] 0.0, 128
    %5420 = vxpose.xlu0.b32.cont [14/16] 0.0, 128
    %5421 = vxpose.xlu0.b32.cont [15/16] 0.0, 128
    %5422 = vxpose.xlu0.b32.end [16/16] 0.0, 128
    %v5423 = vpop.trf.xlu0
    %v5424 = vpop.trf.xlu0
    %v5425 = vpop.trf.xlu0
    %v5426 = vpop.trf.xlu0
    %v5427 = vpop.trf.xlu0
    %v5428 = vpop.trf.xlu0
    %v5429 = vpop.trf.xlu0
    %v5430 = vpop.trf.xlu0
    %v5431 = vpop.trf.xlu0
    %v5432 = vpop.trf.xlu0
    %v5433 = vpop.trf.xlu0
    %v5434 = vpop.trf.xlu0
    %v5435 = vpop.trf.xlu0
    %v5436 = vpop.trf.xlu0
    %v5437 = vpop.trf.xlu0
    %v5438 = vpop.trf.xlu0
    %v5440 = vsel %vm170, %v5423, 0
    %v5443 = vsel %vm170, %v5424, 0
    %v5446 = vsel %vm177, %v5405, 0
    %5448 = vmatprep.subr.mxu0 0.0
    %5449 = vmatpush1.msra.mxu0 0.0
    %5450 = vmatprep.subr.mxu0 0.0
    %5451 = vmatpush1.msra.mxu0 0.0
    %5452 = vmatprep.subr.mxu0 0.0
    %5453 = vmatpush1.msra.mxu0 0.0
    %5454 = vmatprep.subr.mxu0 0.0
    %5455 = vmatpush1.msra.mxu0 0.0
    %5456 = vmatprep.subr.mxu0 0.0
    %5457 = vmatpush1.msra.mxu0 0.0
    %5458 = vmatprep.subr.mxu0 0.0
    %5459 = vmatpush1.msra.mxu0 0.0
    %5460 = vmatprep.subr.mxu0 0.0
    %5461 = vmatpush1.msra.mxu0 0.0
    %5462 = vmatprep.subr.mxu0 0.0
    %5463 = vmatpush1.msra.mxu0 0.0
    %5464 = vmatprep.subr.mxu0 0.0
    %5465 = vmatpush1.msra.mxu0 0.0
    %5466 = vmatprep.subr.mxu0 0.0
    %5467 = vmatpush1.msra.mxu0 0.0
    %5468 = vmatprep.subr.mxu0 0.0
    %5469 = vmatpush1.msra.mxu0 0.0
    %5470 = vmatprep.subr.mxu0 0.0
    %5471 = vmatpush1.msra.mxu0 0.0
    %5472 = vmatprep.subr.mxu0 0.0
    %5473 = vmatpush1.msra.mxu0 0.0
    %5474 = vmatprep.subr.mxu0 0.0
    %5475 = vmatpush1.msra.mxu0 0.0
    %5476 = vmatprep.subr.mxu0 0.0
    %5477 = vmatpush1.msra.mxu0 0.0
    %5478 = vmatprep.subr.mxu0 0.0
    %5479 = vmatpush1.msra.mxu0 %v5446
    %5480 = vmatprep.subr.mxu0 0.0
    %5481 = vmatpush2.msra.mxu0 0.0
    %5482 = vmatprep.subr.mxu0 0.0
    %5483 = vmatpush2.msra.mxu0 0.0
    %5484 = vmatprep.subr.mxu0 0.0
    %5485 = vmatpush2.msra.mxu0 0.0
    %5486 = vmatprep.subr.mxu0 0.0
    %5487 = vmatpush2.msra.mxu0 0.0
    %5488 = vmatprep.subr.mxu0 0.0
    %5489 = vmatpush2.msra.mxu0 0.0
    %5490 = vmatprep.subr.mxu0 0.0
    %5491 = vmatpush2.msra.mxu0 0.0
    %5492 = vmatprep.subr.mxu0 0.0
    %5493 = vmatpush2.msra.mxu0 0.0
    %5494 = vmatprep.subr.mxu0 0.0
    %5495 = vmatpush2.msra.mxu0 0.0
    %5496 = vmatprep.subr.mxu0 0.0
    %5497 = vmatpush2.msra.mxu0 0.0
    %5498 = vmatprep.subr.mxu0 0.0
    %5499 = vmatpush2.msra.mxu0 0.0
    %5500 = vmatprep.subr.mxu0 0.0
    %5501 = vmatpush2.msra.mxu0 0.0
    %5502 = vmatprep.subr.mxu0 0.0
    %5503 = vmatpush2.msra.mxu0 0.0
    %5504 = vmatprep.subr.mxu0 0.0
    %5505 = vmatpush2.msra.mxu0 0.0
    %5506 = vmatprep.subr.mxu0 0.0
    %5507 = vmatpush2.msra.mxu0 0.0
    %5508 = vmatprep.subr.mxu0 0.0
    %5509 = vmatpush2.msra.mxu0 0.0
    %5510 = vmatprep.subr.mxu0 0.0
    %5511 = vmatpush2.msra.mxu0 0.0
    %5512 = vmatprep.mubr.f32.mxu0 0.0
    %5513 = vmatmul.mubr.f32.gmra.mxu0 %v5440
    %v5514 = vpop.f32.mrf.mxu0
    %v5515 = vadd.f32 0.0, %v5514
    %v5516 = vpop.f32.mrf.mxu0
    %5517 = vmatprep.mubr.f32.mxu0 0.0
    %5518 = vmatmul.mubr.f32.gmra.mxu0 %v5443
    %v5519 = vpop.f32.mrf.mxu0
    %v5520 = vadd.f32 0.0, %v5519
    %v5521 = vpop.f32.mrf.mxu0
    %5522 = vdwg.mxu0
    %5524 = vrot.lane.b32.xlu0 %v5406, 96
    %v5525 = vpop.permute.xlu0 %5524
    %v5526 = vsel %vm177, %v5525, 0
    %5528 = vmatprep.subr.mxu0 0.0
    %5529 = vmatpush1.msra.mxu0 0.0
    %5530 = vmatprep.subr.mxu0 0.0
    %5531 = vmatpush1.msra.mxu0 0.0
    %5532 = vmatprep.subr.mxu0 0.0
    %5533 = vmatpush1.msra.mxu0 0.0
    %5534 = vmatprep.subr.mxu0 0.0
    %5535 = vmatpush1.msra.mxu0 0.0
    %5536 = vmatprep.subr.mxu0 0.0
    %5537 = vmatpush1.msra.mxu0 0.0
    %5538 = vmatprep.subr.mxu0 0.0
    %5539 = vmatpush1.msra.mxu0 0.0
    %5540 = vmatprep.subr.mxu0 0.0
    %5541 = vmatpush1.msra.mxu0 0.0
    %5542 = vmatprep.subr.mxu0 0.0
    %5543 = vmatpush1.msra.mxu0 0.0
    %5544 = vmatprep.subr.mxu0 0.0
    %5545 = vmatpush1.msra.mxu0 0.0
    %5546 = vmatprep.subr.mxu0 0.0
    %5547 = vmatpush1.msra.mxu0 0.0
    %5548 = vmatprep.subr.mxu0 0.0
    %5549 = vmatpush1.msra.mxu0 0.0
    %5550 = vmatprep.subr.mxu0 0.0
    %5551 = vmatpush1.msra.mxu0 0.0
    %5552 = vmatprep.subr.mxu0 0.0
    %5553 = vmatpush1.msra.mxu0 0.0
    %5554 = vmatprep.subr.mxu0 0.0
    %5555 = vmatpush1.msra.mxu0 0.0
    %5556 = vmatprep.subr.mxu0 0.0
    %5557 = vmatpush1.msra.mxu0 0.0
    %5558 = vmatprep.subr.mxu0 0.0
    %5559 = vmatpush1.msra.mxu0 %v5526
    %5560 = vmatprep.subr.mxu0 0.0
    %5561 = vmatpush2.msra.mxu0 0.0
    %5562 = vmatprep.subr.mxu0 0.0
    %5563 = vmatpush2.msra.mxu0 0.0
    %5564 = vmatprep.subr.mxu0 0.0
    %5565 = vmatpush2.msra.mxu0 0.0
    %5566 = vmatprep.subr.mxu0 0.0
    %5567 = vmatpush2.msra.mxu0 0.0
    %5568 = vmatprep.subr.mxu0 0.0
    %5569 = vmatpush2.msra.mxu0 0.0
    %5570 = vmatprep.subr.mxu0 0.0
    %5571 = vmatpush2.msra.mxu0 0.0
    %5572 = vmatprep.subr.mxu0 0.0
    %5573 = vmatpush2.msra.mxu0 0.0
    %5574 = vmatprep.subr.mxu0 0.0
    %5575 = vmatpush2.msra.mxu0 0.0
    %5576 = vmatprep.subr.mxu0 0.0
    %5577 = vmatpush2.msra.mxu0 0.0
    %5578 = vmatprep.subr.mxu0 0.0
    %5579 = vmatpush2.msra.mxu0 0.0
    %5580 = vmatprep.subr.mxu0 0.0
    %5581 = vmatpush2.msra.mxu0 0.0
    %5582 = vmatprep.subr.mxu0 0.0
    %5583 = vmatpush2.msra.mxu0 0.0
    %5584 = vmatprep.subr.mxu0 0.0
    %5585 = vmatpush2.msra.mxu0 0.0
    %5586 = vmatprep.subr.mxu0 0.0
    %5587 = vmatpush2.msra.mxu0 0.0
    %5588 = vmatprep.subr.mxu0 0.0
    %5589 = vmatpush2.msra.mxu0 0.0
    %5590 = vmatprep.subr.mxu0 0.0
    %5591 = vmatpush2.msra.mxu0 0.0
    %5592 = vmatprep.mubr.f32.mxu0 0.0
    %5593 = vmatmul.mubr.f32.gmra.mxu0 %v5440
    %v5594 = vpop.f32.mrf.mxu0
    %v5595 = vadd.f32 0.0, %v5594
    %v5596 = vpop.f32.mrf.mxu0
    %5597 = vmatprep.mubr.f32.mxu0 0.0
    %5598 = vmatmul.mubr.f32.gmra.mxu0 %v5443
    %v5599 = vpop.f32.mrf.mxu0
    %v5600 = vadd.f32 0.0, %v5599
    %v5601 = vpop.f32.mrf.mxu0
    %5602 = vdwg.mxu0
    %v5603 = vsub.f32 1.0, %v5515
    %v5604 = vsub.f32 1.0, %v5520
    %v5605 = vmul.f32 %v5310, %v5603
    %v5606 = vmul.f32 %v5311, %v5604
    %v5607 = vadd.f32 %v5605, %v5595
    %v5608 = vadd.f32 %v5606, %v5600
    %v5610 = vsel %vm342, %v5283, 0
    %5612 = vmatprep.subr.mxu0 0.0
    %5613 = vmatpush1.msra.mxu0 0.0
    %5614 = vmatprep.subr.mxu0 0.0
    %5615 = vmatpush1.msra.mxu0 0.0
    %5616 = vmatprep.subr.mxu0 0.0
    %5617 = vmatpush1.msra.mxu0 0.0
    %5618 = vmatprep.subr.mxu0 0.0
    %5619 = vmatpush1.msra.mxu0 0.0
    %5620 = vmatprep.subr.mxu0 0.0
    %5621 = vmatpush1.msra.mxu0 0.0
    %5622 = vmatprep.subr.mxu0 0.0
    %5623 = vmatpush1.msra.mxu0 0.0
    %5624 = vmatprep.subr.mxu0 0.0
    %5625 = vmatpush1.msra.mxu0 0.0
    %5626 = vmatprep.subr.mxu0 0.0
    %5627 = vmatpush1.msra.mxu0 0.0
    %5628 = vmatprep.subr.mxu0 0.0
    %5629 = vmatpush1.msra.mxu0 0.0
    %5630 = vmatprep.subr.mxu0 0.0
    %5631 = vmatpush1.msra.mxu0 0.0
    %5632 = vmatprep.subr.mxu0 0.0
    %5633 = vmatpush1.msra.mxu0 0.0
    %5634 = vmatprep.subr.mxu0 0.0
    %5635 = vmatpush1.msra.mxu0 0.0
    %5636 = vmatprep.subr.mxu0 0.0
    %5637 = vmatpush1.msra.mxu0 0.0
    %5638 = vmatprep.subr.mxu0 0.0
    %5639 = vmatpush1.msra.mxu0 0.0
    %5640 = vmatprep.subr.mxu0 0.0
    %5641 = vmatpush1.msra.mxu0 %v5608
    %5642 = vmatprep.subr.mxu0 0.0
    %5643 = vmatpush1.msra.mxu0 %v5607
    %5644 = vmatprep.subr.mxu0 0.0
    %5645 = vmatpush2.msra.mxu0 0.0
    %5646 = vmatprep.subr.mxu0 0.0
    %5647 = vmatpush2.msra.mxu0 0.0
    %5648 = vmatprep.subr.mxu0 0.0
    %5649 = vmatpush2.msra.mxu0 0.0
    %5650 = vmatprep.subr.mxu0 0.0
    %5651 = vmatpush2.msra.mxu0 0.0
    %5652 = vmatprep.subr.mxu0 0.0
    %5653 = vmatpush2.msra.mxu0 0.0
    %5654 = vmatprep.subr.mxu0 0.0
    %5655 = vmatpush2.msra.mxu0 0.0
    %5656 = vmatprep.subr.mxu0 0.0
    %5657 = vmatpush2.msra.mxu0 0.0
    %5658 = vmatprep.subr.mxu0 0.0
    %5659 = vmatpush2.msra.mxu0 0.0
    %5660 = vmatprep.subr.mxu0 0.0
    %5661 = vmatpush2.msra.mxu0 0.0
    %5662 = vmatprep.subr.mxu0 0.0
    %5663 = vmatpush2.msra.mxu0 0.0
    %5664 = vmatprep.subr.mxu0 0.0
    %5665 = vmatpush2.msra.mxu0 0.0
    %5666 = vmatprep.subr.mxu0 0.0
    %5667 = vmatpush2.msra.mxu0 0.0
    %5668 = vmatprep.subr.mxu0 0.0
    %5669 = vmatpush2.msra.mxu0 0.0
    %5670 = vmatprep.subr.mxu0 0.0
    %5671 = vmatpush2.msra.mxu0 0.0
    %5672 = vmatprep.subr.mxu0 0.0
    %5673 = vmatpush2.msra.mxu0 0.0
    %5674 = vmatprep.subr.mxu0 0.0
    %5675 = vmatpush2.msra.mxu0 0.0
    %5676 = vmatprep.mubr.f32.mxu0 0.0
    %5677 = vmatmul.mubr.f32.gmra.mxu0 %v5610
    %v5678 = vpop.f32.mrf.mxu0
    %v5679 = vadd.f32 0.0, %v5678
    %v5680 = vpop.f32.mrf.mxu0
    %5681 = vdwg.mxu0
    %v5682 = vld [vmem:[%s3] sm:$0xff]
    %v5683 = vld [vmem:[%s3 + $0x8] sm:$0xff]
    %v5684 = vld [vmem:[%s3 + $0x10] sm:$0xff]
    %v5685 = vld [vmem:[%s3 + $0x18] sm:$0xff]
    %v5686 = vld [vmem:[%s3 + $0x20] sm:$0xff]
    %v5687 = vld [vmem:[%s3 + $0x28] sm:$0xff]
    %v5688 = vld [vmem:[%s3 + $0x30] sm:$0xff]
    %v5689 = vld [vmem:[%s3 + $0x38] sm:$0xff]
    %v5690 = vld [vmem:[%s3 + $0x40] sm:$0xff]
    %v5691 = vld [vmem:[%s3 + $0x48] sm:$0xff]
    %v5692 = vld [vmem:[%s3 + $0x50] sm:$0xff]
    %v5693 = vld [vmem:[%s3 + $0x58] sm:$0xff]
    %v5695 = vsel %vm57, %v5679, 0
    %5697 = vmatprep.subr.mxu0 0.0
    %5698 = vmatpush1.msra.mxu0 0.0
    %5699 = vmatprep.subr.mxu0 0.0
    %5700 = vmatpush1.msra.mxu0 0.0
    %5701 = vmatprep.subr.mxu0 0.0
    %5702 = vmatpush1.msra.mxu0 0.0
    %5703 = vmatprep.subr.mxu0 0.0
    %5704 = vmatpush1.msra.mxu0 0.0
    %5705 = vmatprep.subr.mxu0 0.0
    %5706 = vmatpush1.msra.mxu0 0.0
    %5707 = vmatprep.subr.mxu0 0.0
    %5708 = vmatpush1.msra.mxu0 0.0
    %5709 = vmatprep.subr.mxu0 0.0
    %5710 = vmatpush1.msra.mxu0 0.0
    %5711 = vmatprep.subr.mxu0 0.0
    %5712 = vmatpush1.msra.mxu0 0.0
    %5713 = vmatprep.subr.mxu0 0.0
    %5714 = vmatpush1.msra.mxu0 0.0
    %5715 = vmatprep.subr.mxu0 0.0
    %5716 = vmatpush1.msra.mxu0 0.0
    %5717 = vmatprep.subr.mxu0 0.0
    %5718 = vmatpush1.msra.mxu0 0.0
    %5719 = vmatprep.subr.mxu0 0.0
    %5720 = vmatpush1.msra.mxu0 0.0
    %5721 = vmatprep.subr.mxu0 0.0
    %5722 = vmatpush1.msra.mxu0 %v5693
    %5723 = vmatprep.subr.mxu0 0.0
    %5724 = vmatpush1.msra.mxu0 %v5692
    %5725 = vmatprep.subr.mxu0 0.0
    %5726 = vmatpush1.msra.mxu0 %v5691
    %5727 = vmatprep.subr.mxu0 0.0
    %5728 = vmatpush1.msra.mxu0 %v5690
    %5729 = vmatprep.subr.mxu0 0.0
    %5730 = vmatpush2.msra.mxu0 0.0
    %5731 = vmatprep.subr.mxu0 0.0
    %5732 = vmatpush2.msra.mxu0 0.0
    %5733 = vmatprep.subr.mxu0 0.0
    %5734 = vmatpush2.msra.mxu0 0.0
    %5735 = vmatprep.subr.mxu0 0.0
    %5736 = vmatpush2.msra.mxu0 0.0
    %5737 = vmatprep.subr.mxu0 0.0
    %5738 = vmatpush2.msra.mxu0 0.0
    %5739 = vmatprep.subr.mxu0 0.0
    %5740 = vmatpush2.msra.mxu0 0.0
    %5741 = vmatprep.subr.mxu0 0.0
    %5742 = vmatpush2.msra.mxu0 0.0
    %5743 = vmatprep.subr.mxu0 0.0
    %5744 = vmatpush2.msra.mxu0 0.0
    %5745 = vmatprep.subr.mxu0 0.0
    %5746 = vmatpush2.msra.mxu0 0.0
    %5747 = vmatprep.subr.mxu0 0.0
    %5748 = vmatpush2.msra.mxu0 0.0
    %5749 = vmatprep.subr.mxu0 0.0
    %5750 = vmatpush2.msra.mxu0 0.0
    %5751 = vmatprep.subr.mxu0 0.0
    %5752 = vmatpush2.msra.mxu0 0.0
    %5753 = vmatprep.subr.mxu0 0.0
    %5754 = vmatpush2.msra.mxu0 0.0
    %5755 = vmatprep.subr.mxu0 0.0
    %5756 = vmatpush2.msra.mxu0 0.0
    %5757 = vmatprep.subr.mxu0 0.0
    %5758 = vmatpush2.msra.mxu0 0.0
    %5759 = vmatprep.subr.mxu0 0.0
    %5760 = vmatpush2.msra.mxu0 0.0
    %5761 = vmatprep.mubr.f32.mxu0 0.0
    %5762 = vmatmul.mubr.f32.gmra.mxu0 %v5695
    %v5763 = vpop.f32.mrf.mxu0
    %v5764 = vadd.f32 0.0, %v5763
    %v5765 = vpop.f32.mrf.mxu0
    %5766 = vdwg.mxu0
    %v5768 = vsel %vm501, %v5318, 0
    %5770 = vmatprep.subr.mxu0 0.0
    %5771 = vmatpush1.msra.mxu0 0.0
    %5772 = vmatprep.subr.mxu0 0.0
    %5773 = vmatpush1.msra.mxu0 0.0
    %5774 = vmatprep.subr.mxu0 0.0
    %5775 = vmatpush1.msra.mxu0 0.0
    %5776 = vmatprep.subr.mxu0 0.0
    %5777 = vmatpush1.msra.mxu0 0.0
    %5778 = vmatprep.subr.mxu0 0.0
    %5779 = vmatpush1.msra.mxu0 0.0
    %5780 = vmatprep.subr.mxu0 0.0
    %5781 = vmatpush1.msra.mxu0 0.0
    %5782 = vmatprep.subr.mxu0 0.0
    %5783 = vmatpush1.msra.mxu0 0.0
    %5784 = vmatprep.subr.mxu0 0.0
    %5785 = vmatpush1.msra.mxu0 0.0
    %5786 = vmatprep.subr.mxu0 0.0
    %5787 = vmatpush1.msra.mxu0 %v5689
    %5788 = vmatprep.subr.mxu0 0.0
    %5789 = vmatpush1.msra.mxu0 %v5688
    %5790 = vmatprep.subr.mxu0 0.0
    %5791 = vmatpush1.msra.mxu0 %v5687
    %5792 = vmatprep.subr.mxu0 0.0
    %5793 = vmatpush1.msra.mxu0 %v5686
    %5794 = vmatprep.subr.mxu0 0.0
    %5795 = vmatpush1.msra.mxu0 %v5685
    %5796 = vmatprep.subr.mxu0 0.0
    %5797 = vmatpush1.msra.mxu0 %v5684
    %5798 = vmatprep.subr.mxu0 0.0
    %5799 = vmatpush1.msra.mxu0 %v5683
    %5800 = vmatprep.subr.mxu0 0.0
    %5801 = vmatpush1.msra.mxu0 %v5682
    %5802 = vmatprep.subr.mxu0 0.0
    %5803 = vmatpush2.msra.mxu0 0.0
    %5804 = vmatprep.subr.mxu0 0.0
    %5805 = vmatpush2.msra.mxu0 0.0
    %5806 = vmatprep.subr.mxu0 0.0
    %5807 = vmatpush2.msra.mxu0 0.0
    %5808 = vmatprep.subr.mxu0 0.0
    %5809 = vmatpush2.msra.mxu0 0.0
    %5810 = vmatprep.subr.mxu0 0.0
    %5811 = vmatpush2.msra.mxu0 0.0
    %5812 = vmatprep.subr.mxu0 0.0
    %5813 = vmatpush2.msra.mxu0 0.0
    %5814 = vmatprep.subr.mxu0 0.0
    %5815 = vmatpush2.msra.mxu0 0.0
    %5816 = vmatprep.subr.mxu0 0.0
    %5817 = vmatpush2.msra.mxu0 0.0
    %5818 = vmatprep.subr.mxu0 0.0
    %5819 = vmatpush2.msra.mxu0 0.0
    %5820 = vmatprep.subr.mxu0 0.0
    %5821 = vmatpush2.msra.mxu0 0.0
    %5822 = vmatprep.subr.mxu0 0.0
    %5823 = vmatpush2.msra.mxu0 0.0
    %5824 = vmatprep.subr.mxu0 0.0
    %5825 = vmatpush2.msra.mxu0 0.0
    %5826 = vmatprep.subr.mxu0 0.0
    %5827 = vmatpush2.msra.mxu0 0.0
    %5828 = vmatprep.subr.mxu0 0.0
    %5829 = vmatpush2.msra.mxu0 0.0
    %5830 = vmatprep.subr.mxu0 0.0
    %5831 = vmatpush2.msra.mxu0 0.0
    %5832 = vmatprep.subr.mxu0 0.0
    %5833 = vmatpush2.msra.mxu0 0.0
    %5834 = vmatprep.mubr.f32.mxu0 0.0
    %5835 = vmatmul.mubr.f32.gmra.mxu0 %v5768
    %v5836 = vpop.f32.mrf.mxu0
    %v5837 = vadd.f32 %v5764, %v5836
    %v5838 = vpop.f32.mrf.mxu0
    %5839 = vdwg.mxu0
    %v5840 = vld [vmem:[%s4] sm:$0x1]
    %v5842 = vlaneseq
    %v5843 = vshrl.u32 %v5842, 7
    %v5844 = vsub.s32 0, %v5843
    %v5845 = vrot.slane %v5840, %v5844
    %v5847 = vadd.f32 %v5837, %v5845
    %v5848 = vmax.f32 %v5847, 0.0
    %v5849 = vld [vmem:[%s7] sm:$0xff]
    %v5850 = vld [vmem:[%s7 + $0x8] sm:$0xff]
    %v5851 = vld [vmem:[%s7 + $0x10] sm:$0xff]
    %v5852 = vld [vmem:[%s7 + $0x18] sm:$0xff]
    %v5853 = vld [vmem:[%s8] sm:$0x1]
    %v5855 = vlaneseq
    %v5856 = vshrl.u32 %v5855, 7
    %v5857 = vsub.s32 0, %v5856
    %v5858 = vrot.slane %v5853, %v5857
    %v5861 = vsel %vm57, %v5848, 0
    %5863 = vmatprep.subr.mxu0 0.0
    %5864 = vmatpush1.msra.mxu0 0.0
    %5865 = vmatprep.subr.mxu0 0.0
    %5866 = vmatpush1.msra.mxu0 0.0
    %5867 = vmatprep.subr.mxu0 0.0
    %5868 = vmatpush1.msra.mxu0 0.0
    %5869 = vmatprep.subr.mxu0 0.0
    %5870 = vmatpush1.msra.mxu0 0.0
    %5871 = vmatprep.subr.mxu0 0.0
    %5872 = vmatpush1.msra.mxu0 0.0
    %5873 = vmatprep.subr.mxu0 0.0
    %5874 = vmatpush1.msra.mxu0 0.0
    %5875 = vmatprep.subr.mxu0 0.0
    %5876 = vmatpush1.msra.mxu0 0.0
    %5877 = vmatprep.subr.mxu0 0.0
    %5878 = vmatpush1.msra.mxu0 0.0
    %5879 = vmatprep.subr.mxu0 0.0
    %5880 = vmatpush1.msra.mxu0 0.0
    %5881 = vmatprep.subr.mxu0 0.0
    %5882 = vmatpush1.msra.mxu0 0.0
    %5883 = vmatprep.subr.mxu0 0.0
    %5884 = vmatpush1.msra.mxu0 0.0
    %5885 = vmatprep.subr.mxu0 0.0
    %5886 = vmatpush1.msra.mxu0 0.0
    %5887 = vmatprep.subr.mxu0 0.0
    %5888 = vmatpush1.msra.mxu0 %v5852
    %5889 = vmatprep.subr.mxu0 0.0
    %5890 = vmatpush1.msra.mxu0 %v5851
    %5891 = vmatprep.subr.mxu0 0.0
    %5892 = vmatpush1.msra.mxu0 %v5850
    %5893 = vmatprep.subr.mxu0 0.0
    %5894 = vmatpush1.msra.mxu0 %v5849
    %5895 = vmatprep.subr.mxu0 0.0
    %5896 = vmatpush2.msra.mxu0 0.0
    %5897 = vmatprep.subr.mxu0 0.0
    %5898 = vmatpush2.msra.mxu0 0.0
    %5899 = vmatprep.subr.mxu0 0.0
    %5900 = vmatpush2.msra.mxu0 0.0
    %5901 = vmatprep.subr.mxu0 0.0
    %5902 = vmatpush2.msra.mxu0 0.0
    %5903 = vmatprep.subr.mxu0 0.0
    %5904 = vmatpush2.msra.mxu0 0.0
    %5905 = vmatprep.subr.mxu0 0.0
    %5906 = vmatpush2.msra.mxu0 0.0
    %5907 = vmatprep.subr.mxu0 0.0
    %5908 = vmatpush2.msra.mxu0 0.0
    %5909 = vmatprep.subr.mxu0 0.0
    %5910 = vmatpush2.msra.mxu0 0.0
    %5911 = vmatprep.subr.mxu0 0.0
    %5912 = vmatpush2.msra.mxu0 0.0
    %5913 = vmatprep.subr.mxu0 0.0
    %5914 = vmatpush2.msra.mxu0 0.0
    %5915 = vmatprep.subr.mxu0 0.0
    %5916 = vmatpush2.msra.mxu0 0.0
    %5917 = vmatprep.subr.mxu0 0.0
    %5918 = vmatpush2.msra.mxu0 0.0
    %5919 = vmatprep.subr.mxu0 0.0
    %5920 = vmatpush2.msra.mxu0 0.0
    %5921 = vmatprep.subr.mxu0 0.0
    %5922 = vmatpush2.msra.mxu0 0.0
    %5923 = vmatprep.subr.mxu0 0.0
    %5924 = vmatpush2.msra.mxu0 0.0
    %5925 = vmatprep.subr.mxu0 0.0
    %5926 = vmatpush2.msra.mxu0 0.0
    %5927 = vmatprep.mubr.f32.mxu0 0.0
    %5928 = vmatmul.mubr.f32.gmra.mxu0 %v5861
    %v5929 = vpop.f32.mrf.mxu0
    %v5930 = vadd.f32 %v5858, %v5929
    %v5931 = vpop.f32.mrf.mxu0
    %5932 = vdwg.mxu0
    %v5933 = vtanh.pop %v5930
    %v5934 = vxor.u32 %v5930, 2147483648
    %v5935 = vmul.f32 %v5934, 1.442695
    %v5936 = vpow.pop %v5935
    %v5937 = vadd.f32 %v5936, 1.0
    %v5938 = vrcp.pop %v5937
    %v5939 = vmul.f32 1.0, %v5938
    %v5940 = vmax.f32 %v5930, 0.0
    %vm5941 = vcmp.ne.f32.partialorder %v5930, %v5930
    %v5942 = vadd.f32 %v5930, 0.0
    %v5943 = vand.u32 2147483647, %v5930
    %v5944 = vsub.f32 0.0, %v5943
    %v5945 = vmul.f32 %v5944, 1.442695
    %v5946 = vpow.pop %v5945
    %v5947 = vadd.f32 %v5946, 1.0
    %v5948 = vlog2.pop %v5947
    %v5949 = vmul.f32 %v5948, 0.6931472
    %v5950 = vmul.f32 -0.5, %v5946
    %v5951 = vadd.f32 %v5950, 1.0
    %v5952 = vmul.f32 %v5951, %v5946
    %v5953 = vand.u32 2147483647, %v5946
    %vm5954 = vcmp.lt.f32.partialorder %v5953, 0.0004427343
    %v5955 = vsel %vm5954, %v5952, %v5949
    %v5956 = vadd.f32 %v5940, %v5955
    %v5957 = vsel %vm5941, %v5942, %v5956
    %v5958 = vmul.f32 %v5607, %v5607
    %v5959 = vmul.f32 %v5608, %v5608
    %v5960 = vsel %vm57, %v5958, 0.0
    %5961 = vadd.xlane.f32.xlu0 %v5960
    %v5962 = vpop.xlane.xlu0 %5961
    %v5963 = vsel %vm57, %v5959, 0.0
    %5964 = vadd.xlane.f32.xlu0 %v5963
    %v5965 = vpop.xlane.xlu0 %5964
    %v5967 = vsel %vm57, %v5933, 0
    %v5970 = vsel %vm57, %v5607, 0
    %v5973 = vsel %vm57, %v5608, 0
    %5975 = vmatprep.subr.mxu0 0.0
    %5976 = vmatpush1.xpose.msra.mxu0 0.0
    %5977 = vmatprep.subr.mxu0 0.0
    %5978 = vmatpush1.xpose.msra.mxu0 0.0
    %5979 = vmatprep.subr.mxu0 0.0
    %5980 = vmatpush1.xpose.msra.mxu0 0.0
    %5981 = vmatprep.subr.mxu0 0.0
    %5982 = vmatpush1.xpose.msra.mxu0 0.0
    %5983 = vmatprep.subr.mxu0 0.0
    %5984 = vmatpush1.xpose.msra.mxu0 0.0
    %5985 = vmatprep.subr.mxu0 0.0
    %5986 = vmatpush1.xpose.msra.mxu0 0.0
    %5987 = vmatprep.subr.mxu0 0.0
    %5988 = vmatpush1.xpose.msra.mxu0 0.0
    %5989 = vmatprep.subr.mxu0 0.0
    %5990 = vmatpush1.xpose.msra.mxu0 0.0
    %5991 = vmatprep.subr.mxu0 0.0
    %5992 = vmatpush1.xpose.msra.mxu0 0.0
    %5993 = vmatprep.subr.mxu0 0.0
    %5994 = vmatpush1.xpose.msra.mxu0 0.0
    %5995 = vmatprep.subr.mxu0 0.0
    %5996 = vmatpush1.xpose.msra.mxu0 0.0
    %5997 = vmatprep.subr.mxu0 0.0
    %5998 = vmatpush1.xpose.msra.mxu0 0.0
    %5999 = vmatprep.subr.mxu0 0.0
    %6000 = vmatpush1.xpose.msra.mxu0 0.0
    %6001 = vmatprep.subr.mxu0 0.0
    %6002 = vmatpush1.xpose.msra.mxu0 0.0
    %6003 = vmatprep.subr.mxu0 0.0
    %6004 = vmatpush1.xpose.msra.mxu0 %v5973
    %6005 = vmatprep.subr.mxu0 0.0
    %6006 = vmatpush1.xpose.msra.mxu0 %v5970
    %6007 = vmatprep.subr.mxu0 0.0
    %6008 = vmatpush2.xpose.msra.mxu0 0.0
    %6009 = vmatprep.subr.mxu0 0.0
    %6010 = vmatpush2.xpose.msra.mxu0 0.0
    %6011 = vmatprep.subr.mxu0 0.0
    %6012 = vmatpush2.xpose.msra.mxu0 0.0
    %6013 = vmatprep.subr.mxu0 0.0
    %6014 = vmatpush2.xpose.msra.mxu0 0.0
    %6015 = vmatprep.subr.mxu0 0.0
    %6016 = vmatpush2.xpose.msra.mxu0 0.0
    %6017 = vmatprep.subr.mxu0 0.0
    %6018 = vmatpush2.xpose.msra.mxu0 0.0
    %6019 = vmatprep.subr.mxu0 0.0
    %6020 = vmatpush2.xpose.msra.mxu0 0.0
    %6021 = vmatprep.subr.mxu0 0.0
    %6022 = vmatpush2.xpose.msra.mxu0 0.0
    %6023 = vmatprep.subr.mxu0 0.0
    %6024 = vmatpush2.xpose.msra.mxu0 0.0
    %6025 = vmatprep.subr.mxu0 0.0
    %6026 = vmatpush2.xpose.msra.mxu0 0.0
    %6027 = vmatprep.subr.mxu0 0.0
    %6028 = vmatpush2.xpose.msra.mxu0 0.0
    %6029 = vmatprep.subr.mxu0 0.0
    %6030 = vmatpush2.xpose.msra.mxu0 0.0
    %6031 = vmatprep.subr.mxu0 0.0
    %6032 = vmatpush2.xpose.msra.mxu0 0.0
    %6033 = vmatprep.subr.mxu0 0.0
    %6034 = vmatpush2.xpose.msra.mxu0 0.0
    %6035 = vmatprep.subr.mxu0 0.0
    %6036 = vmatpush2.xpose.msra.mxu0 0.0
    %6037 = vmatprep.subr.mxu0 0.0
    %6038 = vmatpush2.xpose.msra.mxu0 0.0
    %6039 = vmatprep.mubr.f32.mxu0 0.0
    %6040 = vmatmul.mubr.f32.gmra.mxu0 %v5967
    %v6041 = vpop.f32.mrf.mxu0
    %v6042 = vadd.f32 0.0, %v6041
    %v6043 = vpop.f32.mrf.mxu0
    %6044 = vdwg.mxu0
    %v6045 = vmul.f32 %v5933, %v5933
    %v6046 = vsel %vm781, %v6045, 0.0
    %6047 = vadd.xlane.f32.xlu0 %v6046
    %v6048 = vpop.xlane.xlu0 %6047
    %v6050 = vsel %vm785, %v6048, 0
    %v6053 = vsel %vm785, %v5962, 0
    %v6056 = vsel %vm785, %v5965, 0
    %6058 = vmatprep.subr.mxu0 0.0
    %6059 = vmatpush1.xpose.msra.mxu0 0.0
    %6060 = vmatprep.subr.mxu0 0.0
    %6061 = vmatpush1.xpose.msra.mxu0 0.0
    %6062 = vmatprep.subr.mxu0 0.0
    %6063 = vmatpush1.xpose.msra.mxu0 0.0
    %6064 = vmatprep.subr.mxu0 0.0
    %6065 = vmatpush1.xpose.msra.mxu0 0.0
    %6066 = vmatprep.subr.mxu0 0.0
    %6067 = vmatpush1.xpose.msra.mxu0 0.0
    %6068 = vmatprep.subr.mxu0 0.0
    %6069 = vmatpush1.xpose.msra.mxu0 0.0
    %6070 = vmatprep.subr.mxu0 0.0
    %6071 = vmatpush1.xpose.msra.mxu0 0.0
    %6072 = vmatprep.subr.mxu0 0.0
    %6073 = vmatpush1.xpose.msra.mxu0 0.0
    %6074 = vmatprep.subr.mxu0 0.0
    %6075 = vmatpush1.xpose.msra.mxu0 0.0
    %6076 = vmatprep.subr.mxu0 0.0
    %6077 = vmatpush1.xpose.msra.mxu0 0.0
    %6078 = vmatprep.subr.mxu0 0.0
    %6079 = vmatpush1.xpose.msra.mxu0 0.0
    %6080 = vmatprep.subr.mxu0 0.0
    %6081 = vmatpush1.xpose.msra.mxu0 0.0
    %6082 = vmatprep.subr.mxu0 0.0
    %6083 = vmatpush1.xpose.msra.mxu0 0.0
    %6084 = vmatprep.subr.mxu0 0.0
    %6085 = vmatpush1.xpose.msra.mxu0 0.0
    %6086 = vmatprep.subr.mxu0 0.0
    %6087 = vmatpush1.xpose.msra.mxu0 %v6056
    %6088 = vmatprep.subr.mxu0 0.0
    %6089 = vmatpush1.xpose.msra.mxu0 %v6053
    %6090 = vmatprep.subr.mxu0 0.0
    %6091 = vmatpush2.xpose.msra.mxu0 0.0
    %6092 = vmatprep.subr.mxu0 0.0
    %6093 = vmatpush2.xpose.msra.mxu0 0.0
    %6094 = vmatprep.subr.mxu0 0.0
    %6095 = vmatpush2.xpose.msra.mxu0 0.0
    %6096 = vmatprep.subr.mxu0 0.0
    %6097 = vmatpush2.xpose.msra.mxu0 0.0
    %6098 = vmatprep.subr.mxu0 0.0
    %6099 = vmatpush2.xpose.msra.mxu0 0.0
    %6100 = vmatprep.subr.mxu0 0.0
    %6101 = vmatpush2.xpose.msra.mxu0 0.0
    %6102 = vmatprep.subr.mxu0 0.0
    %6103 = vmatpush2.xpose.msra.mxu0 0.0
    %6104 = vmatprep.subr.mxu0 0.0
    %6105 = vmatpush2.xpose.msra.mxu0 0.0
    %6106 = vmatprep.subr.mxu0 0.0
    %6107 = vmatpush2.xpose.msra.mxu0 0.0
    %6108 = vmatprep.subr.mxu0 0.0
    %6109 = vmatpush2.xpose.msra.mxu0 0.0
    %6110 = vmatprep.subr.mxu0 0.0
    %6111 = vmatpush2.xpose.msra.mxu0 0.0
    %6112 = vmatprep.subr.mxu0 0.0
    %6113 = vmatpush2.xpose.msra.mxu0 0.0
    %6114 = vmatprep.subr.mxu0 0.0
    %6115 = vmatpush2.xpose.msra.mxu0 0.0
    %6116 = vmatprep.subr.mxu0 0.0
    %6117 = vmatpush2.xpose.msra.mxu0 0.0
    %6118 = vmatprep.subr.mxu0 0.0
    %6119 = vmatpush2.xpose.msra.mxu0 0.0
    %6120 = vmatprep.subr.mxu0 0.0
    %6121 = vmatpush2.xpose.msra.mxu0 0.0
    %6122 = vmatprep.mubr.f32.mxu0 0.0
    %6123 = vmatmul.mubr.f32.gmra.mxu0 %v6050
    %v6124 = vpop.f32.mrf.mxu0
    %v6125 = vadd.f32 0.0, %v6124
    %v6126 = vpop.f32.mrf.mxu0
    %6127 = vdwg.mxu0
    %v6128 = vrsqrt.pop %v6125
    %v6129 = vmul.f32 %v6125, %v6128
    %vm6130 = vcmp.eq.f32.partialorder %v6125, inf
    %v6131 = vsel %vm6130, %v6125, %v6129
    %vm6132 = vcmp.eq.f32.partialorder %v6125, 0.0
    %v6133 = vand.u32 %v6125, 2147483648
    %v6134 = vsel %vm6132, %v6133, %v6131
    %v6135 = vadd.f32 %v6134, 1e-08
    %v6136 = vrcp.pop %v6135
    %v6137 = vmul.f32 %v6042, %v6136
    %6139 = vset.pattern.permute.xlu0 72
    %6140 = vperm.xlu0 %6139, %v5957
    %v6141 = vpop.permute.xlu0 %6140
    %v6143 = vmul.f32 %v6141, %v6137
    %v6144 = vsel %vm881, %v6143, -inf
    %6145 = vmax.xlane.f32.xlu0 %v6144
    %v6146 = vpop.xlane.xlu0 %6145
    %v6147 = vsub.f32 %v6143, %v6146
    %v6148 = vmul.f32 %v6147, 1.442695
    %v6149 = vpow.pop %v6148
    %v6150 = vsel %vm881, %v6149, 0.0
    %6151 = vadd.xlane.f32.xlu0 %v6150
    %v6152 = vpop.xlane.xlu0 %6151
    %v6153 = vrcp.pop %v6152
    %v6154 = vmul.f32 %v6149, %v6153
    %6155 = vrot.lane.b32.xlu0 %v5933, 96
    %v6156 = vpop.permute.xlu0 %6155
    %v6157 = vsel %vm57, %v6156, 0
    %6159 = vmatprep.subr.mxu0 0.0
    %6160 = vmatpush1.xpose.msra.mxu0 0.0
    %6161 = vmatprep.subr.mxu0 0.0
    %6162 = vmatpush1.xpose.msra.mxu0 0.0
    %6163 = vmatprep.subr.mxu0 0.0
    %6164 = vmatpush1.xpose.msra.mxu0 0.0
    %6165 = vmatprep.subr.mxu0 0.0
    %6166 = vmatpush1.xpose.msra.mxu0 0.0
    %6167 = vmatprep.subr.mxu0 0.0
    %6168 = vmatpush1.xpose.msra.mxu0 0.0
    %6169 = vmatprep.subr.mxu0 0.0
    %6170 = vmatpush1.xpose.msra.mxu0 0.0
    %6171 = vmatprep.subr.mxu0 0.0
    %6172 = vmatpush1.xpose.msra.mxu0 0.0
    %6173 = vmatprep.subr.mxu0 0.0
    %6174 = vmatpush1.xpose.msra.mxu0 0.0
    %6175 = vmatprep.subr.mxu0 0.0
    %6176 = vmatpush1.xpose.msra.mxu0 0.0
    %6177 = vmatprep.subr.mxu0 0.0
    %6178 = vmatpush1.xpose.msra.mxu0 0.0
    %6179 = vmatprep.subr.mxu0 0.0
    %6180 = vmatpush1.xpose.msra.mxu0 0.0
    %6181 = vmatprep.subr.mxu0 0.0
    %6182 = vmatpush1.xpose.msra.mxu0 0.0
    %6183 = vmatprep.subr.mxu0 0.0
    %6184 = vmatpush1.xpose.msra.mxu0 0.0
    %6185 = vmatprep.subr.mxu0 0.0
    %6186 = vmatpush1.xpose.msra.mxu0 0.0
    %6187 = vmatprep.subr.mxu0 0.0
    %6188 = vmatpush1.xpose.msra.mxu0 %v5973
    %6189 = vmatprep.subr.mxu0 0.0
    %6190 = vmatpush1.xpose.msra.mxu0 %v5970
    %6191 = vmatprep.subr.mxu0 0.0
    %6192 = vmatpush2.xpose.msra.mxu0 0.0
    %6193 = vmatprep.subr.mxu0 0.0
    %6194 = vmatpush2.xpose.msra.mxu0 0.0
    %6195 = vmatprep.subr.mxu0 0.0
    %6196 = vmatpush2.xpose.msra.mxu0 0.0
    %6197 = vmatprep.subr.mxu0 0.0
    %6198 = vmatpush2.xpose.msra.mxu0 0.0
    %6199 = vmatprep.subr.mxu0 0.0
    %6200 = vmatpush2.xpose.msra.mxu0 0.0
    %6201 = vmatprep.subr.mxu0 0.0
    %6202 = vmatpush2.xpose.msra.mxu0 0.0
    %6203 = vmatprep.subr.mxu0 0.0
    %6204 = vmatpush2.xpose.msra.mxu0 0.0
    %6205 = vmatprep.subr.mxu0 0.0
    %6206 = vmatpush2.xpose.msra.mxu0 0.0
    %6207 = vmatprep.subr.mxu0 0.0
    %6208 = vmatpush2.xpose.msra.mxu0 0.0
    %6209 = vmatprep.subr.mxu0 0.0
    %6210 = vmatpush2.xpose.msra.mxu0 0.0
    %6211 = vmatprep.subr.mxu0 0.0
    %6212 = vmatpush2.xpose.msra.mxu0 0.0
    %6213 = vmatprep.subr.mxu0 0.0
    %6214 = vmatpush2.xpose.msra.mxu0 0.0
    %6215 = vmatprep.subr.mxu0 0.0
    %6216 = vmatpush2.xpose.msra.mxu0 0.0
    %6217 = vmatprep.subr.mxu0 0.0
    %6218 = vmatpush2.xpose.msra.mxu0 0.0
    %6219 = vmatprep.subr.mxu0 0.0
    %6220 = vmatpush2.xpose.msra.mxu0 0.0
    %6221 = vmatprep.subr.mxu0 0.0
    %6222 = vmatpush2.xpose.msra.mxu0 0.0
    %6223 = vmatprep.mubr.f32.mxu0 0.0
    %6224 = vmatmul.mubr.f32.gmra.mxu0 %v6157
    %v6225 = vpop.f32.mrf.mxu0
    %v6226 = vadd.f32 0.0, %v6225
    %v6227 = vpop.f32.mrf.mxu0
    %6228 = vdwg.mxu0
    %6230 = vrot.lane.b32.xlu0 %v6045, 96
    %v6231 = vpop.permute.xlu0 %6230
    %v6233 = vsel %vm781, %v6231, 0.0
    %6234 = vadd.xlane.f32.xlu0 %v6233
    %v6235 = vpop.xlane.xlu0 %6234
    %v6237 = vsel %vm785, %v6235, 0
    %6239 = vmatprep.subr.mxu0 0.0
    %6240 = vmatpush1.xpose.msra.mxu0 0.0
    %6241 = vmatprep.subr.mxu0 0.0
    %6242 = vmatpush1.xpose.msra.mxu0 0.0
    %6243 = vmatprep.subr.mxu0 0.0
    %6244 = vmatpush1.xpose.msra.mxu0 0.0
    %6245 = vmatprep.subr.mxu0 0.0
    %6246 = vmatpush1.xpose.msra.mxu0 0.0
    %6247 = vmatprep.subr.mxu0 0.0
    %6248 = vmatpush1.xpose.msra.mxu0 0.0
    %6249 = vmatprep.subr.mxu0 0.0
    %6250 = vmatpush1.xpose.msra.mxu0 0.0
    %6251 = vmatprep.subr.mxu0 0.0
    %6252 = vmatpush1.xpose.msra.mxu0 0.0
    %6253 = vmatprep.subr.mxu0 0.0
    %6254 = vmatpush1.xpose.msra.mxu0 0.0
    %6255 = vmatprep.subr.mxu0 0.0
    %6256 = vmatpush1.xpose.msra.mxu0 0.0
    %6257 = vmatprep.subr.mxu0 0.0
    %6258 = vmatpush1.xpose.msra.mxu0 0.0
    %6259 = vmatprep.subr.mxu0 0.0
    %6260 = vmatpush1.xpose.msra.mxu0 0.0
    %6261 = vmatprep.subr.mxu0 0.0
    %6262 = vmatpush1.xpose.msra.mxu0 0.0
    %6263 = vmatprep.subr.mxu0 0.0
    %6264 = vmatpush1.xpose.msra.mxu0 0.0
    %6265 = vmatprep.subr.mxu0 0.0
    %6266 = vmatpush1.xpose.msra.mxu0 0.0
    %6267 = vmatprep.subr.mxu0 0.0
    %6268 = vmatpush1.xpose.msra.mxu0 %v6056
    %6269 = vmatprep.subr.mxu0 0.0
    %6270 = vmatpush1.xpose.msra.mxu0 %v6053
    %6271 = vmatprep.subr.mxu0 0.0
    %6272 = vmatpush2.xpose.msra.mxu0 0.0
    %6273 = vmatprep.subr.mxu0 0.0
    %6274 = vmatpush2.xpose.msra.mxu0 0.0
    %6275 = vmatprep.subr.mxu0 0.0
    %6276 = vmatpush2.xpose.msra.mxu0 0.0
    %6277 = vmatprep.subr.mxu0 0.0
    %6278 = vmatpush2.xpose.msra.mxu0 0.0
    %6279 = vmatprep.subr.mxu0 0.0
    %6280 = vmatpush2.xpose.msra.mxu0 0.0
    %6281 = vmatprep.subr.mxu0 0.0
    %6282 = vmatpush2.xpose.msra.mxu0 0.0
    %6283 = vmatprep.subr.mxu0 0.0
    %6284 = vmatpush2.xpose.msra.mxu0 0.0
    %6285 = vmatprep.subr.mxu0 0.0
    %6286 = vmatpush2.xpose.msra.mxu0 0.0
    %6287 = vmatprep.subr.mxu0 0.0
    %6288 = vmatpush2.xpose.msra.mxu0 0.0
    %6289 = vmatprep.subr.mxu0 0.0
    %6290 = vmatpush2.xpose.msra.mxu0 0.0
    %6291 = vmatprep.subr.mxu0 0.0
    %6292 = vmatpush2.xpose.msra.mxu0 0.0
    %6293 = vmatprep.subr.mxu0 0.0
    %6294 = vmatpush2.xpose.msra.mxu0 0.0
    %6295 = vmatprep.subr.mxu0 0.0
    %6296 = vmatpush2.xpose.msra.mxu0 0.0
    %6297 = vmatprep.subr.mxu0 0.0
    %6298 = vmatpush2.xpose.msra.mxu0 0.0
    %6299 = vmatprep.subr.mxu0 0.0
    %6300 = vmatpush2.xpose.msra.mxu0 0.0
    %6301 = vmatprep.subr.mxu0 0.0
    %6302 = vmatpush2.xpose.msra.mxu0 0.0
    %6303 = vmatprep.mubr.f32.mxu0 0.0
    %6304 = vmatmul.mubr.f32.gmra.mxu0 %v6237
    %v6305 = vpop.f32.mrf.mxu0
    %v6306 = vadd.f32 0.0, %v6305
    %v6307 = vpop.f32.mrf.mxu0
    %6308 = vdwg.mxu0
    %v6309 = vrsqrt.pop %v6306
    %v6310 = vmul.f32 %v6306, %v6309
    %vm6311 = vcmp.eq.f32.partialorder %v6306, inf
    %v6312 = vsel %vm6311, %v6306, %v6310
    %vm6313 = vcmp.eq.f32.partialorder %v6306, 0.0
    %v6314 = vand.u32 %v6306, 2147483648
    %v6315 = vsel %vm6313, %v6314, %v6312
    %v6316 = vadd.f32 %v6315, 1e-08
    %v6317 = vrcp.pop %v6316
    %v6318 = vmul.f32 %v6226, %v6317
    %6319 = vset.pattern.permute.xlu0 73
    %6320 = vperm.xlu0 %6319, %v5957
    %v6321 = vpop.permute.xlu0 %6320
    %v6323 = vmul.f32 %v6321, %v6318
    %v6324 = vsel %vm881, %v6323, -inf
    %6325 = vmax.xlane.f32.xlu0 %v6324
    %v6326 = vpop.xlane.xlu0 %6325
    %v6327 = vsub.f32 %v6323, %v6326
    %v6328 = vmul.f32 %v6327, 1.442695
    %v6329 = vpow.pop %v6328
    %v6330 = vsel %vm881, %v6329, 0.0
    %6331 = vadd.xlane.f32.xlu0 %v6330
    %v6332 = vpop.xlane.xlu0 %6331
    %v6333 = vrcp.pop %v6332
    %v6334 = vmul.f32 %v6329, %v6333
    %v6335 = vsel %vm57, %v5607, 0.0
    %v6336 = vsel %vm57, %v5608, 0.0
    %v6337 = vadd.f32 %v6335, %v6336
    %v6338 = vrot.slane %v6337, 4
    %v6339 = vadd.f32 %v6337, %v6338
    %v6340 = vrot.slane %v6339, 2
    %v6341 = vadd.f32 %v6339, %v6340
    %v6342 = vrot.slane %v6341, 1
    %v6343 = vadd.f32 %v6341, %v6342
    %v6344 = vmul.f32 %v6343, %v1082
    %v6345 = vsub.f32 %v5607, %v6344
    %v6346 = vsub.f32 %v5608, %v6344
    %v6347 = vmul.f32 %v6345, %v6345
    %v6348 = vmul.f32 %v6346, %v6346
    %v6349 = vsel %vm57, %v6347, 0.0
    %v6350 = vsel %vm57, %v6348, 0.0
    %v6351 = vadd.f32 %v6349, %v6350
    %v6352 = vrot.slane %v6351, 4
    %v6353 = vadd.f32 %v6351, %v6352
    %v6354 = vrot.slane %v6353, 2
    %v6355 = vadd.f32 %v6353, %v6354
    %v6356 = vrot.slane %v6355, 1
    %v6357 = vadd.f32 %v6355, %v6356
    %v6358 = vmul.f32 %v6357, %v1082
    %v6359 = vadd.f32 %v6358, 1e-05
    %v6360 = vrsqrt.pop %v6359
    %v6361 = vmul.f32 %v6345, %v6360
    %v6362 = vmul.f32 %v6346, %v6360
    %6364 = vrot.lane.b32.xlu0 %v5939, 64
    %v6365 = vpop.permute.xlu0 %6364
    %s6367 = scalar_lea.vmem [#allocation2], 10
    %6368 = vst.msk [vmem:[%s6367] sm:$0x3] %vm1106, %v6365
    %v6369 = vld [vmem:[%s1108] sm:$0x3]
    %v6370 = vld [vmem:[%s5] sm:$0xff]
    %v6371 = vld [vmem:[%s5 + $0x8] sm:$0xff]
    %v6372 = vld [vmem:[%s5 + $0x10] sm:$0xff]
    %v6373 = vld [vmem:[%s5 + $0x18] sm:$0xff]
    %v6374 = vld [vmem:[%s6] sm:$0x1]
    %v6376 = vlaneseq
    %v6377 = vshrl.u32 %v6376, 7
    %v6378 = vsub.s32 0, %v6377
    %v6379 = vrot.slane %v6374, %v6378
    %6381 = vmatprep.subr.mxu0 0.0
    %6382 = vmatpush1.msra.mxu0 0.0
    %6383 = vmatprep.subr.mxu0 0.0
    %6384 = vmatpush1.msra.mxu0 0.0
    %6385 = vmatprep.subr.mxu0 0.0
    %6386 = vmatpush1.msra.mxu0 0.0
    %6387 = vmatprep.subr.mxu0 0.0
    %6388 = vmatpush1.msra.mxu0 0.0
    %6389 = vmatprep.subr.mxu0 0.0
    %6390 = vmatpush1.msra.mxu0 0.0
    %6391 = vmatprep.subr.mxu0 0.0
    %6392 = vmatpush1.msra.mxu0 0.0
    %6393 = vmatprep.subr.mxu0 0.0
    %6394 = vmatpush1.msra.mxu0 0.0
    %6395 = vmatprep.subr.mxu0 0.0
    %6396 = vmatpush1.msra.mxu0 0.0
    %6397 = vmatprep.subr.mxu0 0.0
    %6398 = vmatpush1.msra.mxu0 0.0
    %6399 = vmatprep.subr.mxu0 0.0
    %6400 = vmatpush1.msra.mxu0 0.0
    %6401 = vmatprep.subr.mxu0 0.0
    %6402 = vmatpush1.msra.mxu0 0.0
    %6403 = vmatprep.subr.mxu0 0.0
    %6404 = vmatpush1.msra.mxu0 0.0
    %6405 = vmatprep.subr.mxu0 0.0
    %6406 = vmatpush1.msra.mxu0 %v6373
    %6407 = vmatprep.subr.mxu0 0.0
    %6408 = vmatpush1.msra.mxu0 %v6372
    %6409 = vmatprep.subr.mxu0 0.0
    %6410 = vmatpush1.msra.mxu0 %v6371
    %6411 = vmatprep.subr.mxu0 0.0
    %6412 = vmatpush1.msra.mxu0 %v6370
    %6413 = vmatprep.subr.mxu0 0.0
    %6414 = vmatpush2.msra.mxu0 0.0
    %6415 = vmatprep.subr.mxu0 0.0
    %6416 = vmatpush2.msra.mxu0 0.0
    %6417 = vmatprep.subr.mxu0 0.0
    %6418 = vmatpush2.msra.mxu0 0.0
    %6419 = vmatprep.subr.mxu0 0.0
    %6420 = vmatpush2.msra.mxu0 0.0
    %6421 = vmatprep.subr.mxu0 0.0
    %6422 = vmatpush2.msra.mxu0 0.0
    %6423 = vmatprep.subr.mxu0 0.0
    %6424 = vmatpush2.msra.mxu0 0.0
    %6425 = vmatprep.subr.mxu0 0.0
    %6426 = vmatpush2.msra.mxu0 0.0
    %6427 = vmatprep.subr.mxu0 0.0
    %6428 = vmatpush2.msra.mxu0 0.0
    %6429 = vmatprep.subr.mxu0 0.0
    %6430 = vmatpush2.msra.mxu0 0.0
    %6431 = vmatprep.subr.mxu0 0.0
    %6432 = vmatpush2.msra.mxu0 0.0
    %6433 = vmatprep.subr.mxu0 0.0
    %6434 = vmatpush2.msra.mxu0 0.0
    %6435 = vmatprep.subr.mxu0 0.0
    %6436 = vmatpush2.msra.mxu0 0.0
    %6437 = vmatprep.subr.mxu0 0.0
    %6438 = vmatpush2.msra.mxu0 0.0
    %6439 = vmatprep.subr.mxu0 0.0
    %6440 = vmatpush2.msra.mxu0 0.0
    %6441 = vmatprep.subr.mxu0 0.0
    %6442 = vmatpush2.msra.mxu0 0.0
    %6443 = vmatprep.subr.mxu0 0.0
    %6444 = vmatpush2.msra.mxu0 0.0
    %6445 = vmatprep.mubr.f32.mxu0 0.0
    %6446 = vmatmul.mubr.f32.gmra.mxu0 %v4277
    %v6447 = vpop.f32.mrf.mxu0
    %v6448 = vadd.f32 %v6379, %v6447
    %v6449 = vpop.f32.mrf.mxu0
    %6450 = vdwg.mxu0
    %v6451 = vxor.u32 %v6448, 2147483648
    %v6452 = vmul.f32 %v6451, 1.442695
    %v6453 = vpow.pop %v6452
    %v6454 = vadd.f32 %v6453, 1.0
    %v6455 = vrcp.pop %v6454
    %v6456 = vmul.f32 1.0, %v6455
    %v6457 = vtanh.pop %v6448
    %6458 = vxpose.xlu0.b32.start [1/16] %v6154, 128
    %6459 = vxpose.xlu0.b32.cont [2/16] 0.0, 128
    %6460 = vxpose.xlu0.b32.cont [3/16] 0.0, 128
    %6461 = vxpose.xlu0.b32.cont [4/16] 0.0, 128
    %6462 = vxpose.xlu0.b32.cont [5/16] 0.0, 128
    %6463 = vxpose.xlu0.b32.cont [6/16] 0.0, 128
    %6464 = vxpose.xlu0.b32.cont [7/16] 0.0, 128
    %6465 = vxpose.xlu0.b32.cont [8/16] 0.0, 128
    %6466 = vxpose.xlu0.b32.cont [9/16] 0.0, 128
    %6467 = vxpose.xlu0.b32.cont [10/16] 0.0, 128
    %6468 = vxpose.xlu0.b32.cont [11/16] 0.0, 128
    %6469 = vxpose.xlu0.b32.cont [12/16] 0.0, 128
    %6470 = vxpose.xlu0.b32.cont [13/16] 0.0, 128
    %6471 = vxpose.xlu0.b32.cont [14/16] 0.0, 128
    %6472 = vxpose.xlu0.b32.cont [15/16] 0.0, 128
    %6473 = vxpose.xlu0.b32.end [16/16] 0.0, 128
    %v6474 = vpop.trf.xlu0
    %v6475 = vpop.trf.xlu0
    %v6476 = vpop.trf.xlu0
    %v6477 = vpop.trf.xlu0
    %v6478 = vpop.trf.xlu0
    %v6479 = vpop.trf.xlu0
    %v6480 = vpop.trf.xlu0
    %v6481 = vpop.trf.xlu0
    %v6482 = vpop.trf.xlu0
    %v6483 = vpop.trf.xlu0
    %v6484 = vpop.trf.xlu0
    %v6485 = vpop.trf.xlu0
    %v6486 = vpop.trf.xlu0
    %v6487 = vpop.trf.xlu0
    %v6488 = vpop.trf.xlu0
    %v6489 = vpop.trf.xlu0
    %v6491 = vsel %vm170, %v6474, 0
    %v6494 = vsel %vm170, %v6475, 0
    %v6497 = vsel %vm177, %v6456, 0
    %6499 = vmatprep.subr.mxu0 0.0
    %6500 = vmatpush1.msra.mxu0 0.0
    %6501 = vmatprep.subr.mxu0 0.0
    %6502 = vmatpush1.msra.mxu0 0.0
    %6503 = vmatprep.subr.mxu0 0.0
    %6504 = vmatpush1.msra.mxu0 0.0
    %6505 = vmatprep.subr.mxu0 0.0
    %6506 = vmatpush1.msra.mxu0 0.0
    %6507 = vmatprep.subr.mxu0 0.0
    %6508 = vmatpush1.msra.mxu0 0.0
    %6509 = vmatprep.subr.mxu0 0.0
    %6510 = vmatpush1.msra.mxu0 0.0
    %6511 = vmatprep.subr.mxu0 0.0
    %6512 = vmatpush1.msra.mxu0 0.0
    %6513 = vmatprep.subr.mxu0 0.0
    %6514 = vmatpush1.msra.mxu0 0.0
    %6515 = vmatprep.subr.mxu0 0.0
    %6516 = vmatpush1.msra.mxu0 0.0
    %6517 = vmatprep.subr.mxu0 0.0
    %6518 = vmatpush1.msra.mxu0 0.0
    %6519 = vmatprep.subr.mxu0 0.0
    %6520 = vmatpush1.msra.mxu0 0.0
    %6521 = vmatprep.subr.mxu0 0.0
    %6522 = vmatpush1.msra.mxu0 0.0
    %6523 = vmatprep.subr.mxu0 0.0
    %6524 = vmatpush1.msra.mxu0 0.0
    %6525 = vmatprep.subr.mxu0 0.0
    %6526 = vmatpush1.msra.mxu0 0.0
    %6527 = vmatprep.subr.mxu0 0.0
    %6528 = vmatpush1.msra.mxu0 0.0
    %6529 = vmatprep.subr.mxu0 0.0
    %6530 = vmatpush1.msra.mxu0 %v6497
    %6531 = vmatprep.subr.mxu0 0.0
    %6532 = vmatpush2.msra.mxu0 0.0
    %6533 = vmatprep.subr.mxu0 0.0
    %6534 = vmatpush2.msra.mxu0 0.0
    %6535 = vmatprep.subr.mxu0 0.0
    %6536 = vmatpush2.msra.mxu0 0.0
    %6537 = vmatprep.subr.mxu0 0.0
    %6538 = vmatpush2.msra.mxu0 0.0
    %6539 = vmatprep.subr.mxu0 0.0
    %6540 = vmatpush2.msra.mxu0 0.0
    %6541 = vmatprep.subr.mxu0 0.0
    %6542 = vmatpush2.msra.mxu0 0.0
    %6543 = vmatprep.subr.mxu0 0.0
    %6544 = vmatpush2.msra.mxu0 0.0
    %6545 = vmatprep.subr.mxu0 0.0
    %6546 = vmatpush2.msra.mxu0 0.0
    %6547 = vmatprep.subr.mxu0 0.0
    %6548 = vmatpush2.msra.mxu0 0.0
    %6549 = vmatprep.subr.mxu0 0.0
    %6550 = vmatpush2.msra.mxu0 0.0
    %6551 = vmatprep.subr.mxu0 0.0
    %6552 = vmatpush2.msra.mxu0 0.0
    %6553 = vmatprep.subr.mxu0 0.0
    %6554 = vmatpush2.msra.mxu0 0.0
    %6555 = vmatprep.subr.mxu0 0.0
    %6556 = vmatpush2.msra.mxu0 0.0
    %6557 = vmatprep.subr.mxu0 0.0
    %6558 = vmatpush2.msra.mxu0 0.0
    %6559 = vmatprep.subr.mxu0 0.0
    %6560 = vmatpush2.msra.mxu0 0.0
    %6561 = vmatprep.subr.mxu0 0.0
    %6562 = vmatpush2.msra.mxu0 0.0
    %6563 = vmatprep.mubr.f32.mxu0 0.0
    %6564 = vmatmul.mubr.f32.gmra.mxu0 %v6491
    %v6565 = vpop.f32.mrf.mxu0
    %v6566 = vadd.f32 0.0, %v6565
    %v6567 = vpop.f32.mrf.mxu0
    %6568 = vmatprep.mubr.f32.mxu0 0.0
    %6569 = vmatmul.mubr.f32.gmra.mxu0 %v6494
    %v6570 = vpop.f32.mrf.mxu0
    %v6571 = vadd.f32 0.0, %v6570
    %v6572 = vpop.f32.mrf.mxu0
    %6573 = vdwg.mxu0
    %6575 = vrot.lane.b32.xlu0 %v6457, 96
    %v6576 = vpop.permute.xlu0 %6575
    %v6577 = vsel %vm177, %v6576, 0
    %6579 = vmatprep.subr.mxu0 0.0
    %6580 = vmatpush1.msra.mxu0 0.0
    %6581 = vmatprep.subr.mxu0 0.0
    %6582 = vmatpush1.msra.mxu0 0.0
    %6583 = vmatprep.subr.mxu0 0.0
    %6584 = vmatpush1.msra.mxu0 0.0
    %6585 = vmatprep.subr.mxu0 0.0
    %6586 = vmatpush1.msra.mxu0 0.0
    %6587 = vmatprep.subr.mxu0 0.0
    %6588 = vmatpush1.msra.mxu0 0.0
    %6589 = vmatprep.subr.mxu0 0.0
    %6590 = vmatpush1.msra.mxu0 0.0
    %6591 = vmatprep.subr.mxu0 0.0
    %6592 = vmatpush1.msra.mxu0 0.0
    %6593 = vmatprep.subr.mxu0 0.0
    %6594 = vmatpush1.msra.mxu0 0.0
    %6595 = vmatprep.subr.mxu0 0.0
    %6596 = vmatpush1.msra.mxu0 0.0
    %6597 = vmatprep.subr.mxu0 0.0
    %6598 = vmatpush1.msra.mxu0 0.0
    %6599 = vmatprep.subr.mxu0 0.0
    %6600 = vmatpush1.msra.mxu0 0.0
    %6601 = vmatprep.subr.mxu0 0.0
    %6602 = vmatpush1.msra.mxu0 0.0
    %6603 = vmatprep.subr.mxu0 0.0
    %6604 = vmatpush1.msra.mxu0 0.0
    %6605 = vmatprep.subr.mxu0 0.0
    %6606 = vmatpush1.msra.mxu0 0.0
    %6607 = vmatprep.subr.mxu0 0.0
    %6608 = vmatpush1.msra.mxu0 0.0
    %6609 = vmatprep.subr.mxu0 0.0
    %6610 = vmatpush1.msra.mxu0 %v6577
    %6611 = vmatprep.subr.mxu0 0.0
    %6612 = vmatpush2.msra.mxu0 0.0
    %6613 = vmatprep.subr.mxu0 0.0
    %6614 = vmatpush2.msra.mxu0 0.0
    %6615 = vmatprep.subr.mxu0 0.0
    %6616 = vmatpush2.msra.mxu0 0.0
    %6617 = vmatprep.subr.mxu0 0.0
    %6618 = vmatpush2.msra.mxu0 0.0
    %6619 = vmatprep.subr.mxu0 0.0
    %6620 = vmatpush2.msra.mxu0 0.0
    %6621 = vmatprep.subr.mxu0 0.0
    %6622 = vmatpush2.msra.mxu0 0.0
    %6623 = vmatprep.subr.mxu0 0.0
    %6624 = vmatpush2.msra.mxu0 0.0
    %6625 = vmatprep.subr.mxu0 0.0
    %6626 = vmatpush2.msra.mxu0 0.0
    %6627 = vmatprep.subr.mxu0 0.0
    %6628 = vmatpush2.msra.mxu0 0.0
    %6629 = vmatprep.subr.mxu0 0.0
    %6630 = vmatpush2.msra.mxu0 0.0
    %6631 = vmatprep.subr.mxu0 0.0
    %6632 = vmatpush2.msra.mxu0 0.0
    %6633 = vmatprep.subr.mxu0 0.0
    %6634 = vmatpush2.msra.mxu0 0.0
    %6635 = vmatprep.subr.mxu0 0.0
    %6636 = vmatpush2.msra.mxu0 0.0
    %6637 = vmatprep.subr.mxu0 0.0
    %6638 = vmatpush2.msra.mxu0 0.0
    %6639 = vmatprep.subr.mxu0 0.0
    %6640 = vmatpush2.msra.mxu0 0.0
    %6641 = vmatprep.subr.mxu0 0.0
    %6642 = vmatpush2.msra.mxu0 0.0
    %6643 = vmatprep.mubr.f32.mxu0 0.0
    %6644 = vmatmul.mubr.f32.gmra.mxu0 %v6491
    %v6645 = vpop.f32.mrf.mxu0
    %v6646 = vadd.f32 0.0, %v6645
    %v6647 = vpop.f32.mrf.mxu0
    %6648 = vmatprep.mubr.f32.mxu0 0.0
    %6649 = vmatmul.mubr.f32.gmra.mxu0 %v6494
    %v6650 = vpop.f32.mrf.mxu0
    %v6651 = vadd.f32 0.0, %v6650
    %v6652 = vpop.f32.mrf.mxu0
    %6653 = vdwg.mxu0
    %v6654 = vsub.f32 1.0, %v6566
    %v6655 = vsub.f32 1.0, %v6571
    %v6656 = vmul.f32 %v6361, %v6654
    %v6657 = vmul.f32 %v6362, %v6655
    %v6658 = vadd.f32 %v6656, %v6646
    %v6659 = vadd.f32 %v6657, %v6651
    %v6661 = vsel %vm342, %v6334, 0
    %6663 = vmatprep.subr.mxu0 0.0
    %6664 = vmatpush1.msra.mxu0 0.0
    %6665 = vmatprep.subr.mxu0 0.0
    %6666 = vmatpush1.msra.mxu0 0.0
    %6667 = vmatprep.subr.mxu0 0.0
    %6668 = vmatpush1.msra.mxu0 0.0
    %6669 = vmatprep.subr.mxu0 0.0
    %6670 = vmatpush1.msra.mxu0 0.0
    %6671 = vmatprep.subr.mxu0 0.0
    %6672 = vmatpush1.msra.mxu0 0.0
    %6673 = vmatprep.subr.mxu0 0.0
    %6674 = vmatpush1.msra.mxu0 0.0
    %6675 = vmatprep.subr.mxu0 0.0
    %6676 = vmatpush1.msra.mxu0 0.0
    %6677 = vmatprep.subr.mxu0 0.0
    %6678 = vmatpush1.msra.mxu0 0.0
    %6679 = vmatprep.subr.mxu0 0.0
    %6680 = vmatpush1.msra.mxu0 0.0
    %6681 = vmatprep.subr.mxu0 0.0
    %6682 = vmatpush1.msra.mxu0 0.0
    %6683 = vmatprep.subr.mxu0 0.0
    %6684 = vmatpush1.msra.mxu0 0.0
    %6685 = vmatprep.subr.mxu0 0.0
    %6686 = vmatpush1.msra.mxu0 0.0
    %6687 = vmatprep.subr.mxu0 0.0
    %6688 = vmatpush1.msra.mxu0 0.0
    %6689 = vmatprep.subr.mxu0 0.0
    %6690 = vmatpush1.msra.mxu0 0.0
    %6691 = vmatprep.subr.mxu0 0.0
    %6692 = vmatpush1.msra.mxu0 %v6659
    %6693 = vmatprep.subr.mxu0 0.0
    %6694 = vmatpush1.msra.mxu0 %v6658
    %6695 = vmatprep.subr.mxu0 0.0
    %6696 = vmatpush2.msra.mxu0 0.0
    %6697 = vmatprep.subr.mxu0 0.0
    %6698 = vmatpush2.msra.mxu0 0.0
    %6699 = vmatprep.subr.mxu0 0.0
    %6700 = vmatpush2.msra.mxu0 0.0
    %6701 = vmatprep.subr.mxu0 0.0
    %6702 = vmatpush2.msra.mxu0 0.0
    %6703 = vmatprep.subr.mxu0 0.0
    %6704 = vmatpush2.msra.mxu0 0.0
    %6705 = vmatprep.subr.mxu0 0.0
    %6706 = vmatpush2.msra.mxu0 0.0
    %6707 = vmatprep.subr.mxu0 0.0
    %6708 = vmatpush2.msra.mxu0 0.0
    %6709 = vmatprep.subr.mxu0 0.0
    %6710 = vmatpush2.msra.mxu0 0.0
    %6711 = vmatprep.subr.mxu0 0.0
    %6712 = vmatpush2.msra.mxu0 0.0
    %6713 = vmatprep.subr.mxu0 0.0
    %6714 = vmatpush2.msra.mxu0 0.0
    %6715 = vmatprep.subr.mxu0 0.0
    %6716 = vmatpush2.msra.mxu0 0.0
    %6717 = vmatprep.subr.mxu0 0.0
    %6718 = vmatpush2.msra.mxu0 0.0
    %6719 = vmatprep.subr.mxu0 0.0
    %6720 = vmatpush2.msra.mxu0 0.0
    %6721 = vmatprep.subr.mxu0 0.0
    %6722 = vmatpush2.msra.mxu0 0.0
    %6723 = vmatprep.subr.mxu0 0.0
    %6724 = vmatpush2.msra.mxu0 0.0
    %6725 = vmatprep.subr.mxu0 0.0
    %6726 = vmatpush2.msra.mxu0 0.0
    %6727 = vmatprep.mubr.f32.mxu0 0.0
    %6728 = vmatmul.mubr.f32.gmra.mxu0 %v6661
    %v6729 = vpop.f32.mrf.mxu0
    %v6730 = vadd.f32 0.0, %v6729
    %v6731 = vpop.f32.mrf.mxu0
    %6732 = vdwg.mxu0
    %v6733 = vld [vmem:[%s3] sm:$0xff]
    %v6734 = vld [vmem:[%s3 + $0x8] sm:$0xff]
    %v6735 = vld [vmem:[%s3 + $0x10] sm:$0xff]
    %v6736 = vld [vmem:[%s3 + $0x18] sm:$0xff]
    %v6737 = vld [vmem:[%s3 + $0x20] sm:$0xff]
    %v6738 = vld [vmem:[%s3 + $0x28] sm:$0xff]
    %v6739 = vld [vmem:[%s3 + $0x30] sm:$0xff]
    %v6740 = vld [vmem:[%s3 + $0x38] sm:$0xff]
    %v6741 = vld [vmem:[%s3 + $0x40] sm:$0xff]
    %v6742 = vld [vmem:[%s3 + $0x48] sm:$0xff]
    %v6743 = vld [vmem:[%s3 + $0x50] sm:$0xff]
    %v6744 = vld [vmem:[%s3 + $0x58] sm:$0xff]
    %v6746 = vsel %vm57, %v6730, 0
    %6748 = vmatprep.subr.mxu0 0.0
    %6749 = vmatpush1.msra.mxu0 0.0
    %6750 = vmatprep.subr.mxu0 0.0
    %6751 = vmatpush1.msra.mxu0 0.0
    %6752 = vmatprep.subr.mxu0 0.0
    %6753 = vmatpush1.msra.mxu0 0.0
    %6754 = vmatprep.subr.mxu0 0.0
    %6755 = vmatpush1.msra.mxu0 0.0
    %6756 = vmatprep.subr.mxu0 0.0
    %6757 = vmatpush1.msra.mxu0 0.0
    %6758 = vmatprep.subr.mxu0 0.0
    %6759 = vmatpush1.msra.mxu0 0.0
    %6760 = vmatprep.subr.mxu0 0.0
    %6761 = vmatpush1.msra.mxu0 0.0
    %6762 = vmatprep.subr.mxu0 0.0
    %6763 = vmatpush1.msra.mxu0 0.0
    %6764 = vmatprep.subr.mxu0 0.0
    %6765 = vmatpush1.msra.mxu0 0.0
    %6766 = vmatprep.subr.mxu0 0.0
    %6767 = vmatpush1.msra.mxu0 0.0
    %6768 = vmatprep.subr.mxu0 0.0
    %6769 = vmatpush1.msra.mxu0 0.0
    %6770 = vmatprep.subr.mxu0 0.0
    %6771 = vmatpush1.msra.mxu0 0.0
    %6772 = vmatprep.subr.mxu0 0.0
    %6773 = vmatpush1.msra.mxu0 %v6744
    %6774 = vmatprep.subr.mxu0 0.0
    %6775 = vmatpush1.msra.mxu0 %v6743
    %6776 = vmatprep.subr.mxu0 0.0
    %6777 = vmatpush1.msra.mxu0 %v6742
    %6778 = vmatprep.subr.mxu0 0.0
    %6779 = vmatpush1.msra.mxu0 %v6741
    %6780 = vmatprep.subr.mxu0 0.0
    %6781 = vmatpush2.msra.mxu0 0.0
    %6782 = vmatprep.subr.mxu0 0.0
    %6783 = vmatpush2.msra.mxu0 0.0
    %6784 = vmatprep.subr.mxu0 0.0
    %6785 = vmatpush2.msra.mxu0 0.0
    %6786 = vmatprep.subr.mxu0 0.0
    %6787 = vmatpush2.msra.mxu0 0.0
    %6788 = vmatprep.subr.mxu0 0.0
    %6789 = vmatpush2.msra.mxu0 0.0
    %6790 = vmatprep.subr.mxu0 0.0
    %6791 = vmatpush2.msra.mxu0 0.0
    %6792 = vmatprep.subr.mxu0 0.0
    %6793 = vmatpush2.msra.mxu0 0.0
    %6794 = vmatprep.subr.mxu0 0.0
    %6795 = vmatpush2.msra.mxu0 0.0
    %6796 = vmatprep.subr.mxu0 0.0
    %6797 = vmatpush2.msra.mxu0 0.0
    %6798 = vmatprep.subr.mxu0 0.0
    %6799 = vmatpush2.msra.mxu0 0.0
    %6800 = vmatprep.subr.mxu0 0.0
    %6801 = vmatpush2.msra.mxu0 0.0
    %6802 = vmatprep.subr.mxu0 0.0
    %6803 = vmatpush2.msra.mxu0 0.0
    %6804 = vmatprep.subr.mxu0 0.0
    %6805 = vmatpush2.msra.mxu0 0.0
    %6806 = vmatprep.subr.mxu0 0.0
    %6807 = vmatpush2.msra.mxu0 0.0
    %6808 = vmatprep.subr.mxu0 0.0
    %6809 = vmatpush2.msra.mxu0 0.0
    %6810 = vmatprep.subr.mxu0 0.0
    %6811 = vmatpush2.msra.mxu0 0.0
    %6812 = vmatprep.mubr.f32.mxu0 0.0
    %6813 = vmatmul.mubr.f32.gmra.mxu0 %v6746
    %v6814 = vpop.f32.mrf.mxu0
    %v6815 = vadd.f32 0.0, %v6814
    %v6816 = vpop.f32.mrf.mxu0
    %6817 = vdwg.mxu0
    %v6819 = vsel %vm501, %v6369, 0
    %6821 = vmatprep.subr.mxu0 0.0
    %6822 = vmatpush1.msra.mxu0 0.0
    %6823 = vmatprep.subr.mxu0 0.0
    %6824 = vmatpush1.msra.mxu0 0.0
    %6825 = vmatprep.subr.mxu0 0.0
    %6826 = vmatpush1.msra.mxu0 0.0
    %6827 = vmatprep.subr.mxu0 0.0
    %6828 = vmatpush1.msra.mxu0 0.0
    %6829 = vmatprep.subr.mxu0 0.0
    %6830 = vmatpush1.msra.mxu0 0.0
    %6831 = vmatprep.subr.mxu0 0.0
    %6832 = vmatpush1.msra.mxu0 0.0
    %6833 = vmatprep.subr.mxu0 0.0
    %6834 = vmatpush1.msra.mxu0 0.0
    %6835 = vmatprep.subr.mxu0 0.0
    %6836 = vmatpush1.msra.mxu0 0.0
    %6837 = vmatprep.subr.mxu0 0.0
    %6838 = vmatpush1.msra.mxu0 %v6740
    %6839 = vmatprep.subr.mxu0 0.0
    %6840 = vmatpush1.msra.mxu0 %v6739
    %6841 = vmatprep.subr.mxu0 0.0
    %6842 = vmatpush1.msra.mxu0 %v6738
    %6843 = vmatprep.subr.mxu0 0.0
    %6844 = vmatpush1.msra.mxu0 %v6737
    %6845 = vmatprep.subr.mxu0 0.0
    %6846 = vmatpush1.msra.mxu0 %v6736
    %6847 = vmatprep.subr.mxu0 0.0
    %6848 = vmatpush1.msra.mxu0 %v6735
    %6849 = vmatprep.subr.mxu0 0.0
    %6850 = vmatpush1.msra.mxu0 %v6734
    %6851 = vmatprep.subr.mxu0 0.0
    %6852 = vmatpush1.msra.mxu0 %v6733
    %6853 = vmatprep.subr.mxu0 0.0
    %6854 = vmatpush2.msra.mxu0 0.0
    %6855 = vmatprep.subr.mxu0 0.0
    %6856 = vmatpush2.msra.mxu0 0.0
    %6857 = vmatprep.subr.mxu0 0.0
    %6858 = vmatpush2.msra.mxu0 0.0
    %6859 = vmatprep.subr.mxu0 0.0
    %6860 = vmatpush2.msra.mxu0 0.0
    %6861 = vmatprep.subr.mxu0 0.0
    %6862 = vmatpush2.msra.mxu0 0.0
    %6863 = vmatprep.subr.mxu0 0.0
    %6864 = vmatpush2.msra.mxu0 0.0
    %6865 = vmatprep.subr.mxu0 0.0
    %6866 = vmatpush2.msra.mxu0 0.0
    %6867 = vmatprep.subr.mxu0 0.0
    %6868 = vmatpush2.msra.mxu0 0.0
    %6869 = vmatprep.subr.mxu0 0.0
    %6870 = vmatpush2.msra.mxu0 0.0
    %6871 = vmatprep.subr.mxu0 0.0
    %6872 = vmatpush2.msra.mxu0 0.0
    %6873 = vmatprep.subr.mxu0 0.0
    %6874 = vmatpush2.msra.mxu0 0.0
    %6875 = vmatprep.subr.mxu0 0.0
    %6876 = vmatpush2.msra.mxu0 0.0
    %6877 = vmatprep.subr.mxu0 0.0
    %6878 = vmatpush2.msra.mxu0 0.0
    %6879 = vmatprep.subr.mxu0 0.0
    %6880 = vmatpush2.msra.mxu0 0.0
    %6881 = vmatprep.subr.mxu0 0.0
    %6882 = vmatpush2.msra.mxu0 0.0
    %6883 = vmatprep.subr.mxu0 0.0
    %6884 = vmatpush2.msra.mxu0 0.0
    %6885 = vmatprep.mubr.f32.mxu0 0.0
    %6886 = vmatmul.mubr.f32.gmra.mxu0 %v6819
    %v6887 = vpop.f32.mrf.mxu0
    %v6888 = vadd.f32 %v6815, %v6887
    %v6889 = vpop.f32.mrf.mxu0
    %6890 = vdwg.mxu0
    %v6891 = vld [vmem:[%s4] sm:$0x1]
    %v6893 = vlaneseq
    %v6894 = vshrl.u32 %v6893, 7
    %v6895 = vsub.s32 0, %v6894
    %v6896 = vrot.slane %v6891, %v6895
    %v6898 = vadd.f32 %v6888, %v6896
    %v6899 = vmax.f32 %v6898, 0.0
    %v6900 = vld [vmem:[%s7] sm:$0xff]
    %v6901 = vld [vmem:[%s7 + $0x8] sm:$0xff]
    %v6902 = vld [vmem:[%s7 + $0x10] sm:$0xff]
    %v6903 = vld [vmem:[%s7 + $0x18] sm:$0xff]
    %v6904 = vld [vmem:[%s8] sm:$0x1]
    %v6906 = vlaneseq
    %v6907 = vshrl.u32 %v6906, 7
    %v6908 = vsub.s32 0, %v6907
    %v6909 = vrot.slane %v6904, %v6908
    %v6912 = vsel %vm57, %v6899, 0
    %6914 = vmatprep.subr.mxu0 0.0
    %6915 = vmatpush1.msra.mxu0 0.0
    %6916 = vmatprep.subr.mxu0 0.0
    %6917 = vmatpush1.msra.mxu0 0.0
    %6918 = vmatprep.subr.mxu0 0.0
    %6919 = vmatpush1.msra.mxu0 0.0
    %6920 = vmatprep.subr.mxu0 0.0
    %6921 = vmatpush1.msra.mxu0 0.0
    %6922 = vmatprep.subr.mxu0 0.0
    %6923 = vmatpush1.msra.mxu0 0.0
    %6924 = vmatprep.subr.mxu0 0.0
    %6925 = vmatpush1.msra.mxu0 0.0
    %6926 = vmatprep.subr.mxu0 0.0
    %6927 = vmatpush1.msra.mxu0 0.0
    %6928 = vmatprep.subr.mxu0 0.0
    %6929 = vmatpush1.msra.mxu0 0.0
    %6930 = vmatprep.subr.mxu0 0.0
    %6931 = vmatpush1.msra.mxu0 0.0
    %6932 = vmatprep.subr.mxu0 0.0
    %6933 = vmatpush1.msra.mxu0 0.0
    %6934 = vmatprep.subr.mxu0 0.0
    %6935 = vmatpush1.msra.mxu0 0.0
    %6936 = vmatprep.subr.mxu0 0.0
    %6937 = vmatpush1.msra.mxu0 0.0
    %6938 = vmatprep.subr.mxu0 0.0
    %6939 = vmatpush1.msra.mxu0 %v6903
    %6940 = vmatprep.subr.mxu0 0.0
    %6941 = vmatpush1.msra.mxu0 %v6902
    %6942 = vmatprep.subr.mxu0 0.0
    %6943 = vmatpush1.msra.mxu0 %v6901
    %6944 = vmatprep.subr.mxu0 0.0
    %6945 = vmatpush1.msra.mxu0 %v6900
    %6946 = vmatprep.subr.mxu0 0.0
    %6947 = vmatpush2.msra.mxu0 0.0
    %6948 = vmatprep.subr.mxu0 0.0
    %6949 = vmatpush2.msra.mxu0 0.0
    %6950 = vmatprep.subr.mxu0 0.0
    %6951 = vmatpush2.msra.mxu0 0.0
    %6952 = vmatprep.subr.mxu0 0.0
    %6953 = vmatpush2.msra.mxu0 0.0
    %6954 = vmatprep.subr.mxu0 0.0
    %6955 = vmatpush2.msra.mxu0 0.0
    %6956 = vmatprep.subr.mxu0 0.0
    %6957 = vmatpush2.msra.mxu0 0.0
    %6958 = vmatprep.subr.mxu0 0.0
    %6959 = vmatpush2.msra.mxu0 0.0
    %6960 = vmatprep.subr.mxu0 0.0
    %6961 = vmatpush2.msra.mxu0 0.0
    %6962 = vmatprep.subr.mxu0 0.0
    %6963 = vmatpush2.msra.mxu0 0.0
    %6964 = vmatprep.subr.mxu0 0.0
    %6965 = vmatpush2.msra.mxu0 0.0
    %6966 = vmatprep.subr.mxu0 0.0
    %6967 = vmatpush2.msra.mxu0 0.0
    %6968 = vmatprep.subr.mxu0 0.0
    %6969 = vmatpush2.msra.mxu0 0.0
    %6970 = vmatprep.subr.mxu0 0.0
    %6971 = vmatpush2.msra.mxu0 0.0
    %6972 = vmatprep.subr.mxu0 0.0
    %6973 = vmatpush2.msra.mxu0 0.0
    %6974 = vmatprep.subr.mxu0 0.0
    %6975 = vmatpush2.msra.mxu0 0.0
    %6976 = vmatprep.subr.mxu0 0.0
    %6977 = vmatpush2.msra.mxu0 0.0
    %6978 = vmatprep.mubr.f32.mxu0 0.0
    %6979 = vmatmul.mubr.f32.gmra.mxu0 %v6912
    %v6980 = vpop.f32.mrf.mxu0
    %v6981 = vadd.f32 %v6909, %v6980
    %v6982 = vpop.f32.mrf.mxu0
    %6983 = vdwg.mxu0
    %v6984 = vtanh.pop %v6981
    %v6985 = vxor.u32 %v6981, 2147483648
    %v6986 = vmul.f32 %v6985, 1.442695
    %v6987 = vpow.pop %v6986
    %v6988 = vadd.f32 %v6987, 1.0
    %v6989 = vrcp.pop %v6988
    %v6990 = vmul.f32 1.0, %v6989
    %v6991 = vmax.f32 %v6981, 0.0
    %vm6992 = vcmp.ne.f32.partialorder %v6981, %v6981
    %v6993 = vadd.f32 %v6981, 0.0
    %v6994 = vand.u32 2147483647, %v6981
    %v6995 = vsub.f32 0.0, %v6994
    %v6996 = vmul.f32 %v6995, 1.442695
    %v6997 = vpow.pop %v6996
    %v6998 = vadd.f32 %v6997, 1.0
    %v6999 = vlog2.pop %v6998
    %v7000 = vmul.f32 %v6999, 0.6931472
    %v7001 = vmul.f32 -0.5, %v6997
    %v7002 = vadd.f32 %v7001, 1.0
    %v7003 = vmul.f32 %v7002, %v6997
    %v7004 = vand.u32 2147483647, %v6997
    %vm7005 = vcmp.lt.f32.partialorder %v7004, 0.0004427343
    %v7006 = vsel %vm7005, %v7003, %v7000
    %v7007 = vadd.f32 %v6991, %v7006
    %v7008 = vsel %vm6992, %v6993, %v7007
    %v7009 = vmul.f32 %v6658, %v6658
    %v7010 = vmul.f32 %v6659, %v6659
    %v7011 = vsel %vm57, %v7009, 0.0
    %7012 = vadd.xlane.f32.xlu0 %v7011
    %v7013 = vpop.xlane.xlu0 %7012
    %v7014 = vsel %vm57, %v7010, 0.0
    %7015 = vadd.xlane.f32.xlu0 %v7014
    %v7016 = vpop.xlane.xlu0 %7015
    %v7018 = vsel %vm57, %v6984, 0
    %v7021 = vsel %vm57, %v6658, 0
    %v7024 = vsel %vm57, %v6659, 0
    %7026 = vmatprep.subr.mxu0 0.0
    %7027 = vmatpush1.xpose.msra.mxu0 0.0
    %7028 = vmatprep.subr.mxu0 0.0
    %7029 = vmatpush1.xpose.msra.mxu0 0.0
    %7030 = vmatprep.subr.mxu0 0.0
    %7031 = vmatpush1.xpose.msra.mxu0 0.0
    %7032 = vmatprep.subr.mxu0 0.0
    %7033 = vmatpush1.xpose.msra.mxu0 0.0
    %7034 = vmatprep.subr.mxu0 0.0
    %7035 = vmatpush1.xpose.msra.mxu0 0.0
    %7036 = vmatprep.subr.mxu0 0.0
    %7037 = vmatpush1.xpose.msra.mxu0 0.0
    %7038 = vmatprep.subr.mxu0 0.0
    %7039 = vmatpush1.xpose.msra.mxu0 0.0
    %7040 = vmatprep.subr.mxu0 0.0
    %7041 = vmatpush1.xpose.msra.mxu0 0.0
    %7042 = vmatprep.subr.mxu0 0.0
    %7043 = vmatpush1.xpose.msra.mxu0 0.0
    %7044 = vmatprep.subr.mxu0 0.0
    %7045 = vmatpush1.xpose.msra.mxu0 0.0
    %7046 = vmatprep.subr.mxu0 0.0
    %7047 = vmatpush1.xpose.msra.mxu0 0.0
    %7048 = vmatprep.subr.mxu0 0.0
    %7049 = vmatpush1.xpose.msra.mxu0 0.0
    %7050 = vmatprep.subr.mxu0 0.0
    %7051 = vmatpush1.xpose.msra.mxu0 0.0
    %7052 = vmatprep.subr.mxu0 0.0
    %7053 = vmatpush1.xpose.msra.mxu0 0.0
    %7054 = vmatprep.subr.mxu0 0.0
    %7055 = vmatpush1.xpose.msra.mxu0 %v7024
    %7056 = vmatprep.subr.mxu0 0.0
    %7057 = vmatpush1.xpose.msra.mxu0 %v7021
    %7058 = vmatprep.subr.mxu0 0.0
    %7059 = vmatpush2.xpose.msra.mxu0 0.0
    %7060 = vmatprep.subr.mxu0 0.0
    %7061 = vmatpush2.xpose.msra.mxu0 0.0
    %7062 = vmatprep.subr.mxu0 0.0
    %7063 = vmatpush2.xpose.msra.mxu0 0.0
    %7064 = vmatprep.subr.mxu0 0.0
    %7065 = vmatpush2.xpose.msra.mxu0 0.0
    %7066 = vmatprep.subr.mxu0 0.0
    %7067 = vmatpush2.xpose.msra.mxu0 0.0
    %7068 = vmatprep.subr.mxu0 0.0
    %7069 = vmatpush2.xpose.msra.mxu0 0.0
    %7070 = vmatprep.subr.mxu0 0.0
    %7071 = vmatpush2.xpose.msra.mxu0 0.0
    %7072 = vmatprep.subr.mxu0 0.0
    %7073 = vmatpush2.xpose.msra.mxu0 0.0
    %7074 = vmatprep.subr.mxu0 0.0
    %7075 = vmatpush2.xpose.msra.mxu0 0.0
    %7076 = vmatprep.subr.mxu0 0.0
    %7077 = vmatpush2.xpose.msra.mxu0 0.0
    %7078 = vmatprep.subr.mxu0 0.0
    %7079 = vmatpush2.xpose.msra.mxu0 0.0
    %7080 = vmatprep.subr.mxu0 0.0
    %7081 = vmatpush2.xpose.msra.mxu0 0.0
    %7082 = vmatprep.subr.mxu0 0.0
    %7083 = vmatpush2.xpose.msra.mxu0 0.0
    %7084 = vmatprep.subr.mxu0 0.0
    %7085 = vmatpush2.xpose.msra.mxu0 0.0
    %7086 = vmatprep.subr.mxu0 0.0
    %7087 = vmatpush2.xpose.msra.mxu0 0.0
    %7088 = vmatprep.subr.mxu0 0.0
    %7089 = vmatpush2.xpose.msra.mxu0 0.0
    %7090 = vmatprep.mubr.f32.mxu0 0.0
    %7091 = vmatmul.mubr.f32.gmra.mxu0 %v7018
    %v7092 = vpop.f32.mrf.mxu0
    %v7093 = vadd.f32 0.0, %v7092
    %v7094 = vpop.f32.mrf.mxu0
    %7095 = vdwg.mxu0
    %v7096 = vmul.f32 %v6984, %v6984
    %v7097 = vsel %vm781, %v7096, 0.0
    %7098 = vadd.xlane.f32.xlu0 %v7097
    %v7099 = vpop.xlane.xlu0 %7098
    %v7101 = vsel %vm785, %v7099, 0
    %v7104 = vsel %vm785, %v7013, 0
    %v7107 = vsel %vm785, %v7016, 0
    %7109 = vmatprep.subr.mxu0 0.0
    %7110 = vmatpush1.xpose.msra.mxu0 0.0
    %7111 = vmatprep.subr.mxu0 0.0
    %7112 = vmatpush1.xpose.msra.mxu0 0.0
    %7113 = vmatprep.subr.mxu0 0.0
    %7114 = vmatpush1.xpose.msra.mxu0 0.0
    %7115 = vmatprep.subr.mxu0 0.0
    %7116 = vmatpush1.xpose.msra.mxu0 0.0
    %7117 = vmatprep.subr.mxu0 0.0
    %7118 = vmatpush1.xpose.msra.mxu0 0.0
    %7119 = vmatprep.subr.mxu0 0.0
    %7120 = vmatpush1.xpose.msra.mxu0 0.0
    %7121 = vmatprep.subr.mxu0 0.0
    %7122 = vmatpush1.xpose.msra.mxu0 0.0
    %7123 = vmatprep.subr.mxu0 0.0
    %7124 = vmatpush1.xpose.msra.mxu0 0.0
    %7125 = vmatprep.subr.mxu0 0.0
    %7126 = vmatpush1.xpose.msra.mxu0 0.0
    %7127 = vmatprep.subr.mxu0 0.0
    %7128 = vmatpush1.xpose.msra.mxu0 0.0
    %7129 = vmatprep.subr.mxu0 0.0
    %7130 = vmatpush1.xpose.msra.mxu0 0.0
    %7131 = vmatprep.subr.mxu0 0.0
    %7132 = vmatpush1.xpose.msra.mxu0 0.0
    %7133 = vmatprep.subr.mxu0 0.0
    %7134 = vmatpush1.xpose.msra.mxu0 0.0
    %7135 = vmatprep.subr.mxu0 0.0
    %7136 = vmatpush1.xpose.msra.mxu0 0.0
    %7137 = vmatprep.subr.mxu0 0.0
    %7138 = vmatpush1.xpose.msra.mxu0 %v7107
    %7139 = vmatprep.subr.mxu0 0.0
    %7140 = vmatpush1.xpose.msra.mxu0 %v7104
    %7141 = vmatprep.subr.mxu0 0.0
    %7142 = vmatpush2.xpose.msra.mxu0 0.0
    %7143 = vmatprep.subr.mxu0 0.0
    %7144 = vmatpush2.xpose.msra.mxu0 0.0
    %7145 = vmatprep.subr.mxu0 0.0
    %7146 = vmatpush2.xpose.msra.mxu0 0.0
    %7147 = vmatprep.subr.mxu0 0.0
    %7148 = vmatpush2.xpose.msra.mxu0 0.0
    %7149 = vmatprep.subr.mxu0 0.0
    %7150 = vmatpush2.xpose.msra.mxu0 0.0
    %7151 = vmatprep.subr.mxu0 0.0
    %7152 = vmatpush2.xpose.msra.mxu0 0.0
    %7153 = vmatprep.subr.mxu0 0.0
    %7154 = vmatpush2.xpose.msra.mxu0 0.0
    %7155 = vmatprep.subr.mxu0 0.0
    %7156 = vmatpush2.xpose.msra.mxu0 0.0
    %7157 = vmatprep.subr.mxu0 0.0
    %7158 = vmatpush2.xpose.msra.mxu0 0.0
    %7159 = vmatprep.subr.mxu0 0.0
    %7160 = vmatpush2.xpose.msra.mxu0 0.0
    %7161 = vmatprep.subr.mxu0 0.0
    %7162 = vmatpush2.xpose.msra.mxu0 0.0
    %7163 = vmatprep.subr.mxu0 0.0
    %7164 = vmatpush2.xpose.msra.mxu0 0.0
    %7165 = vmatprep.subr.mxu0 0.0
    %7166 = vmatpush2.xpose.msra.mxu0 0.0
    %7167 = vmatprep.subr.mxu0 0.0
    %7168 = vmatpush2.xpose.msra.mxu0 0.0
    %7169 = vmatprep.subr.mxu0 0.0
    %7170 = vmatpush2.xpose.msra.mxu0 0.0
    %7171 = vmatprep.subr.mxu0 0.0
    %7172 = vmatpush2.xpose.msra.mxu0 0.0
    %7173 = vmatprep.mubr.f32.mxu0 0.0
    %7174 = vmatmul.mubr.f32.gmra.mxu0 %v7101
    %v7175 = vpop.f32.mrf.mxu0
    %v7176 = vadd.f32 0.0, %v7175
    %v7177 = vpop.f32.mrf.mxu0
    %7178 = vdwg.mxu0
    %v7179 = vrsqrt.pop %v7176
    %v7180 = vmul.f32 %v7176, %v7179
    %vm7181 = vcmp.eq.f32.partialorder %v7176, inf
    %v7182 = vsel %vm7181, %v7176, %v7180
    %vm7183 = vcmp.eq.f32.partialorder %v7176, 0.0
    %v7184 = vand.u32 %v7176, 2147483648
    %v7185 = vsel %vm7183, %v7184, %v7182
    %v7186 = vadd.f32 %v7185, 1e-08
    %v7187 = vrcp.pop %v7186
    %v7188 = vmul.f32 %v7093, %v7187
    %7190 = vset.pattern.permute.xlu0 72
    %7191 = vperm.xlu0 %7190, %v7008
    %v7192 = vpop.permute.xlu0 %7191
    %v7194 = vmul.f32 %v7192, %v7188
    %v7195 = vsel %vm881, %v7194, -inf
    %7196 = vmax.xlane.f32.xlu0 %v7195
    %v7197 = vpop.xlane.xlu0 %7196
    %v7198 = vsub.f32 %v7194, %v7197
    %v7199 = vmul.f32 %v7198, 1.442695
    %v7200 = vpow.pop %v7199
    %v7201 = vsel %vm881, %v7200, 0.0
    %7202 = vadd.xlane.f32.xlu0 %v7201
    %v7203 = vpop.xlane.xlu0 %7202
    %v7204 = vrcp.pop %v7203
    %v7205 = vmul.f32 %v7200, %v7204
    %7206 = vrot.lane.b32.xlu0 %v6984, 96
    %v7207 = vpop.permute.xlu0 %7206
    %v7208 = vsel %vm57, %v7207, 0
    %7210 = vmatprep.subr.mxu0 0.0
    %7211 = vmatpush1.xpose.msra.mxu0 0.0
    %7212 = vmatprep.subr.mxu0 0.0
    %7213 = vmatpush1.xpose.msra.mxu0 0.0
    %7214 = vmatprep.subr.mxu0 0.0
    %7215 = vmatpush1.xpose.msra.mxu0 0.0
    %7216 = vmatprep.subr.mxu0 0.0
    %7217 = vmatpush1.xpose.msra.mxu0 0.0
    %7218 = vmatprep.subr.mxu0 0.0
    %7219 = vmatpush1.xpose.msra.mxu0 0.0
    %7220 = vmatprep.subr.mxu0 0.0
    %7221 = vmatpush1.xpose.msra.mxu0 0.0
    %7222 = vmatprep.subr.mxu0 0.0
    %7223 = vmatpush1.xpose.msra.mxu0 0.0
    %7224 = vmatprep.subr.mxu0 0.0
    %7225 = vmatpush1.xpose.msra.mxu0 0.0
    %7226 = vmatprep.subr.mxu0 0.0
    %7227 = vmatpush1.xpose.msra.mxu0 0.0
    %7228 = vmatprep.subr.mxu0 0.0
    %7229 = vmatpush1.xpose.msra.mxu0 0.0
    %7230 = vmatprep.subr.mxu0 0.0
    %7231 = vmatpush1.xpose.msra.mxu0 0.0
    %7232 = vmatprep.subr.mxu0 0.0
    %7233 = vmatpush1.xpose.msra.mxu0 0.0
    %7234 = vmatprep.subr.mxu0 0.0
    %7235 = vmatpush1.xpose.msra.mxu0 0.0
    %7236 = vmatprep.subr.mxu0 0.0
    %7237 = vmatpush1.xpose.msra.mxu0 0.0
    %7238 = vmatprep.subr.mxu0 0.0
    %7239 = vmatpush1.xpose.msra.mxu0 %v7024
    %7240 = vmatprep.subr.mxu0 0.0
    %7241 = vmatpush1.xpose.msra.mxu0 %v7021
    %7242 = vmatprep.subr.mxu0 0.0
    %7243 = vmatpush2.xpose.msra.mxu0 0.0
    %7244 = vmatprep.subr.mxu0 0.0
    %7245 = vmatpush2.xpose.msra.mxu0 0.0
    %7246 = vmatprep.subr.mxu0 0.0
    %7247 = vmatpush2.xpose.msra.mxu0 0.0
    %7248 = vmatprep.subr.mxu0 0.0
    %7249 = vmatpush2.xpose.msra.mxu0 0.0
    %7250 = vmatprep.subr.mxu0 0.0
    %7251 = vmatpush2.xpose.msra.mxu0 0.0
    %7252 = vmatprep.subr.mxu0 0.0
    %7253 = vmatpush2.xpose.msra.mxu0 0.0
    %7254 = vmatprep.subr.mxu0 0.0
    %7255 = vmatpush2.xpose.msra.mxu0 0.0
    %7256 = vmatprep.subr.mxu0 0.0
    %7257 = vmatpush2.xpose.msra.mxu0 0.0
    %7258 = vmatprep.subr.mxu0 0.0
    %7259 = vmatpush2.xpose.msra.mxu0 0.0
    %7260 = vmatprep.subr.mxu0 0.0
    %7261 = vmatpush2.xpose.msra.mxu0 0.0
    %7262 = vmatprep.subr.mxu0 0.0
    %7263 = vmatpush2.xpose.msra.mxu0 0.0
    %7264 = vmatprep.subr.mxu0 0.0
    %7265 = vmatpush2.xpose.msra.mxu0 0.0
    %7266 = vmatprep.subr.mxu0 0.0
    %7267 = vmatpush2.xpose.msra.mxu0 0.0
    %7268 = vmatprep.subr.mxu0 0.0
    %7269 = vmatpush2.xpose.msra.mxu0 0.0
    %7270 = vmatprep.subr.mxu0 0.0
    %7271 = vmatpush2.xpose.msra.mxu0 0.0
    %7272 = vmatprep.subr.mxu0 0.0
    %7273 = vmatpush2.xpose.msra.mxu0 0.0
    %7274 = vmatprep.mubr.f32.mxu0 0.0
    %7275 = vmatmul.mubr.f32.gmra.mxu0 %v7208
    %v7276 = vpop.f32.mrf.mxu0
    %v7277 = vadd.f32 0.0, %v7276
    %v7278 = vpop.f32.mrf.mxu0
    %7279 = vdwg.mxu0
    %7281 = vrot.lane.b32.xlu0 %v7096, 96
    %v7282 = vpop.permute.xlu0 %7281
    %v7284 = vsel %vm781, %v7282, 0.0
    %7285 = vadd.xlane.f32.xlu0 %v7284
    %v7286 = vpop.xlane.xlu0 %7285
    %v7288 = vsel %vm785, %v7286, 0
    %7290 = vmatprep.subr.mxu0 0.0
    %7291 = vmatpush1.xpose.msra.mxu0 0.0
    %7292 = vmatprep.subr.mxu0 0.0
    %7293 = vmatpush1.xpose.msra.mxu0 0.0
    %7294 = vmatprep.subr.mxu0 0.0
    %7295 = vmatpush1.xpose.msra.mxu0 0.0
    %7296 = vmatprep.subr.mxu0 0.0
    %7297 = vmatpush1.xpose.msra.mxu0 0.0
    %7298 = vmatprep.subr.mxu0 0.0
    %7299 = vmatpush1.xpose.msra.mxu0 0.0
    %7300 = vmatprep.subr.mxu0 0.0
    %7301 = vmatpush1.xpose.msra.mxu0 0.0
    %7302 = vmatprep.subr.mxu0 0.0
    %7303 = vmatpush1.xpose.msra.mxu0 0.0
    %7304 = vmatprep.subr.mxu0 0.0
    %7305 = vmatpush1.xpose.msra.mxu0 0.0
    %7306 = vmatprep.subr.mxu0 0.0
    %7307 = vmatpush1.xpose.msra.mxu0 0.0
    %7308 = vmatprep.subr.mxu0 0.0
    %7309 = vmatpush1.xpose.msra.mxu0 0.0
    %7310 = vmatprep.subr.mxu0 0.0
    %7311 = vmatpush1.xpose.msra.mxu0 0.0
    %7312 = vmatprep.subr.mxu0 0.0
    %7313 = vmatpush1.xpose.msra.mxu0 0.0
    %7314 = vmatprep.subr.mxu0 0.0
    %7315 = vmatpush1.xpose.msra.mxu0 0.0
    %7316 = vmatprep.subr.mxu0 0.0
    %7317 = vmatpush1.xpose.msra.mxu0 0.0
    %7318 = vmatprep.subr.mxu0 0.0
    %7319 = vmatpush1.xpose.msra.mxu0 %v7107
    %7320 = vmatprep.subr.mxu0 0.0
    %7321 = vmatpush1.xpose.msra.mxu0 %v7104
    %7322 = vmatprep.subr.mxu0 0.0
    %7323 = vmatpush2.xpose.msra.mxu0 0.0
    %7324 = vmatprep.subr.mxu0 0.0
    %7325 = vmatpush2.xpose.msra.mxu0 0.0
    %7326 = vmatprep.subr.mxu0 0.0
    %7327 = vmatpush2.xpose.msra.mxu0 0.0
    %7328 = vmatprep.subr.mxu0 0.0
    %7329 = vmatpush2.xpose.msra.mxu0 0.0
    %7330 = vmatprep.subr.mxu0 0.0
    %7331 = vmatpush2.xpose.msra.mxu0 0.0
    %7332 = vmatprep.subr.mxu0 0.0
    %7333 = vmatpush2.xpose.msra.mxu0 0.0
    %7334 = vmatprep.subr.mxu0 0.0
    %7335 = vmatpush2.xpose.msra.mxu0 0.0
    %7336 = vmatprep.subr.mxu0 0.0
    %7337 = vmatpush2.xpose.msra.mxu0 0.0
    %7338 = vmatprep.subr.mxu0 0.0
    %7339 = vmatpush2.xpose.msra.mxu0 0.0
    %7340 = vmatprep.subr.mxu0 0.0
    %7341 = vmatpush2.xpose.msra.mxu0 0.0
    %7342 = vmatprep.subr.mxu0 0.0
    %7343 = vmatpush2.xpose.msra.mxu0 0.0
    %7344 = vmatprep.subr.mxu0 0.0
    %7345 = vmatpush2.xpose.msra.mxu0 0.0
    %7346 = vmatprep.subr.mxu0 0.0
    %7347 = vmatpush2.xpose.msra.mxu0 0.0
    %7348 = vmatprep.subr.mxu0 0.0
    %7349 = vmatpush2.xpose.msra.mxu0 0.0
    %7350 = vmatprep.subr.mxu0 0.0
    %7351 = vmatpush2.xpose.msra.mxu0 0.0
    %7352 = vmatprep.subr.mxu0 0.0
    %7353 = vmatpush2.xpose.msra.mxu0 0.0
    %7354 = vmatprep.mubr.f32.mxu0 0.0
    %7355 = vmatmul.mubr.f32.gmra.mxu0 %v7288
    %v7356 = vpop.f32.mrf.mxu0
    %v7357 = vadd.f32 0.0, %v7356
    %v7358 = vpop.f32.mrf.mxu0
    %7359 = vdwg.mxu0
    %v7360 = vrsqrt.pop %v7357
    %v7361 = vmul.f32 %v7357, %v7360
    %vm7362 = vcmp.eq.f32.partialorder %v7357, inf
    %v7363 = vsel %vm7362, %v7357, %v7361
    %vm7364 = vcmp.eq.f32.partialorder %v7357, 0.0
    %v7365 = vand.u32 %v7357, 2147483648
    %v7366 = vsel %vm7364, %v7365, %v7363
    %v7367 = vadd.f32 %v7366, 1e-08
    %v7368 = vrcp.pop %v7367
    %v7369 = vmul.f32 %v7277, %v7368
    %7370 = vset.pattern.permute.xlu0 73
    %7371 = vperm.xlu0 %7370, %v7008
    %v7372 = vpop.permute.xlu0 %7371
    %v7374 = vmul.f32 %v7372, %v7369
    %v7375 = vsel %vm881, %v7374, -inf
    %7376 = vmax.xlane.f32.xlu0 %v7375
    %v7377 = vpop.xlane.xlu0 %7376
    %v7378 = vsub.f32 %v7374, %v7377
    %v7379 = vmul.f32 %v7378, 1.442695
    %v7380 = vpow.pop %v7379
    %v7381 = vsel %vm881, %v7380, 0.0
    %7382 = vadd.xlane.f32.xlu0 %v7381
    %v7383 = vpop.xlane.xlu0 %7382
    %v7384 = vrcp.pop %v7383
    %v7385 = vmul.f32 %v7380, %v7384
    %v7386 = vsel %vm57, %v6658, 0.0
    %v7387 = vsel %vm57, %v6659, 0.0
    %v7388 = vadd.f32 %v7386, %v7387
    %v7389 = vrot.slane %v7388, 4
    %v7390 = vadd.f32 %v7388, %v7389
    %v7391 = vrot.slane %v7390, 2
    %v7392 = vadd.f32 %v7390, %v7391
    %v7393 = vrot.slane %v7392, 1
    %v7394 = vadd.f32 %v7392, %v7393
    %v7395 = vmul.f32 %v7394, %v1082
    %v7396 = vsub.f32 %v6658, %v7395
    %v7397 = vsub.f32 %v6659, %v7395
    %v7398 = vmul.f32 %v7396, %v7396
    %v7399 = vmul.f32 %v7397, %v7397
    %v7400 = vsel %vm57, %v7398, 0.0
    %v7401 = vsel %vm57, %v7399, 0.0
    %v7402 = vadd.f32 %v7400, %v7401
    %v7403 = vrot.slane %v7402, 4
    %v7404 = vadd.f32 %v7402, %v7403
    %v7405 = vrot.slane %v7404, 2
    %v7406 = vadd.f32 %v7404, %v7405
    %v7407 = vrot.slane %v7406, 1
    %v7408 = vadd.f32 %v7406, %v7407
    %v7409 = vmul.f32 %v7408, %v1082
    %v7410 = vadd.f32 %v7409, 1e-05
    %v7411 = vrsqrt.pop %v7410
    %v7412 = vmul.f32 %v7396, %v7411
    %v7413 = vmul.f32 %v7397, %v7411
    %7415 = vrot.lane.b32.xlu0 %v6990, 64
    %v7416 = vpop.permute.xlu0 %7415
    %s7418 = scalar_lea.vmem [#allocation2], 12
    %7419 = vst.msk [vmem:[%s7418] sm:$0x3] %vm1106, %v7416
    %v7420 = vld [vmem:[%s0] sm:$0x3]
    %v7421 = vld [vmem:[%s5] sm:$0xff]
    %v7422 = vld [vmem:[%s5 + $0x8] sm:$0xff]
    %v7423 = vld [vmem:[%s5 + $0x10] sm:$0xff]
    %v7424 = vld [vmem:[%s5 + $0x18] sm:$0xff]
    %v7425 = vld [vmem:[%s6] sm:$0x1]
    %v7427 = vlaneseq
    %v7428 = vshrl.u32 %v7427, 7
    %v7429 = vsub.s32 0, %v7428
    %v7430 = vrot.slane %v7425, %v7429
    %7432 = vmatprep.subr.mxu0 0.0
    %7433 = vmatpush1.msra.mxu0 0.0
    %7434 = vmatprep.subr.mxu0 0.0
    %7435 = vmatpush1.msra.mxu0 0.0
    %7436 = vmatprep.subr.mxu0 0.0
    %7437 = vmatpush1.msra.mxu0 0.0
    %7438 = vmatprep.subr.mxu0 0.0
    %7439 = vmatpush1.msra.mxu0 0.0
    %7440 = vmatprep.subr.mxu0 0.0
    %7441 = vmatpush1.msra.mxu0 0.0
    %7442 = vmatprep.subr.mxu0 0.0
    %7443 = vmatpush1.msra.mxu0 0.0
    %7444 = vmatprep.subr.mxu0 0.0
    %7445 = vmatpush1.msra.mxu0 0.0
    %7446 = vmatprep.subr.mxu0 0.0
    %7447 = vmatpush1.msra.mxu0 0.0
    %7448 = vmatprep.subr.mxu0 0.0
    %7449 = vmatpush1.msra.mxu0 0.0
    %7450 = vmatprep.subr.mxu0 0.0
    %7451 = vmatpush1.msra.mxu0 0.0
    %7452 = vmatprep.subr.mxu0 0.0
    %7453 = vmatpush1.msra.mxu0 0.0
    %7454 = vmatprep.subr.mxu0 0.0
    %7455 = vmatpush1.msra.mxu0 0.0
    %7456 = vmatprep.subr.mxu0 0.0
    %7457 = vmatpush1.msra.mxu0 %v7424
    %7458 = vmatprep.subr.mxu0 0.0
    %7459 = vmatpush1.msra.mxu0 %v7423
    %7460 = vmatprep.subr.mxu0 0.0
    %7461 = vmatpush1.msra.mxu0 %v7422
    %7462 = vmatprep.subr.mxu0 0.0
    %7463 = vmatpush1.msra.mxu0 %v7421
    %7464 = vmatprep.subr.mxu0 0.0
    %7465 = vmatpush2.msra.mxu0 0.0
    %7466 = vmatprep.subr.mxu0 0.0
    %7467 = vmatpush2.msra.mxu0 0.0
    %7468 = vmatprep.subr.mxu0 0.0
    %7469 = vmatpush2.msra.mxu0 0.0
    %7470 = vmatprep.subr.mxu0 0.0
    %7471 = vmatpush2.msra.mxu0 0.0
    %7472 = vmatprep.subr.mxu0 0.0
    %7473 = vmatpush2.msra.mxu0 0.0
    %7474 = vmatprep.subr.mxu0 0.0
    %7475 = vmatpush2.msra.mxu0 0.0
    %7476 = vmatprep.subr.mxu0 0.0
    %7477 = vmatpush2.msra.mxu0 0.0
    %7478 = vmatprep.subr.mxu0 0.0
    %7479 = vmatpush2.msra.mxu0 0.0
    %7480 = vmatprep.subr.mxu0 0.0
    %7481 = vmatpush2.msra.mxu0 0.0
    %7482 = vmatprep.subr.mxu0 0.0
    %7483 = vmatpush2.msra.mxu0 0.0
    %7484 = vmatprep.subr.mxu0 0.0
    %7485 = vmatpush2.msra.mxu0 0.0
    %7486 = vmatprep.subr.mxu0 0.0
    %7487 = vmatpush2.msra.mxu0 0.0
    %7488 = vmatprep.subr.mxu0 0.0
    %7489 = vmatpush2.msra.mxu0 0.0
    %7490 = vmatprep.subr.mxu0 0.0
    %7491 = vmatpush2.msra.mxu0 0.0
    %7492 = vmatprep.subr.mxu0 0.0
    %7493 = vmatpush2.msra.mxu0 0.0
    %7494 = vmatprep.subr.mxu0 0.0
    %7495 = vmatpush2.msra.mxu0 0.0
    %7496 = vmatprep.mubr.f32.mxu0 0.0
    %7497 = vmatmul.mubr.f32.gmra.mxu0 %v4277
    %v7498 = vpop.f32.mrf.mxu0
    %v7499 = vadd.f32 %v7430, %v7498
    %v7500 = vpop.f32.mrf.mxu0
    %7501 = vdwg.mxu0
    %v7502 = vxor.u32 %v7499, 2147483648
    %v7503 = vmul.f32 %v7502, 1.442695
    %v7504 = vpow.pop %v7503
    %v7505 = vadd.f32 %v7504, 1.0
    %v7506 = vrcp.pop %v7505
    %v7507 = vmul.f32 1.0, %v7506
    %v7508 = vtanh.pop %v7499
    %7509 = vxpose.xlu0.b32.start [1/16] %v7205, 128
    %7510 = vxpose.xlu0.b32.cont [2/16] 0.0, 128
    %7511 = vxpose.xlu0.b32.cont [3/16] 0.0, 128
    %7512 = vxpose.xlu0.b32.cont [4/16] 0.0, 128
    %7513 = vxpose.xlu0.b32.cont [5/16] 0.0, 128
    %7514 = vxpose.xlu0.b32.cont [6/16] 0.0, 128
    %7515 = vxpose.xlu0.b32.cont [7/16] 0.0, 128
    %7516 = vxpose.xlu0.b32.cont [8/16] 0.0, 128
    %7517 = vxpose.xlu0.b32.cont [9/16] 0.0, 128
    %7518 = vxpose.xlu0.b32.cont [10/16] 0.0, 128
    %7519 = vxpose.xlu0.b32.cont [11/16] 0.0, 128
    %7520 = vxpose.xlu0.b32.cont [12/16] 0.0, 128
    %7521 = vxpose.xlu0.b32.cont [13/16] 0.0, 128
    %7522 = vxpose.xlu0.b32.cont [14/16] 0.0, 128
    %7523 = vxpose.xlu0.b32.cont [15/16] 0.0, 128
    %7524 = vxpose.xlu0.b32.end [16/16] 0.0, 128
    %v7525 = vpop.trf.xlu0
    %v7526 = vpop.trf.xlu0
    %v7527 = vpop.trf.xlu0
    %v7528 = vpop.trf.xlu0
    %v7529 = vpop.trf.xlu0
    %v7530 = vpop.trf.xlu0
    %v7531 = vpop.trf.xlu0
    %v7532 = vpop.trf.xlu0
    %v7533 = vpop.trf.xlu0
    %v7534 = vpop.trf.xlu0
    %v7535 = vpop.trf.xlu0
    %v7536 = vpop.trf.xlu0
    %v7537 = vpop.trf.xlu0
    %v7538 = vpop.trf.xlu0
    %v7539 = vpop.trf.xlu0
    %v7540 = vpop.trf.xlu0
    %v7542 = vsel %vm170, %v7525, 0
    %v7545 = vsel %vm170, %v7526, 0
    %v7548 = vsel %vm177, %v7507, 0
    %7550 = vmatprep.subr.mxu0 0.0
    %7551 = vmatpush1.msra.mxu0 0.0
    %7552 = vmatprep.subr.mxu0 0.0
    %7553 = vmatpush1.msra.mxu0 0.0
    %7554 = vmatprep.subr.mxu0 0.0
    %7555 = vmatpush1.msra.mxu0 0.0
    %7556 = vmatprep.subr.mxu0 0.0
    %7557 = vmatpush1.msra.mxu0 0.0
    %7558 = vmatprep.subr.mxu0 0.0
    %7559 = vmatpush1.msra.mxu0 0.0
    %7560 = vmatprep.subr.mxu0 0.0
    %7561 = vmatpush1.msra.mxu0 0.0
    %7562 = vmatprep.subr.mxu0 0.0
    %7563 = vmatpush1.msra.mxu0 0.0
    %7564 = vmatprep.subr.mxu0 0.0
    %7565 = vmatpush1.msra.mxu0 0.0
    %7566 = vmatprep.subr.mxu0 0.0
    %7567 = vmatpush1.msra.mxu0 0.0
    %7568 = vmatprep.subr.mxu0 0.0
    %7569 = vmatpush1.msra.mxu0 0.0
    %7570 = vmatprep.subr.mxu0 0.0
    %7571 = vmatpush1.msra.mxu0 0.0
    %7572 = vmatprep.subr.mxu0 0.0
    %7573 = vmatpush1.msra.mxu0 0.0
    %7574 = vmatprep.subr.mxu0 0.0
    %7575 = vmatpush1.msra.mxu0 0.0
    %7576 = vmatprep.subr.mxu0 0.0
    %7577 = vmatpush1.msra.mxu0 0.0
    %7578 = vmatprep.subr.mxu0 0.0
    %7579 = vmatpush1.msra.mxu0 0.0
    %7580 = vmatprep.subr.mxu0 0.0
    %7581 = vmatpush1.msra.mxu0 %v7548
    %7582 = vmatprep.subr.mxu0 0.0
    %7583 = vmatpush2.msra.mxu0 0.0
    %7584 = vmatprep.subr.mxu0 0.0
    %7585 = vmatpush2.msra.mxu0 0.0
    %7586 = vmatprep.subr.mxu0 0.0
    %7587 = vmatpush2.msra.mxu0 0.0
    %7588 = vmatprep.subr.mxu0 0.0
    %7589 = vmatpush2.msra.mxu0 0.0
    %7590 = vmatprep.subr.mxu0 0.0
    %7591 = vmatpush2.msra.mxu0 0.0
    %7592 = vmatprep.subr.mxu0 0.0
    %7593 = vmatpush2.msra.mxu0 0.0
    %7594 = vmatprep.subr.mxu0 0.0
    %7595 = vmatpush2.msra.mxu0 0.0
    %7596 = vmatprep.subr.mxu0 0.0
    %7597 = vmatpush2.msra.mxu0 0.0
    %7598 = vmatprep.subr.mxu0 0.0
    %7599 = vmatpush2.msra.mxu0 0.0
    %7600 = vmatprep.subr.mxu0 0.0
    %7601 = vmatpush2.msra.mxu0 0.0
    %7602 = vmatprep.subr.mxu0 0.0
    %7603 = vmatpush2.msra.mxu0 0.0
    %7604 = vmatprep.subr.mxu0 0.0
    %7605 = vmatpush2.msra.mxu0 0.0
    %7606 = vmatprep.subr.mxu0 0.0
    %7607 = vmatpush2.msra.mxu0 0.0
    %7608 = vmatprep.subr.mxu0 0.0
    %7609 = vmatpush2.msra.mxu0 0.0
    %7610 = vmatprep.subr.mxu0 0.0
    %7611 = vmatpush2.msra.mxu0 0.0
    %7612 = vmatprep.subr.mxu0 0.0
    %7613 = vmatpush2.msra.mxu0 0.0
    %7614 = vmatprep.mubr.f32.mxu0 0.0
    %7615 = vmatmul.mubr.f32.gmra.mxu0 %v7542
    %v7616 = vpop.f32.mrf.mxu0
    %v7617 = vadd.f32 0.0, %v7616
    %v7618 = vpop.f32.mrf.mxu0
    %7619 = vmatprep.mubr.f32.mxu0 0.0
    %7620 = vmatmul.mubr.f32.gmra.mxu0 %v7545
    %v7621 = vpop.f32.mrf.mxu0
    %v7622 = vadd.f32 0.0, %v7621
    %v7623 = vpop.f32.mrf.mxu0
    %7624 = vdwg.mxu0
    %7626 = vrot.lane.b32.xlu0 %v7508, 96
    %v7627 = vpop.permute.xlu0 %7626
    %v7628 = vsel %vm177, %v7627, 0
    %7630 = vmatprep.subr.mxu0 0.0
    %7631 = vmatpush1.msra.mxu0 0.0
    %7632 = vmatprep.subr.mxu0 0.0
    %7633 = vmatpush1.msra.mxu0 0.0
    %7634 = vmatprep.subr.mxu0 0.0
    %7635 = vmatpush1.msra.mxu0 0.0
    %7636 = vmatprep.subr.mxu0 0.0
    %7637 = vmatpush1.msra.mxu0 0.0
    %7638 = vmatprep.subr.mxu0 0.0
    %7639 = vmatpush1.msra.mxu0 0.0
    %7640 = vmatprep.subr.mxu0 0.0
    %7641 = vmatpush1.msra.mxu0 0.0
    %7642 = vmatprep.subr.mxu0 0.0
    %7643 = vmatpush1.msra.mxu0 0.0
    %7644 = vmatprep.subr.mxu0 0.0
    %7645 = vmatpush1.msra.mxu0 0.0
    %7646 = vmatprep.subr.mxu0 0.0
    %7647 = vmatpush1.msra.mxu0 0.0
    %7648 = vmatprep.subr.mxu0 0.0
    %7649 = vmatpush1.msra.mxu0 0.0
    %7650 = vmatprep.subr.mxu0 0.0
    %7651 = vmatpush1.msra.mxu0 0.0
    %7652 = vmatprep.subr.mxu0 0.0
    %7653 = vmatpush1.msra.mxu0 0.0
    %7654 = vmatprep.subr.mxu0 0.0
    %7655 = vmatpush1.msra.mxu0 0.0
    %7656 = vmatprep.subr.mxu0 0.0
    %7657 = vmatpush1.msra.mxu0 0.0
    %7658 = vmatprep.subr.mxu0 0.0
    %7659 = vmatpush1.msra.mxu0 0.0
    %7660 = vmatprep.subr.mxu0 0.0
    %7661 = vmatpush1.msra.mxu0 %v7628
    %7662 = vmatprep.subr.mxu0 0.0
    %7663 = vmatpush2.msra.mxu0 0.0
    %7664 = vmatprep.subr.mxu0 0.0
    %7665 = vmatpush2.msra.mxu0 0.0
    %7666 = vmatprep.subr.mxu0 0.0
    %7667 = vmatpush2.msra.mxu0 0.0
    %7668 = vmatprep.subr.mxu0 0.0
    %7669 = vmatpush2.msra.mxu0 0.0
    %7670 = vmatprep.subr.mxu0 0.0
    %7671 = vmatpush2.msra.mxu0 0.0
    %7672 = vmatprep.subr.mxu0 0.0
    %7673 = vmatpush2.msra.mxu0 0.0
    %7674 = vmatprep.subr.mxu0 0.0
    %7675 = vmatpush2.msra.mxu0 0.0
    %7676 = vmatprep.subr.mxu0 0.0
    %7677 = vmatpush2.msra.mxu0 0.0
    %7678 = vmatprep.subr.mxu0 0.0
    %7679 = vmatpush2.msra.mxu0 0.0
    %7680 = vmatprep.subr.mxu0 0.0
    %7681 = vmatpush2.msra.mxu0 0.0
    %7682 = vmatprep.subr.mxu0 0.0
    %7683 = vmatpush2.msra.mxu0 0.0
    %7684 = vmatprep.subr.mxu0 0.0
    %7685 = vmatpush2.msra.mxu0 0.0
    %7686 = vmatprep.subr.mxu0 0.0
    %7687 = vmatpush2.msra.mxu0 0.0
    %7688 = vmatprep.subr.mxu0 0.0
    %7689 = vmatpush2.msra.mxu0 0.0
    %7690 = vmatprep.subr.mxu0 0.0
    %7691 = vmatpush2.msra.mxu0 0.0
    %7692 = vmatprep.subr.mxu0 0.0
    %7693 = vmatpush2.msra.mxu0 0.0
    %7694 = vmatprep.mubr.f32.mxu0 0.0
    %7695 = vmatmul.mubr.f32.gmra.mxu0 %v7542
    %v7696 = vpop.f32.mrf.mxu0
    %v7697 = vadd.f32 0.0, %v7696
    %v7698 = vpop.f32.mrf.mxu0
    %7699 = vmatprep.mubr.f32.mxu0 0.0
    %7700 = vmatmul.mubr.f32.gmra.mxu0 %v7545
    %v7701 = vpop.f32.mrf.mxu0
    %v7702 = vadd.f32 0.0, %v7701
    %v7703 = vpop.f32.mrf.mxu0
    %7704 = vdwg.mxu0
    %v7705 = vsub.f32 1.0, %v7617
    %v7706 = vsub.f32 1.0, %v7622
    %v7707 = vmul.f32 %v7412, %v7705
    %v7708 = vmul.f32 %v7413, %v7706
    %v7709 = vadd.f32 %v7707, %v7697
    %v7710 = vadd.f32 %v7708, %v7702
    %v7712 = vsel %vm342, %v7385, 0
    %7714 = vmatprep.subr.mxu0 0.0
    %7715 = vmatpush1.msra.mxu0 0.0
    %7716 = vmatprep.subr.mxu0 0.0
    %7717 = vmatpush1.msra.mxu0 0.0
    %7718 = vmatprep.subr.mxu0 0.0
    %7719 = vmatpush1.msra.mxu0 0.0
    %7720 = vmatprep.subr.mxu0 0.0
    %7721 = vmatpush1.msra.mxu0 0.0
    %7722 = vmatprep.subr.mxu0 0.0
    %7723 = vmatpush1.msra.mxu0 0.0
    %7724 = vmatprep.subr.mxu0 0.0
    %7725 = vmatpush1.msra.mxu0 0.0
    %7726 = vmatprep.subr.mxu0 0.0
    %7727 = vmatpush1.msra.mxu0 0.0
    %7728 = vmatprep.subr.mxu0 0.0
    %7729 = vmatpush1.msra.mxu0 0.0
    %7730 = vmatprep.subr.mxu0 0.0
    %7731 = vmatpush1.msra.mxu0 0.0
    %7732 = vmatprep.subr.mxu0 0.0
    %7733 = vmatpush1.msra.mxu0 0.0
    %7734 = vmatprep.subr.mxu0 0.0
    %7735 = vmatpush1.msra.mxu0 0.0
    %7736 = vmatprep.subr.mxu0 0.0
    %7737 = vmatpush1.msra.mxu0 0.0
    %7738 = vmatprep.subr.mxu0 0.0
    %7739 = vmatpush1.msra.mxu0 0.0
    %7740 = vmatprep.subr.mxu0 0.0
    %7741 = vmatpush1.msra.mxu0 0.0
    %7742 = vmatprep.subr.mxu0 0.0
    %7743 = vmatpush1.msra.mxu0 %v7710
    %7744 = vmatprep.subr.mxu0 0.0
    %7745 = vmatpush1.msra.mxu0 %v7709
    %7746 = vmatprep.subr.mxu0 0.0
    %7747 = vmatpush2.msra.mxu0 0.0
    %7748 = vmatprep.subr.mxu0 0.0
    %7749 = vmatpush2.msra.mxu0 0.0
    %7750 = vmatprep.subr.mxu0 0.0
    %7751 = vmatpush2.msra.mxu0 0.0
    %7752 = vmatprep.subr.mxu0 0.0
    %7753 = vmatpush2.msra.mxu0 0.0
    %7754 = vmatprep.subr.mxu0 0.0
    %7755 = vmatpush2.msra.mxu0 0.0
    %7756 = vmatprep.subr.mxu0 0.0
    %7757 = vmatpush2.msra.mxu0 0.0
    %7758 = vmatprep.subr.mxu0 0.0
    %7759 = vmatpush2.msra.mxu0 0.0
    %7760 = vmatprep.subr.mxu0 0.0
    %7761 = vmatpush2.msra.mxu0 0.0
    %7762 = vmatprep.subr.mxu0 0.0
    %7763 = vmatpush2.msra.mxu0 0.0
    %7764 = vmatprep.subr.mxu0 0.0
    %7765 = vmatpush2.msra.mxu0 0.0
    %7766 = vmatprep.subr.mxu0 0.0
    %7767 = vmatpush2.msra.mxu0 0.0
    %7768 = vmatprep.subr.mxu0 0.0
    %7769 = vmatpush2.msra.mxu0 0.0
    %7770 = vmatprep.subr.mxu0 0.0
    %7771 = vmatpush2.msra.mxu0 0.0
    %7772 = vmatprep.subr.mxu0 0.0
    %7773 = vmatpush2.msra.mxu0 0.0
    %7774 = vmatprep.subr.mxu0 0.0
    %7775 = vmatpush2.msra.mxu0 0.0
    %7776 = vmatprep.subr.mxu0 0.0
    %7777 = vmatpush2.msra.mxu0 0.0
    %7778 = vmatprep.mubr.f32.mxu0 0.0
    %7779 = vmatmul.mubr.f32.gmra.mxu0 %v7712
    %v7780 = vpop.f32.mrf.mxu0
    %v7781 = vadd.f32 0.0, %v7780
    %v7782 = vpop.f32.mrf.mxu0
    %7783 = vdwg.mxu0
    %v7784 = vld [vmem:[%s3] sm:$0xff]
    %v7785 = vld [vmem:[%s3 + $0x8] sm:$0xff]
    %v7786 = vld [vmem:[%s3 + $0x10] sm:$0xff]
    %v7787 = vld [vmem:[%s3 + $0x18] sm:$0xff]
    %v7788 = vld [vmem:[%s3 + $0x20] sm:$0xff]
    %v7789 = vld [vmem:[%s3 + $0x28] sm:$0xff]
    %v7790 = vld [vmem:[%s3 + $0x30] sm:$0xff]
    %v7791 = vld [vmem:[%s3 + $0x38] sm:$0xff]
    %v7792 = vld [vmem:[%s3 + $0x40] sm:$0xff]
    %v7793 = vld [vmem:[%s3 + $0x48] sm:$0xff]
    %v7794 = vld [vmem:[%s3 + $0x50] sm:$0xff]
    %v7795 = vld [vmem:[%s3 + $0x58] sm:$0xff]
    %v7797 = vsel %vm57, %v7781, 0
    %7799 = vmatprep.subr.mxu0 0.0
    %7800 = vmatpush1.msra.mxu0 0.0
    %7801 = vmatprep.subr.mxu0 0.0
    %7802 = vmatpush1.msra.mxu0 0.0
    %7803 = vmatprep.subr.mxu0 0.0
    %7804 = vmatpush1.msra.mxu0 0.0
    %7805 = vmatprep.subr.mxu0 0.0
    %7806 = vmatpush1.msra.mxu0 0.0
    %7807 = vmatprep.subr.mxu0 0.0
    %7808 = vmatpush1.msra.mxu0 0.0
    %7809 = vmatprep.subr.mxu0 0.0
    %7810 = vmatpush1.msra.mxu0 0.0
    %7811 = vmatprep.subr.mxu0 0.0
    %7812 = vmatpush1.msra.mxu0 0.0
    %7813 = vmatprep.subr.mxu0 0.0
    %7814 = vmatpush1.msra.mxu0 0.0
    %7815 = vmatprep.subr.mxu0 0.0
    %7816 = vmatpush1.msra.mxu0 0.0
    %7817 = vmatprep.subr.mxu0 0.0
    %7818 = vmatpush1.msra.mxu0 0.0
    %7819 = vmatprep.subr.mxu0 0.0
    %7820 = vmatpush1.msra.mxu0 0.0
    %7821 = vmatprep.subr.mxu0 0.0
    %7822 = vmatpush1.msra.mxu0 0.0
    %7823 = vmatprep.subr.mxu0 0.0
    %7824 = vmatpush1.msra.mxu0 %v7795
    %7825 = vmatprep.subr.mxu0 0.0
    %7826 = vmatpush1.msra.mxu0 %v7794
    %7827 = vmatprep.subr.mxu0 0.0
    %7828 = vmatpush1.msra.mxu0 %v7793
    %7829 = vmatprep.subr.mxu0 0.0
    %7830 = vmatpush1.msra.mxu0 %v7792
    %7831 = vmatprep.subr.mxu0 0.0
    %7832 = vmatpush2.msra.mxu0 0.0
    %7833 = vmatprep.subr.mxu0 0.0
    %7834 = vmatpush2.msra.mxu0 0.0
    %7835 = vmatprep.subr.mxu0 0.0
    %7836 = vmatpush2.msra.mxu0 0.0
    %7837 = vmatprep.subr.mxu0 0.0
    %7838 = vmatpush2.msra.mxu0 0.0
    %7839 = vmatprep.subr.mxu0 0.0
    %7840 = vmatpush2.msra.mxu0 0.0
    %7841 = vmatprep.subr.mxu0 0.0
    %7842 = vmatpush2.msra.mxu0 0.0
    %7843 = vmatprep.subr.mxu0 0.0
    %7844 = vmatpush2.msra.mxu0 0.0
    %7845 = vmatprep.subr.mxu0 0.0
    %7846 = vmatpush2.msra.mxu0 0.0
    %7847 = vmatprep.subr.mxu0 0.0
    %7848 = vmatpush2.msra.mxu0 0.0
    %7849 = vmatprep.subr.mxu0 0.0
    %7850 = vmatpush2.msra.mxu0 0.0
    %7851 = vmatprep.subr.mxu0 0.0
    %7852 = vmatpush2.msra.mxu0 0.0
    %7853 = vmatprep.subr.mxu0 0.0
    %7854 = vmatpush2.msra.mxu0 0.0
    %7855 = vmatprep.subr.mxu0 0.0
    %7856 = vmatpush2.msra.mxu0 0.0
    %7857 = vmatprep.subr.mxu0 0.0
    %7858 = vmatpush2.msra.mxu0 0.0
    %7859 = vmatprep.subr.mxu0 0.0
    %7860 = vmatpush2.msra.mxu0 0.0
    %7861 = vmatprep.subr.mxu0 0.0
    %7862 = vmatpush2.msra.mxu0 0.0
    %7863 = vmatprep.mubr.f32.mxu0 0.0
    %7864 = vmatmul.mubr.f32.gmra.mxu0 %v7797
    %v7865 = vpop.f32.mrf.mxu0
    %v7866 = vadd.f32 0.0, %v7865
    %v7867 = vpop.f32.mrf.mxu0
    %7868 = vdwg.mxu0
    %v7870 = vsel %vm501, %v7420, 0
    %7872 = vmatprep.subr.mxu0 0.0
    %7873 = vmatpush1.msra.mxu0 0.0
    %7874 = vmatprep.subr.mxu0 0.0
    %7875 = vmatpush1.msra.mxu0 0.0
    %7876 = vmatprep.subr.mxu0 0.0
    %7877 = vmatpush1.msra.mxu0 0.0
    %7878 = vmatprep.subr.mxu0 0.0
    %7879 = vmatpush1.msra.mxu0 0.0
    %7880 = vmatprep.subr.mxu0 0.0
    %7881 = vmatpush1.msra.mxu0 0.0
    %7882 = vmatprep.subr.mxu0 0.0
    %7883 = vmatpush1.msra.mxu0 0.0
    %7884 = vmatprep.subr.mxu0 0.0
    %7885 = vmatpush1.msra.mxu0 0.0
    %7886 = vmatprep.subr.mxu0 0.0
    %7887 = vmatpush1.msra.mxu0 0.0
    %7888 = vmatprep.subr.mxu0 0.0
    %7889 = vmatpush1.msra.mxu0 %v7791
    %7890 = vmatprep.subr.mxu0 0.0
    %7891 = vmatpush1.msra.mxu0 %v7790
    %7892 = vmatprep.subr.mxu0 0.0
    %7893 = vmatpush1.msra.mxu0 %v7789
    %7894 = vmatprep.subr.mxu0 0.0
    %7895 = vmatpush1.msra.mxu0 %v7788
    %7896 = vmatprep.subr.mxu0 0.0
    %7897 = vmatpush1.msra.mxu0 %v7787
    %7898 = vmatprep.subr.mxu0 0.0
    %7899 = vmatpush1.msra.mxu0 %v7786
    %7900 = vmatprep.subr.mxu0 0.0
    %7901 = vmatpush1.msra.mxu0 %v7785
    %7902 = vmatprep.subr.mxu0 0.0
    %7903 = vmatpush1.msra.mxu0 %v7784
    %7904 = vmatprep.subr.mxu0 0.0
    %7905 = vmatpush2.msra.mxu0 0.0
    %7906 = vmatprep.subr.mxu0 0.0
    %7907 = vmatpush2.msra.mxu0 0.0
    %7908 = vmatprep.subr.mxu0 0.0
    %7909 = vmatpush2.msra.mxu0 0.0
    %7910 = vmatprep.subr.mxu0 0.0
    %7911 = vmatpush2.msra.mxu0 0.0
    %7912 = vmatprep.subr.mxu0 0.0
    %7913 = vmatpush2.msra.mxu0 0.0
    %7914 = vmatprep.subr.mxu0 0.0
    %7915 = vmatpush2.msra.mxu0 0.0
    %7916 = vmatprep.subr.mxu0 0.0
    %7917 = vmatpush2.msra.mxu0 0.0
    %7918 = vmatprep.subr.mxu0 0.0
    %7919 = vmatpush2.msra.mxu0 0.0
    %7920 = vmatprep.subr.mxu0 0.0
    %7921 = vmatpush2.msra.mxu0 0.0
    %7922 = vmatprep.subr.mxu0 0.0
    %7923 = vmatpush2.msra.mxu0 0.0
    %7924 = vmatprep.subr.mxu0 0.0
    %7925 = vmatpush2.msra.mxu0 0.0
    %7926 = vmatprep.subr.mxu0 0.0
    %7927 = vmatpush2.msra.mxu0 0.0
    %7928 = vmatprep.subr.mxu0 0.0
    %7929 = vmatpush2.msra.mxu0 0.0
    %7930 = vmatprep.subr.mxu0 0.0
    %7931 = vmatpush2.msra.mxu0 0.0
    %7932 = vmatprep.subr.mxu0 0.0
    %7933 = vmatpush2.msra.mxu0 0.0
    %7934 = vmatprep.subr.mxu0 0.0
    %7935 = vmatpush2.msra.mxu0 0.0
    %7936 = vmatprep.mubr.f32.mxu0 0.0
    %7937 = vmatmul.mubr.f32.gmra.mxu0 %v7870
    %v7938 = vpop.f32.mrf.mxu0
    %v7939 = vadd.f32 %v7866, %v7938
    %v7940 = vpop.f32.mrf.mxu0
    %7941 = vdwg.mxu0
    %v7942 = vld [vmem:[%s4] sm:$0x1]
    %v7944 = vlaneseq
    %v7945 = vshrl.u32 %v7944, 7
    %v7946 = vsub.s32 0, %v7945
    %v7947 = vrot.slane %v7942, %v7946
    %v7949 = vadd.f32 %v7939, %v7947
    %v7950 = vmax.f32 %v7949, 0.0
    %v7951 = vld [vmem:[%s7] sm:$0xff]
    %v7952 = vld [vmem:[%s7 + $0x8] sm:$0xff]
    %v7953 = vld [vmem:[%s7 + $0x10] sm:$0xff]
    %v7954 = vld [vmem:[%s7 + $0x18] sm:$0xff]
    %v7955 = vld [vmem:[%s8] sm:$0x1]
    %v7957 = vlaneseq
    %v7958 = vshrl.u32 %v7957, 7
    %v7959 = vsub.s32 0, %v7958
    %v7960 = vrot.slane %v7955, %v7959
    %v7963 = vsel %vm57, %v7950, 0
    %7965 = vmatprep.subr.mxu0 0.0
    %7966 = vmatpush1.msra.mxu0 0.0
    %7967 = vmatprep.subr.mxu0 0.0
    %7968 = vmatpush1.msra.mxu0 0.0
    %7969 = vmatprep.subr.mxu0 0.0
    %7970 = vmatpush1.msra.mxu0 0.0
    %7971 = vmatprep.subr.mxu0 0.0
    %7972 = vmatpush1.msra.mxu0 0.0
    %7973 = vmatprep.subr.mxu0 0.0
    %7974 = vmatpush1.msra.mxu0 0.0
    %7975 = vmatprep.subr.mxu0 0.0
    %7976 = vmatpush1.msra.mxu0 0.0
    %7977 = vmatprep.subr.mxu0 0.0
    %7978 = vmatpush1.msra.mxu0 0.0
    %7979 = vmatprep.subr.mxu0 0.0
    %7980 = vmatpush1.msra.mxu0 0.0
    %7981 = vmatprep.subr.mxu0 0.0
    %7982 = vmatpush1.msra.mxu0 0.0
    %7983 = vmatprep.subr.mxu0 0.0
    %7984 = vmatpush1.msra.mxu0 0.0
    %7985 = vmatprep.subr.mxu0 0.0
    %7986 = vmatpush1.msra.mxu0 0.0
    %7987 = vmatprep.subr.mxu0 0.0
    %7988 = vmatpush1.msra.mxu0 0.0
    %7989 = vmatprep.subr.mxu0 0.0
    %7990 = vmatpush1.msra.mxu0 %v7954
    %7991 = vmatprep.subr.mxu0 0.0
    %7992 = vmatpush1.msra.mxu0 %v7953
    %7993 = vmatprep.subr.mxu0 0.0
    %7994 = vmatpush1.msra.mxu0 %v7952
    %7995 = vmatprep.subr.mxu0 0.0
    %7996 = vmatpush1.msra.mxu0 %v7951
    %7997 = vmatprep.subr.mxu0 0.0
    %7998 = vmatpush2.msra.mxu0 0.0
    %7999 = vmatprep.subr.mxu0 0.0
    %8000 = vmatpush2.msra.mxu0 0.0
    %8001 = vmatprep.subr.mxu0 0.0
    %8002 = vmatpush2.msra.mxu0 0.0
    %8003 = vmatprep.subr.mxu0 0.0
    %8004 = vmatpush2.msra.mxu0 0.0
    %8005 = vmatprep.subr.mxu0 0.0
    %8006 = vmatpush2.msra.mxu0 0.0
    %8007 = vmatprep.subr.mxu0 0.0
    %8008 = vmatpush2.msra.mxu0 0.0
    %8009 = vmatprep.subr.mxu0 0.0
    %8010 = vmatpush2.msra.mxu0 0.0
    %8011 = vmatprep.subr.mxu0 0.0
    %8012 = vmatpush2.msra.mxu0 0.0
    %8013 = vmatprep.subr.mxu0 0.0
    %8014 = vmatpush2.msra.mxu0 0.0
    %8015 = vmatprep.subr.mxu0 0.0
    %8016 = vmatpush2.msra.mxu0 0.0
    %8017 = vmatprep.subr.mxu0 0.0
    %8018 = vmatpush2.msra.mxu0 0.0
    %8019 = vmatprep.subr.mxu0 0.0
    %8020 = vmatpush2.msra.mxu0 0.0
    %8021 = vmatprep.subr.mxu0 0.0
    %8022 = vmatpush2.msra.mxu0 0.0
    %8023 = vmatprep.subr.mxu0 0.0
    %8024 = vmatpush2.msra.mxu0 0.0
    %8025 = vmatprep.subr.mxu0 0.0
    %8026 = vmatpush2.msra.mxu0 0.0
    %8027 = vmatprep.subr.mxu0 0.0
    %8028 = vmatpush2.msra.mxu0 0.0
    %8029 = vmatprep.mubr.f32.mxu0 0.0
    %8030 = vmatmul.mubr.f32.gmra.mxu0 %v7963
    %v8031 = vpop.f32.mrf.mxu0
    %v8032 = vadd.f32 %v7960, %v8031
    %v8033 = vpop.f32.mrf.mxu0
    %8034 = vdwg.mxu0
    %v8035 = vxor.u32 %v8032, 2147483648
    %v8036 = vmul.f32 %v8035, 1.442695
    %v8037 = vpow.pop %v8036
    %v8038 = vadd.f32 %v8037, 1.0
    %v8039 = vrcp.pop %v8038
    %v8040 = vmul.f32 1.0, %v8039
    %8042 = vrot.lane.b32.xlu0 %v8040, 64
    %v8043 = vpop.permute.xlu0 %8042
    %s8045 = scalar_lea.vmem [#allocation2], 14
    %8046 = vst.msk [vmem:[%s8045] sm:$0x3] %vm1106, %v8043
    // Predicated region
    $region38: #{bidirectional_ntm_forward.1} parent=1 // pred_check
      _
    $region39: #{bidirectional_ntm_forward.1} parent=1 // pred_check_branch
      %8048 = sbr.rel (0) target = $region41
    $region40: #{bidirectional_ntm_forward.1} parent=1 // pred_region
      %s8050 = ssub.s32 256, 256
      %8051 = vsyncadd [#allocation3], %s8050
      %s8052 = sshll.u32 [#allocation2], 4
      %s8053 = int_to_ptr.vmem [resolvable:$true] %s8052
      %8058 = dma.vmem_to_hbm [thread:$0]  %s8053, 256, %s9, [#allocation3], 32, 32, 2
    $region41: #{bidirectional_ntm_forward.1} parent=1 // pred_fallthru
      _
    // Predicated region
    $region42: #{bidirectional_ntm_forward.1} parent=1 // pred_check
      _
    $region43: #{bidirectional_ntm_forward.1} parent=1 // pred_check_branch
      %8060 = sbr.rel (0) target = $region45
    $region44: #{bidirectional_ntm_forward.1} parent=1 // pred_region
      %8061 = dma.done [#allocation3], 256
    $region45: #{bidirectional_ntm_forward.1} parent=1 // pred_fallthru
      _
    %8062 = vsyncpa [#allocation3], 1

</llo_original>
